<compile_context>
chip_gen: v7x
topology: tpu7x:2x2x1
jax: 0.10.0
libtpu: 0.0.40
codegen_flags: <defaults>
</compile_context>

<pallas_src>
import jax
import jax.numpy as jnp
import numpy as np
from jax.experimental import pallas as pl
from jax.experimental.pallas import tpu as pltpu

BN_EPS = 1e-5


# ----------------------------- Pallas kernel --------------------------------
def _make_kernel(cfg):
    D = cfg["D"]          # embed_output_dim = F * E
    F = cfg["F"]          # num fields
    Vp = cfg["Vp"]        # padded vocab size (one-hot / table K extent)
    WS = cfg["WS"]        # uniform padded width of all weight pieces
    n_cross = cfg["n_cross"]
    offm = cfg["offm"]    # name -> (row offset, K rows) in the bf16 slab
    offv = cfg["offv"]    # name -> (row offset, rows)  in the f32 slab

    def kernel(idx_ref, wm_ref, wv_ref, o_ref):
        Bt = idx_ref.shape[0]

        def mm_w(name):                              # bf16 matmul weight (K, WS)
            o, k = offm[name]
            return wm_ref[o:o + k, :]

        def vec_w(name, row=0, cols=WS):             # f32 row vector (1, cols)
            o, _ = offv[name]
            return wv_ref[o + row:o + row + 1, :cols]

        # ---- FeaturesEmbedding fused: one-hot(global id) @ expanded table ----
        lane = jax.lax.broadcasted_iota(jnp.int32, (Bt, Vp), 1)
        hit = lane == idx_ref[:, 0:1]
        for f in range(1, F):
            hit = jnp.logical_or(hit, lane == idx_ref[:, f:f + 1])
        onehot = hit.astype(jnp.bfloat16)                                  # (Bt, Vp)
        x = jnp.dot(onehot, mm_w("t_exp"),
                    preferred_element_type=jnp.float32)[:, :D]             # (Bt, D) f32

        # ---- fused FRN1 + FRN2 (pool folded, block-diagonal weights) ----
        a = jnp.maximum(
            jnp.dot(x.astype(jnp.bfloat16), mm_w("frn_w1"),
                    preferred_element_type=jnp.float32) + vec_w("frn_b1"), 0.0)
        a = jnp.maximum(
            jnp.dot(a.astype(jnp.bfloat16), mm_w("frn_w2"),
                    preferred_element_type=jnp.float32) + vec_w("frn_b2"), 0.0)
        gate = jnp.dot(a.astype(jnp.bfloat16), mm_w("frn_exp"),
                       preferred_element_type=jnp.float32)                 # (Bt, WS)
        x1 = x * gate[:, :D]            # cross branch input
        x2 = x * gate[:, D:2 * D]       # mlp branch input

        # ---- CrossNetwork: x_{l+1} = x0 * (x_l . w_l) + b_l + x_l  (f32 VPU) ----
        xc = x1
        for l in range(n_cross):
            w_l = vec_w("cw", l, D)                                        # (1, D)
            b_l = vec_w("cb", l, D)                                        # (1, D)
            xw = jnp.sum(xc * w_l, axis=-1, keepdims=True)                 # (Bt, 1)
            xc = x1 * xw + b_l + xc

        # ---- MLP: (Linear -> BN -> ReLU -> Dropout[eval]) x 3, BN folded ----
        h = x2
        for wn, bn in (("m1w", "m1b"), ("m2w", "m2b"), ("m3w", "m3b")):
            h = jnp.maximum(
                jnp.dot(h.astype(jnp.bfloat16), mm_w(wn),
                        preferred_element_type=jnp.float32) + vec_w(bn), 0.0)

        # ---- fc on concat([cross, mlp]) as VPU multiply + lane reductions ----
        out = (jnp.sum(xc * vec_w("fca", 0, D), axis=-1, keepdims=True)
               + jnp.sum(h * vec_w("fcb"), axis=-1, keepdims=True)
               + vec_w("fcbias", 0, 1))
        o_ref[...] = out.astype(o_ref.dtype)

    return kernel


# ------------------------- host-side weight packing --------------------------
def _pack_slab(pieces, dtype, width, row_mult):
    """pieces: [(name, 2D array, k_rows)].  Returns (slab, {name: (offset, k_rows)})."""
    blocks, offs, off = [], {}, 0
    for name, arr, k in pieces:
        arr = np.asarray(arr, np.float32)
        assert arr.shape[1] <= width
        store = ((max(k, arr.shape[0]) + row_mult - 1) // row_mult) * row_mult
        blk = np.zeros((store, width), np.float32)
        blk[:arr.shape[0], :arr.shape[1]] = arr
        blocks.append(blk)
        offs[name] = (off, k)
        off += store
    return jnp.asarray(np.concatenate(blocks, axis=0), dtype), offs


def build_params(raw, *, field_dims, embed_dim, mlp_dims, cn_layers):
    g = lambda k: np.asarray(raw[k], np.float32)
    F, E = len(field_dims), embed_dim
    D = F * E
    V = int(sum(field_dims))
    Vp = ((V + 127) // 128) * 128
    R = g("f1w1").shape[1]
    WS = max(2 * D, *mlp_dims)                      # uniform padded width

    # pool @ w1 == repeat(w1 / E, E, axis=0)  (pool averages over the embed dim)
    fold_pool = lambda w1: np.repeat(w1, E, axis=0) / float(E)             # (D, R)
    expand = np.repeat(np.eye(F, dtype=np.float32), E, axis=1)             # (F, D)
    z_rf = np.zeros((R, F), np.float32)
    z_fd = np.zeros((F, D), np.float32)

    frn_w1 = np.concatenate([fold_pool(g("f1w1")), fold_pool(g("f2w1"))], axis=1)  # (D, 2R)
    frn_b1 = np.concatenate([g("f1b1"), g("f2b1")], axis=1)                # (1, 2R)
    frn_w2 = np.block([[g("f1w2"), z_rf], [z_rf, g("f2w2")]])              # (2R, 2F)
    frn_b2 = np.concatenate([g("f1b2"), g("f2b2")], axis=1)                # (1, 2F)
    frn_exp = np.block([[expand, z_fd], [z_fd, expand]])                   # (2F, 2D)

    # Expanded embedding table: row v holds emb_table[v] placed in the column
    # block of the field that owns vocab entry v, so
    #   onehot(global ids) @ T_exp == concat_f(emb_table[idx_f + offset_f]).
    starts = np.concatenate([[0], np.cumsum(field_dims)]).astype(np.int64)
    tbl = g("emb_table")
    t_exp = np.zeros((V, D), np.float32)
    for f in range(F):
        t_exp[starts[f]:starts[f + 1], f * E:(f + 1) * E] = tbl[starts[f]:starts[f + 1]]

    bn_scale = np.float32(1.0 / np.sqrt(1.0 + BN_EPS))   # fresh BN stats -> pure scale

    # bf16 slab: MXU weights, each padded to (K of incoming activation, WS).
    mm_pieces = [
        ("t_exp", t_exp, Vp),
        ("frn_w1", frn_w1, D),
        ("frn_w2", frn_w2, WS),
        ("frn_exp", frn_exp, WS),
        ("m1w", g("m1w") * bn_scale, D),
        ("m2w", g("m2w") * bn_scale, WS),
        ("m3w", g("m3w") * bn_scale, WS),
    ]
    # f32 slab: biases + VPU weights (cross net, final fc).
    vv_pieces = [
        ("frn_b1", frn_b1, 1),
        ("frn_b2", frn_b2, 1),
        ("cw", g("cw"), cn_layers),
        ("cb", g("cb"), cn_layers),
        ("m1b", g("m1b") * bn_scale, 1),
        ("m2b", g("m2b") * bn_scale, 1),
        ("m3b", g("m3b") * bn_scale, 1),
        ("fca", g("fca").T, 1),
        ("fcb", g("fcb").T, 1),
        ("fcbias", g("fcbias"), 1),
    ]
    wm, offm = _pack_slab(mm_pieces, jnp.bfloat16, WS, 16)
    wv, offv = _pack_slab(vv_pieces, jnp.float32, WS, 8)
    cfg = dict(D=D, F=F, Vp=Vp, WS=WS, n_cross=cn_layers, offm=offm, offv=offv)
    return dict(wm=wm, wv=wv, cfg=cfg)


# ------------------------- chip-aware grid selection -------------------------
def _tensorcores_per_chip():
    try:
        info = pltpu.get_tpu_info()
        for attr in ("num_cores", "core_count", "num_tensorcores", "tensorcores_per_chip"):
            v = getattr(info, attr, None)
            if isinstance(v, int) and 0 < v <= 8:
                return v
    except Exception:
        pass
    try:
        if "v7" in jax.devices()[0].device_kind.lower():
            return 2
    except Exception:
        pass
    return 1


def _pick_batch_tile(B, n_tc, max_tile=1024):
    # Overhead-bound kernel: fewest grid steps that still feed every TensorCore.
    # Move to 2 steps per TC only once each step still has >= 512 rows.
    steps = n_tc
    if B >= n_tc * 1024:
        steps = n_tc * 2
    tile = min(-(-B // steps), max_tile)
    return max(16, ((tile + 15) // 16) * 16)


# ------------------------------- wrapper -------------------------------------
def dcn_frnp_forward(x_idx_global, params):
    """x_idx_global: (B, F) int32 global vocab ids (field offsets already added)."""
    B, F = x_idx_global.shape
    cfg = params["cfg"]

    tile = _pick_batch_tile(B, _tensorcores_per_chip())
    num_tiles = pl.cdiv(B, tile)
    Bp = num_tiles * tile
    if Bp != B:
        x_idx_global = jnp.pad(x_idx_global, ((0, Bp - B), (0, 0)))

    out = pl.pallas_call(
        _make_kernel(cfg),
        out_shape=jax.ShapeDtypeStruct((Bp, 1), jnp.float32),
        grid=(num_tiles,),
        in_specs=[
            pl.BlockSpec((tile, F), lambda i: (i, 0)),                 # batch-tiled ids
            pl.BlockSpec(tuple(params["wm"].shape), lambda i: (0, 0)),  # bf16 weight slab
            pl.BlockSpec(tuple(params["wv"].shape), lambda i: (0, 0)),  # f32 weight slab
        ],
        out_specs=pl.BlockSpec((tile, 1), lambda i: (i, 0)),
        compiler_params=pltpu.CompilerParams(
            dimension_semantics=("parallel",)),
    )(x_idx_global, params["wm"], params["wv"])
    return out[:B]


# ---------------- pure-JAX reference (unfolded module semantics, f32) --------
def reference_forward(x_idx, raw, *, field_dims, embed_dim):
    hp = jax.lax.Precision.HIGHEST
    dot = lambda a, b: jnp.dot(a, b, precision=hp)
    F, E = len(field_dims), embed_dim
    D = F * E

    offsets = jnp.asarray(np.concatenate([[0], np.cumsum(field_dims)[:-1]]), jnp.int32)
    x_emb = jnp.take(jnp.asarray(raw["emb_table"]), x_idx + offsets[None, :], axis=0)
    x = x_emb.reshape(x_idx.shape[0], D).astype(jnp.float32)

    pool = jnp.asarray(np.repeat(np.eye(F, dtype=np.float32), E, axis=0) / E)   # (D, F)
    expand = jnp.asarray(np.repeat(np.eye(F, dtype=np.float32), E, axis=1))     # (F, D)

    def frn(xi, w1, b1, w2, b2):
        z = dot(xi, pool)
        a = jnp.maximum(dot(z, w1) + b1, 0.0)
        a = jnp.maximum(dot(a, w2) + b2, 0.0)
        return xi * dot(a, expand)

    x1 = frn(x, raw["f1w1"], raw["f1b1"], raw["f1w2"], raw["f1b2"])
    x2 = frn(x, raw["f2w1"], raw["f2b1"], raw["f2w2"], raw["f2b2"])

    xc = x1
    for l in range(raw["cw"].shape[0]):
        xw = jnp.sum(xc * raw["cw"][l][None, :], axis=-1, keepdims=True)
        xc = x1 * xw + raw["cb"][l][None, :] + xc

    bn_scale = 1.0 / np.sqrt(1.0 + BN_EPS)
    h = x2
    for w, b in ((raw["m1w"], raw["m1b"]), (raw["m2w"], raw["m2b"]), (raw["m3w"], raw["m3b"])):
        h = jnp.maximum((dot(h, w) + b) * bn_scale, 0.0)

    return dot(xc, raw["fca"]) + dot(h, raw["fcb"]) + raw["fcbias"]


if __name__ == "__main__":
    # --- small shapes consistent with the module ---
    field_dims = [10, 20, 30, 40]
    F = len(field_dims)
    E = 8                        # embed_dim
    D = F * E                    # embed_output_dim = 32
    R = max(1, F // 2)           # SENET reduction
    CN_LAYERS = 3
    MLP = (64, 64, 64)
    B = 512

    key = jax.random.PRNGKey(0)
    ks = iter(jax.random.split(key, 32))
    nrm = lambda shape, s=0.1: (s * jax.random.normal(next(ks), shape)).astype(jnp.float32)

    raw = {
        "emb_table": nrm((sum(field_dims), E)),
        # FRN1 / FRN2 (SENET-style)
        "f1w1": nrm((F, R)), "f1b1": nrm((1, R)),
        "f1w2": nrm((R, F)), "f1b2": nrm((1, F)) + 1.0,
        "f2w1": nrm((F, R)), "f2b1": nrm((1, R)),
        "f2w2": nrm((R, F)), "f2b2": nrm((1, F)) + 1.0,
        # CrossNetwork
        "cw": nrm((CN_LAYERS, D)), "cb": nrm((CN_LAYERS, D)),
        # MLP
        "m1w": nrm((D, MLP[0])), "m1b": nrm((1, MLP[0])),
        "m2w": nrm((MLP[0], MLP[1])), "m2b": nrm((1, MLP[1])),
        "m3w": nrm((MLP[1], MLP[2])), "m3b": nrm((1, MLP[2])),
        # fc, split into cross / mlp halves of Linear(D + MLP[-1], 1)
        "fca": nrm((D, 1)), "fcb": nrm((MLP[-1], 1)), "fcbias": nrm((1, 1)),
    }
    params = build_params(raw, field_dims=field_dims, embed_dim=E,
                          mlp_dims=MLP, cn_layers=CN_LAYERS)

    # integer categorical inputs, one id per field
    x_idx = jnp.stack(
        [jax.random.randint(next(ks), (B,), 0, fd) for fd in field_dims], axis=1
    ).astype(jnp.int32)                                             # (B, F)
    offsets = jnp.asarray(np.concatenate([[0], np.cumsum(field_dims)[:-1]]), jnp.int32)
    x_idx_global = x_idx + offsets[None, :]        # global vocab ids for the fused gather

    out = dcn_frnp_forward(x_idx_global, params)
    out = jax.block_until_ready(out)

    ref = reference_forward(x_idx, raw, field_dims=field_dims, embed_dim=E)
    # Tolerance reflects bf16 MXU operands inside the kernel (f32 accumulators);
    # the weight padding / pool / BN folds themselves are exact.
    np.testing.assert_allclose(np.asarray(out), np.asarray(ref), rtol=5e-2, atol=1e-2)
    assert out.shape == (B, 1)
    print("KERNEL_OK")
</pallas_src>

<mosaic_0001>
module attributes {stable_mosaic.version = 11 : i64} {
  func.func @kernel(%arg0: i32, %arg1: memref<512x4xi32, #tpu.memory_space<vmem>>, %arg2: memref<448x64xbf16, #tpu.memory_space<vmem>>, %arg3: memref<80x64xf32, #tpu.memory_space<vmem>>, %arg4: memref<512x1xf32, #tpu.memory_space<vmem>>) attributes {dimension_semantics = [#tpu.dimension_semantics<parallel>], iteration_bounds = array<i64: 1>, scalar_prefetch = 0 : i64, scratch_operands = 0 : i64, tpu.core_type = #tpu.core_type<tc>, window_params = [{transform_indices = @transform_0, window_bounds = array<i64: 512, 4>}, {pipeline_mode = #tpu.pipeline_mode<synchronous>, transform_indices = @transform_1, window_bounds = array<i64: 448, 64>}, {pipeline_mode = #tpu.pipeline_mode<synchronous>, transform_indices = @transform_2, window_bounds = array<i64: 80, 64>}, {transform_indices = @transform_3, window_bounds = array<i64: 512, 1>}]} {
    %0 = tpu.iota {dimensions = array<i32: 1>} : vector<512x128xi32>
    %c0 = arith.constant 0 : index
    %c0_0 = arith.constant 0 : index
    %1 = vector.load %arg1[%c0, %c0_0] : memref<512x4xi32, #tpu.memory_space<vmem>>, vector<512x1xi32>
    %2 = vector.broadcast %1 : vector<512x1xi32> to vector<512x128xi32>
    %3 = arith.cmpi eq, %0, %2 : vector<512x128xi32>
    %c0_1 = arith.constant 0 : index
    %c1 = arith.constant 1 : index
    %4 = vector.load %arg1[%c0_1, %c1] : memref<512x4xi32, #tpu.memory_space<vmem>>, vector<512x1xi32>
    %5 = vector.broadcast %4 : vector<512x1xi32> to vector<512x128xi32>
    %6 = arith.cmpi eq, %0, %5 : vector<512x128xi32>
    %7 = arith.ori %3, %6 : vector<512x128xi1>
    %c0_2 = arith.constant 0 : index
    %c2 = arith.constant 2 : index
    %8 = vector.load %arg1[%c0_2, %c2] : memref<512x4xi32, #tpu.memory_space<vmem>>, vector<512x1xi32>
    %9 = vector.broadcast %8 : vector<512x1xi32> to vector<512x128xi32>
    %10 = arith.cmpi eq, %0, %9 : vector<512x128xi32>
    %11 = arith.ori %7, %10 : vector<512x128xi1>
    %c0_3 = arith.constant 0 : index
    %c3 = arith.constant 3 : index
    %12 = vector.load %arg1[%c0_3, %c3] : memref<512x4xi32, #tpu.memory_space<vmem>>, vector<512x1xi32>
    %13 = vector.broadcast %12 : vector<512x1xi32> to vector<512x128xi32>
    %14 = arith.cmpi eq, %0, %13 : vector<512x128xi32>
    %15 = arith.ori %11, %14 : vector<512x128xi1>
    %16 = arith.extui %15 : vector<512x128xi1> to vector<512x128xi32>
    %17 = arith.sitofp %16 : vector<512x128xi32> to vector<512x128xf32>
    %18 = arith.truncf %17 : vector<512x128xf32> to vector<512x128xbf16>
    %c0_4 = arith.constant 0 : index
    %c0_5 = arith.constant 0 : index
    %19 = vector.load %arg2[%c0_4, %c0_5] : memref<448x64xbf16, #tpu.memory_space<vmem>>, vector<128x64xbf16>
    %cst = arith.constant dense<0.000000e+00> : vector<512x64xf32>
    %20 = tpu.matmul %18, %19, %cst {dimension_numbers = #tpu.dot_dimension_numbers<[1], [0], [0], [1], [0, 0, 1, 1], [], []>} : vector<512x128xbf16>, vector<128x64xbf16>, vector<512x64xf32> -> vector<512x64xf32>
    %21 = vector.extract_strided_slice %20 {offsets = [0, 0], sizes = [512, 32], strides = [1, 1]} : vector<512x64xf32> to vector<512x32xf32>
    %22 = arith.truncf %21 : vector<512x32xf32> to vector<512x32xbf16>
    %c128 = arith.constant 128 : index
    %c0_6 = arith.constant 0 : index
    %23 = vector.load %arg2[%c128, %c0_6] : memref<448x64xbf16, #tpu.memory_space<vmem>>, vector<32x64xbf16>
    %cst_7 = arith.constant dense<0.000000e+00> : vector<512x64xf32>
    %24 = tpu.matmul %22, %23, %cst_7 {dimension_numbers = #tpu.dot_dimension_numbers<[1], [0], [0], [1], [0, 0, 1, 1], [], []>} : vector<512x32xbf16>, vector<32x64xbf16>, vector<512x64xf32> -> vector<512x64xf32>
    %c0_8 = arith.constant 0 : index
    %c0_9 = arith.constant 0 : index
    %25 = vector.load %arg3[%c0_8, %c0_9] : memref<80x64xf32, #tpu.memory_space<vmem>>, vector<1x64xf32>
    %26 = vector.broadcast %25 : vector<1x64xf32> to vector<512x64xf32>
    %27 = arith.addf %24, %26 : vector<512x64xf32>
    %cst_10 = arith.constant 0.000000e+00 : f32
    %28 = vector.broadcast %cst_10 : f32 to vector<512x64xf32>
    %29 = arith.maximumf %27, %28 : vector<512x64xf32>
    %30 = arith.truncf %29 : vector<512x64xf32> to vector<512x64xbf16>
    %c160 = arith.constant 160 : index
    %c0_11 = arith.constant 0 : index
    %31 = vector.load %arg2[%c160, %c0_11] : memref<448x64xbf16, #tpu.memory_space<vmem>>, vector<64x64xbf16>
    %cst_12 = arith.constant dense<0.000000e+00> : vector<512x64xf32>
    %32 = tpu.matmul %30, %31, %cst_12 {dimension_numbers = #tpu.dot_dimension_numbers<[1], [0], [0], [1], [0, 0, 1, 1], [], []>} : vector<512x64xbf16>, vector<64x64xbf16>, vector<512x64xf32> -> vector<512x64xf32>
    %c8 = arith.constant 8 : index
    %c0_13 = arith.constant 0 : index
    %33 = vector.load %arg3[%c8, %c0_13] : memref<80x64xf32, #tpu.memory_space<vmem>>, vector<1x64xf32>
    %34 = vector.broadcast %33 : vector<1x64xf32> to vector<512x64xf32>
    %35 = arith.addf %32, %34 : vector<512x64xf32>
    %cst_14 = arith.constant 0.000000e+00 : f32
    %36 = vector.broadcast %cst_14 : f32 to vector<512x64xf32>
    %37 = arith.maximumf %35, %36 : vector<512x64xf32>
    %38 = arith.truncf %37 : vector<512x64xf32> to vector<512x64xbf16>
    %c224 = arith.constant 224 : index
    %c0_15 = arith.constant 0 : index
    %39 = vector.load %arg2[%c224, %c0_15] : memref<448x64xbf16, #tpu.memory_space<vmem>>, vector<64x64xbf16>
    %cst_16 = arith.constant dense<0.000000e+00> : vector<512x64xf32>
    %40 = tpu.matmul %38, %39, %cst_16 {dimension_numbers = #tpu.dot_dimension_numbers<[1], [0], [0], [1], [0, 0, 1, 1], [], []>} : vector<512x64xbf16>, vector<64x64xbf16>, vector<512x64xf32> -> vector<512x64xf32>
    %41 = vector.extract_strided_slice %40 {offsets = [0, 0], sizes = [512, 32], strides = [1, 1]} : vector<512x64xf32> to vector<512x32xf32>
    %42 = arith.mulf %21, %41 : vector<512x32xf32>
    %43 = vector.extract_strided_slice %40 {offsets = [0, 32], sizes = [512, 32], strides = [1, 1]} : vector<512x64xf32> to vector<512x32xf32>
    %44 = arith.mulf %21, %43 : vector<512x32xf32>
    %c16 = arith.constant 16 : index
    %c0_17 = arith.constant 0 : index
    %45 = vector.load %arg3[%c16, %c0_17] : memref<80x64xf32, #tpu.memory_space<vmem>>, vector<1x32xf32>
    %c24 = arith.constant 24 : index
    %c0_18 = arith.constant 0 : index
    %46 = vector.load %arg3[%c24, %c0_18] : memref<80x64xf32, #tpu.memory_space<vmem>>, vector<1x32xf32>
    %47 = vector.broadcast %45 : vector<1x32xf32> to vector<512x32xf32>
    %48 = arith.mulf %42, %47 : vector<512x32xf32>
    %cst_19 = arith.constant dense<0.000000e+00> : vector<512xf32>
    %49 = vector.multi_reduction <add>, %48, %cst_19 [1] : vector<512x32xf32> to vector<512xf32>
    %50 = vector.shape_cast %49 : vector<512xf32> to vector<512x1xf32>
    %51 = vector.broadcast %50 : vector<512x1xf32> to vector<512x32xf32>
    %52 = arith.mulf %42, %51 : vector<512x32xf32>
    %53 = vector.broadcast %46 : vector<1x32xf32> to vector<512x32xf32>
    %54 = arith.addf %52, %53 : vector<512x32xf32>
    %55 = arith.addf %54, %42 : vector<512x32xf32>
    %c17 = arith.constant 17 : index
    %c0_20 = arith.constant 0 : index
    %56 = vector.load %arg3[%c17, %c0_20] : memref<80x64xf32, #tpu.memory_space<vmem>>, vector<1x32xf32>
    %c25 = arith.constant 25 : index
    %c0_21 = arith.constant 0 : index
    %57 = vector.load %arg3[%c25, %c0_21] : memref<80x64xf32, #tpu.memory_space<vmem>>, vector<1x32xf32>
    %58 = vector.broadcast %56 : vector<1x32xf32> to vector<512x32xf32>
    %59 = arith.mulf %55, %58 : vector<512x32xf32>
    %cst_22 = arith.constant dense<0.000000e+00> : vector<512xf32>
    %60 = vector.multi_reduction <add>, %59, %cst_22 [1] : vector<512x32xf32> to vector<512xf32>
    %61 = vector.shape_cast %60 : vector<512xf32> to vector<512x1xf32>
    %62 = vector.broadcast %61 : vector<512x1xf32> to vector<512x32xf32>
    %63 = arith.mulf %42, %62 : vector<512x32xf32>
    %64 = vector.broadcast %57 : vector<1x32xf32> to vector<512x32xf32>
    %65 = arith.addf %63, %64 : vector<512x32xf32>
    %66 = arith.addf %65, %55 : vector<512x32xf32>
    %c18 = arith.constant 18 : index
    %c0_23 = arith.constant 0 : index
    %67 = vector.load %arg3[%c18, %c0_23] : memref<80x64xf32, #tpu.memory_space<vmem>>, vector<1x32xf32>
    %c26 = arith.constant 26 : index
    %c0_24 = arith.constant 0 : index
    %68 = vector.load %arg3[%c26, %c0_24] : memref<80x64xf32, #tpu.memory_space<vmem>>, vector<1x32xf32>
    %69 = vector.broadcast %67 : vector<1x32xf32> to vector<512x32xf32>
    %70 = arith.mulf %66, %69 : vector<512x32xf32>
    %cst_25 = arith.constant dense<0.000000e+00> : vector<512xf32>
    %71 = vector.multi_reduction <add>, %70, %cst_25 [1] : vector<512x32xf32> to vector<512xf32>
    %72 = vector.shape_cast %71 : vector<512xf32> to vector<512x1xf32>
    %73 = vector.broadcast %72 : vector<512x1xf32> to vector<512x32xf32>
    %74 = arith.mulf %42, %73 : vector<512x32xf32>
    %75 = vector.broadcast %68 : vector<1x32xf32> to vector<512x32xf32>
    %76 = arith.addf %74, %75 : vector<512x32xf32>
    %77 = arith.addf %76, %66 : vector<512x32xf32>
    %78 = arith.truncf %44 : vector<512x32xf32> to vector<512x32xbf16>
    %c288 = arith.constant 288 : index
    %c0_26 = arith.constant 0 : index
    %79 = vector.load %arg2[%c288, %c0_26] : memref<448x64xbf16, #tpu.memory_space<vmem>>, vector<32x64xbf16>
    %cst_27 = arith.constant dense<0.000000e+00> : vector<512x64xf32>
    %80 = tpu.matmul %78, %79, %cst_27 {dimension_numbers = #tpu.dot_dimension_numbers<[1], [0], [0], [1], [0, 0, 1, 1], [], []>} : vector<512x32xbf16>, vector<32x64xbf16>, vector<512x64xf32> -> vector<512x64xf32>
    %c32 = arith.constant 32 : index
    %c0_28 = arith.constant 0 : index
    %81 = vector.load %arg3[%c32, %c0_28] : memref<80x64xf32, #tpu.memory_space<vmem>>, vector<1x64xf32>
    %82 = vector.broadcast %81 : vector<1x64xf32> to vector<512x64xf32>
    %83 = arith.addf %80, %82 : vector<512x64xf32>
    %cst_29 = arith.constant 0.000000e+00 : f32
    %84 = vector.broadcast %cst_29 : f32 to vector<512x64xf32>
    %85 = arith.maximumf %83, %84 : vector<512x64xf32>
    %86 = arith.truncf %85 : vector<512x64xf32> to vector<512x64xbf16>
    %c320 = arith.constant 320 : index
    %c0_30 = arith.constant 0 : index
    %87 = vector.load %arg2[%c320, %c0_30] : memref<448x64xbf16, #tpu.memory_space<vmem>>, vector<64x64xbf16>
    %cst_31 = arith.constant dense<0.000000e+00> : vector<512x64xf32>
    %88 = tpu.matmul %86, %87, %cst_31 {dimension_numbers = #tpu.dot_dimension_numbers<[1], [0], [0], [1], [0, 0, 1, 1], [], []>} : vector<512x64xbf16>, vector<64x64xbf16>, vector<512x64xf32> -> vector<512x64xf32>
    %c40 = arith.constant 40 : index
    %c0_32 = arith.constant 0 : index
    %89 = vector.load %arg3[%c40, %c0_32] : memref<80x64xf32, #tpu.memory_space<vmem>>, vector<1x64xf32>
    %90 = vector.broadcast %89 : vector<1x64xf32> to vector<512x64xf32>
    %91 = arith.addf %88, %90 : vector<512x64xf32>
    %cst_33 = arith.constant 0.000000e+00 : f32
    %92 = vector.broadcast %cst_33 : f32 to vector<512x64xf32>
    %93 = arith.maximumf %91, %92 : vector<512x64xf32>
    %94 = arith.truncf %93 : vector<512x64xf32> to vector<512x64xbf16>
    %c384 = arith.constant 384 : index
    %c0_34 = arith.constant 0 : index
    %95 = vector.load %arg2[%c384, %c0_34] : memref<448x64xbf16, #tpu.memory_space<vmem>>, vector<64x64xbf16>
    %cst_35 = arith.constant dense<0.000000e+00> : vector<512x64xf32>
    %96 = tpu.matmul %94, %95, %cst_35 {dimension_numbers = #tpu.dot_dimension_numbers<[1], [0], [0], [1], [0, 0, 1, 1], [], []>} : vector<512x64xbf16>, vector<64x64xbf16>, vector<512x64xf32> -> vector<512x64xf32>
    %c48 = arith.constant 48 : index
    %c0_36 = arith.constant 0 : index
    %97 = vector.load %arg3[%c48, %c0_36] : memref<80x64xf32, #tpu.memory_space<vmem>>, vector<1x64xf32>
    %98 = vector.broadcast %97 : vector<1x64xf32> to vector<512x64xf32>
    %99 = arith.addf %96, %98 : vector<512x64xf32>
    %cst_37 = arith.constant 0.000000e+00 : f32
    %100 = vector.broadcast %cst_37 : f32 to vector<512x64xf32>
    %101 = arith.maximumf %99, %100 : vector<512x64xf32>
    %c56 = arith.constant 56 : index
    %c0_38 = arith.constant 0 : index
    %102 = vector.load %arg3[%c56, %c0_38] : memref<80x64xf32, #tpu.memory_space<vmem>>, vector<1x32xf32>
    %103 = vector.broadcast %102 : vector<1x32xf32> to vector<512x32xf32>
    %104 = arith.mulf %77, %103 : vector<512x32xf32>
    %cst_39 = arith.constant dense<0.000000e+00> : vector<512xf32>
    %105 = vector.multi_reduction <add>, %104, %cst_39 [1] : vector<512x32xf32> to vector<512xf32>
    %106 = vector.shape_cast %105 : vector<512xf32> to vector<512x1xf32>
    %c64 = arith.constant 64 : index
    %c0_40 = arith.constant 0 : index
    %107 = vector.load %arg3[%c64, %c0_40] : memref<80x64xf32, #tpu.memory_space<vmem>>, vector<1x64xf32>
    %108 = vector.broadcast %107 : vector<1x64xf32> to vector<512x64xf32>
    %109 = arith.mulf %101, %108 : vector<512x64xf32>
    %cst_41 = arith.constant dense<0.000000e+00> : vector<512xf32>
    %110 = vector.multi_reduction <add>, %109, %cst_41 [1] : vector<512x64xf32> to vector<512xf32>
    %111 = vector.shape_cast %110 : vector<512xf32> to vector<512x1xf32>
    %112 = arith.addf %106, %111 : vector<512x1xf32>
    %c72 = arith.constant 72 : index
    %c0_42 = arith.constant 0 : index
    %113 = vector.load %arg3[%c72, %c0_42] : memref<80x64xf32, #tpu.memory_space<vmem>>, vector<1x1xf32>
    %114 = vector.broadcast %113 : vector<1x1xf32> to vector<512x1xf32>
    %115 = arith.addf %112, %114 : vector<512x1xf32>
    %c0_43 = arith.constant 0 : index
    %c0_44 = arith.constant 0 : index
    %116 = vector.load %arg4[%c0_43, %c0_44] : memref<512x1xf32, #tpu.memory_space<vmem>>, vector<512x1xf32>
    tpu.vector_store %arg4[%c0_43, %c0_44], %115 {strides = array<i32>} : memref<512x1xf32, #tpu.memory_space<vmem>>, vector<512x1xf32>,
    return
  }
  func.func @transform_0(%arg0: i32) -> (i32, i32) {
    %c0_i32 = arith.constant 0 : i32
    %c0_i32_0 = arith.constant 0 : i32
    return %arg0, %c0_i32 : i32, i32
  }
  func.func @transform_1(%arg0: i32) -> (i32, i32) {
    %c0_i32 = arith.constant 0 : i32
    %c0_i32_0 = arith.constant 0 : i32
    %c0_i32_1 = arith.constant 0 : i32
    return %c0_i32, %c0_i32_0 : i32, i32
  }
  func.func @transform_2(%arg0: i32) -> (i32, i32) {
    %c0_i32 = arith.constant 0 : i32
    %c0_i32_0 = arith.constant 0 : i32
    %c0_i32_1 = arith.constant 0 : i32
    return %c0_i32, %c0_i32_0 : i32, i32
  }
  func.func @transform_3(%arg0: i32) -> (i32, i32) {
    %c0_i32 = arith.constant 0 : i32
    %c0_i32_0 = arith.constant 0 : i32
    return %arg0, %c0_i32 : i32, i32
  }
}

</mosaic_0001>

<llo_original>
// kernel: tpu_custom_call.1
$region0: #{tpu_custom_call.1}
  #allocation0 [shape = 'u32[]', space=smem, size = 0x4, offset = 0x4, fixed_abs, tag = 'smem constant byte address 0x4 - core index']
  #allocation1 [shape = 'u32[144,128]{1,0:T(1,128)}', space=vmem, size = 0x12000, scoped, tag = 'internal scratch']
  %s0 = inlined_call_operand.vmem [shape: s32[512,4], index: 0, kind: input, shape index: {}]
  %s1 = inlined_call_operand.vmem [shape: bf16[448,64], index: 1, kind: input, shape index: {}]
  %s2 = inlined_call_operand.vmem [shape: f32[80,64], index: 2, kind: input, shape index: {}]
  %s3 = inlined_call_operand.vmem [shape: f32[512,1], index: 3, kind: output, shape index: {}]
  %s4 = sld [smem:[#allocation0]]
  $region22: #{tpu_custom_call.1} parent=0
    _
  %s6 = ssub.s32 1, %s4
  %s7 = scalar_select 0, %s6, %s4
  // Predicated region
  $region2: #{tpu_custom_call.1} parent=0 // pred_check
    _
  $region3: #{tpu_custom_call.1} parent=0 // pred_check_branch
    %9 = sbr.rel (0) target = $region5
  $region4: #{tpu_custom_call.1} parent=0 // pred_region
    _
  $region5: #{tpu_custom_call.1} parent=0 // pred_fallthru
    _
  // Predicated region
  $region6: #{tpu_custom_call.1} parent=0 // pred_check
    _
  $region7: #{tpu_custom_call.1} parent=0 // pred_check_branch
    %11 = sbr.rel (0) target = $region9
  $region8: #{tpu_custom_call.1} parent=0 // pred_region
    _
  $region9: #{tpu_custom_call.1} parent=0 // pred_fallthru
    _
  // Predicated region
  $region10: #{tpu_custom_call.1} parent=0 // pred_check
    _
  $region11: #{tpu_custom_call.1} parent=0 // pred_check_branch
    %13 = sbr.rel (0) target = $region13
  $region12: #{tpu_custom_call.1} parent=0 // pred_region
    _
  $region13: #{tpu_custom_call.1} parent=0 // pred_fallthru
    _
  %v15 = vlaneseq
  %v16 = vand.u32 %v15, 127
  %v17 = vld [vmem:[%s0] sm:$0xff]
  %v18 = vld [vmem:[%s0 + $0x8] sm:$0xff]
  %v19 = vld [vmem:[%s0 + $0x10] sm:$0xff]
  %v20 = vld [vmem:[%s0 + $0x18] sm:$0xff]
  %v21 = vld [vmem:[%s0 + $0x20] sm:$0xff]
  %v22 = vld [vmem:[%s0 + $0x28] sm:$0xff]
  %v23 = vld [vmem:[%s0 + $0x30] sm:$0xff]
  %v24 = vld [vmem:[%s0 + $0x38] sm:$0xff]
  %v25 = vld [vmem:[%s0 + $0x40] sm:$0xff]
  %v26 = vld [vmem:[%s0 + $0x48] sm:$0xff]
  %v27 = vld [vmem:[%s0 + $0x50] sm:$0xff]
  %v28 = vld [vmem:[%s0 + $0x58] sm:$0xff]
  %v29 = vld [vmem:[%s0 + $0x60] sm:$0xff]
  %v30 = vld [vmem:[%s0 + $0x68] sm:$0xff]
  %v31 = vld [vmem:[%s0 + $0x70] sm:$0xff]
  %v32 = vld [vmem:[%s0 + $0x78] sm:$0xff]
  %v33 = vld [vmem:[%s0 + $0x80] sm:$0xff]
  %v34 = vld [vmem:[%s0 + $0x88] sm:$0xff]
  %v35 = vld [vmem:[%s0 + $0x90] sm:$0xff]
  %v36 = vld [vmem:[%s0 + $0x98] sm:$0xff]
  %v37 = vld [vmem:[%s0 + $0xa0] sm:$0xff]
  %v38 = vld [vmem:[%s0 + $0xa8] sm:$0xff]
  %v39 = vld [vmem:[%s0 + $0xb0] sm:$0xff]
  %v40 = vld [vmem:[%s0 + $0xb8] sm:$0xff]
  %v41 = vld [vmem:[%s0 + $0xc0] sm:$0xff]
  %v42 = vld [vmem:[%s0 + $0xc8] sm:$0xff]
  %v43 = vld [vmem:[%s0 + $0xd0] sm:$0xff]
  %v44 = vld [vmem:[%s0 + $0xd8] sm:$0xff]
  %v45 = vld [vmem:[%s0 + $0xe0] sm:$0xff]
  %v46 = vld [vmem:[%s0 + $0xe8] sm:$0xff]
  %v47 = vld [vmem:[%s0 + $0xf0] sm:$0xff]
  %v48 = vld [vmem:[%s0 + $0xf8] sm:$0xff]
  %v49 = vld [vmem:[%s0 + $0x100] sm:$0xff]
  %v50 = vld [vmem:[%s0 + $0x108] sm:$0xff]
  %v51 = vld [vmem:[%s0 + $0x110] sm:$0xff]
  %v52 = vld [vmem:[%s0 + $0x118] sm:$0xff]
  %v53 = vld [vmem:[%s0 + $0x120] sm:$0xff]
  %v54 = vld [vmem:[%s0 + $0x128] sm:$0xff]
  %v55 = vld [vmem:[%s0 + $0x130] sm:$0xff]
  %v56 = vld [vmem:[%s0 + $0x138] sm:$0xff]
  %v57 = vld [vmem:[%s0 + $0x140] sm:$0xff]
  %v58 = vld [vmem:[%s0 + $0x148] sm:$0xff]
  %v59 = vld [vmem:[%s0 + $0x150] sm:$0xff]
  %v60 = vld [vmem:[%s0 + $0x158] sm:$0xff]
  %v61 = vld [vmem:[%s0 + $0x160] sm:$0xff]
  %v62 = vld [vmem:[%s0 + $0x168] sm:$0xff]
  %v63 = vld [vmem:[%s0 + $0x170] sm:$0xff]
  %v64 = vld [vmem:[%s0 + $0x178] sm:$0xff]
  %v65 = vld [vmem:[%s0 + $0x180] sm:$0xff]
  %v66 = vld [vmem:[%s0 + $0x188] sm:$0xff]
  %v67 = vld [vmem:[%s0 + $0x190] sm:$0xff]
  %v68 = vld [vmem:[%s0 + $0x198] sm:$0xff]
  %v69 = vld [vmem:[%s0 + $0x1a0] sm:$0xff]
  %v70 = vld [vmem:[%s0 + $0x1a8] sm:$0xff]
  %v71 = vld [vmem:[%s0 + $0x1b0] sm:$0xff]
  %v72 = vld [vmem:[%s0 + $0x1b8] sm:$0xff]
  %v73 = vld [vmem:[%s0 + $0x1c0] sm:$0xff]
  %v74 = vld [vmem:[%s0 + $0x1c8] sm:$0xff]
  %v75 = vld [vmem:[%s0 + $0x1d0] sm:$0xff]
  %v76 = vld [vmem:[%s0 + $0x1d8] sm:$0xff]
  %v77 = vld [vmem:[%s0 + $0x1e0] sm:$0xff]
  %v78 = vld [vmem:[%s0 + $0x1e8] sm:$0xff]
  %v79 = vld [vmem:[%s0 + $0x1f0] sm:$0xff]
  %v80 = vld [vmem:[%s0 + $0x1f8] sm:$0xff]
  %81 = vset.pattern.permute.xlu0 0
  %82 = vperm.xlu0 %81, %v17
  %v83 = vpop.permute.xlu0 %82
  %84 = vset.pattern.permute.xlu0 0
  %85 = vperm.xlu0 %84, %v18
  %v86 = vpop.permute.xlu0 %85
  %87 = vset.pattern.permute.xlu0 0
  %88 = vperm.xlu0 %87, %v19
  %v89 = vpop.permute.xlu0 %88
  %90 = vset.pattern.permute.xlu0 0
  %91 = vperm.xlu0 %90, %v20
  %v92 = vpop.permute.xlu0 %91
  %93 = vset.pattern.permute.xlu0 0
  %94 = vperm.xlu0 %93, %v21
  %v95 = vpop.permute.xlu0 %94
  %96 = vset.pattern.permute.xlu0 0
  %97 = vperm.xlu0 %96, %v22
  %v98 = vpop.permute.xlu0 %97
  %99 = vset.pattern.permute.xlu0 0
  %100 = vperm.xlu0 %99, %v23
  %v101 = vpop.permute.xlu0 %100
  %102 = vset.pattern.permute.xlu0 0
  %103 = vperm.xlu0 %102, %v24
  %v104 = vpop.permute.xlu0 %103
  %105 = vset.pattern.permute.xlu0 0
  %106 = vperm.xlu0 %105, %v25
  %v107 = vpop.permute.xlu0 %106
  %108 = vset.pattern.permute.xlu0 0
  %109 = vperm.xlu0 %108, %v26
  %v110 = vpop.permute.xlu0 %109
  %111 = vset.pattern.permute.xlu0 0
  %112 = vperm.xlu0 %111, %v27
  %v113 = vpop.permute.xlu0 %112
  %114 = vset.pattern.permute.xlu0 0
  %115 = vperm.xlu0 %114, %v28
  %v116 = vpop.permute.xlu0 %115
  %117 = vset.pattern.permute.xlu0 0
  %118 = vperm.xlu0 %117, %v29
  %v119 = vpop.permute.xlu0 %118
  %120 = vset.pattern.permute.xlu0 0
  %121 = vperm.xlu0 %120, %v30
  %v122 = vpop.permute.xlu0 %121
  %123 = vset.pattern.permute.xlu0 0
  %124 = vperm.xlu0 %123, %v31
  %v125 = vpop.permute.xlu0 %124
  %126 = vset.pattern.permute.xlu0 0
  %127 = vperm.xlu0 %126, %v32
  %v128 = vpop.permute.xlu0 %127
  %129 = vset.pattern.permute.xlu0 0
  %130 = vperm.xlu0 %129, %v33
  %v131 = vpop.permute.xlu0 %130
  %132 = vset.pattern.permute.xlu0 0
  %133 = vperm.xlu0 %132, %v34
  %v134 = vpop.permute.xlu0 %133
  %135 = vset.pattern.permute.xlu0 0
  %136 = vperm.xlu0 %135, %v35
  %v137 = vpop.permute.xlu0 %136
  %138 = vset.pattern.permute.xlu0 0
  %139 = vperm.xlu0 %138, %v36
  %v140 = vpop.permute.xlu0 %139
  %141 = vset.pattern.permute.xlu0 0
  %142 = vperm.xlu0 %141, %v37
  %v143 = vpop.permute.xlu0 %142
  %144 = vset.pattern.permute.xlu0 0
  %145 = vperm.xlu0 %144, %v38
  %v146 = vpop.permute.xlu0 %145
  %147 = vset.pattern.permute.xlu0 0
  %148 = vperm.xlu0 %147, %v39
  %v149 = vpop.permute.xlu0 %148
  %150 = vset.pattern.permute.xlu0 0
  %151 = vperm.xlu0 %150, %v40
  %v152 = vpop.permute.xlu0 %151
  %153 = vset.pattern.permute.xlu0 0
  %154 = vperm.xlu0 %153, %v41
  %v155 = vpop.permute.xlu0 %154
  %156 = vset.pattern.permute.xlu0 0
  %157 = vperm.xlu0 %156, %v42
  %v158 = vpop.permute.xlu0 %157
  %159 = vset.pattern.permute.xlu0 0
  %160 = vperm.xlu0 %159, %v43
  %v161 = vpop.permute.xlu0 %160
  %162 = vset.pattern.permute.xlu0 0
  %163 = vperm.xlu0 %162, %v44
  %v164 = vpop.permute.xlu0 %163
  %165 = vset.pattern.permute.xlu0 0
  %166 = vperm.xlu0 %165, %v45
  %v167 = vpop.permute.xlu0 %166
  %168 = vset.pattern.permute.xlu0 0
  %169 = vperm.xlu0 %168, %v46
  %v170 = vpop.permute.xlu0 %169
  %171 = vset.pattern.permute.xlu0 0
  %172 = vperm.xlu0 %171, %v47
  %v173 = vpop.permute.xlu0 %172
  %174 = vset.pattern.permute.xlu0 0
  %175 = vperm.xlu0 %174, %v48
  %v176 = vpop.permute.xlu0 %175
  %177 = vset.pattern.permute.xlu0 0
  %178 = vperm.xlu0 %177, %v49
  %v179 = vpop.permute.xlu0 %178
  %180 = vset.pattern.permute.xlu0 0
  %181 = vperm.xlu0 %180, %v50
  %v182 = vpop.permute.xlu0 %181
  %183 = vset.pattern.permute.xlu0 0
  %184 = vperm.xlu0 %183, %v51
  %v185 = vpop.permute.xlu0 %184
  %186 = vset.pattern.permute.xlu0 0
  %187 = vperm.xlu0 %186, %v52
  %v188 = vpop.permute.xlu0 %187
  %189 = vset.pattern.permute.xlu0 0
  %190 = vperm.xlu0 %189, %v53
  %v191 = vpop.permute.xlu0 %190
  %192 = vset.pattern.permute.xlu0 0
  %193 = vperm.xlu0 %192, %v54
  %v194 = vpop.permute.xlu0 %193
  %195 = vset.pattern.permute.xlu0 0
  %196 = vperm.xlu0 %195, %v55
  %v197 = vpop.permute.xlu0 %196
  %198 = vset.pattern.permute.xlu0 0
  %199 = vperm.xlu0 %198, %v56
  %v200 = vpop.permute.xlu0 %199
  %201 = vset.pattern.permute.xlu0 0
  %202 = vperm.xlu0 %201, %v57
  %v203 = vpop.permute.xlu0 %202
  %204 = vset.pattern.permute.xlu0 0
  %205 = vperm.xlu0 %204, %v58
  %v206 = vpop.permute.xlu0 %205
  %207 = vset.pattern.permute.xlu0 0
  %208 = vperm.xlu0 %207, %v59
  %v209 = vpop.permute.xlu0 %208
  %210 = vset.pattern.permute.xlu0 0
  %211 = vperm.xlu0 %210, %v60
  %v212 = vpop.permute.xlu0 %211
  %213 = vset.pattern.permute.xlu0 0
  %214 = vperm.xlu0 %213, %v61
  %v215 = vpop.permute.xlu0 %214
  %216 = vset.pattern.permute.xlu0 0
  %217 = vperm.xlu0 %216, %v62
  %v218 = vpop.permute.xlu0 %217
  %219 = vset.pattern.permute.xlu0 0
  %220 = vperm.xlu0 %219, %v63
  %v221 = vpop.permute.xlu0 %220
  %222 = vset.pattern.permute.xlu0 0
  %223 = vperm.xlu0 %222, %v64
  %v224 = vpop.permute.xlu0 %223
  %225 = vset.pattern.permute.xlu0 0
  %226 = vperm.xlu0 %225, %v65
  %v227 = vpop.permute.xlu0 %226
  %228 = vset.pattern.permute.xlu0 0
  %229 = vperm.xlu0 %228, %v66
  %v230 = vpop.permute.xlu0 %229
  %231 = vset.pattern.permute.xlu0 0
  %232 = vperm.xlu0 %231, %v67
  %v233 = vpop.permute.xlu0 %232
  %234 = vset.pattern.permute.xlu0 0
  %235 = vperm.xlu0 %234, %v68
  %v236 = vpop.permute.xlu0 %235
  %237 = vset.pattern.permute.xlu0 0
  %238 = vperm.xlu0 %237, %v69
  %v239 = vpop.permute.xlu0 %238
  %240 = vset.pattern.permute.xlu0 0
  %241 = vperm.xlu0 %240, %v70
  %v242 = vpop.permute.xlu0 %241
  %243 = vset.pattern.permute.xlu0 0
  %244 = vperm.xlu0 %243, %v71
  %v245 = vpop.permute.xlu0 %244
  %246 = vset.pattern.permute.xlu0 0
  %247 = vperm.xlu0 %246, %v72
  %v248 = vpop.permute.xlu0 %247
  %249 = vset.pattern.permute.xlu0 0
  %250 = vperm.xlu0 %249, %v73
  %v251 = vpop.permute.xlu0 %250
  %252 = vset.pattern.permute.xlu0 0
  %253 = vperm.xlu0 %252, %v74
  %v254 = vpop.permute.xlu0 %253
  %255 = vset.pattern.permute.xlu0 0
  %256 = vperm.xlu0 %255, %v75
  %v257 = vpop.permute.xlu0 %256
  %258 = vset.pattern.permute.xlu0 0
  %259 = vperm.xlu0 %258, %v76
  %v260 = vpop.permute.xlu0 %259
  %261 = vset.pattern.permute.xlu0 0
  %262 = vperm.xlu0 %261, %v77
  %v263 = vpop.permute.xlu0 %262
  %264 = vset.pattern.permute.xlu0 0
  %265 = vperm.xlu0 %264, %v78
  %v266 = vpop.permute.xlu0 %265
  %267 = vset.pattern.permute.xlu0 0
  %268 = vperm.xlu0 %267, %v79
  %v269 = vpop.permute.xlu0 %268
  %270 = vset.pattern.permute.xlu0 0
  %271 = vperm.xlu0 %270, %v80
  %v272 = vpop.permute.xlu0 %271
  %vm273 = vcmp.eq.s32.totalorder %v16, %v83
  %vm274 = vcmp.eq.s32.totalorder %v16, %v86
  %vm275 = vcmp.eq.s32.totalorder %v16, %v89
  %vm276 = vcmp.eq.s32.totalorder %v16, %v92
  %vm277 = vcmp.eq.s32.totalorder %v16, %v95
  %vm278 = vcmp.eq.s32.totalorder %v16, %v98
  %vm279 = vcmp.eq.s32.totalorder %v16, %v101
  %vm280 = vcmp.eq.s32.totalorder %v16, %v104
  %vm281 = vcmp.eq.s32.totalorder %v16, %v107
  %vm282 = vcmp.eq.s32.totalorder %v16, %v110
  %vm283 = vcmp.eq.s32.totalorder %v16, %v113
  %vm284 = vcmp.eq.s32.totalorder %v16, %v116
  %vm285 = vcmp.eq.s32.totalorder %v16, %v119
  %vm286 = vcmp.eq.s32.totalorder %v16, %v122
  %vm287 = vcmp.eq.s32.totalorder %v16, %v125
  %vm288 = vcmp.eq.s32.totalorder %v16, %v128
  %vm289 = vcmp.eq.s32.totalorder %v16, %v131
  %vm290 = vcmp.eq.s32.totalorder %v16, %v134
  %vm291 = vcmp.eq.s32.totalorder %v16, %v137
  %vm292 = vcmp.eq.s32.totalorder %v16, %v140
  %vm293 = vcmp.eq.s32.totalorder %v16, %v143
  %vm294 = vcmp.eq.s32.totalorder %v16, %v146
  %vm295 = vcmp.eq.s32.totalorder %v16, %v149
  %vm296 = vcmp.eq.s32.totalorder %v16, %v152
  %vm297 = vcmp.eq.s32.totalorder %v16, %v155
  %vm298 = vcmp.eq.s32.totalorder %v16, %v158
  %vm299 = vcmp.eq.s32.totalorder %v16, %v161
  %vm300 = vcmp.eq.s32.totalorder %v16, %v164
  %vm301 = vcmp.eq.s32.totalorder %v16, %v167
  %vm302 = vcmp.eq.s32.totalorder %v16, %v170
  %vm303 = vcmp.eq.s32.totalorder %v16, %v173
  %vm304 = vcmp.eq.s32.totalorder %v16, %v176
  %vm305 = vcmp.eq.s32.totalorder %v16, %v179
  %vm306 = vcmp.eq.s32.totalorder %v16, %v182
  %vm307 = vcmp.eq.s32.totalorder %v16, %v185
  %vm308 = vcmp.eq.s32.totalorder %v16, %v188
  %vm309 = vcmp.eq.s32.totalorder %v16, %v191
  %vm310 = vcmp.eq.s32.totalorder %v16, %v194
  %vm311 = vcmp.eq.s32.totalorder %v16, %v197
  %vm312 = vcmp.eq.s32.totalorder %v16, %v200
  %vm313 = vcmp.eq.s32.totalorder %v16, %v203
  %vm314 = vcmp.eq.s32.totalorder %v16, %v206
  %vm315 = vcmp.eq.s32.totalorder %v16, %v209
  %vm316 = vcmp.eq.s32.totalorder %v16, %v212
  %vm317 = vcmp.eq.s32.totalorder %v16, %v215
  %vm318 = vcmp.eq.s32.totalorder %v16, %v218
  %vm319 = vcmp.eq.s32.totalorder %v16, %v221
  %vm320 = vcmp.eq.s32.totalorder %v16, %v224
  %vm321 = vcmp.eq.s32.totalorder %v16, %v227
  %vm322 = vcmp.eq.s32.totalorder %v16, %v230
  %vm323 = vcmp.eq.s32.totalorder %v16, %v233
  %vm324 = vcmp.eq.s32.totalorder %v16, %v236
  %vm325 = vcmp.eq.s32.totalorder %v16, %v239
  %vm326 = vcmp.eq.s32.totalorder %v16, %v242
  %vm327 = vcmp.eq.s32.totalorder %v16, %v245
  %vm328 = vcmp.eq.s32.totalorder %v16, %v248
  %vm329 = vcmp.eq.s32.totalorder %v16, %v251
  %vm330 = vcmp.eq.s32.totalorder %v16, %v254
  %vm331 = vcmp.eq.s32.totalorder %v16, %v257
  %vm332 = vcmp.eq.s32.totalorder %v16, %v260
  %vm333 = vcmp.eq.s32.totalorder %v16, %v263
  %vm334 = vcmp.eq.s32.totalorder %v16, %v266
  %vm335 = vcmp.eq.s32.totalorder %v16, %v269
  %vm336 = vcmp.eq.s32.totalorder %v16, %v272
  %337 = vset.pattern.permute.xlu0 1
  %338 = vperm.xlu0 %337, %v17
  %v339 = vpop.permute.xlu0 %338
  %340 = vset.pattern.permute.xlu0 1
  %341 = vperm.xlu0 %340, %v18
  %v342 = vpop.permute.xlu0 %341
  %343 = vset.pattern.permute.xlu0 1
  %344 = vperm.xlu0 %343, %v19
  %v345 = vpop.permute.xlu0 %344
  %346 = vset.pattern.permute.xlu0 1
  %347 = vperm.xlu0 %346, %v20
  %v348 = vpop.permute.xlu0 %347
  %349 = vset.pattern.permute.xlu0 1
  %350 = vperm.xlu0 %349, %v21
  %v351 = vpop.permute.xlu0 %350
  %352 = vset.pattern.permute.xlu0 1
  %353 = vperm.xlu0 %352, %v22
  %v354 = vpop.permute.xlu0 %353
  %355 = vset.pattern.permute.xlu0 1
  %356 = vperm.xlu0 %355, %v23
  %v357 = vpop.permute.xlu0 %356
  %358 = vset.pattern.permute.xlu0 1
  %359 = vperm.xlu0 %358, %v24
  %v360 = vpop.permute.xlu0 %359
  %361 = vset.pattern.permute.xlu0 1
  %362 = vperm.xlu0 %361, %v25
  %v363 = vpop.permute.xlu0 %362
  %364 = vset.pattern.permute.xlu0 1
  %365 = vperm.xlu0 %364, %v26
  %v366 = vpop.permute.xlu0 %365
  %367 = vset.pattern.permute.xlu0 1
  %368 = vperm.xlu0 %367, %v27
  %v369 = vpop.permute.xlu0 %368
  %370 = vset.pattern.permute.xlu0 1
  %371 = vperm.xlu0 %370, %v28
  %v372 = vpop.permute.xlu0 %371
  %373 = vset.pattern.permute.xlu0 1
  %374 = vperm.xlu0 %373, %v29
  %v375 = vpop.permute.xlu0 %374
  %376 = vset.pattern.permute.xlu0 1
  %377 = vperm.xlu0 %376, %v30
  %v378 = vpop.permute.xlu0 %377
  %379 = vset.pattern.permute.xlu0 1
  %380 = vperm.xlu0 %379, %v31
  %v381 = vpop.permute.xlu0 %380
  %382 = vset.pattern.permute.xlu0 1
  %383 = vperm.xlu0 %382, %v32
  %v384 = vpop.permute.xlu0 %383
  %385 = vset.pattern.permute.xlu0 1
  %386 = vperm.xlu0 %385, %v33
  %v387 = vpop.permute.xlu0 %386
  %388 = vset.pattern.permute.xlu0 1
  %389 = vperm.xlu0 %388, %v34
  %v390 = vpop.permute.xlu0 %389
  %391 = vset.pattern.permute.xlu0 1
  %392 = vperm.xlu0 %391, %v35
  %v393 = vpop.permute.xlu0 %392
  %394 = vset.pattern.permute.xlu0 1
  %395 = vperm.xlu0 %394, %v36
  %v396 = vpop.permute.xlu0 %395
  %397 = vset.pattern.permute.xlu0 1
  %398 = vperm.xlu0 %397, %v37
  %v399 = vpop.permute.xlu0 %398
  %400 = vset.pattern.permute.xlu0 1
  %401 = vperm.xlu0 %400, %v38
  %v402 = vpop.permute.xlu0 %401
  %403 = vset.pattern.permute.xlu0 1
  %404 = vperm.xlu0 %403, %v39
  %v405 = vpop.permute.xlu0 %404
  %406 = vset.pattern.permute.xlu0 1
  %407 = vperm.xlu0 %406, %v40
  %v408 = vpop.permute.xlu0 %407
  %409 = vset.pattern.permute.xlu0 1
  %410 = vperm.xlu0 %409, %v41
  %v411 = vpop.permute.xlu0 %410
  %412 = vset.pattern.permute.xlu0 1
  %413 = vperm.xlu0 %412, %v42
  %v414 = vpop.permute.xlu0 %413
  %415 = vset.pattern.permute.xlu0 1
  %416 = vperm.xlu0 %415, %v43
  %v417 = vpop.permute.xlu0 %416
  %418 = vset.pattern.permute.xlu0 1
  %419 = vperm.xlu0 %418, %v44
  %v420 = vpop.permute.xlu0 %419
  %421 = vset.pattern.permute.xlu0 1
  %422 = vperm.xlu0 %421, %v45
  %v423 = vpop.permute.xlu0 %422
  %424 = vset.pattern.permute.xlu0 1
  %425 = vperm.xlu0 %424, %v46
  %v426 = vpop.permute.xlu0 %425
  %427 = vset.pattern.permute.xlu0 1
  %428 = vperm.xlu0 %427, %v47
  %v429 = vpop.permute.xlu0 %428
  %430 = vset.pattern.permute.xlu0 1
  %431 = vperm.xlu0 %430, %v48
  %v432 = vpop.permute.xlu0 %431
  %433 = vset.pattern.permute.xlu0 1
  %434 = vperm.xlu0 %433, %v49
  %v435 = vpop.permute.xlu0 %434
  %436 = vset.pattern.permute.xlu0 1
  %437 = vperm.xlu0 %436, %v50
  %v438 = vpop.permute.xlu0 %437
  %439 = vset.pattern.permute.xlu0 1
  %440 = vperm.xlu0 %439, %v51
  %v441 = vpop.permute.xlu0 %440
  %442 = vset.pattern.permute.xlu0 1
  %443 = vperm.xlu0 %442, %v52
  %v444 = vpop.permute.xlu0 %443
  %445 = vset.pattern.permute.xlu0 1
  %446 = vperm.xlu0 %445, %v53
  %v447 = vpop.permute.xlu0 %446
  %448 = vset.pattern.permute.xlu0 1
  %449 = vperm.xlu0 %448, %v54
  %v450 = vpop.permute.xlu0 %449
  %451 = vset.pattern.permute.xlu0 1
  %452 = vperm.xlu0 %451, %v55
  %v453 = vpop.permute.xlu0 %452
  %454 = vset.pattern.permute.xlu0 1
  %455 = vperm.xlu0 %454, %v56
  %v456 = vpop.permute.xlu0 %455
  %457 = vset.pattern.permute.xlu0 1
  %458 = vperm.xlu0 %457, %v57
  %v459 = vpop.permute.xlu0 %458
  %460 = vset.pattern.permute.xlu0 1
  %461 = vperm.xlu0 %460, %v58
  %v462 = vpop.permute.xlu0 %461
  %463 = vset.pattern.permute.xlu0 1
  %464 = vperm.xlu0 %463, %v59
  %v465 = vpop.permute.xlu0 %464
  %466 = vset.pattern.permute.xlu0 1
  %467 = vperm.xlu0 %466, %v60
  %v468 = vpop.permute.xlu0 %467
  %469 = vset.pattern.permute.xlu0 1
  %470 = vperm.xlu0 %469, %v61
  %v471 = vpop.permute.xlu0 %470
  %472 = vset.pattern.permute.xlu0 1
  %473 = vperm.xlu0 %472, %v62
  %v474 = vpop.permute.xlu0 %473
  %475 = vset.pattern.permute.xlu0 1
  %476 = vperm.xlu0 %475, %v63
  %v477 = vpop.permute.xlu0 %476
  %478 = vset.pattern.permute.xlu0 1
  %479 = vperm.xlu0 %478, %v64
  %v480 = vpop.permute.xlu0 %479
  %481 = vset.pattern.permute.xlu0 1
  %482 = vperm.xlu0 %481, %v65
  %v483 = vpop.permute.xlu0 %482
  %484 = vset.pattern.permute.xlu0 1
  %485 = vperm.xlu0 %484, %v66
  %v486 = vpop.permute.xlu0 %485
  %487 = vset.pattern.permute.xlu0 1
  %488 = vperm.xlu0 %487, %v67
  %v489 = vpop.permute.xlu0 %488
  %490 = vset.pattern.permute.xlu0 1
  %491 = vperm.xlu0 %490, %v68
  %v492 = vpop.permute.xlu0 %491
  %493 = vset.pattern.permute.xlu0 1
  %494 = vperm.xlu0 %493, %v69
  %v495 = vpop.permute.xlu0 %494
  %496 = vset.pattern.permute.xlu0 1
  %497 = vperm.xlu0 %496, %v70
  %v498 = vpop.permute.xlu0 %497
  %499 = vset.pattern.permute.xlu0 1
  %500 = vperm.xlu0 %499, %v71
  %v501 = vpop.permute.xlu0 %500
  %502 = vset.pattern.permute.xlu0 1
  %503 = vperm.xlu0 %502, %v72
  %v504 = vpop.permute.xlu0 %503
  %505 = vset.pattern.permute.xlu0 1
  %506 = vperm.xlu0 %505, %v73
  %v507 = vpop.permute.xlu0 %506
  %508 = vset.pattern.permute.xlu0 1
  %509 = vperm.xlu0 %508, %v74
  %v510 = vpop.permute.xlu0 %509
  %511 = vset.pattern.permute.xlu0 1
  %512 = vperm.xlu0 %511, %v75
  %v513 = vpop.permute.xlu0 %512
  %514 = vset.pattern.permute.xlu0 1
  %515 = vperm.xlu0 %514, %v76
  %v516 = vpop.permute.xlu0 %515
  %517 = vset.pattern.permute.xlu0 1
  %518 = vperm.xlu0 %517, %v77
  %v519 = vpop.permute.xlu0 %518
  %520 = vset.pattern.permute.xlu0 1
  %521 = vperm.xlu0 %520, %v78
  %v522 = vpop.permute.xlu0 %521
  %523 = vset.pattern.permute.xlu0 1
  %524 = vperm.xlu0 %523, %v79
  %v525 = vpop.permute.xlu0 %524
  %526 = vset.pattern.permute.xlu0 1
  %527 = vperm.xlu0 %526, %v80
  %v528 = vpop.permute.xlu0 %527
  %vm529 = vcmp.eq.s32.totalorder %v16, %v339
  %vm530 = vcmp.eq.s32.totalorder %v16, %v342
  %vm531 = vcmp.eq.s32.totalorder %v16, %v345
  %vm532 = vcmp.eq.s32.totalorder %v16, %v348
  %vm533 = vcmp.eq.s32.totalorder %v16, %v351
  %vm534 = vcmp.eq.s32.totalorder %v16, %v354
  %vm535 = vcmp.eq.s32.totalorder %v16, %v357
  %vm536 = vcmp.eq.s32.totalorder %v16, %v360
  %vm537 = vcmp.eq.s32.totalorder %v16, %v363
  %vm538 = vcmp.eq.s32.totalorder %v16, %v366
  %vm539 = vcmp.eq.s32.totalorder %v16, %v369
  %vm540 = vcmp.eq.s32.totalorder %v16, %v372
  %vm541 = vcmp.eq.s32.totalorder %v16, %v375
  %vm542 = vcmp.eq.s32.totalorder %v16, %v378
  %vm543 = vcmp.eq.s32.totalorder %v16, %v381
  %vm544 = vcmp.eq.s32.totalorder %v16, %v384
  %vm545 = vcmp.eq.s32.totalorder %v16, %v387
  %vm546 = vcmp.eq.s32.totalorder %v16, %v390
  %vm547 = vcmp.eq.s32.totalorder %v16, %v393
  %vm548 = vcmp.eq.s32.totalorder %v16, %v396
  %vm549 = vcmp.eq.s32.totalorder %v16, %v399
  %vm550 = vcmp.eq.s32.totalorder %v16, %v402
  %vm551 = vcmp.eq.s32.totalorder %v16, %v405
  %vm552 = vcmp.eq.s32.totalorder %v16, %v408
  %vm553 = vcmp.eq.s32.totalorder %v16, %v411
  %vm554 = vcmp.eq.s32.totalorder %v16, %v414
  %vm555 = vcmp.eq.s32.totalorder %v16, %v417
  %vm556 = vcmp.eq.s32.totalorder %v16, %v420
  %vm557 = vcmp.eq.s32.totalorder %v16, %v423
  %vm558 = vcmp.eq.s32.totalorder %v16, %v426
  %vm559 = vcmp.eq.s32.totalorder %v16, %v429
  %vm560 = vcmp.eq.s32.totalorder %v16, %v432
  %vm561 = vcmp.eq.s32.totalorder %v16, %v435
  %vm562 = vcmp.eq.s32.totalorder %v16, %v438
  %vm563 = vcmp.eq.s32.totalorder %v16, %v441
  %vm564 = vcmp.eq.s32.totalorder %v16, %v444
  %vm565 = vcmp.eq.s32.totalorder %v16, %v447
  %vm566 = vcmp.eq.s32.totalorder %v16, %v450
  %vm567 = vcmp.eq.s32.totalorder %v16, %v453
  %vm568 = vcmp.eq.s32.totalorder %v16, %v456
  %vm569 = vcmp.eq.s32.totalorder %v16, %v459
  %vm570 = vcmp.eq.s32.totalorder %v16, %v462
  %vm571 = vcmp.eq.s32.totalorder %v16, %v465
  %vm572 = vcmp.eq.s32.totalorder %v16, %v468
  %vm573 = vcmp.eq.s32.totalorder %v16, %v471
  %vm574 = vcmp.eq.s32.totalorder %v16, %v474
  %vm575 = vcmp.eq.s32.totalorder %v16, %v477
  %vm576 = vcmp.eq.s32.totalorder %v16, %v480
  %vm577 = vcmp.eq.s32.totalorder %v16, %v483
  %vm578 = vcmp.eq.s32.totalorder %v16, %v486
  %vm579 = vcmp.eq.s32.totalorder %v16, %v489
  %vm580 = vcmp.eq.s32.totalorder %v16, %v492
  %vm581 = vcmp.eq.s32.totalorder %v16, %v495
  %vm582 = vcmp.eq.s32.totalorder %v16, %v498
  %vm583 = vcmp.eq.s32.totalorder %v16, %v501
  %vm584 = vcmp.eq.s32.totalorder %v16, %v504
  %vm585 = vcmp.eq.s32.totalorder %v16, %v507
  %vm586 = vcmp.eq.s32.totalorder %v16, %v510
  %vm587 = vcmp.eq.s32.totalorder %v16, %v513
  %vm588 = vcmp.eq.s32.totalorder %v16, %v516
  %vm589 = vcmp.eq.s32.totalorder %v16, %v519
  %vm590 = vcmp.eq.s32.totalorder %v16, %v522
  %vm591 = vcmp.eq.s32.totalorder %v16, %v525
  %vm592 = vcmp.eq.s32.totalorder %v16, %v528
  %vm593 = vmor %vm273, %vm529
  %vm594 = vmor %vm274, %vm530
  %vm595 = vmor %vm275, %vm531
  %vm596 = vmor %vm276, %vm532
  %vm597 = vmor %vm277, %vm533
  %vm598 = vmor %vm278, %vm534
  %vm599 = vmor %vm279, %vm535
  %vm600 = vmor %vm280, %vm536
  %vm601 = vmor %vm281, %vm537
  %vm602 = vmor %vm282, %vm538
  %vm603 = vmor %vm283, %vm539
  %vm604 = vmor %vm284, %vm540
  %vm605 = vmor %vm285, %vm541
  %vm606 = vmor %vm286, %vm542
  %vm607 = vmor %vm287, %vm543
  %vm608 = vmor %vm288, %vm544
  %vm609 = vmor %vm289, %vm545
  %vm610 = vmor %vm290, %vm546
  %vm611 = vmor %vm291, %vm547
  %vm612 = vmor %vm292, %vm548
  %vm613 = vmor %vm293, %vm549
  %vm614 = vmor %vm294, %vm550
  %vm615 = vmor %vm295, %vm551
  %vm616 = vmor %vm296, %vm552
  %vm617 = vmor %vm297, %vm553
  %vm618 = vmor %vm298, %vm554
  %vm619 = vmor %vm299, %vm555
  %vm620 = vmor %vm300, %vm556
  %vm621 = vmor %vm301, %vm557
  %vm622 = vmor %vm302, %vm558
  %vm623 = vmor %vm303, %vm559
  %vm624 = vmor %vm304, %vm560
  %vm625 = vmor %vm305, %vm561
  %vm626 = vmor %vm306, %vm562
  %vm627 = vmor %vm307, %vm563
  %vm628 = vmor %vm308, %vm564
  %vm629 = vmor %vm309, %vm565
  %vm630 = vmor %vm310, %vm566
  %vm631 = vmor %vm311, %vm567
  %vm632 = vmor %vm312, %vm568
  %vm633 = vmor %vm313, %vm569
  %vm634 = vmor %vm314, %vm570
  %vm635 = vmor %vm315, %vm571
  %vm636 = vmor %vm316, %vm572
  %vm637 = vmor %vm317, %vm573
  %vm638 = vmor %vm318, %vm574
  %vm639 = vmor %vm319, %vm575
  %vm640 = vmor %vm320, %vm576
  %vm641 = vmor %vm321, %vm577
  %vm642 = vmor %vm322, %vm578
  %vm643 = vmor %vm323, %vm579
  %vm644 = vmor %vm324, %vm580
  %vm645 = vmor %vm325, %vm581
  %vm646 = vmor %vm326, %vm582
  %vm647 = vmor %vm327, %vm583
  %vm648 = vmor %vm328, %vm584
  %vm649 = vmor %vm329, %vm585
  %vm650 = vmor %vm330, %vm586
  %vm651 = vmor %vm331, %vm587
  %vm652 = vmor %vm332, %vm588
  %vm653 = vmor %vm333, %vm589
  %vm654 = vmor %vm334, %vm590
  %vm655 = vmor %vm335, %vm591
  %vm656 = vmor %vm336, %vm592
  %657 = vset.pattern.permute.xlu0 2
  %658 = vperm.xlu0 %657, %v17
  %v659 = vpop.permute.xlu0 %658
  %660 = vset.pattern.permute.xlu0 2
  %661 = vperm.xlu0 %660, %v18
  %v662 = vpop.permute.xlu0 %661
  %663 = vset.pattern.permute.xlu0 2
  %664 = vperm.xlu0 %663, %v19
  %v665 = vpop.permute.xlu0 %664
  %666 = vset.pattern.permute.xlu0 2
  %667 = vperm.xlu0 %666, %v20
  %v668 = vpop.permute.xlu0 %667
  %669 = vset.pattern.permute.xlu0 2
  %670 = vperm.xlu0 %669, %v21
  %v671 = vpop.permute.xlu0 %670
  %672 = vset.pattern.permute.xlu0 2
  %673 = vperm.xlu0 %672, %v22
  %v674 = vpop.permute.xlu0 %673
  %675 = vset.pattern.permute.xlu0 2
  %676 = vperm.xlu0 %675, %v23
  %v677 = vpop.permute.xlu0 %676
  %678 = vset.pattern.permute.xlu0 2
  %679 = vperm.xlu0 %678, %v24
  %v680 = vpop.permute.xlu0 %679
  %681 = vset.pattern.permute.xlu0 2
  %682 = vperm.xlu0 %681, %v25
  %v683 = vpop.permute.xlu0 %682
  %684 = vset.pattern.permute.xlu0 2
  %685 = vperm.xlu0 %684, %v26
  %v686 = vpop.permute.xlu0 %685
  %687 = vset.pattern.permute.xlu0 2
  %688 = vperm.xlu0 %687, %v27
  %v689 = vpop.permute.xlu0 %688
  %690 = vset.pattern.permute.xlu0 2
  %691 = vperm.xlu0 %690, %v28
  %v692 = vpop.permute.xlu0 %691
  %693 = vset.pattern.permute.xlu0 2
  %694 = vperm.xlu0 %693, %v29
  %v695 = vpop.permute.xlu0 %694
  %696 = vset.pattern.permute.xlu0 2
  %697 = vperm.xlu0 %696, %v30
  %v698 = vpop.permute.xlu0 %697
  %699 = vset.pattern.permute.xlu0 2
  %700 = vperm.xlu0 %699, %v31
  %v701 = vpop.permute.xlu0 %700
  %702 = vset.pattern.permute.xlu0 2
  %703 = vperm.xlu0 %702, %v32
  %v704 = vpop.permute.xlu0 %703
  %705 = vset.pattern.permute.xlu0 2
  %706 = vperm.xlu0 %705, %v33
  %v707 = vpop.permute.xlu0 %706
  %708 = vset.pattern.permute.xlu0 2
  %709 = vperm.xlu0 %708, %v34
  %v710 = vpop.permute.xlu0 %709
  %711 = vset.pattern.permute.xlu0 2
  %712 = vperm.xlu0 %711, %v35
  %v713 = vpop.permute.xlu0 %712
  %714 = vset.pattern.permute.xlu0 2
  %715 = vperm.xlu0 %714, %v36
  %v716 = vpop.permute.xlu0 %715
  %717 = vset.pattern.permute.xlu0 2
  %718 = vperm.xlu0 %717, %v37
  %v719 = vpop.permute.xlu0 %718
  %720 = vset.pattern.permute.xlu0 2
  %721 = vperm.xlu0 %720, %v38
  %v722 = vpop.permute.xlu0 %721
  %723 = vset.pattern.permute.xlu0 2
  %724 = vperm.xlu0 %723, %v39
  %v725 = vpop.permute.xlu0 %724
  %726 = vset.pattern.permute.xlu0 2
  %727 = vperm.xlu0 %726, %v40
  %v728 = vpop.permute.xlu0 %727
  %729 = vset.pattern.permute.xlu0 2
  %730 = vperm.xlu0 %729, %v41
  %v731 = vpop.permute.xlu0 %730
  %732 = vset.pattern.permute.xlu0 2
  %733 = vperm.xlu0 %732, %v42
  %v734 = vpop.permute.xlu0 %733
  %735 = vset.pattern.permute.xlu0 2
  %736 = vperm.xlu0 %735, %v43
  %v737 = vpop.permute.xlu0 %736
  %738 = vset.pattern.permute.xlu0 2
  %739 = vperm.xlu0 %738, %v44
  %v740 = vpop.permute.xlu0 %739
  %741 = vset.pattern.permute.xlu0 2
  %742 = vperm.xlu0 %741, %v45
  %v743 = vpop.permute.xlu0 %742
  %744 = vset.pattern.permute.xlu0 2
  %745 = vperm.xlu0 %744, %v46
  %v746 = vpop.permute.xlu0 %745
  %747 = vset.pattern.permute.xlu0 2
  %748 = vperm.xlu0 %747, %v47
  %v749 = vpop.permute.xlu0 %748
  %750 = vset.pattern.permute.xlu0 2
  %751 = vperm.xlu0 %750, %v48
  %v752 = vpop.permute.xlu0 %751
  %753 = vset.pattern.permute.xlu0 2
  %754 = vperm.xlu0 %753, %v49
  %v755 = vpop.permute.xlu0 %754
  %756 = vset.pattern.permute.xlu0 2
  %757 = vperm.xlu0 %756, %v50
  %v758 = vpop.permute.xlu0 %757
  %759 = vset.pattern.permute.xlu0 2
  %760 = vperm.xlu0 %759, %v51
  %v761 = vpop.permute.xlu0 %760
  %762 = vset.pattern.permute.xlu0 2
  %763 = vperm.xlu0 %762, %v52
  %v764 = vpop.permute.xlu0 %763
  %765 = vset.pattern.permute.xlu0 2
  %766 = vperm.xlu0 %765, %v53
  %v767 = vpop.permute.xlu0 %766
  %768 = vset.pattern.permute.xlu0 2
  %769 = vperm.xlu0 %768, %v54
  %v770 = vpop.permute.xlu0 %769
  %771 = vset.pattern.permute.xlu0 2
  %772 = vperm.xlu0 %771, %v55
  %v773 = vpop.permute.xlu0 %772
  %774 = vset.pattern.permute.xlu0 2
  %775 = vperm.xlu0 %774, %v56
  %v776 = vpop.permute.xlu0 %775
  %777 = vset.pattern.permute.xlu0 2
  %778 = vperm.xlu0 %777, %v57
  %v779 = vpop.permute.xlu0 %778
  %780 = vset.pattern.permute.xlu0 2
  %781 = vperm.xlu0 %780, %v58
  %v782 = vpop.permute.xlu0 %781
  %783 = vset.pattern.permute.xlu0 2
  %784 = vperm.xlu0 %783, %v59
  %v785 = vpop.permute.xlu0 %784
  %786 = vset.pattern.permute.xlu0 2
  %787 = vperm.xlu0 %786, %v60
  %v788 = vpop.permute.xlu0 %787
  %789 = vset.pattern.permute.xlu0 2
  %790 = vperm.xlu0 %789, %v61
  %v791 = vpop.permute.xlu0 %790
  %792 = vset.pattern.permute.xlu0 2
  %793 = vperm.xlu0 %792, %v62
  %v794 = vpop.permute.xlu0 %793
  %795 = vset.pattern.permute.xlu0 2
  %796 = vperm.xlu0 %795, %v63
  %v797 = vpop.permute.xlu0 %796
  %798 = vset.pattern.permute.xlu0 2
  %799 = vperm.xlu0 %798, %v64
  %v800 = vpop.permute.xlu0 %799
  %801 = vset.pattern.permute.xlu0 2
  %802 = vperm.xlu0 %801, %v65
  %v803 = vpop.permute.xlu0 %802
  %804 = vset.pattern.permute.xlu0 2
  %805 = vperm.xlu0 %804, %v66
  %v806 = vpop.permute.xlu0 %805
  %807 = vset.pattern.permute.xlu0 2
  %808 = vperm.xlu0 %807, %v67
  %v809 = vpop.permute.xlu0 %808
  %810 = vset.pattern.permute.xlu0 2
  %811 = vperm.xlu0 %810, %v68
  %v812 = vpop.permute.xlu0 %811
  %813 = vset.pattern.permute.xlu0 2
  %814 = vperm.xlu0 %813, %v69
  %v815 = vpop.permute.xlu0 %814
  %816 = vset.pattern.permute.xlu0 2
  %817 = vperm.xlu0 %816, %v70
  %v818 = vpop.permute.xlu0 %817
  %819 = vset.pattern.permute.xlu0 2
  %820 = vperm.xlu0 %819, %v71
  %v821 = vpop.permute.xlu0 %820
  %822 = vset.pattern.permute.xlu0 2
  %823 = vperm.xlu0 %822, %v72
  %v824 = vpop.permute.xlu0 %823
  %825 = vset.pattern.permute.xlu0 2
  %826 = vperm.xlu0 %825, %v73
  %v827 = vpop.permute.xlu0 %826
  %828 = vset.pattern.permute.xlu0 2
  %829 = vperm.xlu0 %828, %v74
  %v830 = vpop.permute.xlu0 %829
  %831 = vset.pattern.permute.xlu0 2
  %832 = vperm.xlu0 %831, %v75
  %v833 = vpop.permute.xlu0 %832
  %834 = vset.pattern.permute.xlu0 2
  %835 = vperm.xlu0 %834, %v76
  %v836 = vpop.permute.xlu0 %835
  %837 = vset.pattern.permute.xlu0 2
  %838 = vperm.xlu0 %837, %v77
  %v839 = vpop.permute.xlu0 %838
  %840 = vset.pattern.permute.xlu0 2
  %841 = vperm.xlu0 %840, %v78
  %v842 = vpop.permute.xlu0 %841
  %843 = vset.pattern.permute.xlu0 2
  %844 = vperm.xlu0 %843, %v79
  %v845 = vpop.permute.xlu0 %844
  %846 = vset.pattern.permute.xlu0 2
  %847 = vperm.xlu0 %846, %v80
  %v848 = vpop.permute.xlu0 %847
  %vm849 = vcmp.eq.s32.totalorder %v16, %v659
  %vm850 = vcmp.eq.s32.totalorder %v16, %v662
  %vm851 = vcmp.eq.s32.totalorder %v16, %v665
  %vm852 = vcmp.eq.s32.totalorder %v16, %v668
  %vm853 = vcmp.eq.s32.totalorder %v16, %v671
  %vm854 = vcmp.eq.s32.totalorder %v16, %v674
  %vm855 = vcmp.eq.s32.totalorder %v16, %v677
  %vm856 = vcmp.eq.s32.totalorder %v16, %v680
  %vm857 = vcmp.eq.s32.totalorder %v16, %v683
  %vm858 = vcmp.eq.s32.totalorder %v16, %v686
  %vm859 = vcmp.eq.s32.totalorder %v16, %v689
  %vm860 = vcmp.eq.s32.totalorder %v16, %v692
  %vm861 = vcmp.eq.s32.totalorder %v16, %v695
  %vm862 = vcmp.eq.s32.totalorder %v16, %v698
  %vm863 = vcmp.eq.s32.totalorder %v16, %v701
  %vm864 = vcmp.eq.s32.totalorder %v16, %v704
  %vm865 = vcmp.eq.s32.totalorder %v16, %v707
  %vm866 = vcmp.eq.s32.totalorder %v16, %v710
  %vm867 = vcmp.eq.s32.totalorder %v16, %v713
  %vm868 = vcmp.eq.s32.totalorder %v16, %v716
  %vm869 = vcmp.eq.s32.totalorder %v16, %v719
  %vm870 = vcmp.eq.s32.totalorder %v16, %v722
  %vm871 = vcmp.eq.s32.totalorder %v16, %v725
  %vm872 = vcmp.eq.s32.totalorder %v16, %v728
  %vm873 = vcmp.eq.s32.totalorder %v16, %v731
  %vm874 = vcmp.eq.s32.totalorder %v16, %v734
  %vm875 = vcmp.eq.s32.totalorder %v16, %v737
  %vm876 = vcmp.eq.s32.totalorder %v16, %v740
  %vm877 = vcmp.eq.s32.totalorder %v16, %v743
  %vm878 = vcmp.eq.s32.totalorder %v16, %v746
  %vm879 = vcmp.eq.s32.totalorder %v16, %v749
  %vm880 = vcmp.eq.s32.totalorder %v16, %v752
  %vm881 = vcmp.eq.s32.totalorder %v16, %v755
  %vm882 = vcmp.eq.s32.totalorder %v16, %v758
  %vm883 = vcmp.eq.s32.totalorder %v16, %v761
  %vm884 = vcmp.eq.s32.totalorder %v16, %v764
  %vm885 = vcmp.eq.s32.totalorder %v16, %v767
  %vm886 = vcmp.eq.s32.totalorder %v16, %v770
  %vm887 = vcmp.eq.s32.totalorder %v16, %v773
  %vm888 = vcmp.eq.s32.totalorder %v16, %v776
  %vm889 = vcmp.eq.s32.totalorder %v16, %v779
  %vm890 = vcmp.eq.s32.totalorder %v16, %v782
  %vm891 = vcmp.eq.s32.totalorder %v16, %v785
  %vm892 = vcmp.eq.s32.totalorder %v16, %v788
  %vm893 = vcmp.eq.s32.totalorder %v16, %v791
  %vm894 = vcmp.eq.s32.totalorder %v16, %v794
  %vm895 = vcmp.eq.s32.totalorder %v16, %v797
  %vm896 = vcmp.eq.s32.totalorder %v16, %v800
  %vm897 = vcmp.eq.s32.totalorder %v16, %v803
  %vm898 = vcmp.eq.s32.totalorder %v16, %v806
  %vm899 = vcmp.eq.s32.totalorder %v16, %v809
  %vm900 = vcmp.eq.s32.totalorder %v16, %v812
  %vm901 = vcmp.eq.s32.totalorder %v16, %v815
  %vm902 = vcmp.eq.s32.totalorder %v16, %v818
  %vm903 = vcmp.eq.s32.totalorder %v16, %v821
  %vm904 = vcmp.eq.s32.totalorder %v16, %v824
  %vm905 = vcmp.eq.s32.totalorder %v16, %v827
  %vm906 = vcmp.eq.s32.totalorder %v16, %v830
  %vm907 = vcmp.eq.s32.totalorder %v16, %v833
  %vm908 = vcmp.eq.s32.totalorder %v16, %v836
  %vm909 = vcmp.eq.s32.totalorder %v16, %v839
  %vm910 = vcmp.eq.s32.totalorder %v16, %v842
  %vm911 = vcmp.eq.s32.totalorder %v16, %v845
  %vm912 = vcmp.eq.s32.totalorder %v16, %v848
  %vm913 = vmor %vm593, %vm849
  %vm914 = vmor %vm594, %vm850
  %vm915 = vmor %vm595, %vm851
  %vm916 = vmor %vm596, %vm852
  %vm917 = vmor %vm597, %vm853
  %vm918 = vmor %vm598, %vm854
  %vm919 = vmor %vm599, %vm855
  %vm920 = vmor %vm600, %vm856
  %vm921 = vmor %vm601, %vm857
  %vm922 = vmor %vm602, %vm858
  %vm923 = vmor %vm603, %vm859
  %vm924 = vmor %vm604, %vm860
  %vm925 = vmor %vm605, %vm861
  %vm926 = vmor %vm606, %vm862
  %vm927 = vmor %vm607, %vm863
  %vm928 = vmor %vm608, %vm864
  %vm929 = vmor %vm609, %vm865
  %vm930 = vmor %vm610, %vm866
  %vm931 = vmor %vm611, %vm867
  %vm932 = vmor %vm612, %vm868
  %vm933 = vmor %vm613, %vm869
  %vm934 = vmor %vm614, %vm870
  %vm935 = vmor %vm615, %vm871
  %vm936 = vmor %vm616, %vm872
  %vm937 = vmor %vm617, %vm873
  %vm938 = vmor %vm618, %vm874
  %vm939 = vmor %vm619, %vm875
  %vm940 = vmor %vm620, %vm876
  %vm941 = vmor %vm621, %vm877
  %vm942 = vmor %vm622, %vm878
  %vm943 = vmor %vm623, %vm879
  %vm944 = vmor %vm624, %vm880
  %vm945 = vmor %vm625, %vm881
  %vm946 = vmor %vm626, %vm882
  %vm947 = vmor %vm627, %vm883
  %vm948 = vmor %vm628, %vm884
  %vm949 = vmor %vm629, %vm885
  %vm950 = vmor %vm630, %vm886
  %vm951 = vmor %vm631, %vm887
  %vm952 = vmor %vm632, %vm888
  %vm953 = vmor %vm633, %vm889
  %vm954 = vmor %vm634, %vm890
  %vm955 = vmor %vm635, %vm891
  %vm956 = vmor %vm636, %vm892
  %vm957 = vmor %vm637, %vm893
  %vm958 = vmor %vm638, %vm894
  %vm959 = vmor %vm639, %vm895
  %vm960 = vmor %vm640, %vm896
  %vm961 = vmor %vm641, %vm897
  %vm962 = vmor %vm642, %vm898
  %vm963 = vmor %vm643, %vm899
  %vm964 = vmor %vm644, %vm900
  %vm965 = vmor %vm645, %vm901
  %vm966 = vmor %vm646, %vm902
  %vm967 = vmor %vm647, %vm903
  %vm968 = vmor %vm648, %vm904
  %vm969 = vmor %vm649, %vm905
  %vm970 = vmor %vm650, %vm906
  %vm971 = vmor %vm651, %vm907
  %vm972 = vmor %vm652, %vm908
  %vm973 = vmor %vm653, %vm909
  %vm974 = vmor %vm654, %vm910
  %vm975 = vmor %vm655, %vm911
  %vm976 = vmor %vm656, %vm912
  %977 = vset.pattern.permute.xlu0 3
  %978 = vperm.xlu0 %977, %v17
  %v979 = vpop.permute.xlu0 %978
  %980 = vset.pattern.permute.xlu0 3
  %981 = vperm.xlu0 %980, %v18
  %v982 = vpop.permute.xlu0 %981
  %983 = vset.pattern.permute.xlu0 3
  %984 = vperm.xlu0 %983, %v19
  %v985 = vpop.permute.xlu0 %984
  %986 = vset.pattern.permute.xlu0 3
  %987 = vperm.xlu0 %986, %v20
  %v988 = vpop.permute.xlu0 %987
  %989 = vset.pattern.permute.xlu0 3
  %990 = vperm.xlu0 %989, %v21
  %v991 = vpop.permute.xlu0 %990
  %992 = vset.pattern.permute.xlu0 3
  %993 = vperm.xlu0 %992, %v22
  %v994 = vpop.permute.xlu0 %993
  %995 = vset.pattern.permute.xlu0 3
  %996 = vperm.xlu0 %995, %v23
  %v997 = vpop.permute.xlu0 %996
  %998 = vset.pattern.permute.xlu0 3
  %999 = vperm.xlu0 %998, %v24
  %v1000 = vpop.permute.xlu0 %999
  %1001 = vset.pattern.permute.xlu0 3
  %1002 = vperm.xlu0 %1001, %v25
  %v1003 = vpop.permute.xlu0 %1002
  %1004 = vset.pattern.permute.xlu0 3
  %1005 = vperm.xlu0 %1004, %v26
  %v1006 = vpop.permute.xlu0 %1005
  %1007 = vset.pattern.permute.xlu0 3
  %1008 = vperm.xlu0 %1007, %v27
  %v1009 = vpop.permute.xlu0 %1008
  %1010 = vset.pattern.permute.xlu0 3
  %1011 = vperm.xlu0 %1010, %v28
  %v1012 = vpop.permute.xlu0 %1011
  %1013 = vset.pattern.permute.xlu0 3
  %1014 = vperm.xlu0 %1013, %v29
  %v1015 = vpop.permute.xlu0 %1014
  %1016 = vset.pattern.permute.xlu0 3
  %1017 = vperm.xlu0 %1016, %v30
  %v1018 = vpop.permute.xlu0 %1017
  %1019 = vset.pattern.permute.xlu0 3
  %1020 = vperm.xlu0 %1019, %v31
  %v1021 = vpop.permute.xlu0 %1020
  %1022 = vset.pattern.permute.xlu0 3
  %1023 = vperm.xlu0 %1022, %v32
  %v1024 = vpop.permute.xlu0 %1023
  %1025 = vset.pattern.permute.xlu0 3
  %1026 = vperm.xlu0 %1025, %v33
  %v1027 = vpop.permute.xlu0 %1026
  %1028 = vset.pattern.permute.xlu0 3
  %1029 = vperm.xlu0 %1028, %v34
  %v1030 = vpop.permute.xlu0 %1029
  %1031 = vset.pattern.permute.xlu0 3
  %1032 = vperm.xlu0 %1031, %v35
  %v1033 = vpop.permute.xlu0 %1032
  %1034 = vset.pattern.permute.xlu0 3
  %1035 = vperm.xlu0 %1034, %v36
  %v1036 = vpop.permute.xlu0 %1035
  %1037 = vset.pattern.permute.xlu0 3
  %1038 = vperm.xlu0 %1037, %v37
  %v1039 = vpop.permute.xlu0 %1038
  %1040 = vset.pattern.permute.xlu0 3
  %1041 = vperm.xlu0 %1040, %v38
  %v1042 = vpop.permute.xlu0 %1041
  %1043 = vset.pattern.permute.xlu0 3
  %1044 = vperm.xlu0 %1043, %v39
  %v1045 = vpop.permute.xlu0 %1044
  %1046 = vset.pattern.permute.xlu0 3
  %1047 = vperm.xlu0 %1046, %v40
  %v1048 = vpop.permute.xlu0 %1047
  %1049 = vset.pattern.permute.xlu0 3
  %1050 = vperm.xlu0 %1049, %v41
  %v1051 = vpop.permute.xlu0 %1050
  %1052 = vset.pattern.permute.xlu0 3
  %1053 = vperm.xlu0 %1052, %v42
  %v1054 = vpop.permute.xlu0 %1053
  %1055 = vset.pattern.permute.xlu0 3
  %1056 = vperm.xlu0 %1055, %v43
  %v1057 = vpop.permute.xlu0 %1056
  %1058 = vset.pattern.permute.xlu0 3
  %1059 = vperm.xlu0 %1058, %v44
  %v1060 = vpop.permute.xlu0 %1059
  %1061 = vset.pattern.permute.xlu0 3
  %1062 = vperm.xlu0 %1061, %v45
  %v1063 = vpop.permute.xlu0 %1062
  %1064 = vset.pattern.permute.xlu0 3
  %1065 = vperm.xlu0 %1064, %v46
  %v1066 = vpop.permute.xlu0 %1065
  %1067 = vset.pattern.permute.xlu0 3
  %1068 = vperm.xlu0 %1067, %v47
  %v1069 = vpop.permute.xlu0 %1068
  %1070 = vset.pattern.permute.xlu0 3
  %1071 = vperm.xlu0 %1070, %v48
  %v1072 = vpop.permute.xlu0 %1071
  %1073 = vset.pattern.permute.xlu0 3
  %1074 = vperm.xlu0 %1073, %v49
  %v1075 = vpop.permute.xlu0 %1074
  %1076 = vset.pattern.permute.xlu0 3
  %1077 = vperm.xlu0 %1076, %v50
  %v1078 = vpop.permute.xlu0 %1077
  %1079 = vset.pattern.permute.xlu0 3
  %1080 = vperm.xlu0 %1079, %v51
  %v1081 = vpop.permute.xlu0 %1080
  %1082 = vset.pattern.permute.xlu0 3
  %1083 = vperm.xlu0 %1082, %v52
  %v1084 = vpop.permute.xlu0 %1083
  %1085 = vset.pattern.permute.xlu0 3
  %1086 = vperm.xlu0 %1085, %v53
  %v1087 = vpop.permute.xlu0 %1086
  %1088 = vset.pattern.permute.xlu0 3
  %1089 = vperm.xlu0 %1088, %v54
  %v1090 = vpop.permute.xlu0 %1089
  %1091 = vset.pattern.permute.xlu0 3
  %1092 = vperm.xlu0 %1091, %v55
  %v1093 = vpop.permute.xlu0 %1092
  %1094 = vset.pattern.permute.xlu0 3
  %1095 = vperm.xlu0 %1094, %v56
  %v1096 = vpop.permute.xlu0 %1095
  %1097 = vset.pattern.permute.xlu0 3
  %1098 = vperm.xlu0 %1097, %v57
  %v1099 = vpop.permute.xlu0 %1098
  %1100 = vset.pattern.permute.xlu0 3
  %1101 = vperm.xlu0 %1100, %v58
  %v1102 = vpop.permute.xlu0 %1101
  %1103 = vset.pattern.permute.xlu0 3
  %1104 = vperm.xlu0 %1103, %v59
  %v1105 = vpop.permute.xlu0 %1104
  %1106 = vset.pattern.permute.xlu0 3
  %1107 = vperm.xlu0 %1106, %v60
  %v1108 = vpop.permute.xlu0 %1107
  %1109 = vset.pattern.permute.xlu0 3
  %1110 = vperm.xlu0 %1109, %v61
  %v1111 = vpop.permute.xlu0 %1110
  %1112 = vset.pattern.permute.xlu0 3
  %1113 = vperm.xlu0 %1112, %v62
  %v1114 = vpop.permute.xlu0 %1113
  %1115 = vset.pattern.permute.xlu0 3
  %1116 = vperm.xlu0 %1115, %v63
  %v1117 = vpop.permute.xlu0 %1116
  %1118 = vset.pattern.permute.xlu0 3
  %1119 = vperm.xlu0 %1118, %v64
  %v1120 = vpop.permute.xlu0 %1119
  %1121 = vset.pattern.permute.xlu0 3
  %1122 = vperm.xlu0 %1121, %v65
  %v1123 = vpop.permute.xlu0 %1122
  %1124 = vset.pattern.permute.xlu0 3
  %1125 = vperm.xlu0 %1124, %v66
  %v1126 = vpop.permute.xlu0 %1125
  %1127 = vset.pattern.permute.xlu0 3
  %1128 = vperm.xlu0 %1127, %v67
  %v1129 = vpop.permute.xlu0 %1128
  %1130 = vset.pattern.permute.xlu0 3
  %1131 = vperm.xlu0 %1130, %v68
  %v1132 = vpop.permute.xlu0 %1131
  %1133 = vset.pattern.permute.xlu0 3
  %1134 = vperm.xlu0 %1133, %v69
  %v1135 = vpop.permute.xlu0 %1134
  %1136 = vset.pattern.permute.xlu0 3
  %1137 = vperm.xlu0 %1136, %v70
  %v1138 = vpop.permute.xlu0 %1137
  %1139 = vset.pattern.permute.xlu0 3
  %1140 = vperm.xlu0 %1139, %v71
  %v1141 = vpop.permute.xlu0 %1140
  %1142 = vset.pattern.permute.xlu0 3
  %1143 = vperm.xlu0 %1142, %v72
  %v1144 = vpop.permute.xlu0 %1143
  %1145 = vset.pattern.permute.xlu0 3
  %1146 = vperm.xlu0 %1145, %v73
  %v1147 = vpop.permute.xlu0 %1146
  %1148 = vset.pattern.permute.xlu0 3
  %1149 = vperm.xlu0 %1148, %v74
  %v1150 = vpop.permute.xlu0 %1149
  %1151 = vset.pattern.permute.xlu0 3
  %1152 = vperm.xlu0 %1151, %v75
  %v1153 = vpop.permute.xlu0 %1152
  %1154 = vset.pattern.permute.xlu0 3
  %1155 = vperm.xlu0 %1154, %v76
  %v1156 = vpop.permute.xlu0 %1155
  %1157 = vset.pattern.permute.xlu0 3
  %1158 = vperm.xlu0 %1157, %v77
  %v1159 = vpop.permute.xlu0 %1158
  %1160 = vset.pattern.permute.xlu0 3
  %1161 = vperm.xlu0 %1160, %v78
  %v1162 = vpop.permute.xlu0 %1161
  %1163 = vset.pattern.permute.xlu0 3
  %1164 = vperm.xlu0 %1163, %v79
  %v1165 = vpop.permute.xlu0 %1164
  %1166 = vset.pattern.permute.xlu0 3
  %1167 = vperm.xlu0 %1166, %v80
  %v1168 = vpop.permute.xlu0 %1167
  %vm1169 = vcmp.eq.s32.totalorder %v16, %v979
  %vm1170 = vcmp.eq.s32.totalorder %v16, %v982
  %vm1171 = vcmp.eq.s32.totalorder %v16, %v985
  %vm1172 = vcmp.eq.s32.totalorder %v16, %v988
  %vm1173 = vcmp.eq.s32.totalorder %v16, %v991
  %vm1174 = vcmp.eq.s32.totalorder %v16, %v994
  %vm1175 = vcmp.eq.s32.totalorder %v16, %v997
  %vm1176 = vcmp.eq.s32.totalorder %v16, %v1000
  %vm1177 = vcmp.eq.s32.totalorder %v16, %v1003
  %vm1178 = vcmp.eq.s32.totalorder %v16, %v1006
  %vm1179 = vcmp.eq.s32.totalorder %v16, %v1009
  %vm1180 = vcmp.eq.s32.totalorder %v16, %v1012
  %vm1181 = vcmp.eq.s32.totalorder %v16, %v1015
  %vm1182 = vcmp.eq.s32.totalorder %v16, %v1018
  %vm1183 = vcmp.eq.s32.totalorder %v16, %v1021
  %vm1184 = vcmp.eq.s32.totalorder %v16, %v1024
  %vm1185 = vcmp.eq.s32.totalorder %v16, %v1027
  %vm1186 = vcmp.eq.s32.totalorder %v16, %v1030
  %vm1187 = vcmp.eq.s32.totalorder %v16, %v1033
  %vm1188 = vcmp.eq.s32.totalorder %v16, %v1036
  %vm1189 = vcmp.eq.s32.totalorder %v16, %v1039
  %vm1190 = vcmp.eq.s32.totalorder %v16, %v1042
  %vm1191 = vcmp.eq.s32.totalorder %v16, %v1045
  %vm1192 = vcmp.eq.s32.totalorder %v16, %v1048
  %vm1193 = vcmp.eq.s32.totalorder %v16, %v1051
  %vm1194 = vcmp.eq.s32.totalorder %v16, %v1054
  %vm1195 = vcmp.eq.s32.totalorder %v16, %v1057
  %vm1196 = vcmp.eq.s32.totalorder %v16, %v1060
  %vm1197 = vcmp.eq.s32.totalorder %v16, %v1063
  %vm1198 = vcmp.eq.s32.totalorder %v16, %v1066
  %vm1199 = vcmp.eq.s32.totalorder %v16, %v1069
  %vm1200 = vcmp.eq.s32.totalorder %v16, %v1072
  %vm1201 = vcmp.eq.s32.totalorder %v16, %v1075
  %vm1202 = vcmp.eq.s32.totalorder %v16, %v1078
  %vm1203 = vcmp.eq.s32.totalorder %v16, %v1081
  %vm1204 = vcmp.eq.s32.totalorder %v16, %v1084
  %vm1205 = vcmp.eq.s32.totalorder %v16, %v1087
  %vm1206 = vcmp.eq.s32.totalorder %v16, %v1090
  %vm1207 = vcmp.eq.s32.totalorder %v16, %v1093
  %vm1208 = vcmp.eq.s32.totalorder %v16, %v1096
  %vm1209 = vcmp.eq.s32.totalorder %v16, %v1099
  %vm1210 = vcmp.eq.s32.totalorder %v16, %v1102
  %vm1211 = vcmp.eq.s32.totalorder %v16, %v1105
  %vm1212 = vcmp.eq.s32.totalorder %v16, %v1108
  %vm1213 = vcmp.eq.s32.totalorder %v16, %v1111
  %vm1214 = vcmp.eq.s32.totalorder %v16, %v1114
  %vm1215 = vcmp.eq.s32.totalorder %v16, %v1117
  %vm1216 = vcmp.eq.s32.totalorder %v16, %v1120
  %vm1217 = vcmp.eq.s32.totalorder %v16, %v1123
  %vm1218 = vcmp.eq.s32.totalorder %v16, %v1126
  %vm1219 = vcmp.eq.s32.totalorder %v16, %v1129
  %vm1220 = vcmp.eq.s32.totalorder %v16, %v1132
  %vm1221 = vcmp.eq.s32.totalorder %v16, %v1135
  %vm1222 = vcmp.eq.s32.totalorder %v16, %v1138
  %vm1223 = vcmp.eq.s32.totalorder %v16, %v1141
  %vm1224 = vcmp.eq.s32.totalorder %v16, %v1144
  %vm1225 = vcmp.eq.s32.totalorder %v16, %v1147
  %vm1226 = vcmp.eq.s32.totalorder %v16, %v1150
  %vm1227 = vcmp.eq.s32.totalorder %v16, %v1153
  %vm1228 = vcmp.eq.s32.totalorder %v16, %v1156
  %vm1229 = vcmp.eq.s32.totalorder %v16, %v1159
  %vm1230 = vcmp.eq.s32.totalorder %v16, %v1162
  %vm1231 = vcmp.eq.s32.totalorder %v16, %v1165
  %vm1232 = vcmp.eq.s32.totalorder %v16, %v1168
  %vm1233 = vmor %vm913, %vm1169
  %vm1234 = vmor %vm914, %vm1170
  %vm1235 = vmor %vm915, %vm1171
  %vm1236 = vmor %vm916, %vm1172
  %vm1237 = vmor %vm917, %vm1173
  %vm1238 = vmor %vm918, %vm1174
  %vm1239 = vmor %vm919, %vm1175
  %vm1240 = vmor %vm920, %vm1176
  %vm1241 = vmor %vm921, %vm1177
  %vm1242 = vmor %vm922, %vm1178
  %vm1243 = vmor %vm923, %vm1179
  %vm1244 = vmor %vm924, %vm1180
  %vm1245 = vmor %vm925, %vm1181
  %vm1246 = vmor %vm926, %vm1182
  %vm1247 = vmor %vm927, %vm1183
  %vm1248 = vmor %vm928, %vm1184
  %vm1249 = vmor %vm929, %vm1185
  %vm1250 = vmor %vm930, %vm1186
  %vm1251 = vmor %vm931, %vm1187
  %vm1252 = vmor %vm932, %vm1188
  %vm1253 = vmor %vm933, %vm1189
  %vm1254 = vmor %vm934, %vm1190
  %vm1255 = vmor %vm935, %vm1191
  %vm1256 = vmor %vm936, %vm1192
  %vm1257 = vmor %vm937, %vm1193
  %vm1258 = vmor %vm938, %vm1194
  %vm1259 = vmor %vm939, %vm1195
  %vm1260 = vmor %vm940, %vm1196
  %vm1261 = vmor %vm941, %vm1197
  %vm1262 = vmor %vm942, %vm1198
  %vm1263 = vmor %vm943, %vm1199
  %vm1264 = vmor %vm944, %vm1200
  %vm1265 = vmor %vm945, %vm1201
  %vm1266 = vmor %vm946, %vm1202
  %vm1267 = vmor %vm947, %vm1203
  %vm1268 = vmor %vm948, %vm1204
  %vm1269 = vmor %vm949, %vm1205
  %vm1270 = vmor %vm950, %vm1206
  %vm1271 = vmor %vm951, %vm1207
  %vm1272 = vmor %vm952, %vm1208
  %vm1273 = vmor %vm953, %vm1209
  %vm1274 = vmor %vm954, %vm1210
  %vm1275 = vmor %vm955, %vm1211
  %vm1276 = vmor %vm956, %vm1212
  %vm1277 = vmor %vm957, %vm1213
  %vm1278 = vmor %vm958, %vm1214
  %vm1279 = vmor %vm959, %vm1215
  %vm1280 = vmor %vm960, %vm1216
  %vm1281 = vmor %vm961, %vm1217
  %vm1282 = vmor %vm962, %vm1218
  %vm1283 = vmor %vm963, %vm1219
  %vm1284 = vmor %vm964, %vm1220
  %vm1285 = vmor %vm965, %vm1221
  %vm1286 = vmor %vm966, %vm1222
  %vm1287 = vmor %vm967, %vm1223
  %vm1288 = vmor %vm968, %vm1224
  %vm1289 = vmor %vm969, %vm1225
  %vm1290 = vmor %vm970, %vm1226
  %vm1291 = vmor %vm971, %vm1227
  %vm1292 = vmor %vm972, %vm1228
  %vm1293 = vmor %vm973, %vm1229
  %vm1294 = vmor %vm974, %vm1230
  %vm1295 = vmor %vm975, %vm1231
  %vm1296 = vmor %vm976, %vm1232
  %v1297 = vsel %vm1233, 1, 0
  %v1298 = vsel %vm1234, 1, 0
  %v1299 = vsel %vm1235, 1, 0
  %v1300 = vsel %vm1236, 1, 0
  %v1301 = vsel %vm1237, 1, 0
  %v1302 = vsel %vm1238, 1, 0
  %v1303 = vsel %vm1239, 1, 0
  %v1304 = vsel %vm1240, 1, 0
  %v1305 = vsel %vm1241, 1, 0
  %v1306 = vsel %vm1242, 1, 0
  %v1307 = vsel %vm1243, 1, 0
  %v1308 = vsel %vm1244, 1, 0
  %v1309 = vsel %vm1245, 1, 0
  %v1310 = vsel %vm1246, 1, 0
  %v1311 = vsel %vm1247, 1, 0
  %v1312 = vsel %vm1248, 1, 0
  %v1313 = vsel %vm1249, 1, 0
  %v1314 = vsel %vm1250, 1, 0
  %v1315 = vsel %vm1251, 1, 0
  %v1316 = vsel %vm1252, 1, 0
  %v1317 = vsel %vm1253, 1, 0
  %v1318 = vsel %vm1254, 1, 0
  %v1319 = vsel %vm1255, 1, 0
  %v1320 = vsel %vm1256, 1, 0
  %v1321 = vsel %vm1257, 1, 0
  %v1322 = vsel %vm1258, 1, 0
  %v1323 = vsel %vm1259, 1, 0
  %v1324 = vsel %vm1260, 1, 0
  %v1325 = vsel %vm1261, 1, 0
  %v1326 = vsel %vm1262, 1, 0
  %v1327 = vsel %vm1263, 1, 0
  %v1328 = vsel %vm1264, 1, 0
  %v1329 = vsel %vm1265, 1, 0
  %v1330 = vsel %vm1266, 1, 0
  %v1331 = vsel %vm1267, 1, 0
  %v1332 = vsel %vm1268, 1, 0
  %v1333 = vsel %vm1269, 1, 0
  %v1334 = vsel %vm1270, 1, 0
  %v1335 = vsel %vm1271, 1, 0
  %v1336 = vsel %vm1272, 1, 0
  %v1337 = vsel %vm1273, 1, 0
  %v1338 = vsel %vm1274, 1, 0
  %v1339 = vsel %vm1275, 1, 0
  %v1340 = vsel %vm1276, 1, 0
  %v1341 = vsel %vm1277, 1, 0
  %v1342 = vsel %vm1278, 1, 0
  %v1343 = vsel %vm1279, 1, 0
  %v1344 = vsel %vm1280, 1, 0
  %v1345 = vsel %vm1281, 1, 0
  %v1346 = vsel %vm1282, 1, 0
  %v1347 = vsel %vm1283, 1, 0
  %v1348 = vsel %vm1284, 1, 0
  %v1349 = vsel %vm1285, 1, 0
  %v1350 = vsel %vm1286, 1, 0
  %v1351 = vsel %vm1287, 1, 0
  %v1352 = vsel %vm1288, 1, 0
  %v1353 = vsel %vm1289, 1, 0
  %v1354 = vsel %vm1290, 1, 0
  %v1355 = vsel %vm1291, 1, 0
  %v1356 = vsel %vm1292, 1, 0
  %v1357 = vsel %vm1293, 1, 0
  %v1358 = vsel %vm1294, 1, 0
  %v1359 = vsel %vm1295, 1, 0
  %v1360 = vsel %vm1296, 1, 0
  %v1361 = vcvt.s32.f32 %v1297
  %v1362 = vcvt.s32.f32 %v1298
  %v1363 = vcvt.s32.f32 %v1299
  %v1364 = vcvt.s32.f32 %v1300
  %v1365 = vcvt.s32.f32 %v1301
  %v1366 = vcvt.s32.f32 %v1302
  %v1367 = vcvt.s32.f32 %v1303
  %v1368 = vcvt.s32.f32 %v1304
  %v1369 = vcvt.s32.f32 %v1305
  %v1370 = vcvt.s32.f32 %v1306
  %v1371 = vcvt.s32.f32 %v1307
  %v1372 = vcvt.s32.f32 %v1308
  %v1373 = vcvt.s32.f32 %v1309
  %v1374 = vcvt.s32.f32 %v1310
  %v1375 = vcvt.s32.f32 %v1311
  %v1376 = vcvt.s32.f32 %v1312
  %v1377 = vcvt.s32.f32 %v1313
  %v1378 = vcvt.s32.f32 %v1314
  %v1379 = vcvt.s32.f32 %v1315
  %v1380 = vcvt.s32.f32 %v1316
  %v1381 = vcvt.s32.f32 %v1317
  %v1382 = vcvt.s32.f32 %v1318
  %v1383 = vcvt.s32.f32 %v1319
  %v1384 = vcvt.s32.f32 %v1320
  %v1385 = vcvt.s32.f32 %v1321
  %v1386 = vcvt.s32.f32 %v1322
  %v1387 = vcvt.s32.f32 %v1323
  %v1388 = vcvt.s32.f32 %v1324
  %v1389 = vcvt.s32.f32 %v1325
  %v1390 = vcvt.s32.f32 %v1326
  %v1391 = vcvt.s32.f32 %v1327
  %v1392 = vcvt.s32.f32 %v1328
  %v1393 = vcvt.s32.f32 %v1329
  %v1394 = vcvt.s32.f32 %v1330
  %v1395 = vcvt.s32.f32 %v1331
  %v1396 = vcvt.s32.f32 %v1332
  %v1397 = vcvt.s32.f32 %v1333
  %v1398 = vcvt.s32.f32 %v1334
  %v1399 = vcvt.s32.f32 %v1335
  %v1400 = vcvt.s32.f32 %v1336
  %v1401 = vcvt.s32.f32 %v1337
  %v1402 = vcvt.s32.f32 %v1338
  %v1403 = vcvt.s32.f32 %v1339
  %v1404 = vcvt.s32.f32 %v1340
  %v1405 = vcvt.s32.f32 %v1341
  %v1406 = vcvt.s32.f32 %v1342
  %v1407 = vcvt.s32.f32 %v1343
  %v1408 = vcvt.s32.f32 %v1344
  %v1409 = vcvt.s32.f32 %v1345
  %v1410 = vcvt.s32.f32 %v1346
  %v1411 = vcvt.s32.f32 %v1347
  %v1412 = vcvt.s32.f32 %v1348
  %v1413 = vcvt.s32.f32 %v1349
  %v1414 = vcvt.s32.f32 %v1350
  %v1415 = vcvt.s32.f32 %v1351
  %v1416 = vcvt.s32.f32 %v1352
  %v1417 = vcvt.s32.f32 %v1353
  %v1418 = vcvt.s32.f32 %v1354
  %v1419 = vcvt.s32.f32 %v1355
  %v1420 = vcvt.s32.f32 %v1356
  %v1421 = vcvt.s32.f32 %v1357
  %v1422 = vcvt.s32.f32 %v1358
  %v1423 = vcvt.s32.f32 %v1359
  %v1424 = vcvt.s32.f32 %v1360
  %v1425 = vpack.c.bf16 %v1362, %v1361
  %v1426 = vpack.c.bf16 %v1364, %v1363
  %v1427 = vpack.c.bf16 %v1366, %v1365
  %v1428 = vpack.c.bf16 %v1368, %v1367
  %v1429 = vpack.c.bf16 %v1370, %v1369
  %v1430 = vpack.c.bf16 %v1372, %v1371
  %v1431 = vpack.c.bf16 %v1374, %v1373
  %v1432 = vpack.c.bf16 %v1376, %v1375
  %v1433 = vpack.c.bf16 %v1378, %v1377
  %v1434 = vpack.c.bf16 %v1380, %v1379
  %v1435 = vpack.c.bf16 %v1382, %v1381
  %v1436 = vpack.c.bf16 %v1384, %v1383
  %v1437 = vpack.c.bf16 %v1386, %v1385
  %v1438 = vpack.c.bf16 %v1388, %v1387
  %v1439 = vpack.c.bf16 %v1390, %v1389
  %v1440 = vpack.c.bf16 %v1392, %v1391
  %v1441 = vpack.c.bf16 %v1394, %v1393
  %v1442 = vpack.c.bf16 %v1396, %v1395
  %v1443 = vpack.c.bf16 %v1398, %v1397
  %v1444 = vpack.c.bf16 %v1400, %v1399
  %v1445 = vpack.c.bf16 %v1402, %v1401
  %v1446 = vpack.c.bf16 %v1404, %v1403
  %v1447 = vpack.c.bf16 %v1406, %v1405
  %v1448 = vpack.c.bf16 %v1408, %v1407
  %v1449 = vpack.c.bf16 %v1410, %v1409
  %v1450 = vpack.c.bf16 %v1412, %v1411
  %v1451 = vpack.c.bf16 %v1414, %v1413
  %v1452 = vpack.c.bf16 %v1416, %v1415
  %v1453 = vpack.c.bf16 %v1418, %v1417
  %v1454 = vpack.c.bf16 %v1420, %v1419
  %v1455 = vpack.c.bf16 %v1422, %v1421
  %v1456 = vpack.c.bf16 %v1424, %v1423
  %v1457 = vld [vmem:[%s1] sm:$0xf]
  %v1458 = vld [vmem:[%s1 + $0x4] sm:$0xf]
  %v1459 = vld [vmem:[%s1 + $0x8] sm:$0xf]
  %v1460 = vld [vmem:[%s1 + $0xc] sm:$0xf]
  %v1461 = vld [vmem:[%s1 + $0x10] sm:$0xf]
  %v1462 = vld [vmem:[%s1 + $0x14] sm:$0xf]
  %v1463 = vld [vmem:[%s1 + $0x18] sm:$0xf]
  %v1464 = vld [vmem:[%s1 + $0x1c] sm:$0xf]
  %v1465 = vld [vmem:[%s1 + $0x20] sm:$0xf]
  %v1466 = vld [vmem:[%s1 + $0x24] sm:$0xf]
  %v1467 = vld [vmem:[%s1 + $0x28] sm:$0xf]
  %v1468 = vld [vmem:[%s1 + $0x2c] sm:$0xf]
  %v1469 = vld [vmem:[%s1 + $0x30] sm:$0xf]
  %v1470 = vld [vmem:[%s1 + $0x34] sm:$0xf]
  %v1471 = vld [vmem:[%s1 + $0x38] sm:$0xf]
  %v1472 = vld [vmem:[%s1 + $0x3c] sm:$0xf]
  %v1489 = vunpack.c.l.b16 %v1457
  %v1490 = vunpack.c.l.b16 %v1458
  %v1491 = vunpack.c.l.b16 %v1459
  %v1492 = vunpack.c.l.b16 %v1460
  %v1493 = vunpack.c.l.b16 %v1461
  %v1494 = vunpack.c.l.b16 %v1462
  %v1495 = vunpack.c.l.b16 %v1463
  %v1496 = vunpack.c.l.b16 %v1464
  %v1497 = vunpack.c.l.b16 %v1465
  %v1498 = vunpack.c.l.b16 %v1466
  %v1499 = vunpack.c.l.b16 %v1467
  %v1500 = vunpack.c.l.b16 %v1468
  %v1501 = vunpack.c.l.b16 %v1469
  %v1502 = vunpack.c.l.b16 %v1470
  %v1503 = vunpack.c.l.b16 %v1471
  %v1504 = vunpack.c.l.b16 %v1472
  %v1505 = vpack.c.b16 %v1490, %v1489
  %v1506 = vpack.c.b16 %v1492, %v1491
  %v1507 = vpack.c.b16 %v1494, %v1493
  %v1508 = vpack.c.b16 %v1496, %v1495
  %v1509 = vpack.c.b16 %v1498, %v1497
  %v1510 = vpack.c.b16 %v1500, %v1499
  %v1511 = vpack.c.b16 %v1502, %v1501
  %v1512 = vpack.c.b16 %v1504, %v1503
  %1521 = vmatprep.subr.bf16.mxu0 0
  %1522 = vmatpush1.bf16.msra.mxu0 %v1505
  %1523 = vmatprep.subr.bf16.mxu0 0
  %1524 = vmatpush1.bf16.msra.mxu0 %v1506
  %1525 = vmatprep.subr.bf16.mxu0 0
  %1526 = vmatpush1.bf16.msra.mxu0 %v1507
  %1527 = vmatprep.subr.bf16.mxu0 0
  %1528 = vmatpush1.bf16.msra.mxu0 %v1508
  %1529 = vmatprep.subr.bf16.mxu0 0
  %1530 = vmatpush1.bf16.msra.mxu0 %v1509
  %1531 = vmatprep.subr.bf16.mxu0 0
  %1532 = vmatpush1.bf16.msra.mxu0 %v1510
  %1533 = vmatprep.subr.bf16.mxu0 0
  %1534 = vmatpush1.bf16.msra.mxu0 %v1511
  %1535 = vmatprep.subr.bf16.mxu0 0
  %1536 = vmatpush1.bf16.msra.mxu0 %v1512
  %1537 = vmatprep.subr.bf16.mxu0 0
  %1538 = vmatpush1.bf16.msra.mxu0 0
  %1539 = vmatprep.subr.bf16.mxu0 0
  %1540 = vmatpush1.bf16.msra.mxu0 0
  %1541 = vmatprep.subr.bf16.mxu0 0
  %1542 = vmatpush1.bf16.msra.mxu0 0
  %1543 = vmatprep.subr.bf16.mxu0 0
  %1544 = vmatpush1.bf16.msra.mxu0 0
  %1545 = vmatprep.subr.bf16.mxu0 0
  %1546 = vmatpush1.bf16.msra.mxu0 0
  %1547 = vmatprep.subr.bf16.mxu0 0
  %1548 = vmatpush1.bf16.msra.mxu0 0
  %1549 = vmatprep.subr.bf16.mxu0 0
  %1550 = vmatpush1.bf16.msra.mxu0 0
  %1551 = vmatprep.subr.bf16.mxu0 0
  %1552 = vmatpush1.bf16.msra.mxu0 0
  %1553 = vmatprep.mubr.bf16.mxu0 0
  %1554 = vmatmul.mubr.bf16.gmra.mrb[0].mxu0 %v1425
  %v1555 = vpop.f32.mrb[0].mxu0
  %v1556 = vadd.f32 0.0, %v1555
  %v1557 = vpop.f32.mrb[0].mxu0
  %v1558 = vpop.f32.mrb[0].mxu0
  %v1559 = vadd.f32 0.0, %v1558
  %v1560 = vpop.f32.mrb[0].mxu0
  %1561 = vmatprep.mubr.bf16.mxu0 0
  %1562 = vmatmul.mubr.bf16.gmra.mrb[0].mxu0 %v1426
  %v1563 = vpop.f32.mrb[0].mxu0
  %v1564 = vadd.f32 0.0, %v1563
  %v1565 = vpop.f32.mrb[0].mxu0
  %v1566 = vpop.f32.mrb[0].mxu0
  %v1567 = vadd.f32 0.0, %v1566
  %v1568 = vpop.f32.mrb[0].mxu0
  %1569 = vmatprep.mubr.bf16.mxu0 0
  %1570 = vmatmul.mubr.bf16.gmra.mrb[0].mxu0 %v1427
  %v1571 = vpop.f32.mrb[0].mxu0
  %v1572 = vadd.f32 0.0, %v1571
  %v1573 = vpop.f32.mrb[0].mxu0
  %v1574 = vpop.f32.mrb[0].mxu0
  %v1575 = vadd.f32 0.0, %v1574
  %v1576 = vpop.f32.mrb[0].mxu0
  %1577 = vmatprep.mubr.bf16.mxu0 0
  %1578 = vmatmul.mubr.bf16.gmra.mrb[0].mxu0 %v1428
  %v1579 = vpop.f32.mrb[0].mxu0
  %v1580 = vadd.f32 0.0, %v1579
  %v1581 = vpop.f32.mrb[0].mxu0
  %v1582 = vpop.f32.mrb[0].mxu0
  %v1583 = vadd.f32 0.0, %v1582
  %v1584 = vpop.f32.mrb[0].mxu0
  %1585 = vmatprep.mubr.bf16.mxu0 0
  %1586 = vmatmul.mubr.bf16.gmra.mrb[0].mxu0 %v1429
  %v1587 = vpop.f32.mrb[0].mxu0
  %v1588 = vadd.f32 0.0, %v1587
  %v1589 = vpop.f32.mrb[0].mxu0
  %v1590 = vpop.f32.mrb[0].mxu0
  %v1591 = vadd.f32 0.0, %v1590
  %v1592 = vpop.f32.mrb[0].mxu0
  %1593 = vmatprep.mubr.bf16.mxu0 0
  %1594 = vmatmul.mubr.bf16.gmra.mrb[0].mxu0 %v1430
  %v1595 = vpop.f32.mrb[0].mxu0
  %v1596 = vadd.f32 0.0, %v1595
  %v1597 = vpop.f32.mrb[0].mxu0
  %v1598 = vpop.f32.mrb[0].mxu0
  %v1599 = vadd.f32 0.0, %v1598
  %v1600 = vpop.f32.mrb[0].mxu0
  %1601 = vmatprep.mubr.bf16.mxu0 0
  %1602 = vmatmul.mubr.bf16.gmra.mrb[0].mxu0 %v1431
  %v1603 = vpop.f32.mrb[0].mxu0
  %v1604 = vadd.f32 0.0, %v1603
  %v1605 = vpop.f32.mrb[0].mxu0
  %v1606 = vpop.f32.mrb[0].mxu0
  %v1607 = vadd.f32 0.0, %v1606
  %v1608 = vpop.f32.mrb[0].mxu0
  %1609 = vmatprep.mubr.bf16.mxu0 0
  %1610 = vmatmul.mubr.bf16.gmra.mrb[0].mxu0 %v1432
  %v1611 = vpop.f32.mrb[0].mxu0
  %v1612 = vadd.f32 0.0, %v1611
  %v1613 = vpop.f32.mrb[0].mxu0
  %v1614 = vpop.f32.mrb[0].mxu0
  %v1615 = vadd.f32 0.0, %v1614
  %v1616 = vpop.f32.mrb[0].mxu0
  %1617 = vmatprep.mubr.bf16.mxu0 0
  %1618 = vmatmul.mubr.bf16.gmra.mrb[0].mxu0 %v1433
  %v1619 = vpop.f32.mrb[0].mxu0
  %v1620 = vadd.f32 0.0, %v1619
  %v1621 = vpop.f32.mrb[0].mxu0
  %v1622 = vpop.f32.mrb[0].mxu0
  %v1623 = vadd.f32 0.0, %v1622
  %v1624 = vpop.f32.mrb[0].mxu0
  %1625 = vmatprep.mubr.bf16.mxu0 0
  %1626 = vmatmul.mubr.bf16.gmra.mrb[0].mxu0 %v1434
  %v1627 = vpop.f32.mrb[0].mxu0
  %v1628 = vadd.f32 0.0, %v1627
  %v1629 = vpop.f32.mrb[0].mxu0
  %v1630 = vpop.f32.mrb[0].mxu0
  %v1631 = vadd.f32 0.0, %v1630
  %v1632 = vpop.f32.mrb[0].mxu0
  %1633 = vmatprep.mubr.bf16.mxu0 0
  %1634 = vmatmul.mubr.bf16.gmra.mrb[0].mxu0 %v1435
  %v1635 = vpop.f32.mrb[0].mxu0
  %v1636 = vadd.f32 0.0, %v1635
  %v1637 = vpop.f32.mrb[0].mxu0
  %v1638 = vpop.f32.mrb[0].mxu0
  %v1639 = vadd.f32 0.0, %v1638
  %v1640 = vpop.f32.mrb[0].mxu0
  %1641 = vmatprep.mubr.bf16.mxu0 0
  %1642 = vmatmul.mubr.bf16.gmra.mrb[0].mxu0 %v1436
  %v1643 = vpop.f32.mrb[0].mxu0
  %v1644 = vadd.f32 0.0, %v1643
  %v1645 = vpop.f32.mrb[0].mxu0
  %v1646 = vpop.f32.mrb[0].mxu0
  %v1647 = vadd.f32 0.0, %v1646
  %v1648 = vpop.f32.mrb[0].mxu0
  %1649 = vmatprep.mubr.bf16.mxu0 0
  %1650 = vmatmul.mubr.bf16.gmra.mrb[0].mxu0 %v1437
  %v1651 = vpop.f32.mrb[0].mxu0
  %v1652 = vadd.f32 0.0, %v1651
  %v1653 = vpop.f32.mrb[0].mxu0
  %v1654 = vpop.f32.mrb[0].mxu0
  %v1655 = vadd.f32 0.0, %v1654
  %v1656 = vpop.f32.mrb[0].mxu0
  %1657 = vmatprep.mubr.bf16.mxu0 0
  %1658 = vmatmul.mubr.bf16.gmra.mrb[0].mxu0 %v1438
  %v1659 = vpop.f32.mrb[0].mxu0
  %v1660 = vadd.f32 0.0, %v1659
  %v1661 = vpop.f32.mrb[0].mxu0
  %v1662 = vpop.f32.mrb[0].mxu0
  %v1663 = vadd.f32 0.0, %v1662
  %v1664 = vpop.f32.mrb[0].mxu0
  %1665 = vmatprep.mubr.bf16.mxu0 0
  %1666 = vmatmul.mubr.bf16.gmra.mrb[0].mxu0 %v1439
  %v1667 = vpop.f32.mrb[0].mxu0
  %v1668 = vadd.f32 0.0, %v1667
  %v1669 = vpop.f32.mrb[0].mxu0
  %v1670 = vpop.f32.mrb[0].mxu0
  %v1671 = vadd.f32 0.0, %v1670
  %v1672 = vpop.f32.mrb[0].mxu0
  %1673 = vmatprep.mubr.bf16.mxu0 0
  %1674 = vmatmul.mubr.bf16.gmra.mrb[0].mxu0 %v1440
  %v1675 = vpop.f32.mrb[0].mxu0
  %v1676 = vadd.f32 0.0, %v1675
  %v1677 = vpop.f32.mrb[0].mxu0
  %v1678 = vpop.f32.mrb[0].mxu0
  %v1679 = vadd.f32 0.0, %v1678
  %v1680 = vpop.f32.mrb[0].mxu0
  %1681 = vmatprep.mubr.bf16.mxu0 0
  %1682 = vmatmul.mubr.bf16.gmra.mrb[0].mxu0 %v1441
  %v1683 = vpop.f32.mrb[0].mxu0
  %v1684 = vadd.f32 0.0, %v1683
  %v1685 = vpop.f32.mrb[0].mxu0
  %v1686 = vpop.f32.mrb[0].mxu0
  %v1687 = vadd.f32 0.0, %v1686
  %v1688 = vpop.f32.mrb[0].mxu0
  %1689 = vmatprep.mubr.bf16.mxu0 0
  %1690 = vmatmul.mubr.bf16.gmra.mrb[0].mxu0 %v1442
  %v1691 = vpop.f32.mrb[0].mxu0
  %v1692 = vadd.f32 0.0, %v1691
  %v1693 = vpop.f32.mrb[0].mxu0
  %v1694 = vpop.f32.mrb[0].mxu0
  %v1695 = vadd.f32 0.0, %v1694
  %v1696 = vpop.f32.mrb[0].mxu0
  %1697 = vmatprep.mubr.bf16.mxu0 0
  %1698 = vmatmul.mubr.bf16.gmra.mrb[0].mxu0 %v1443
  %v1699 = vpop.f32.mrb[0].mxu0
  %v1700 = vadd.f32 0.0, %v1699
  %v1701 = vpop.f32.mrb[0].mxu0
  %v1702 = vpop.f32.mrb[0].mxu0
  %v1703 = vadd.f32 0.0, %v1702
  %v1704 = vpop.f32.mrb[0].mxu0
  %1705 = vmatprep.mubr.bf16.mxu0 0
  %1706 = vmatmul.mubr.bf16.gmra.mrb[0].mxu0 %v1444
  %v1707 = vpop.f32.mrb[0].mxu0
  %v1708 = vadd.f32 0.0, %v1707
  %v1709 = vpop.f32.mrb[0].mxu0
  %v1710 = vpop.f32.mrb[0].mxu0
  %v1711 = vadd.f32 0.0, %v1710
  %v1712 = vpop.f32.mrb[0].mxu0
  %1713 = vmatprep.mubr.bf16.mxu0 0
  %1714 = vmatmul.mubr.bf16.gmra.mrb[0].mxu0 %v1445
  %v1715 = vpop.f32.mrb[0].mxu0
  %v1716 = vadd.f32 0.0, %v1715
  %v1717 = vpop.f32.mrb[0].mxu0
  %v1718 = vpop.f32.mrb[0].mxu0
  %v1719 = vadd.f32 0.0, %v1718
  %v1720 = vpop.f32.mrb[0].mxu0
  %1721 = vmatprep.mubr.bf16.mxu0 0
  %1722 = vmatmul.mubr.bf16.gmra.mrb[0].mxu0 %v1446
  %v1723 = vpop.f32.mrb[0].mxu0
  %v1724 = vadd.f32 0.0, %v1723
  %v1725 = vpop.f32.mrb[0].mxu0
  %v1726 = vpop.f32.mrb[0].mxu0
  %v1727 = vadd.f32 0.0, %v1726
  %v1728 = vpop.f32.mrb[0].mxu0
  %1729 = vmatprep.mubr.bf16.mxu0 0
  %1730 = vmatmul.mubr.bf16.gmra.mrb[0].mxu0 %v1447
  %v1731 = vpop.f32.mrb[0].mxu0
  %v1732 = vadd.f32 0.0, %v1731
  %v1733 = vpop.f32.mrb[0].mxu0
  %v1734 = vpop.f32.mrb[0].mxu0
  %v1735 = vadd.f32 0.0, %v1734
  %v1736 = vpop.f32.mrb[0].mxu0
  %1737 = vmatprep.mubr.bf16.mxu0 0
  %1738 = vmatmul.mubr.bf16.gmra.mrb[0].mxu0 %v1448
  %v1739 = vpop.f32.mrb[0].mxu0
  %v1740 = vadd.f32 0.0, %v1739
  %v1741 = vpop.f32.mrb[0].mxu0
  %v1742 = vpop.f32.mrb[0].mxu0
  %v1743 = vadd.f32 0.0, %v1742
  %v1744 = vpop.f32.mrb[0].mxu0
  %1745 = vmatprep.mubr.bf16.mxu0 0
  %1746 = vmatmul.mubr.bf16.gmra.mrb[0].mxu0 %v1449
  %v1747 = vpop.f32.mrb[0].mxu0
  %v1748 = vadd.f32 0.0, %v1747
  %v1749 = vpop.f32.mrb[0].mxu0
  %v1750 = vpop.f32.mrb[0].mxu0
  %v1751 = vadd.f32 0.0, %v1750
  %v1752 = vpop.f32.mrb[0].mxu0
  %1753 = vmatprep.mubr.bf16.mxu0 0
  %1754 = vmatmul.mubr.bf16.gmra.mrb[0].mxu0 %v1450
  %v1755 = vpop.f32.mrb[0].mxu0
  %v1756 = vadd.f32 0.0, %v1755
  %v1757 = vpop.f32.mrb[0].mxu0
  %v1758 = vpop.f32.mrb[0].mxu0
  %v1759 = vadd.f32 0.0, %v1758
  %v1760 = vpop.f32.mrb[0].mxu0
  %1761 = vmatprep.mubr.bf16.mxu0 0
  %1762 = vmatmul.mubr.bf16.gmra.mrb[0].mxu0 %v1451
  %v1763 = vpop.f32.mrb[0].mxu0
  %v1764 = vadd.f32 0.0, %v1763
  %v1765 = vpop.f32.mrb[0].mxu0
  %v1766 = vpop.f32.mrb[0].mxu0
  %v1767 = vadd.f32 0.0, %v1766
  %v1768 = vpop.f32.mrb[0].mxu0
  %1769 = vmatprep.mubr.bf16.mxu0 0
  %1770 = vmatmul.mubr.bf16.gmra.mrb[0].mxu0 %v1452
  %v1771 = vpop.f32.mrb[0].mxu0
  %v1772 = vadd.f32 0.0, %v1771
  %v1773 = vpop.f32.mrb[0].mxu0
  %v1774 = vpop.f32.mrb[0].mxu0
  %v1775 = vadd.f32 0.0, %v1774
  %v1776 = vpop.f32.mrb[0].mxu0
  %1777 = vmatprep.mubr.bf16.mxu0 0
  %1778 = vmatmul.mubr.bf16.gmra.mrb[0].mxu0 %v1453
  %v1779 = vpop.f32.mrb[0].mxu0
  %v1780 = vadd.f32 0.0, %v1779
  %v1781 = vpop.f32.mrb[0].mxu0
  %v1782 = vpop.f32.mrb[0].mxu0
  %v1783 = vadd.f32 0.0, %v1782
  %v1784 = vpop.f32.mrb[0].mxu0
  %1785 = vmatprep.mubr.bf16.mxu0 0
  %1786 = vmatmul.mubr.bf16.gmra.mrb[0].mxu0 %v1454
  %v1787 = vpop.f32.mrb[0].mxu0
  %v1788 = vadd.f32 0.0, %v1787
  %v1789 = vpop.f32.mrb[0].mxu0
  %v1790 = vpop.f32.mrb[0].mxu0
  %v1791 = vadd.f32 0.0, %v1790
  %v1792 = vpop.f32.mrb[0].mxu0
  %1793 = vmatprep.mubr.bf16.mxu0 0
  %1794 = vmatmul.mubr.bf16.gmra.mrb[0].mxu0 %v1455
  %v1795 = vpop.f32.mrb[0].mxu0
  %v1796 = vadd.f32 0.0, %v1795
  %v1797 = vpop.f32.mrb[0].mxu0
  %v1798 = vpop.f32.mrb[0].mxu0
  %v1799 = vadd.f32 0.0, %v1798
  %v1800 = vpop.f32.mrb[0].mxu0
  %1801 = vmatprep.mubr.bf16.mxu0 0
  %1802 = vmatmul.mubr.bf16.gmra.mrb[0].mxu0 %v1456
  %v1803 = vpop.f32.mrb[0].mxu0
  %v1804 = vadd.f32 0.0, %v1803
  %v1805 = vpop.f32.mrb[0].mxu0
  %v1806 = vpop.f32.mrb[0].mxu0
  %v1807 = vadd.f32 0.0, %v1806
  %v1808 = vpop.f32.mrb[0].mxu0
  %1809 = vdwg.mxu0
  %v1810 = vpack.c.bf16 %v1559, %v1556
  %v1811 = vpack.c.bf16 %v1567, %v1564
  %v1812 = vpack.c.bf16 %v1575, %v1572
  %v1813 = vpack.c.bf16 %v1583, %v1580
  %v1814 = vpack.c.bf16 %v1591, %v1588
  %v1815 = vpack.c.bf16 %v1599, %v1596
  %v1816 = vpack.c.bf16 %v1607, %v1604
  %v1817 = vpack.c.bf16 %v1615, %v1612
  %v1818 = vpack.c.bf16 %v1623, %v1620
  %v1819 = vpack.c.bf16 %v1631, %v1628
  %v1820 = vpack.c.bf16 %v1639, %v1636
  %v1821 = vpack.c.bf16 %v1647, %v1644
  %v1822 = vpack.c.bf16 %v1655, %v1652
  %v1823 = vpack.c.bf16 %v1663, %v1660
  %v1824 = vpack.c.bf16 %v1671, %v1668
  %v1825 = vpack.c.bf16 %v1679, %v1676
  %v1826 = vpack.c.bf16 %v1687, %v1684
  %v1827 = vpack.c.bf16 %v1695, %v1692
  %v1828 = vpack.c.bf16 %v1703, %v1700
  %v1829 = vpack.c.bf16 %v1711, %v1708
  %v1830 = vpack.c.bf16 %v1719, %v1716
  %v1831 = vpack.c.bf16 %v1727, %v1724
  %v1832 = vpack.c.bf16 %v1735, %v1732
  %v1833 = vpack.c.bf16 %v1743, %v1740
  %v1834 = vpack.c.bf16 %v1751, %v1748
  %v1835 = vpack.c.bf16 %v1759, %v1756
  %v1836 = vpack.c.bf16 %v1767, %v1764
  %v1837 = vpack.c.bf16 %v1775, %v1772
  %v1838 = vpack.c.bf16 %v1783, %v1780
  %v1839 = vpack.c.bf16 %v1791, %v1788
  %v1840 = vpack.c.bf16 %v1799, %v1796
  %v1841 = vpack.c.bf16 %v1807, %v1804
  %v1842 = vld [vmem:[%s1 + $0x40] sm:$0xf]
  %v1843 = vld [vmem:[%s1 + $0x44] sm:$0xf]
  %v1844 = vld [vmem:[%s1 + $0x48] sm:$0xf]
  %v1845 = vld [vmem:[%s1 + $0x4c] sm:$0xf]
  %v1846 = vld [vmem:[%s2] sm:$0x1]
  %v1847 = vlaneseq
  %v1848 = vshrl.u32 %v1847, 7
  %v1849 = vsub.s32 0, %v1848
  %v1850 = vrot.slane %v1846, %v1849
  %v1855 = vunpack.c.l.b16 %v1842
  %v1856 = vunpack.c.l.b16 %v1843
  %v1857 = vunpack.c.l.b16 %v1844
  %v1858 = vunpack.c.l.b16 %v1845
  %v1859 = vpack.c.b16 %v1856, %v1855
  %v1860 = vpack.c.b16 %v1858, %v1857
  %vm1863 = vcmask 261120
  %v1865 = vsel %vm1863, %v1810, 0
  %v1868 = vsel %vm1863, %v1811, 0
  %v1871 = vsel %vm1863, %v1812, 0
  %v1874 = vsel %vm1863, %v1813, 0
  %v1877 = vsel %vm1863, %v1814, 0
  %v1880 = vsel %vm1863, %v1815, 0
  %v1883 = vsel %vm1863, %v1816, 0
  %v1886 = vsel %vm1863, %v1817, 0
  %v1889 = vsel %vm1863, %v1818, 0
  %v1892 = vsel %vm1863, %v1819, 0
  %v1895 = vsel %vm1863, %v1820, 0
  %v1898 = vsel %vm1863, %v1821, 0
  %v1901 = vsel %vm1863, %v1822, 0
  %v1904 = vsel %vm1863, %v1823, 0
  %v1907 = vsel %vm1863, %v1824, 0
  %v1910 = vsel %vm1863, %v1825, 0
  %v1913 = vsel %vm1863, %v1826, 0
  %v1916 = vsel %vm1863, %v1827, 0
  %v1919 = vsel %vm1863, %v1828, 0
  %v1922 = vsel %vm1863, %v1829, 0
  %v1925 = vsel %vm1863, %v1830, 0
  %v1928 = vsel %vm1863, %v1831, 0
  %v1931 = vsel %vm1863, %v1832, 0
  %v1934 = vsel %vm1863, %v1833, 0
  %v1937 = vsel %vm1863, %v1834, 0
  %v1940 = vsel %vm1863, %v1835, 0
  %v1943 = vsel %vm1863, %v1836, 0
  %v1946 = vsel %vm1863, %v1837, 0
  %v1949 = vsel %vm1863, %v1838, 0
  %v1952 = vsel %vm1863, %v1839, 0
  %v1955 = vsel %vm1863, %v1840, 0
  %v1958 = vsel %vm1863, %v1841, 0
  %1960 = vmatprep.subr.bf16.mxu0 0
  %1961 = vmatpush1.bf16.msra.mxu0 %v1859
  %1962 = vmatprep.subr.bf16.mxu0 0
  %1963 = vmatpush1.bf16.msra.mxu0 %v1860
  %1964 = vmatprep.subr.bf16.mxu0 0
  %1965 = vmatpush1.bf16.msra.mxu0 0
  %1966 = vmatprep.subr.bf16.mxu0 0
  %1967 = vmatpush1.bf16.msra.mxu0 0
  %1968 = vmatprep.subr.bf16.mxu0 0
  %1969 = vmatpush1.bf16.msra.mxu0 0
  %1970 = vmatprep.subr.bf16.mxu0 0
  %1971 = vmatpush1.bf16.msra.mxu0 0
  %1972 = vmatprep.subr.bf16.mxu0 0
  %1973 = vmatpush1.bf16.msra.mxu0 0
  %1974 = vmatprep.subr.bf16.mxu0 0
  %1975 = vmatpush1.bf16.msra.mxu0 0
  %1976 = vmatprep.subr.bf16.mxu0 0
  %1977 = vmatpush1.bf16.msra.mxu0 0
  %1978 = vmatprep.subr.bf16.mxu0 0
  %1979 = vmatpush1.bf16.msra.mxu0 0
  %1980 = vmatprep.subr.bf16.mxu0 0
  %1981 = vmatpush1.bf16.msra.mxu0 0
  %1982 = vmatprep.subr.bf16.mxu0 0
  %1983 = vmatpush1.bf16.msra.mxu0 0
  %1984 = vmatprep.subr.bf16.mxu0 0
  %1985 = vmatpush1.bf16.msra.mxu0 0
  %1986 = vmatprep.subr.bf16.mxu0 0
  %1987 = vmatpush1.bf16.msra.mxu0 0
  %1988 = vmatprep.subr.bf16.mxu0 0
  %1989 = vmatpush1.bf16.msra.mxu0 0
  %1990 = vmatprep.subr.bf16.mxu0 0
  %1991 = vmatpush1.bf16.msra.mxu0 0
  %1992 = vmatprep.mubr.bf16.mxu0 0
  %1993 = vmatmul.mubr.bf16.gmra.mrb[0].mxu0 %v1865
  %v1994 = vpop.f32.mrb[0].mxu0
  %v1995 = vadd.f32 %v1850, %v1994
  %v1996 = vpop.f32.mrb[0].mxu0
  %v1997 = vpop.f32.mrb[0].mxu0
  %v1998 = vadd.f32 %v1850, %v1997
  %v1999 = vpop.f32.mrb[0].mxu0
  %2000 = vmatprep.mubr.bf16.mxu0 0
  %2001 = vmatmul.mubr.bf16.gmra.mrb[0].mxu0 %v1868
  %v2002 = vpop.f32.mrb[0].mxu0
  %v2003 = vadd.f32 %v1850, %v2002
  %v2004 = vpop.f32.mrb[0].mxu0
  %v2005 = vpop.f32.mrb[0].mxu0
  %v2006 = vadd.f32 %v1850, %v2005
  %v2007 = vpop.f32.mrb[0].mxu0
  %2008 = vmatprep.mubr.bf16.mxu0 0
  %2009 = vmatmul.mubr.bf16.gmra.mrb[0].mxu0 %v1871
  %v2010 = vpop.f32.mrb[0].mxu0
  %v2011 = vadd.f32 %v1850, %v2010
  %v2012 = vpop.f32.mrb[0].mxu0
  %v2013 = vpop.f32.mrb[0].mxu0
  %v2014 = vadd.f32 %v1850, %v2013
  %v2015 = vpop.f32.mrb[0].mxu0
  %2016 = vmatprep.mubr.bf16.mxu0 0
  %2017 = vmatmul.mubr.bf16.gmra.mrb[0].mxu0 %v1874
  %v2018 = vpop.f32.mrb[0].mxu0
  %v2019 = vadd.f32 %v1850, %v2018
  %v2020 = vpop.f32.mrb[0].mxu0
  %v2021 = vpop.f32.mrb[0].mxu0
  %v2022 = vadd.f32 %v1850, %v2021
  %v2023 = vpop.f32.mrb[0].mxu0
  %2024 = vmatprep.mubr.bf16.mxu0 0
  %2025 = vmatmul.mubr.bf16.gmra.mrb[0].mxu0 %v1877
  %v2026 = vpop.f32.mrb[0].mxu0
  %v2027 = vadd.f32 %v1850, %v2026
  %v2028 = vpop.f32.mrb[0].mxu0
  %v2029 = vpop.f32.mrb[0].mxu0
  %v2030 = vadd.f32 %v1850, %v2029
  %v2031 = vpop.f32.mrb[0].mxu0
  %2032 = vmatprep.mubr.bf16.mxu0 0
  %2033 = vmatmul.mubr.bf16.gmra.mrb[0].mxu0 %v1880
  %v2034 = vpop.f32.mrb[0].mxu0
  %v2035 = vadd.f32 %v1850, %v2034
  %v2036 = vpop.f32.mrb[0].mxu0
  %v2037 = vpop.f32.mrb[0].mxu0
  %v2038 = vadd.f32 %v1850, %v2037
  %v2039 = vpop.f32.mrb[0].mxu0
  %2040 = vmatprep.mubr.bf16.mxu0 0
  %2041 = vmatmul.mubr.bf16.gmra.mrb[0].mxu0 %v1883
  %v2042 = vpop.f32.mrb[0].mxu0
  %v2043 = vadd.f32 %v1850, %v2042
  %v2044 = vpop.f32.mrb[0].mxu0
  %v2045 = vpop.f32.mrb[0].mxu0
  %v2046 = vadd.f32 %v1850, %v2045
  %v2047 = vpop.f32.mrb[0].mxu0
  %2048 = vmatprep.mubr.bf16.mxu0 0
  %2049 = vmatmul.mubr.bf16.gmra.mrb[0].mxu0 %v1886
  %v2050 = vpop.f32.mrb[0].mxu0
  %v2051 = vadd.f32 %v1850, %v2050
  %v2052 = vpop.f32.mrb[0].mxu0
  %v2053 = vpop.f32.mrb[0].mxu0
  %v2054 = vadd.f32 %v1850, %v2053
  %v2055 = vpop.f32.mrb[0].mxu0
  %2056 = vmatprep.mubr.bf16.mxu0 0
  %2057 = vmatmul.mubr.bf16.gmra.mrb[0].mxu0 %v1889
  %v2058 = vpop.f32.mrb[0].mxu0
  %v2059 = vadd.f32 %v1850, %v2058
  %v2060 = vpop.f32.mrb[0].mxu0
  %v2061 = vpop.f32.mrb[0].mxu0
  %v2062 = vadd.f32 %v1850, %v2061
  %v2063 = vpop.f32.mrb[0].mxu0
  %2064 = vmatprep.mubr.bf16.mxu0 0
  %2065 = vmatmul.mubr.bf16.gmra.mrb[0].mxu0 %v1892
  %v2066 = vpop.f32.mrb[0].mxu0
  %v2067 = vadd.f32 %v1850, %v2066
  %v2068 = vpop.f32.mrb[0].mxu0
  %v2069 = vpop.f32.mrb[0].mxu0
  %v2070 = vadd.f32 %v1850, %v2069
  %v2071 = vpop.f32.mrb[0].mxu0
  %2072 = vmatprep.mubr.bf16.mxu0 0
  %2073 = vmatmul.mubr.bf16.gmra.mrb[0].mxu0 %v1895
  %v2074 = vpop.f32.mrb[0].mxu0
  %v2075 = vadd.f32 %v1850, %v2074
  %v2076 = vpop.f32.mrb[0].mxu0
  %v2077 = vpop.f32.mrb[0].mxu0
  %v2078 = vadd.f32 %v1850, %v2077
  %v2079 = vpop.f32.mrb[0].mxu0
  %2080 = vmatprep.mubr.bf16.mxu0 0
  %2081 = vmatmul.mubr.bf16.gmra.mrb[0].mxu0 %v1898
  %v2082 = vpop.f32.mrb[0].mxu0
  %v2083 = vadd.f32 %v1850, %v2082
  %v2084 = vpop.f32.mrb[0].mxu0
  %v2085 = vpop.f32.mrb[0].mxu0
  %v2086 = vadd.f32 %v1850, %v2085
  %v2087 = vpop.f32.mrb[0].mxu0
  %2088 = vmatprep.mubr.bf16.mxu0 0
  %2089 = vmatmul.mubr.bf16.gmra.mrb[0].mxu0 %v1901
  %v2090 = vpop.f32.mrb[0].mxu0
  %v2091 = vadd.f32 %v1850, %v2090
  %v2092 = vpop.f32.mrb[0].mxu0
  %v2093 = vpop.f32.mrb[0].mxu0
  %v2094 = vadd.f32 %v1850, %v2093
  %v2095 = vpop.f32.mrb[0].mxu0
  %2096 = vmatprep.mubr.bf16.mxu0 0
  %2097 = vmatmul.mubr.bf16.gmra.mrb[0].mxu0 %v1904
  %v2098 = vpop.f32.mrb[0].mxu0
  %v2099 = vadd.f32 %v1850, %v2098
  %v2100 = vpop.f32.mrb[0].mxu0
  %v2101 = vpop.f32.mrb[0].mxu0
  %v2102 = vadd.f32 %v1850, %v2101
  %v2103 = vpop.f32.mrb[0].mxu0
  %2104 = vmatprep.mubr.bf16.mxu0 0
  %2105 = vmatmul.mubr.bf16.gmra.mrb[0].mxu0 %v1907
  %v2106 = vpop.f32.mrb[0].mxu0
  %v2107 = vadd.f32 %v1850, %v2106
  %v2108 = vpop.f32.mrb[0].mxu0
  %v2109 = vpop.f32.mrb[0].mxu0
  %v2110 = vadd.f32 %v1850, %v2109
  %v2111 = vpop.f32.mrb[0].mxu0
  %2112 = vmatprep.mubr.bf16.mxu0 0
  %2113 = vmatmul.mubr.bf16.gmra.mrb[0].mxu0 %v1910
  %v2114 = vpop.f32.mrb[0].mxu0
  %v2115 = vadd.f32 %v1850, %v2114
  %v2116 = vpop.f32.mrb[0].mxu0
  %v2117 = vpop.f32.mrb[0].mxu0
  %v2118 = vadd.f32 %v1850, %v2117
  %v2119 = vpop.f32.mrb[0].mxu0
  %2120 = vmatprep.mubr.bf16.mxu0 0
  %2121 = vmatmul.mubr.bf16.gmra.mrb[0].mxu0 %v1913
  %v2122 = vpop.f32.mrb[0].mxu0
  %v2123 = vadd.f32 %v1850, %v2122
  %v2124 = vpop.f32.mrb[0].mxu0
  %v2125 = vpop.f32.mrb[0].mxu0
  %v2126 = vadd.f32 %v1850, %v2125
  %v2127 = vpop.f32.mrb[0].mxu0
  %2128 = vmatprep.mubr.bf16.mxu0 0
  %2129 = vmatmul.mubr.bf16.gmra.mrb[0].mxu0 %v1916
  %v2130 = vpop.f32.mrb[0].mxu0
  %v2131 = vadd.f32 %v1850, %v2130
  %v2132 = vpop.f32.mrb[0].mxu0
  %v2133 = vpop.f32.mrb[0].mxu0
  %v2134 = vadd.f32 %v1850, %v2133
  %v2135 = vpop.f32.mrb[0].mxu0
  %2136 = vmatprep.mubr.bf16.mxu0 0
  %2137 = vmatmul.mubr.bf16.gmra.mrb[0].mxu0 %v1919
  %v2138 = vpop.f32.mrb[0].mxu0
  %v2139 = vadd.f32 %v1850, %v2138
  %v2140 = vpop.f32.mrb[0].mxu0
  %v2141 = vpop.f32.mrb[0].mxu0
  %v2142 = vadd.f32 %v1850, %v2141
  %v2143 = vpop.f32.mrb[0].mxu0
  %2144 = vmatprep.mubr.bf16.mxu0 0
  %2145 = vmatmul.mubr.bf16.gmra.mrb[0].mxu0 %v1922
  %v2146 = vpop.f32.mrb[0].mxu0
  %v2147 = vadd.f32 %v1850, %v2146
  %v2148 = vpop.f32.mrb[0].mxu0
  %v2149 = vpop.f32.mrb[0].mxu0
  %v2150 = vadd.f32 %v1850, %v2149
  %v2151 = vpop.f32.mrb[0].mxu0
  %2152 = vmatprep.mubr.bf16.mxu0 0
  %2153 = vmatmul.mubr.bf16.gmra.mrb[0].mxu0 %v1925
  %v2154 = vpop.f32.mrb[0].mxu0
  %v2155 = vadd.f32 %v1850, %v2154
  %v2156 = vpop.f32.mrb[0].mxu0
  %v2157 = vpop.f32.mrb[0].mxu0
  %v2158 = vadd.f32 %v1850, %v2157
  %v2159 = vpop.f32.mrb[0].mxu0
  %2160 = vmatprep.mubr.bf16.mxu0 0
  %2161 = vmatmul.mubr.bf16.gmra.mrb[0].mxu0 %v1928
  %v2162 = vpop.f32.mrb[0].mxu0
  %v2163 = vadd.f32 %v1850, %v2162
  %v2164 = vpop.f32.mrb[0].mxu0
  %v2165 = vpop.f32.mrb[0].mxu0
  %v2166 = vadd.f32 %v1850, %v2165
  %v2167 = vpop.f32.mrb[0].mxu0
  %2168 = vmatprep.mubr.bf16.mxu0 0
  %2169 = vmatmul.mubr.bf16.gmra.mrb[0].mxu0 %v1931
  %v2170 = vpop.f32.mrb[0].mxu0
  %v2171 = vadd.f32 %v1850, %v2170
  %v2172 = vpop.f32.mrb[0].mxu0
  %v2173 = vpop.f32.mrb[0].mxu0
  %v2174 = vadd.f32 %v1850, %v2173
  %v2175 = vpop.f32.mrb[0].mxu0
  %2176 = vmatprep.mubr.bf16.mxu0 0
  %2177 = vmatmul.mubr.bf16.gmra.mrb[0].mxu0 %v1934
  %v2178 = vpop.f32.mrb[0].mxu0
  %v2179 = vadd.f32 %v1850, %v2178
  %v2180 = vpop.f32.mrb[0].mxu0
  %v2181 = vpop.f32.mrb[0].mxu0
  %v2182 = vadd.f32 %v1850, %v2181
  %v2183 = vpop.f32.mrb[0].mxu0
  %2184 = vmatprep.mubr.bf16.mxu0 0
  %2185 = vmatmul.mubr.bf16.gmra.mrb[0].mxu0 %v1937
  %v2186 = vpop.f32.mrb[0].mxu0
  %v2187 = vadd.f32 %v1850, %v2186
  %v2188 = vpop.f32.mrb[0].mxu0
  %v2189 = vpop.f32.mrb[0].mxu0
  %v2190 = vadd.f32 %v1850, %v2189
  %v2191 = vpop.f32.mrb[0].mxu0
  %2192 = vmatprep.mubr.bf16.mxu0 0
  %2193 = vmatmul.mubr.bf16.gmra.mrb[0].mxu0 %v1940
  %v2194 = vpop.f32.mrb[0].mxu0
  %v2195 = vadd.f32 %v1850, %v2194
  %v2196 = vpop.f32.mrb[0].mxu0
  %v2197 = vpop.f32.mrb[0].mxu0
  %v2198 = vadd.f32 %v1850, %v2197
  %v2199 = vpop.f32.mrb[0].mxu0
  %2200 = vmatprep.mubr.bf16.mxu0 0
  %2201 = vmatmul.mubr.bf16.gmra.mrb[0].mxu0 %v1943
  %v2202 = vpop.f32.mrb[0].mxu0
  %v2203 = vadd.f32 %v1850, %v2202
  %v2204 = vpop.f32.mrb[0].mxu0
  %v2205 = vpop.f32.mrb[0].mxu0
  %v2206 = vadd.f32 %v1850, %v2205
  %v2207 = vpop.f32.mrb[0].mxu0
  %2208 = vmatprep.mubr.bf16.mxu0 0
  %2209 = vmatmul.mubr.bf16.gmra.mrb[0].mxu0 %v1946
  %v2210 = vpop.f32.mrb[0].mxu0
  %v2211 = vadd.f32 %v1850, %v2210
  %v2212 = vpop.f32.mrb[0].mxu0
  %v2213 = vpop.f32.mrb[0].mxu0
  %v2214 = vadd.f32 %v1850, %v2213
  %v2215 = vpop.f32.mrb[0].mxu0
  %2216 = vmatprep.mubr.bf16.mxu0 0
  %2217 = vmatmul.mubr.bf16.gmra.mrb[0].mxu0 %v1949
  %v2218 = vpop.f32.mrb[0].mxu0
  %v2219 = vadd.f32 %v1850, %v2218
  %v2220 = vpop.f32.mrb[0].mxu0
  %v2221 = vpop.f32.mrb[0].mxu0
  %v2222 = vadd.f32 %v1850, %v2221
  %v2223 = vpop.f32.mrb[0].mxu0
  %2224 = vmatprep.mubr.bf16.mxu0 0
  %2225 = vmatmul.mubr.bf16.gmra.mrb[0].mxu0 %v1952
  %v2226 = vpop.f32.mrb[0].mxu0
  %v2227 = vadd.f32 %v1850, %v2226
  %v2228 = vpop.f32.mrb[0].mxu0
  %v2229 = vpop.f32.mrb[0].mxu0
  %v2230 = vadd.f32 %v1850, %v2229
  %v2231 = vpop.f32.mrb[0].mxu0
  %2232 = vmatprep.mubr.bf16.mxu0 0
  %2233 = vmatmul.mubr.bf16.gmra.mrb[0].mxu0 %v1955
  %v2234 = vpop.f32.mrb[0].mxu0
  %v2235 = vadd.f32 %v1850, %v2234
  %v2236 = vpop.f32.mrb[0].mxu0
  %v2237 = vpop.f32.mrb[0].mxu0
  %v2238 = vadd.f32 %v1850, %v2237
  %v2239 = vpop.f32.mrb[0].mxu0
  %2240 = vmatprep.mubr.bf16.mxu0 0
  %2241 = vmatmul.mubr.bf16.gmra.mrb[0].mxu0 %v1958
  %v2242 = vpop.f32.mrb[0].mxu0
  %v2243 = vadd.f32 %v1850, %v2242
  %v2244 = vpop.f32.mrb[0].mxu0
  %v2245 = vpop.f32.mrb[0].mxu0
  %v2246 = vadd.f32 %v1850, %v2245
  %v2247 = vpop.f32.mrb[0].mxu0
  %2248 = vdwg.mxu0
  %v2249 = vmax.f32 %v1995, 0.0
  %v2250 = vmax.f32 %v1998, 0.0
  %v2251 = vmax.f32 %v2003, 0.0
  %v2252 = vmax.f32 %v2006, 0.0
  %v2253 = vmax.f32 %v2011, 0.0
  %v2254 = vmax.f32 %v2014, 0.0
  %v2255 = vmax.f32 %v2019, 0.0
  %v2256 = vmax.f32 %v2022, 0.0
  %v2257 = vmax.f32 %v2027, 0.0
  %v2258 = vmax.f32 %v2030, 0.0
  %v2259 = vmax.f32 %v2035, 0.0
  %v2260 = vmax.f32 %v2038, 0.0
  %v2261 = vmax.f32 %v2043, 0.0
  %v2262 = vmax.f32 %v2046, 0.0
  %v2263 = vmax.f32 %v2051, 0.0
  %v2264 = vmax.f32 %v2054, 0.0
  %v2265 = vmax.f32 %v2059, 0.0
  %v2266 = vmax.f32 %v2062, 0.0
  %v2267 = vmax.f32 %v2067, 0.0
  %v2268 = vmax.f32 %v2070, 0.0
  %v2269 = vmax.f32 %v2075, 0.0
  %v2270 = vmax.f32 %v2078, 0.0
  %v2271 = vmax.f32 %v2083, 0.0
  %v2272 = vmax.f32 %v2086, 0.0
  %v2273 = vmax.f32 %v2091, 0.0
  %v2274 = vmax.f32 %v2094, 0.0
  %v2275 = vmax.f32 %v2099, 0.0
  %v2276 = vmax.f32 %v2102, 0.0
  %v2277 = vmax.f32 %v2107, 0.0
  %v2278 = vmax.f32 %v2110, 0.0
  %v2279 = vmax.f32 %v2115, 0.0
  %v2280 = vmax.f32 %v2118, 0.0
  %v2281 = vmax.f32 %v2123, 0.0
  %v2282 = vmax.f32 %v2126, 0.0
  %v2283 = vmax.f32 %v2131, 0.0
  %v2284 = vmax.f32 %v2134, 0.0
  %v2285 = vmax.f32 %v2139, 0.0
  %v2286 = vmax.f32 %v2142, 0.0
  %v2287 = vmax.f32 %v2147, 0.0
  %v2288 = vmax.f32 %v2150, 0.0
  %v2289 = vmax.f32 %v2155, 0.0
  %v2290 = vmax.f32 %v2158, 0.0
  %v2291 = vmax.f32 %v2163, 0.0
  %v2292 = vmax.f32 %v2166, 0.0
  %v2293 = vmax.f32 %v2171, 0.0
  %v2294 = vmax.f32 %v2174, 0.0
  %v2295 = vmax.f32 %v2179, 0.0
  %v2296 = vmax.f32 %v2182, 0.0
  %v2297 = vmax.f32 %v2187, 0.0
  %v2298 = vmax.f32 %v2190, 0.0
  %v2299 = vmax.f32 %v2195, 0.0
  %v2300 = vmax.f32 %v2198, 0.0
  %v2301 = vmax.f32 %v2203, 0.0
  %v2302 = vmax.f32 %v2206, 0.0
  %v2303 = vmax.f32 %v2211, 0.0
  %v2304 = vmax.f32 %v2214, 0.0
  %v2305 = vmax.f32 %v2219, 0.0
  %v2306 = vmax.f32 %v2222, 0.0
  %v2307 = vmax.f32 %v2227, 0.0
  %v2308 = vmax.f32 %v2230, 0.0
  %v2309 = vmax.f32 %v2235, 0.0
  %v2310 = vmax.f32 %v2238, 0.0
  %v2311 = vmax.f32 %v2243, 0.0
  %v2312 = vmax.f32 %v2246, 0.0
  %v2313 = vpack.c.bf16 %v2250, %v2249
  %v2314 = vpack.c.bf16 %v2252, %v2251
  %v2315 = vpack.c.bf16 %v2254, %v2253
  %v2316 = vpack.c.bf16 %v2256, %v2255
  %v2317 = vpack.c.bf16 %v2258, %v2257
  %v2318 = vpack.c.bf16 %v2260, %v2259
  %v2319 = vpack.c.bf16 %v2262, %v2261
  %v2320 = vpack.c.bf16 %v2264, %v2263
  %v2321 = vpack.c.bf16 %v2266, %v2265
  %v2322 = vpack.c.bf16 %v2268, %v2267
  %v2323 = vpack.c.bf16 %v2270, %v2269
  %v2324 = vpack.c.bf16 %v2272, %v2271
  %v2325 = vpack.c.bf16 %v2274, %v2273
  %v2326 = vpack.c.bf16 %v2276, %v2275
  %v2327 = vpack.c.bf16 %v2278, %v2277
  %v2328 = vpack.c.bf16 %v2280, %v2279
  %v2329 = vpack.c.bf16 %v2282, %v2281
  %v2330 = vpack.c.bf16 %v2284, %v2283
  %v2331 = vpack.c.bf16 %v2286, %v2285
  %v2332 = vpack.c.bf16 %v2288, %v2287
  %v2333 = vpack.c.bf16 %v2290, %v2289
  %v2334 = vpack.c.bf16 %v2292, %v2291
  %v2335 = vpack.c.bf16 %v2294, %v2293
  %v2336 = vpack.c.bf16 %v2296, %v2295
  %v2337 = vpack.c.bf16 %v2298, %v2297
  %v2338 = vpack.c.bf16 %v2300, %v2299
  %v2339 = vpack.c.bf16 %v2302, %v2301
  %v2340 = vpack.c.bf16 %v2304, %v2303
  %v2341 = vpack.c.bf16 %v2306, %v2305
  %v2342 = vpack.c.bf16 %v2308, %v2307
  %v2343 = vpack.c.bf16 %v2310, %v2309
  %v2344 = vpack.c.bf16 %v2312, %v2311
  %v2345 = vld [vmem:[%s1 + $0x50] sm:$0xf]
  %v2346 = vld [vmem:[%s1 + $0x54] sm:$0xf]
  %v2347 = vld [vmem:[%s1 + $0x58] sm:$0xf]
  %v2348 = vld [vmem:[%s1 + $0x5c] sm:$0xf]
  %v2349 = vld [vmem:[%s1 + $0x60] sm:$0xf]
  %v2350 = vld [vmem:[%s1 + $0x64] sm:$0xf]
  %v2351 = vld [vmem:[%s1 + $0x68] sm:$0xf]
  %v2352 = vld [vmem:[%s1 + $0x6c] sm:$0xf]
  %v2353 = vld [vmem:[%s2 + $0x8] sm:$0x1]
  %v2354 = vlaneseq
  %v2355 = vshrl.u32 %v2354, 7
  %v2356 = vsub.s32 0, %v2355
  %v2357 = vrot.slane %v2353, %v2356
  %v2366 = vunpack.c.l.b16 %v2345
  %v2367 = vunpack.c.l.b16 %v2346
  %v2368 = vunpack.c.l.b16 %v2347
  %v2369 = vunpack.c.l.b16 %v2348
  %v2370 = vunpack.c.l.b16 %v2349
  %v2371 = vunpack.c.l.b16 %v2350
  %v2372 = vunpack.c.l.b16 %v2351
  %v2373 = vunpack.c.l.b16 %v2352
  %v2374 = vpack.c.b16 %v2367, %v2366
  %v2375 = vpack.c.b16 %v2369, %v2368
  %v2376 = vpack.c.b16 %v2371, %v2370
  %v2377 = vpack.c.b16 %v2373, %v2372
  %vm2382 = vcmask 523264
  %v2384 = vsel %vm2382, %v2313, 0
  %v2387 = vsel %vm2382, %v2314, 0
  %v2390 = vsel %vm2382, %v2315, 0
  %v2393 = vsel %vm2382, %v2316, 0
  %v2396 = vsel %vm2382, %v2317, 0
  %v2399 = vsel %vm2382, %v2318, 0
  %v2402 = vsel %vm2382, %v2319, 0
  %v2405 = vsel %vm2382, %v2320, 0
  %v2408 = vsel %vm2382, %v2321, 0
  %v2411 = vsel %vm2382, %v2322, 0
  %v2414 = vsel %vm2382, %v2323, 0
  %v2417 = vsel %vm2382, %v2324, 0
  %v2420 = vsel %vm2382, %v2325, 0
  %v2423 = vsel %vm2382, %v2326, 0
  %v2426 = vsel %vm2382, %v2327, 0
  %v2429 = vsel %vm2382, %v2328, 0
  %v2432 = vsel %vm2382, %v2329, 0
  %v2435 = vsel %vm2382, %v2330, 0
  %v2438 = vsel %vm2382, %v2331, 0
  %v2441 = vsel %vm2382, %v2332, 0
  %v2444 = vsel %vm2382, %v2333, 0
  %v2447 = vsel %vm2382, %v2334, 0
  %v2450 = vsel %vm2382, %v2335, 0
  %v2453 = vsel %vm2382, %v2336, 0
  %v2456 = vsel %vm2382, %v2337, 0
  %v2459 = vsel %vm2382, %v2338, 0
  %v2462 = vsel %vm2382, %v2339, 0
  %v2465 = vsel %vm2382, %v2340, 0
  %v2468 = vsel %vm2382, %v2341, 0
  %v2471 = vsel %vm2382, %v2342, 0
  %v2474 = vsel %vm2382, %v2343, 0
  %v2477 = vsel %vm2382, %v2344, 0
  %2479 = vmatprep.subr.bf16.mxu0 0
  %2480 = vmatpush1.bf16.msra.mxu0 %v2374
  %2481 = vmatprep.subr.bf16.mxu0 0
  %2482 = vmatpush1.bf16.msra.mxu0 %v2375
  %2483 = vmatprep.subr.bf16.mxu0 0
  %2484 = vmatpush1.bf16.msra.mxu0 %v2376
  %2485 = vmatprep.subr.bf16.mxu0 0
  %2486 = vmatpush1.bf16.msra.mxu0 %v2377
  %2487 = vmatprep.subr.bf16.mxu0 0
  %2488 = vmatpush1.bf16.msra.mxu0 0
  %2489 = vmatprep.subr.bf16.mxu0 0
  %2490 = vmatpush1.bf16.msra.mxu0 0
  %2491 = vmatprep.subr.bf16.mxu0 0
  %2492 = vmatpush1.bf16.msra.mxu0 0
  %2493 = vmatprep.subr.bf16.mxu0 0
  %2494 = vmatpush1.bf16.msra.mxu0 0
  %2495 = vmatprep.subr.bf16.mxu0 0
  %2496 = vmatpush1.bf16.msra.mxu0 0
  %2497 = vmatprep.subr.bf16.mxu0 0
  %2498 = vmatpush1.bf16.msra.mxu0 0
  %2499 = vmatprep.subr.bf16.mxu0 0
  %2500 = vmatpush1.bf16.msra.mxu0 0
  %2501 = vmatprep.subr.bf16.mxu0 0
  %2502 = vmatpush1.bf16.msra.mxu0 0
  %2503 = vmatprep.subr.bf16.mxu0 0
  %2504 = vmatpush1.bf16.msra.mxu0 0
  %2505 = vmatprep.subr.bf16.mxu0 0
  %2506 = vmatpush1.bf16.msra.mxu0 0
  %2507 = vmatprep.subr.bf16.mxu0 0
  %2508 = vmatpush1.bf16.msra.mxu0 0
  %2509 = vmatprep.subr.bf16.mxu0 0
  %2510 = vmatpush1.bf16.msra.mxu0 0
  %2511 = vmatprep.mubr.bf16.mxu0 0
  %2512 = vmatmul.mubr.bf16.gmra.mrb[0].mxu0 %v2384
  %v2513 = vpop.f32.mrb[0].mxu0
  %v2514 = vadd.f32 %v2357, %v2513
  %v2515 = vpop.f32.mrb[0].mxu0
  %v2516 = vpop.f32.mrb[0].mxu0
  %v2517 = vadd.f32 %v2357, %v2516
  %v2518 = vpop.f32.mrb[0].mxu0
  %2519 = vmatprep.mubr.bf16.mxu0 0
  %2520 = vmatmul.mubr.bf16.gmra.mrb[0].mxu0 %v2387
  %v2521 = vpop.f32.mrb[0].mxu0
  %v2522 = vadd.f32 %v2357, %v2521
  %v2523 = vpop.f32.mrb[0].mxu0
  %v2524 = vpop.f32.mrb[0].mxu0
  %v2525 = vadd.f32 %v2357, %v2524
  %v2526 = vpop.f32.mrb[0].mxu0
  %2527 = vmatprep.mubr.bf16.mxu0 0
  %2528 = vmatmul.mubr.bf16.gmra.mrb[0].mxu0 %v2390
  %v2529 = vpop.f32.mrb[0].mxu0
  %v2530 = vadd.f32 %v2357, %v2529
  %v2531 = vpop.f32.mrb[0].mxu0
  %v2532 = vpop.f32.mrb[0].mxu0
  %v2533 = vadd.f32 %v2357, %v2532
  %v2534 = vpop.f32.mrb[0].mxu0
  %2535 = vmatprep.mubr.bf16.mxu0 0
  %2536 = vmatmul.mubr.bf16.gmra.mrb[0].mxu0 %v2393
  %v2537 = vpop.f32.mrb[0].mxu0
  %v2538 = vadd.f32 %v2357, %v2537
  %v2539 = vpop.f32.mrb[0].mxu0
  %v2540 = vpop.f32.mrb[0].mxu0
  %v2541 = vadd.f32 %v2357, %v2540
  %v2542 = vpop.f32.mrb[0].mxu0
  %2543 = vmatprep.mubr.bf16.mxu0 0
  %2544 = vmatmul.mubr.bf16.gmra.mrb[0].mxu0 %v2396
  %v2545 = vpop.f32.mrb[0].mxu0
  %v2546 = vadd.f32 %v2357, %v2545
  %v2547 = vpop.f32.mrb[0].mxu0
  %v2548 = vpop.f32.mrb[0].mxu0
  %v2549 = vadd.f32 %v2357, %v2548
  %v2550 = vpop.f32.mrb[0].mxu0
  %2551 = vmatprep.mubr.bf16.mxu0 0
  %2552 = vmatmul.mubr.bf16.gmra.mrb[0].mxu0 %v2399
  %v2553 = vpop.f32.mrb[0].mxu0
  %v2554 = vadd.f32 %v2357, %v2553
  %v2555 = vpop.f32.mrb[0].mxu0
  %v2556 = vpop.f32.mrb[0].mxu0
  %v2557 = vadd.f32 %v2357, %v2556
  %v2558 = vpop.f32.mrb[0].mxu0
  %2559 = vmatprep.mubr.bf16.mxu0 0
  %2560 = vmatmul.mubr.bf16.gmra.mrb[0].mxu0 %v2402
  %v2561 = vpop.f32.mrb[0].mxu0
  %v2562 = vadd.f32 %v2357, %v2561
  %v2563 = vpop.f32.mrb[0].mxu0
  %v2564 = vpop.f32.mrb[0].mxu0
  %v2565 = vadd.f32 %v2357, %v2564
  %v2566 = vpop.f32.mrb[0].mxu0
  %2567 = vmatprep.mubr.bf16.mxu0 0
  %2568 = vmatmul.mubr.bf16.gmra.mrb[0].mxu0 %v2405
  %v2569 = vpop.f32.mrb[0].mxu0
  %v2570 = vadd.f32 %v2357, %v2569
  %v2571 = vpop.f32.mrb[0].mxu0
  %v2572 = vpop.f32.mrb[0].mxu0
  %v2573 = vadd.f32 %v2357, %v2572
  %v2574 = vpop.f32.mrb[0].mxu0
  %2575 = vmatprep.mubr.bf16.mxu0 0
  %2576 = vmatmul.mubr.bf16.gmra.mrb[0].mxu0 %v2408
  %v2577 = vpop.f32.mrb[0].mxu0
  %v2578 = vadd.f32 %v2357, %v2577
  %v2579 = vpop.f32.mrb[0].mxu0
  %v2580 = vpop.f32.mrb[0].mxu0
  %v2581 = vadd.f32 %v2357, %v2580
  %v2582 = vpop.f32.mrb[0].mxu0
  %2583 = vmatprep.mubr.bf16.mxu0 0
  %2584 = vmatmul.mubr.bf16.gmra.mrb[0].mxu0 %v2411
  %v2585 = vpop.f32.mrb[0].mxu0
  %v2586 = vadd.f32 %v2357, %v2585
  %v2587 = vpop.f32.mrb[0].mxu0
  %v2588 = vpop.f32.mrb[0].mxu0
  %v2589 = vadd.f32 %v2357, %v2588
  %v2590 = vpop.f32.mrb[0].mxu0
  %2591 = vmatprep.mubr.bf16.mxu0 0
  %2592 = vmatmul.mubr.bf16.gmra.mrb[0].mxu0 %v2414
  %v2593 = vpop.f32.mrb[0].mxu0
  %v2594 = vadd.f32 %v2357, %v2593
  %v2595 = vpop.f32.mrb[0].mxu0
  %v2596 = vpop.f32.mrb[0].mxu0
  %v2597 = vadd.f32 %v2357, %v2596
  %v2598 = vpop.f32.mrb[0].mxu0
  %2599 = vmatprep.mubr.bf16.mxu0 0
  %2600 = vmatmul.mubr.bf16.gmra.mrb[0].mxu0 %v2417
  %v2601 = vpop.f32.mrb[0].mxu0
  %v2602 = vadd.f32 %v2357, %v2601
  %v2603 = vpop.f32.mrb[0].mxu0
  %v2604 = vpop.f32.mrb[0].mxu0
  %v2605 = vadd.f32 %v2357, %v2604
  %v2606 = vpop.f32.mrb[0].mxu0
  %2607 = vmatprep.mubr.bf16.mxu0 0
  %2608 = vmatmul.mubr.bf16.gmra.mrb[0].mxu0 %v2420
  %v2609 = vpop.f32.mrb[0].mxu0
  %v2610 = vadd.f32 %v2357, %v2609
  %v2611 = vpop.f32.mrb[0].mxu0
  %v2612 = vpop.f32.mrb[0].mxu0
  %v2613 = vadd.f32 %v2357, %v2612
  %v2614 = vpop.f32.mrb[0].mxu0
  %2615 = vmatprep.mubr.bf16.mxu0 0
  %2616 = vmatmul.mubr.bf16.gmra.mrb[0].mxu0 %v2423
  %v2617 = vpop.f32.mrb[0].mxu0
  %v2618 = vadd.f32 %v2357, %v2617
  %v2619 = vpop.f32.mrb[0].mxu0
  %v2620 = vpop.f32.mrb[0].mxu0
  %v2621 = vadd.f32 %v2357, %v2620
  %v2622 = vpop.f32.mrb[0].mxu0
  %2623 = vmatprep.mubr.bf16.mxu0 0
  %2624 = vmatmul.mubr.bf16.gmra.mrb[0].mxu0 %v2426
  %v2625 = vpop.f32.mrb[0].mxu0
  %v2626 = vadd.f32 %v2357, %v2625
  %v2627 = vpop.f32.mrb[0].mxu0
  %v2628 = vpop.f32.mrb[0].mxu0
  %v2629 = vadd.f32 %v2357, %v2628
  %v2630 = vpop.f32.mrb[0].mxu0
  %2631 = vmatprep.mubr.bf16.mxu0 0
  %2632 = vmatmul.mubr.bf16.gmra.mrb[0].mxu0 %v2429
  %v2633 = vpop.f32.mrb[0].mxu0
  %v2634 = vadd.f32 %v2357, %v2633
  %v2635 = vpop.f32.mrb[0].mxu0
  %v2636 = vpop.f32.mrb[0].mxu0
  %v2637 = vadd.f32 %v2357, %v2636
  %v2638 = vpop.f32.mrb[0].mxu0
  %2639 = vmatprep.mubr.bf16.mxu0 0
  %2640 = vmatmul.mubr.bf16.gmra.mrb[0].mxu0 %v2432
  %v2641 = vpop.f32.mrb[0].mxu0
  %v2642 = vadd.f32 %v2357, %v2641
  %v2643 = vpop.f32.mrb[0].mxu0
  %v2644 = vpop.f32.mrb[0].mxu0
  %v2645 = vadd.f32 %v2357, %v2644
  %v2646 = vpop.f32.mrb[0].mxu0
  %2647 = vmatprep.mubr.bf16.mxu0 0
  %2648 = vmatmul.mubr.bf16.gmra.mrb[0].mxu0 %v2435
  %v2649 = vpop.f32.mrb[0].mxu0
  %v2650 = vadd.f32 %v2357, %v2649
  %v2651 = vpop.f32.mrb[0].mxu0
  %v2652 = vpop.f32.mrb[0].mxu0
  %v2653 = vadd.f32 %v2357, %v2652
  %v2654 = vpop.f32.mrb[0].mxu0
  %2655 = vmatprep.mubr.bf16.mxu0 0
  %2656 = vmatmul.mubr.bf16.gmra.mrb[0].mxu0 %v2438
  %v2657 = vpop.f32.mrb[0].mxu0
  %v2658 = vadd.f32 %v2357, %v2657
  %v2659 = vpop.f32.mrb[0].mxu0
  %v2660 = vpop.f32.mrb[0].mxu0
  %v2661 = vadd.f32 %v2357, %v2660
  %v2662 = vpop.f32.mrb[0].mxu0
  %2663 = vmatprep.mubr.bf16.mxu0 0
  %2664 = vmatmul.mubr.bf16.gmra.mrb[0].mxu0 %v2441
  %v2665 = vpop.f32.mrb[0].mxu0
  %v2666 = vadd.f32 %v2357, %v2665
  %v2667 = vpop.f32.mrb[0].mxu0
  %v2668 = vpop.f32.mrb[0].mxu0
  %v2669 = vadd.f32 %v2357, %v2668
  %v2670 = vpop.f32.mrb[0].mxu0
  %2671 = vmatprep.mubr.bf16.mxu0 0
  %2672 = vmatmul.mubr.bf16.gmra.mrb[0].mxu0 %v2444
  %v2673 = vpop.f32.mrb[0].mxu0
  %v2674 = vadd.f32 %v2357, %v2673
  %v2675 = vpop.f32.mrb[0].mxu0
  %v2676 = vpop.f32.mrb[0].mxu0
  %v2677 = vadd.f32 %v2357, %v2676
  %v2678 = vpop.f32.mrb[0].mxu0
  %2679 = vmatprep.mubr.bf16.mxu0 0
  %2680 = vmatmul.mubr.bf16.gmra.mrb[0].mxu0 %v2447
  %v2681 = vpop.f32.mrb[0].mxu0
  %v2682 = vadd.f32 %v2357, %v2681
  %v2683 = vpop.f32.mrb[0].mxu0
  %v2684 = vpop.f32.mrb[0].mxu0
  %v2685 = vadd.f32 %v2357, %v2684
  %v2686 = vpop.f32.mrb[0].mxu0
  %2687 = vmatprep.mubr.bf16.mxu0 0
  %2688 = vmatmul.mubr.bf16.gmra.mrb[0].mxu0 %v2450
  %v2689 = vpop.f32.mrb[0].mxu0
  %v2690 = vadd.f32 %v2357, %v2689
  %v2691 = vpop.f32.mrb[0].mxu0
  %v2692 = vpop.f32.mrb[0].mxu0
  %v2693 = vadd.f32 %v2357, %v2692
  %v2694 = vpop.f32.mrb[0].mxu0
  %2695 = vmatprep.mubr.bf16.mxu0 0
  %2696 = vmatmul.mubr.bf16.gmra.mrb[0].mxu0 %v2453
  %v2697 = vpop.f32.mrb[0].mxu0
  %v2698 = vadd.f32 %v2357, %v2697
  %v2699 = vpop.f32.mrb[0].mxu0
  %v2700 = vpop.f32.mrb[0].mxu0
  %v2701 = vadd.f32 %v2357, %v2700
  %v2702 = vpop.f32.mrb[0].mxu0
  %2703 = vmatprep.mubr.bf16.mxu0 0
  %2704 = vmatmul.mubr.bf16.gmra.mrb[0].mxu0 %v2456
  %v2705 = vpop.f32.mrb[0].mxu0
  %v2706 = vadd.f32 %v2357, %v2705
  %v2707 = vpop.f32.mrb[0].mxu0
  %v2708 = vpop.f32.mrb[0].mxu0
  %v2709 = vadd.f32 %v2357, %v2708
  %v2710 = vpop.f32.mrb[0].mxu0
  %2711 = vmatprep.mubr.bf16.mxu0 0
  %2712 = vmatmul.mubr.bf16.gmra.mrb[0].mxu0 %v2459
  %v2713 = vpop.f32.mrb[0].mxu0
  %v2714 = vadd.f32 %v2357, %v2713
  %v2715 = vpop.f32.mrb[0].mxu0
  %v2716 = vpop.f32.mrb[0].mxu0
  %v2717 = vadd.f32 %v2357, %v2716
  %v2718 = vpop.f32.mrb[0].mxu0
  %2719 = vmatprep.mubr.bf16.mxu0 0
  %2720 = vmatmul.mubr.bf16.gmra.mrb[0].mxu0 %v2462
  %v2721 = vpop.f32.mrb[0].mxu0
  %v2722 = vadd.f32 %v2357, %v2721
  %v2723 = vpop.f32.mrb[0].mxu0
  %v2724 = vpop.f32.mrb[0].mxu0
  %v2725 = vadd.f32 %v2357, %v2724
  %v2726 = vpop.f32.mrb[0].mxu0
  %2727 = vmatprep.mubr.bf16.mxu0 0
  %2728 = vmatmul.mubr.bf16.gmra.mrb[0].mxu0 %v2465
  %v2729 = vpop.f32.mrb[0].mxu0
  %v2730 = vadd.f32 %v2357, %v2729
  %v2731 = vpop.f32.mrb[0].mxu0
  %v2732 = vpop.f32.mrb[0].mxu0
  %v2733 = vadd.f32 %v2357, %v2732
  %v2734 = vpop.f32.mrb[0].mxu0
  %2735 = vmatprep.mubr.bf16.mxu0 0
  %2736 = vmatmul.mubr.bf16.gmra.mrb[0].mxu0 %v2468
  %v2737 = vpop.f32.mrb[0].mxu0
  %v2738 = vadd.f32 %v2357, %v2737
  %v2739 = vpop.f32.mrb[0].mxu0
  %v2740 = vpop.f32.mrb[0].mxu0
  %v2741 = vadd.f32 %v2357, %v2740
  %v2742 = vpop.f32.mrb[0].mxu0
  %2743 = vmatprep.mubr.bf16.mxu0 0
  %2744 = vmatmul.mubr.bf16.gmra.mrb[0].mxu0 %v2471
  %v2745 = vpop.f32.mrb[0].mxu0
  %v2746 = vadd.f32 %v2357, %v2745
  %v2747 = vpop.f32.mrb[0].mxu0
  %v2748 = vpop.f32.mrb[0].mxu0
  %v2749 = vadd.f32 %v2357, %v2748
  %v2750 = vpop.f32.mrb[0].mxu0
  %2751 = vmatprep.mubr.bf16.mxu0 0
  %2752 = vmatmul.mubr.bf16.gmra.mrb[0].mxu0 %v2474
  %v2753 = vpop.f32.mrb[0].mxu0
  %v2754 = vadd.f32 %v2357, %v2753
  %v2755 = vpop.f32.mrb[0].mxu0
  %v2756 = vpop.f32.mrb[0].mxu0
  %v2757 = vadd.f32 %v2357, %v2756
  %v2758 = vpop.f32.mrb[0].mxu0
  %2759 = vmatprep.mubr.bf16.mxu0 0
  %2760 = vmatmul.mubr.bf16.gmra.mrb[0].mxu0 %v2477
  %v2761 = vpop.f32.mrb[0].mxu0
  %v2762 = vadd.f32 %v2357, %v2761
  %v2763 = vpop.f32.mrb[0].mxu0
  %v2764 = vpop.f32.mrb[0].mxu0
  %v2765 = vadd.f32 %v2357, %v2764
  %v2766 = vpop.f32.mrb[0].mxu0
  %2767 = vdwg.mxu0
  %v2768 = vmax.f32 %v2514, 0.0
  %v2769 = vmax.f32 %v2517, 0.0
  %v2770 = vmax.f32 %v2522, 0.0
  %v2771 = vmax.f32 %v2525, 0.0
  %v2772 = vmax.f32 %v2530, 0.0
  %v2773 = vmax.f32 %v2533, 0.0
  %v2774 = vmax.f32 %v2538, 0.0
  %v2775 = vmax.f32 %v2541, 0.0
  %v2776 = vmax.f32 %v2546, 0.0
  %v2777 = vmax.f32 %v2549, 0.0
  %v2778 = vmax.f32 %v2554, 0.0
  %v2779 = vmax.f32 %v2557, 0.0
  %v2780 = vmax.f32 %v2562, 0.0
  %v2781 = vmax.f32 %v2565, 0.0
  %v2782 = vmax.f32 %v2570, 0.0
  %v2783 = vmax.f32 %v2573, 0.0
  %v2784 = vmax.f32 %v2578, 0.0
  %v2785 = vmax.f32 %v2581, 0.0
  %v2786 = vmax.f32 %v2586, 0.0
  %v2787 = vmax.f32 %v2589, 0.0
  %v2788 = vmax.f32 %v2594, 0.0
  %v2789 = vmax.f32 %v2597, 0.0
  %v2790 = vmax.f32 %v2602, 0.0
  %v2791 = vmax.f32 %v2605, 0.0
  %v2792 = vmax.f32 %v2610, 0.0
  %v2793 = vmax.f32 %v2613, 0.0
  %v2794 = vmax.f32 %v2618, 0.0
  %v2795 = vmax.f32 %v2621, 0.0
  %v2796 = vmax.f32 %v2626, 0.0
  %v2797 = vmax.f32 %v2629, 0.0
  %v2798 = vmax.f32 %v2634, 0.0
  %v2799 = vmax.f32 %v2637, 0.0
  %v2800 = vmax.f32 %v2642, 0.0
  %v2801 = vmax.f32 %v2645, 0.0
  %v2802 = vmax.f32 %v2650, 0.0
  %v2803 = vmax.f32 %v2653, 0.0
  %v2804 = vmax.f32 %v2658, 0.0
  %v2805 = vmax.f32 %v2661, 0.0
  %v2806 = vmax.f32 %v2666, 0.0
  %v2807 = vmax.f32 %v2669, 0.0
  %v2808 = vmax.f32 %v2674, 0.0
  %v2809 = vmax.f32 %v2677, 0.0
  %v2810 = vmax.f32 %v2682, 0.0
  %v2811 = vmax.f32 %v2685, 0.0
  %v2812 = vmax.f32 %v2690, 0.0
  %v2813 = vmax.f32 %v2693, 0.0
  %v2814 = vmax.f32 %v2698, 0.0
  %v2815 = vmax.f32 %v2701, 0.0
  %v2816 = vmax.f32 %v2706, 0.0
  %v2817 = vmax.f32 %v2709, 0.0
  %v2818 = vmax.f32 %v2714, 0.0
  %v2819 = vmax.f32 %v2717, 0.0
  %v2820 = vmax.f32 %v2722, 0.0
  %v2821 = vmax.f32 %v2725, 0.0
  %v2822 = vmax.f32 %v2730, 0.0
  %v2823 = vmax.f32 %v2733, 0.0
  %v2824 = vmax.f32 %v2738, 0.0
  %v2825 = vmax.f32 %v2741, 0.0
  %v2826 = vmax.f32 %v2746, 0.0
  %v2827 = vmax.f32 %v2749, 0.0
  %v2828 = vmax.f32 %v2754, 0.0
  %v2829 = vmax.f32 %v2757, 0.0
  %v2830 = vmax.f32 %v2762, 0.0
  %v2831 = vmax.f32 %v2765, 0.0
  %v2832 = vpack.c.bf16 %v2769, %v2768
  %v2833 = vpack.c.bf16 %v2771, %v2770
  %v2834 = vpack.c.bf16 %v2773, %v2772
  %v2835 = vpack.c.bf16 %v2775, %v2774
  %v2836 = vpack.c.bf16 %v2777, %v2776
  %v2837 = vpack.c.bf16 %v2779, %v2778
  %v2838 = vpack.c.bf16 %v2781, %v2780
  %v2839 = vpack.c.bf16 %v2783, %v2782
  %v2840 = vpack.c.bf16 %v2785, %v2784
  %v2841 = vpack.c.bf16 %v2787, %v2786
  %v2842 = vpack.c.bf16 %v2789, %v2788
  %v2843 = vpack.c.bf16 %v2791, %v2790
  %v2844 = vpack.c.bf16 %v2793, %v2792
  %v2845 = vpack.c.bf16 %v2795, %v2794
  %v2846 = vpack.c.bf16 %v2797, %v2796
  %v2847 = vpack.c.bf16 %v2799, %v2798
  %v2848 = vpack.c.bf16 %v2801, %v2800
  %v2849 = vpack.c.bf16 %v2803, %v2802
  %v2850 = vpack.c.bf16 %v2805, %v2804
  %v2851 = vpack.c.bf16 %v2807, %v2806
  %v2852 = vpack.c.bf16 %v2809, %v2808
  %v2853 = vpack.c.bf16 %v2811, %v2810
  %v2854 = vpack.c.bf16 %v2813, %v2812
  %v2855 = vpack.c.bf16 %v2815, %v2814
  %v2856 = vpack.c.bf16 %v2817, %v2816
  %v2857 = vpack.c.bf16 %v2819, %v2818
  %v2858 = vpack.c.bf16 %v2821, %v2820
  %v2859 = vpack.c.bf16 %v2823, %v2822
  %v2860 = vpack.c.bf16 %v2825, %v2824
  %v2861 = vpack.c.bf16 %v2827, %v2826
  %v2862 = vpack.c.bf16 %v2829, %v2828
  %v2863 = vpack.c.bf16 %v2831, %v2830
  %v2864 = vld [vmem:[%s1 + $0x70] sm:$0xf]
  %v2865 = vld [vmem:[%s1 + $0x74] sm:$0xf]
  %v2866 = vld [vmem:[%s1 + $0x78] sm:$0xf]
  %v2867 = vld [vmem:[%s1 + $0x7c] sm:$0xf]
  %v2868 = vld [vmem:[%s1 + $0x80] sm:$0xf]
  %v2869 = vld [vmem:[%s1 + $0x84] sm:$0xf]
  %v2870 = vld [vmem:[%s1 + $0x88] sm:$0xf]
  %v2871 = vld [vmem:[%s1 + $0x8c] sm:$0xf]
  %v2880 = vunpack.c.l.b16 %v2864
  %v2881 = vunpack.c.l.b16 %v2865
  %v2882 = vunpack.c.l.b16 %v2866
  %v2883 = vunpack.c.l.b16 %v2867
  %v2884 = vunpack.c.l.b16 %v2868
  %v2885 = vunpack.c.l.b16 %v2869
  %v2886 = vunpack.c.l.b16 %v2870
  %v2887 = vunpack.c.l.b16 %v2871
  %v2888 = vpack.c.b16 %v2881, %v2880
  %v2889 = vpack.c.b16 %v2883, %v2882
  %v2890 = vpack.c.b16 %v2885, %v2884
  %v2891 = vpack.c.b16 %v2887, %v2886
  %v2897 = vsel %vm2382, %v2832, 0
  %v2900 = vsel %vm2382, %v2833, 0
  %v2903 = vsel %vm2382, %v2834, 0
  %v2906 = vsel %vm2382, %v2835, 0
  %v2909 = vsel %vm2382, %v2836, 0
  %v2912 = vsel %vm2382, %v2837, 0
  %v2915 = vsel %vm2382, %v2838, 0
  %v2918 = vsel %vm2382, %v2839, 0
  %v2921 = vsel %vm2382, %v2840, 0
  %v2924 = vsel %vm2382, %v2841, 0
  %v2927 = vsel %vm2382, %v2842, 0
  %v2930 = vsel %vm2382, %v2843, 0
  %v2933 = vsel %vm2382, %v2844, 0
  %v2936 = vsel %vm2382, %v2845, 0
  %v2939 = vsel %vm2382, %v2846, 0
  %v2942 = vsel %vm2382, %v2847, 0
  %v2945 = vsel %vm2382, %v2848, 0
  %v2948 = vsel %vm2382, %v2849, 0
  %v2951 = vsel %vm2382, %v2850, 0
  %v2954 = vsel %vm2382, %v2851, 0
  %v2957 = vsel %vm2382, %v2852, 0
  %v2960 = vsel %vm2382, %v2853, 0
  %v2963 = vsel %vm2382, %v2854, 0
  %v2966 = vsel %vm2382, %v2855, 0
  %v2969 = vsel %vm2382, %v2856, 0
  %v2972 = vsel %vm2382, %v2857, 0
  %v2975 = vsel %vm2382, %v2858, 0
  %v2978 = vsel %vm2382, %v2859, 0
  %v2981 = vsel %vm2382, %v2860, 0
  %v2984 = vsel %vm2382, %v2861, 0
  %v2987 = vsel %vm2382, %v2862, 0
  %v2990 = vsel %vm2382, %v2863, 0
  %2992 = vmatprep.subr.bf16.mxu0 0
  %2993 = vmatpush1.bf16.msra.mxu0 %v2888
  %2994 = vmatprep.subr.bf16.mxu0 0
  %2995 = vmatpush1.bf16.msra.mxu0 %v2889
  %2996 = vmatprep.subr.bf16.mxu0 0
  %2997 = vmatpush1.bf16.msra.mxu0 %v2890
  %2998 = vmatprep.subr.bf16.mxu0 0
  %2999 = vmatpush1.bf16.msra.mxu0 %v2891
  %3000 = vmatprep.subr.bf16.mxu0 0
  %3001 = vmatpush1.bf16.msra.mxu0 0
  %3002 = vmatprep.subr.bf16.mxu0 0
  %3003 = vmatpush1.bf16.msra.mxu0 0
  %3004 = vmatprep.subr.bf16.mxu0 0
  %3005 = vmatpush1.bf16.msra.mxu0 0
  %3006 = vmatprep.subr.bf16.mxu0 0
  %3007 = vmatpush1.bf16.msra.mxu0 0
  %3008 = vmatprep.subr.bf16.mxu0 0
  %3009 = vmatpush1.bf16.msra.mxu0 0
  %3010 = vmatprep.subr.bf16.mxu0 0
  %3011 = vmatpush1.bf16.msra.mxu0 0
  %3012 = vmatprep.subr.bf16.mxu0 0
  %3013 = vmatpush1.bf16.msra.mxu0 0
  %3014 = vmatprep.subr.bf16.mxu0 0
  %3015 = vmatpush1.bf16.msra.mxu0 0
  %3016 = vmatprep.subr.bf16.mxu0 0
  %3017 = vmatpush1.bf16.msra.mxu0 0
  %3018 = vmatprep.subr.bf16.mxu0 0
  %3019 = vmatpush1.bf16.msra.mxu0 0
  %3020 = vmatprep.subr.bf16.mxu0 0
  %3021 = vmatpush1.bf16.msra.mxu0 0
  %3022 = vmatprep.subr.bf16.mxu0 0
  %3023 = vmatpush1.bf16.msra.mxu0 0
  %3024 = vmatprep.mubr.bf16.mxu0 0
  %3025 = vmatmul.mubr.bf16.gmra.mrb[0].mxu0 %v2897
  %v3026 = vpop.f32.mrb[0].mxu0
  %v3027 = vadd.f32 0.0, %v3026
  %v3028 = vpop.f32.mrb[0].mxu0
  %v3029 = vpop.f32.mrb[0].mxu0
  %v3030 = vadd.f32 0.0, %v3029
  %v3031 = vpop.f32.mrb[0].mxu0
  %3032 = vmatprep.mubr.bf16.mxu0 0
  %3033 = vmatmul.mubr.bf16.gmra.mrb[0].mxu0 %v2900
  %v3034 = vpop.f32.mrb[0].mxu0
  %v3035 = vadd.f32 0.0, %v3034
  %v3036 = vpop.f32.mrb[0].mxu0
  %v3037 = vpop.f32.mrb[0].mxu0
  %v3038 = vadd.f32 0.0, %v3037
  %v3039 = vpop.f32.mrb[0].mxu0
  %3040 = vmatprep.mubr.bf16.mxu0 0
  %3041 = vmatmul.mubr.bf16.gmra.mrb[0].mxu0 %v2903
  %v3042 = vpop.f32.mrb[0].mxu0
  %v3043 = vadd.f32 0.0, %v3042
  %v3044 = vpop.f32.mrb[0].mxu0
  %v3045 = vpop.f32.mrb[0].mxu0
  %v3046 = vadd.f32 0.0, %v3045
  %v3047 = vpop.f32.mrb[0].mxu0
  %3048 = vmatprep.mubr.bf16.mxu0 0
  %3049 = vmatmul.mubr.bf16.gmra.mrb[0].mxu0 %v2906
  %v3050 = vpop.f32.mrb[0].mxu0
  %v3051 = vadd.f32 0.0, %v3050
  %v3052 = vpop.f32.mrb[0].mxu0
  %v3053 = vpop.f32.mrb[0].mxu0
  %v3054 = vadd.f32 0.0, %v3053
  %v3055 = vpop.f32.mrb[0].mxu0
  %3056 = vmatprep.mubr.bf16.mxu0 0
  %3057 = vmatmul.mubr.bf16.gmra.mrb[0].mxu0 %v2909
  %v3058 = vpop.f32.mrb[0].mxu0
  %v3059 = vadd.f32 0.0, %v3058
  %v3060 = vpop.f32.mrb[0].mxu0
  %v3061 = vpop.f32.mrb[0].mxu0
  %v3062 = vadd.f32 0.0, %v3061
  %v3063 = vpop.f32.mrb[0].mxu0
  %3064 = vmatprep.mubr.bf16.mxu0 0
  %3065 = vmatmul.mubr.bf16.gmra.mrb[0].mxu0 %v2912
  %v3066 = vpop.f32.mrb[0].mxu0
  %v3067 = vadd.f32 0.0, %v3066
  %v3068 = vpop.f32.mrb[0].mxu0
  %v3069 = vpop.f32.mrb[0].mxu0
  %v3070 = vadd.f32 0.0, %v3069
  %v3071 = vpop.f32.mrb[0].mxu0
  %3072 = vmatprep.mubr.bf16.mxu0 0
  %3073 = vmatmul.mubr.bf16.gmra.mrb[0].mxu0 %v2915
  %v3074 = vpop.f32.mrb[0].mxu0
  %v3075 = vadd.f32 0.0, %v3074
  %v3076 = vpop.f32.mrb[0].mxu0
  %v3077 = vpop.f32.mrb[0].mxu0
  %v3078 = vadd.f32 0.0, %v3077
  %v3079 = vpop.f32.mrb[0].mxu0
  %3080 = vmatprep.mubr.bf16.mxu0 0
  %3081 = vmatmul.mubr.bf16.gmra.mrb[0].mxu0 %v2918
  %v3082 = vpop.f32.mrb[0].mxu0
  %v3083 = vadd.f32 0.0, %v3082
  %v3084 = vpop.f32.mrb[0].mxu0
  %v3085 = vpop.f32.mrb[0].mxu0
  %v3086 = vadd.f32 0.0, %v3085
  %v3087 = vpop.f32.mrb[0].mxu0
  %3088 = vmatprep.mubr.bf16.mxu0 0
  %3089 = vmatmul.mubr.bf16.gmra.mrb[0].mxu0 %v2921
  %v3090 = vpop.f32.mrb[0].mxu0
  %v3091 = vadd.f32 0.0, %v3090
  %v3092 = vpop.f32.mrb[0].mxu0
  %v3093 = vpop.f32.mrb[0].mxu0
  %v3094 = vadd.f32 0.0, %v3093
  %v3095 = vpop.f32.mrb[0].mxu0
  %3096 = vmatprep.mubr.bf16.mxu0 0
  %3097 = vmatmul.mubr.bf16.gmra.mrb[0].mxu0 %v2924
  %v3098 = vpop.f32.mrb[0].mxu0
  %v3099 = vadd.f32 0.0, %v3098
  %v3100 = vpop.f32.mrb[0].mxu0
  %v3101 = vpop.f32.mrb[0].mxu0
  %v3102 = vadd.f32 0.0, %v3101
  %v3103 = vpop.f32.mrb[0].mxu0
  %3104 = vmatprep.mubr.bf16.mxu0 0
  %3105 = vmatmul.mubr.bf16.gmra.mrb[0].mxu0 %v2927
  %v3106 = vpop.f32.mrb[0].mxu0
  %v3107 = vadd.f32 0.0, %v3106
  %v3108 = vpop.f32.mrb[0].mxu0
  %v3109 = vpop.f32.mrb[0].mxu0
  %v3110 = vadd.f32 0.0, %v3109
  %v3111 = vpop.f32.mrb[0].mxu0
  %3112 = vmatprep.mubr.bf16.mxu0 0
  %3113 = vmatmul.mubr.bf16.gmra.mrb[0].mxu0 %v2930
  %v3114 = vpop.f32.mrb[0].mxu0
  %v3115 = vadd.f32 0.0, %v3114
  %v3116 = vpop.f32.mrb[0].mxu0
  %v3117 = vpop.f32.mrb[0].mxu0
  %v3118 = vadd.f32 0.0, %v3117
  %v3119 = vpop.f32.mrb[0].mxu0
  %3120 = vmatprep.mubr.bf16.mxu0 0
  %3121 = vmatmul.mubr.bf16.gmra.mrb[0].mxu0 %v2933
  %v3122 = vpop.f32.mrb[0].mxu0
  %v3123 = vadd.f32 0.0, %v3122
  %v3124 = vpop.f32.mrb[0].mxu0
  %v3125 = vpop.f32.mrb[0].mxu0
  %v3126 = vadd.f32 0.0, %v3125
  %v3127 = vpop.f32.mrb[0].mxu0
  %3128 = vmatprep.mubr.bf16.mxu0 0
  %3129 = vmatmul.mubr.bf16.gmra.mrb[0].mxu0 %v2936
  %v3130 = vpop.f32.mrb[0].mxu0
  %v3131 = vadd.f32 0.0, %v3130
  %v3132 = vpop.f32.mrb[0].mxu0
  %v3133 = vpop.f32.mrb[0].mxu0
  %v3134 = vadd.f32 0.0, %v3133
  %v3135 = vpop.f32.mrb[0].mxu0
  %3136 = vmatprep.mubr.bf16.mxu0 0
  %3137 = vmatmul.mubr.bf16.gmra.mrb[0].mxu0 %v2939
  %v3138 = vpop.f32.mrb[0].mxu0
  %v3139 = vadd.f32 0.0, %v3138
  %v3140 = vpop.f32.mrb[0].mxu0
  %v3141 = vpop.f32.mrb[0].mxu0
  %v3142 = vadd.f32 0.0, %v3141
  %v3143 = vpop.f32.mrb[0].mxu0
  %3144 = vmatprep.mubr.bf16.mxu0 0
  %3145 = vmatmul.mubr.bf16.gmra.mrb[0].mxu0 %v2942
  %v3146 = vpop.f32.mrb[0].mxu0
  %v3147 = vadd.f32 0.0, %v3146
  %v3148 = vpop.f32.mrb[0].mxu0
  %v3149 = vpop.f32.mrb[0].mxu0
  %v3150 = vadd.f32 0.0, %v3149
  %v3151 = vpop.f32.mrb[0].mxu0
  %3152 = vmatprep.mubr.bf16.mxu0 0
  %3153 = vmatmul.mubr.bf16.gmra.mrb[0].mxu0 %v2945
  %v3154 = vpop.f32.mrb[0].mxu0
  %v3155 = vadd.f32 0.0, %v3154
  %v3156 = vpop.f32.mrb[0].mxu0
  %v3157 = vpop.f32.mrb[0].mxu0
  %v3158 = vadd.f32 0.0, %v3157
  %v3159 = vpop.f32.mrb[0].mxu0
  %3160 = vmatprep.mubr.bf16.mxu0 0
  %3161 = vmatmul.mubr.bf16.gmra.mrb[0].mxu0 %v2948
  %v3162 = vpop.f32.mrb[0].mxu0
  %v3163 = vadd.f32 0.0, %v3162
  %v3164 = vpop.f32.mrb[0].mxu0
  %v3165 = vpop.f32.mrb[0].mxu0
  %v3166 = vadd.f32 0.0, %v3165
  %v3167 = vpop.f32.mrb[0].mxu0
  %3168 = vmatprep.mubr.bf16.mxu0 0
  %3169 = vmatmul.mubr.bf16.gmra.mrb[0].mxu0 %v2951
  %v3170 = vpop.f32.mrb[0].mxu0
  %v3171 = vadd.f32 0.0, %v3170
  %v3172 = vpop.f32.mrb[0].mxu0
  %v3173 = vpop.f32.mrb[0].mxu0
  %v3174 = vadd.f32 0.0, %v3173
  %v3175 = vpop.f32.mrb[0].mxu0
  %3176 = vmatprep.mubr.bf16.mxu0 0
  %3177 = vmatmul.mubr.bf16.gmra.mrb[0].mxu0 %v2954
  %v3178 = vpop.f32.mrb[0].mxu0
  %v3179 = vadd.f32 0.0, %v3178
  %v3180 = vpop.f32.mrb[0].mxu0
  %v3181 = vpop.f32.mrb[0].mxu0
  %v3182 = vadd.f32 0.0, %v3181
  %v3183 = vpop.f32.mrb[0].mxu0
  %3184 = vmatprep.mubr.bf16.mxu0 0
  %3185 = vmatmul.mubr.bf16.gmra.mrb[0].mxu0 %v2957
  %v3186 = vpop.f32.mrb[0].mxu0
  %v3187 = vadd.f32 0.0, %v3186
  %v3188 = vpop.f32.mrb[0].mxu0
  %v3189 = vpop.f32.mrb[0].mxu0
  %v3190 = vadd.f32 0.0, %v3189
  %v3191 = vpop.f32.mrb[0].mxu0
  %3192 = vmatprep.mubr.bf16.mxu0 0
  %3193 = vmatmul.mubr.bf16.gmra.mrb[0].mxu0 %v2960
  %v3194 = vpop.f32.mrb[0].mxu0
  %v3195 = vadd.f32 0.0, %v3194
  %v3196 = vpop.f32.mrb[0].mxu0
  %v3197 = vpop.f32.mrb[0].mxu0
  %v3198 = vadd.f32 0.0, %v3197
  %v3199 = vpop.f32.mrb[0].mxu0
  %3200 = vmatprep.mubr.bf16.mxu0 0
  %3201 = vmatmul.mubr.bf16.gmra.mrb[0].mxu0 %v2963
  %v3202 = vpop.f32.mrb[0].mxu0
  %v3203 = vadd.f32 0.0, %v3202
  %v3204 = vpop.f32.mrb[0].mxu0
  %v3205 = vpop.f32.mrb[0].mxu0
  %v3206 = vadd.f32 0.0, %v3205
  %v3207 = vpop.f32.mrb[0].mxu0
  %3208 = vmatprep.mubr.bf16.mxu0 0
  %3209 = vmatmul.mubr.bf16.gmra.mrb[0].mxu0 %v2966
  %v3210 = vpop.f32.mrb[0].mxu0
  %v3211 = vadd.f32 0.0, %v3210
  %v3212 = vpop.f32.mrb[0].mxu0
  %v3213 = vpop.f32.mrb[0].mxu0
  %v3214 = vadd.f32 0.0, %v3213
  %v3215 = vpop.f32.mrb[0].mxu0
  %3216 = vmatprep.mubr.bf16.mxu0 0
  %3217 = vmatmul.mubr.bf16.gmra.mrb[0].mxu0 %v2969
  %v3218 = vpop.f32.mrb[0].mxu0
  %v3219 = vadd.f32 0.0, %v3218
  %v3220 = vpop.f32.mrb[0].mxu0
  %v3221 = vpop.f32.mrb[0].mxu0
  %v3222 = vadd.f32 0.0, %v3221
  %v3223 = vpop.f32.mrb[0].mxu0
  %3224 = vmatprep.mubr.bf16.mxu0 0
  %3225 = vmatmul.mubr.bf16.gmra.mrb[0].mxu0 %v2972
  %v3226 = vpop.f32.mrb[0].mxu0
  %v3227 = vadd.f32 0.0, %v3226
  %v3228 = vpop.f32.mrb[0].mxu0
  %v3229 = vpop.f32.mrb[0].mxu0
  %v3230 = vadd.f32 0.0, %v3229
  %v3231 = vpop.f32.mrb[0].mxu0
  %3232 = vmatprep.mubr.bf16.mxu0 0
  %3233 = vmatmul.mubr.bf16.gmra.mrb[0].mxu0 %v2975
  %v3234 = vpop.f32.mrb[0].mxu0
  %v3235 = vadd.f32 0.0, %v3234
  %v3236 = vpop.f32.mrb[0].mxu0
  %v3237 = vpop.f32.mrb[0].mxu0
  %v3238 = vadd.f32 0.0, %v3237
  %v3239 = vpop.f32.mrb[0].mxu0
  %3240 = vmatprep.mubr.bf16.mxu0 0
  %3241 = vmatmul.mubr.bf16.gmra.mrb[0].mxu0 %v2978
  %v3242 = vpop.f32.mrb[0].mxu0
  %v3243 = vadd.f32 0.0, %v3242
  %v3244 = vpop.f32.mrb[0].mxu0
  %v3245 = vpop.f32.mrb[0].mxu0
  %v3246 = vadd.f32 0.0, %v3245
  %v3247 = vpop.f32.mrb[0].mxu0
  %3248 = vmatprep.mubr.bf16.mxu0 0
  %3249 = vmatmul.mubr.bf16.gmra.mrb[0].mxu0 %v2981
  %v3250 = vpop.f32.mrb[0].mxu0
  %v3251 = vadd.f32 0.0, %v3250
  %v3252 = vpop.f32.mrb[0].mxu0
  %v3253 = vpop.f32.mrb[0].mxu0
  %v3254 = vadd.f32 0.0, %v3253
  %v3255 = vpop.f32.mrb[0].mxu0
  %3256 = vmatprep.mubr.bf16.mxu0 0
  %3257 = vmatmul.mubr.bf16.gmra.mrb[0].mxu0 %v2984
  %v3258 = vpop.f32.mrb[0].mxu0
  %v3259 = vadd.f32 0.0, %v3258
  %v3260 = vpop.f32.mrb[0].mxu0
  %v3261 = vpop.f32.mrb[0].mxu0
  %v3262 = vadd.f32 0.0, %v3261
  %v3263 = vpop.f32.mrb[0].mxu0
  %3264 = vmatprep.mubr.bf16.mxu0 0
  %3265 = vmatmul.mubr.bf16.gmra.mrb[0].mxu0 %v2987
  %v3266 = vpop.f32.mrb[0].mxu0
  %v3267 = vadd.f32 0.0, %v3266
  %v3268 = vpop.f32.mrb[0].mxu0
  %v3269 = vpop.f32.mrb[0].mxu0
  %v3270 = vadd.f32 0.0, %v3269
  %v3271 = vpop.f32.mrb[0].mxu0
  %3272 = vmatprep.mubr.bf16.mxu0 0
  %3273 = vmatmul.mubr.bf16.gmra.mrb[0].mxu0 %v2990
  %v3274 = vpop.f32.mrb[0].mxu0
  %v3275 = vadd.f32 0.0, %v3274
  %v3276 = vpop.f32.mrb[0].mxu0
  %v3277 = vpop.f32.mrb[0].mxu0
  %v3278 = vadd.f32 0.0, %v3277
  %v3279 = vpop.f32.mrb[0].mxu0
  %3280 = vdwg.mxu0
  %v3281 = vmul.f32 %v1556, %v3027
  %v3282 = vmul.f32 %v1559, %v3030
  %v3283 = vmul.f32 %v1564, %v3035
  %v3284 = vmul.f32 %v1567, %v3038
  %v3285 = vmul.f32 %v1572, %v3043
  %v3286 = vmul.f32 %v1575, %v3046
  %v3287 = vmul.f32 %v1580, %v3051
  %v3288 = vmul.f32 %v1583, %v3054
  %v3289 = vmul.f32 %v1588, %v3059
  %v3290 = vmul.f32 %v1591, %v3062
  %v3291 = vmul.f32 %v1596, %v3067
  %v3292 = vmul.f32 %v1599, %v3070
  %v3293 = vmul.f32 %v1604, %v3075
  %v3294 = vmul.f32 %v1607, %v3078
  %v3295 = vmul.f32 %v1612, %v3083
  %v3296 = vmul.f32 %v1615, %v3086
  %v3297 = vmul.f32 %v1620, %v3091
  %v3298 = vmul.f32 %v1623, %v3094
  %v3299 = vmul.f32 %v1628, %v3099
  %v3300 = vmul.f32 %v1631, %v3102
  %v3301 = vmul.f32 %v1636, %v3107
  %v3302 = vmul.f32 %v1639, %v3110
  %v3303 = vmul.f32 %v1644, %v3115
  %v3304 = vmul.f32 %v1647, %v3118
  %v3305 = vmul.f32 %v1652, %v3123
  %v3306 = vmul.f32 %v1655, %v3126
  %v3307 = vmul.f32 %v1660, %v3131
  %v3308 = vmul.f32 %v1663, %v3134
  %v3309 = vmul.f32 %v1668, %v3139
  %v3310 = vmul.f32 %v1671, %v3142
  %v3311 = vmul.f32 %v1676, %v3147
  %v3312 = vmul.f32 %v1679, %v3150
  %v3313 = vmul.f32 %v1684, %v3155
  %v3314 = vmul.f32 %v1687, %v3158
  %v3315 = vmul.f32 %v1692, %v3163
  %v3316 = vmul.f32 %v1695, %v3166
  %v3317 = vmul.f32 %v1700, %v3171
  %v3318 = vmul.f32 %v1703, %v3174
  %v3319 = vmul.f32 %v1708, %v3179
  %v3320 = vmul.f32 %v1711, %v3182
  %v3321 = vmul.f32 %v1716, %v3187
  %v3322 = vmul.f32 %v1719, %v3190
  %v3323 = vmul.f32 %v1724, %v3195
  %v3324 = vmul.f32 %v1727, %v3198
  %v3325 = vmul.f32 %v1732, %v3203
  %v3326 = vmul.f32 %v1735, %v3206
  %v3327 = vmul.f32 %v1740, %v3211
  %v3328 = vmul.f32 %v1743, %v3214
  %v3329 = vmul.f32 %v1748, %v3219
  %v3330 = vmul.f32 %v1751, %v3222
  %v3331 = vmul.f32 %v1756, %v3227
  %v3332 = vmul.f32 %v1759, %v3230
  %v3333 = vmul.f32 %v1764, %v3235
  %v3334 = vmul.f32 %v1767, %v3238
  %v3335 = vmul.f32 %v1772, %v3243
  %v3336 = vmul.f32 %v1775, %v3246
  %v3337 = vmul.f32 %v1780, %v3251
  %v3338 = vmul.f32 %v1783, %v3254
  %v3339 = vmul.f32 %v1788, %v3259
  %v3340 = vmul.f32 %v1791, %v3262
  %v3341 = vmul.f32 %v1796, %v3267
  %v3342 = vmul.f32 %v1799, %v3270
  %v3343 = vmul.f32 %v1804, %v3275
  %v3344 = vmul.f32 %v1807, %v3278
  %3409 = vrot.lane.b32.xlu0 %v3027, 96
  %v3410 = vpop.permute.xlu0 %3409
  %3411 = vrot.lane.b32.xlu0 %v3030, 96
  %v3412 = vpop.permute.xlu0 %3411
  %3413 = vrot.lane.b32.xlu0 %v3035, 96
  %v3414 = vpop.permute.xlu0 %3413
  %3415 = vrot.lane.b32.xlu0 %v3038, 96
  %v3416 = vpop.permute.xlu0 %3415
  %3417 = vrot.lane.b32.xlu0 %v3043, 96
  %v3418 = vpop.permute.xlu0 %3417
  %3419 = vrot.lane.b32.xlu0 %v3046, 96
  %v3420 = vpop.permute.xlu0 %3419
  %3421 = vrot.lane.b32.xlu0 %v3051, 96
  %v3422 = vpop.permute.xlu0 %3421
  %3423 = vrot.lane.b32.xlu0 %v3054, 96
  %v3424 = vpop.permute.xlu0 %3423
  %3425 = vrot.lane.b32.xlu0 %v3059, 96
  %v3426 = vpop.permute.xlu0 %3425
  %3427 = vrot.lane.b32.xlu0 %v3062, 96
  %v3428 = vpop.permute.xlu0 %3427
  %3429 = vrot.lane.b32.xlu0 %v3067, 96
  %v3430 = vpop.permute.xlu0 %3429
  %3431 = vrot.lane.b32.xlu0 %v3070, 96
  %v3432 = vpop.permute.xlu0 %3431
  %3433 = vrot.lane.b32.xlu0 %v3075, 96
  %v3434 = vpop.permute.xlu0 %3433
  %3435 = vrot.lane.b32.xlu0 %v3078, 96
  %v3436 = vpop.permute.xlu0 %3435
  %3437 = vrot.lane.b32.xlu0 %v3083, 96
  %v3438 = vpop.permute.xlu0 %3437
  %3439 = vrot.lane.b32.xlu0 %v3086, 96
  %v3440 = vpop.permute.xlu0 %3439
  %3441 = vrot.lane.b32.xlu0 %v3091, 96
  %v3442 = vpop.permute.xlu0 %3441
  %3443 = vrot.lane.b32.xlu0 %v3094, 96
  %v3444 = vpop.permute.xlu0 %3443
  %3445 = vrot.lane.b32.xlu0 %v3099, 96
  %v3446 = vpop.permute.xlu0 %3445
  %3447 = vrot.lane.b32.xlu0 %v3102, 96
  %v3448 = vpop.permute.xlu0 %3447
  %3449 = vrot.lane.b32.xlu0 %v3107, 96
  %v3450 = vpop.permute.xlu0 %3449
  %3451 = vrot.lane.b32.xlu0 %v3110, 96
  %v3452 = vpop.permute.xlu0 %3451
  %3453 = vrot.lane.b32.xlu0 %v3115, 96
  %v3454 = vpop.permute.xlu0 %3453
  %3455 = vrot.lane.b32.xlu0 %v3118, 96
  %v3456 = vpop.permute.xlu0 %3455
  %3457 = vrot.lane.b32.xlu0 %v3123, 96
  %v3458 = vpop.permute.xlu0 %3457
  %3459 = vrot.lane.b32.xlu0 %v3126, 96
  %v3460 = vpop.permute.xlu0 %3459
  %3461 = vrot.lane.b32.xlu0 %v3131, 96
  %v3462 = vpop.permute.xlu0 %3461
  %3463 = vrot.lane.b32.xlu0 %v3134, 96
  %v3464 = vpop.permute.xlu0 %3463
  %3465 = vrot.lane.b32.xlu0 %v3139, 96
  %v3466 = vpop.permute.xlu0 %3465
  %3467 = vrot.lane.b32.xlu0 %v3142, 96
  %v3468 = vpop.permute.xlu0 %3467
  %3469 = vrot.lane.b32.xlu0 %v3147, 96
  %v3470 = vpop.permute.xlu0 %3469
  %3471 = vrot.lane.b32.xlu0 %v3150, 96
  %v3472 = vpop.permute.xlu0 %3471
  %3473 = vrot.lane.b32.xlu0 %v3155, 96
  %v3474 = vpop.permute.xlu0 %3473
  %3475 = vrot.lane.b32.xlu0 %v3158, 96
  %v3476 = vpop.permute.xlu0 %3475
  %3477 = vrot.lane.b32.xlu0 %v3163, 96
  %v3478 = vpop.permute.xlu0 %3477
  %3479 = vrot.lane.b32.xlu0 %v3166, 96
  %v3480 = vpop.permute.xlu0 %3479
  %3481 = vrot.lane.b32.xlu0 %v3171, 96
  %v3482 = vpop.permute.xlu0 %3481
  %3483 = vrot.lane.b32.xlu0 %v3174, 96
  %v3484 = vpop.permute.xlu0 %3483
  %3485 = vrot.lane.b32.xlu0 %v3179, 96
  %v3486 = vpop.permute.xlu0 %3485
  %3487 = vrot.lane.b32.xlu0 %v3182, 96
  %v3488 = vpop.permute.xlu0 %3487
  %3489 = vrot.lane.b32.xlu0 %v3187, 96
  %v3490 = vpop.permute.xlu0 %3489
  %3491 = vrot.lane.b32.xlu0 %v3190, 96
  %v3492 = vpop.permute.xlu0 %3491
  %3493 = vrot.lane.b32.xlu0 %v3195, 96
  %v3494 = vpop.permute.xlu0 %3493
  %3495 = vrot.lane.b32.xlu0 %v3198, 96
  %v3496 = vpop.permute.xlu0 %3495
  %3497 = vrot.lane.b32.xlu0 %v3203, 96
  %v3498 = vpop.permute.xlu0 %3497
  %3499 = vrot.lane.b32.xlu0 %v3206, 96
  %v3500 = vpop.permute.xlu0 %3499
  %3501 = vrot.lane.b32.xlu0 %v3211, 96
  %v3502 = vpop.permute.xlu0 %3501
  %3503 = vrot.lane.b32.xlu0 %v3214, 96
  %v3504 = vpop.permute.xlu0 %3503
  %3505 = vrot.lane.b32.xlu0 %v3219, 96
  %v3506 = vpop.permute.xlu0 %3505
  %3507 = vrot.lane.b32.xlu0 %v3222, 96
  %v3508 = vpop.permute.xlu0 %3507
  %3509 = vrot.lane.b32.xlu0 %v3227, 96
  %v3510 = vpop.permute.xlu0 %3509
  %3511 = vrot.lane.b32.xlu0 %v3230, 96
  %v3512 = vpop.permute.xlu0 %3511
  %3513 = vrot.lane.b32.xlu0 %v3235, 96
  %v3514 = vpop.permute.xlu0 %3513
  %3515 = vrot.lane.b32.xlu0 %v3238, 96
  %v3516 = vpop.permute.xlu0 %3515
  %3517 = vrot.lane.b32.xlu0 %v3243, 96
  %v3518 = vpop.permute.xlu0 %3517
  %3519 = vrot.lane.b32.xlu0 %v3246, 96
  %v3520 = vpop.permute.xlu0 %3519
  %3521 = vrot.lane.b32.xlu0 %v3251, 96
  %v3522 = vpop.permute.xlu0 %3521
  %3523 = vrot.lane.b32.xlu0 %v3254, 96
  %v3524 = vpop.permute.xlu0 %3523
  %3525 = vrot.lane.b32.xlu0 %v3259, 96
  %v3526 = vpop.permute.xlu0 %3525
  %3527 = vrot.lane.b32.xlu0 %v3262, 96
  %v3528 = vpop.permute.xlu0 %3527
  %3529 = vrot.lane.b32.xlu0 %v3267, 96
  %v3530 = vpop.permute.xlu0 %3529
  %3531 = vrot.lane.b32.xlu0 %v3270, 96
  %v3532 = vpop.permute.xlu0 %3531
  %3533 = vrot.lane.b32.xlu0 %v3275, 96
  %v3534 = vpop.permute.xlu0 %3533
  %3535 = vrot.lane.b32.xlu0 %v3278, 96
  %v3536 = vpop.permute.xlu0 %3535
  %v3601 = vmul.f32 %v1556, %v3410
  %v3602 = vmul.f32 %v1559, %v3412
  %v3603 = vmul.f32 %v1564, %v3414
  %v3604 = vmul.f32 %v1567, %v3416
  %v3605 = vmul.f32 %v1572, %v3418
  %v3606 = vmul.f32 %v1575, %v3420
  %v3607 = vmul.f32 %v1580, %v3422
  %v3608 = vmul.f32 %v1583, %v3424
  %v3609 = vmul.f32 %v1588, %v3426
  %v3610 = vmul.f32 %v1591, %v3428
  %v3611 = vmul.f32 %v1596, %v3430
  %v3612 = vmul.f32 %v1599, %v3432
  %v3613 = vmul.f32 %v1604, %v3434
  %v3614 = vmul.f32 %v1607, %v3436
  %v3615 = vmul.f32 %v1612, %v3438
  %v3616 = vmul.f32 %v1615, %v3440
  %v3617 = vmul.f32 %v1620, %v3442
  %v3618 = vmul.f32 %v1623, %v3444
  %v3619 = vmul.f32 %v1628, %v3446
  %v3620 = vmul.f32 %v1631, %v3448
  %v3621 = vmul.f32 %v1636, %v3450
  %v3622 = vmul.f32 %v1639, %v3452
  %v3623 = vmul.f32 %v1644, %v3454
  %v3624 = vmul.f32 %v1647, %v3456
  %v3625 = vmul.f32 %v1652, %v3458
  %v3626 = vmul.f32 %v1655, %v3460
  %v3627 = vmul.f32 %v1660, %v3462
  %v3628 = vmul.f32 %v1663, %v3464
  %v3629 = vmul.f32 %v1668, %v3466
  %v3630 = vmul.f32 %v1671, %v3468
  %v3631 = vmul.f32 %v1676, %v3470
  %v3632 = vmul.f32 %v1679, %v3472
  %v3633 = vmul.f32 %v1684, %v3474
  %v3634 = vmul.f32 %v1687, %v3476
  %v3635 = vmul.f32 %v1692, %v3478
  %v3636 = vmul.f32 %v1695, %v3480
  %v3637 = vmul.f32 %v1700, %v3482
  %v3638 = vmul.f32 %v1703, %v3484
  %v3639 = vmul.f32 %v1708, %v3486
  %v3640 = vmul.f32 %v1711, %v3488
  %v3641 = vmul.f32 %v1716, %v3490
  %v3642 = vmul.f32 %v1719, %v3492
  %v3643 = vmul.f32 %v1724, %v3494
  %v3644 = vmul.f32 %v1727, %v3496
  %v3645 = vmul.f32 %v1732, %v3498
  %v3646 = vmul.f32 %v1735, %v3500
  %v3647 = vmul.f32 %v1740, %v3502
  %v3648 = vmul.f32 %v1743, %v3504
  %v3649 = vmul.f32 %v1748, %v3506
  %v3650 = vmul.f32 %v1751, %v3508
  %v3651 = vmul.f32 %v1756, %v3510
  %v3652 = vmul.f32 %v1759, %v3512
  %v3653 = vmul.f32 %v1764, %v3514
  %v3654 = vmul.f32 %v1767, %v3516
  %v3655 = vmul.f32 %v1772, %v3518
  %v3656 = vmul.f32 %v1775, %v3520
  %v3657 = vmul.f32 %v1780, %v3522
  %v3658 = vmul.f32 %v1783, %v3524
  %v3659 = vmul.f32 %v1788, %v3526
  %v3660 = vmul.f32 %v1791, %v3528
  %v3661 = vmul.f32 %v1796, %v3530
  %v3662 = vmul.f32 %v1799, %v3532
  %v3663 = vmul.f32 %v1804, %v3534
  %v3664 = vmul.f32 %v1807, %v3536
  %v3665 = vld [vmem:[%s2 + $0x10] sm:$0x1]
  %v3666 = vld [vmem:[%s2 + $0x18] sm:$0x1]
  %v3667 = vlaneseq
  %v3668 = vshrl.u32 %v3667, 7
  %v3669 = vsub.s32 0, %v3668
  %v3670 = vrot.slane %v3665, %v3669
  %v3671 = vmul.f32 %v3281, %v3670
  %v3672 = vmul.f32 %v3282, %v3670
  %v3673 = vmul.f32 %v3283, %v3670
  %v3674 = vmul.f32 %v3284, %v3670
  %v3675 = vmul.f32 %v3285, %v3670
  %v3676 = vmul.f32 %v3286, %v3670
  %v3677 = vmul.f32 %v3287, %v3670
  %v3678 = vmul.f32 %v3288, %v3670
  %v3679 = vmul.f32 %v3289, %v3670
  %v3680 = vmul.f32 %v3290, %v3670
  %v3681 = vmul.f32 %v3291, %v3670
  %v3682 = vmul.f32 %v3292, %v3670
  %v3683 = vmul.f32 %v3293, %v3670
  %v3684 = vmul.f32 %v3294, %v3670
  %v3685 = vmul.f32 %v3295, %v3670
  %v3686 = vmul.f32 %v3296, %v3670
  %v3687 = vmul.f32 %v3297, %v3670
  %v3688 = vmul.f32 %v3298, %v3670
  %v3689 = vmul.f32 %v3299, %v3670
  %v3690 = vmul.f32 %v3300, %v3670
  %v3691 = vmul.f32 %v3301, %v3670
  %v3692 = vmul.f32 %v3302, %v3670
  %v3693 = vmul.f32 %v3303, %v3670
  %v3694 = vmul.f32 %v3304, %v3670
  %v3695 = vmul.f32 %v3305, %v3670
  %v3696 = vmul.f32 %v3306, %v3670
  %v3697 = vmul.f32 %v3307, %v3670
  %v3698 = vmul.f32 %v3308, %v3670
  %v3699 = vmul.f32 %v3309, %v3670
  %v3700 = vmul.f32 %v3310, %v3670
  %v3701 = vmul.f32 %v3311, %v3670
  %v3702 = vmul.f32 %v3312, %v3670
  %v3703 = vmul.f32 %v3313, %v3670
  %v3704 = vmul.f32 %v3314, %v3670
  %v3705 = vmul.f32 %v3315, %v3670
  %v3706 = vmul.f32 %v3316, %v3670
  %v3707 = vmul.f32 %v3317, %v3670
  %v3708 = vmul.f32 %v3318, %v3670
  %v3709 = vmul.f32 %v3319, %v3670
  %v3710 = vmul.f32 %v3320, %v3670
  %v3711 = vmul.f32 %v3321, %v3670
  %v3712 = vmul.f32 %v3322, %v3670
  %v3713 = vmul.f32 %v3323, %v3670
  %v3714 = vmul.f32 %v3324, %v3670
  %v3715 = vmul.f32 %v3325, %v3670
  %v3716 = vmul.f32 %v3326, %v3670
  %v3717 = vmul.f32 %v3327, %v3670
  %v3718 = vmul.f32 %v3328, %v3670
  %v3719 = vmul.f32 %v3329, %v3670
  %v3720 = vmul.f32 %v3330, %v3670
  %v3721 = vmul.f32 %v3331, %v3670
  %v3722 = vmul.f32 %v3332, %v3670
  %v3723 = vmul.f32 %v3333, %v3670
  %v3724 = vmul.f32 %v3334, %v3670
  %v3725 = vmul.f32 %v3335, %v3670
  %v3726 = vmul.f32 %v3336, %v3670
  %v3727 = vmul.f32 %v3337, %v3670
  %v3728 = vmul.f32 %v3338, %v3670
  %v3729 = vmul.f32 %v3339, %v3670
  %v3730 = vmul.f32 %v3340, %v3670
  %v3731 = vmul.f32 %v3341, %v3670
  %v3732 = vmul.f32 %v3342, %v3670
  %v3733 = vmul.f32 %v3343, %v3670
  %v3734 = vmul.f32 %v3344, %v3670
  %v3735 = vsel %vm1863, %v3671, 0.0
  %3736 = vadd.xlane.f32.xlu0 %v3735
  %v3737 = vpop.xlane.xlu0 %3736
  %v3738 = vsel %vm1863, %v3672, 0.0
  %3739 = vadd.xlane.f32.xlu0 %v3738
  %v3740 = vpop.xlane.xlu0 %3739
  %v3741 = vsel %vm1863, %v3673, 0.0
  %3742 = vadd.xlane.f32.xlu0 %v3741
  %v3743 = vpop.xlane.xlu0 %3742
  %v3744 = vsel %vm1863, %v3674, 0.0
  %3745 = vadd.xlane.f32.xlu0 %v3744
  %v3746 = vpop.xlane.xlu0 %3745
  %v3747 = vsel %vm1863, %v3675, 0.0
  %3748 = vadd.xlane.f32.xlu0 %v3747
  %v3749 = vpop.xlane.xlu0 %3748
  %v3750 = vsel %vm1863, %v3676, 0.0
  %3751 = vadd.xlane.f32.xlu0 %v3750
  %v3752 = vpop.xlane.xlu0 %3751
  %v3753 = vsel %vm1863, %v3677, 0.0
  %3754 = vadd.xlane.f32.xlu0 %v3753
  %v3755 = vpop.xlane.xlu0 %3754
  %v3756 = vsel %vm1863, %v3678, 0.0
  %3757 = vadd.xlane.f32.xlu0 %v3756
  %v3758 = vpop.xlane.xlu0 %3757
  %v3759 = vsel %vm1863, %v3679, 0.0
  %3760 = vadd.xlane.f32.xlu0 %v3759
  %v3761 = vpop.xlane.xlu0 %3760
  %v3762 = vsel %vm1863, %v3680, 0.0
  %3763 = vadd.xlane.f32.xlu0 %v3762
  %v3764 = vpop.xlane.xlu0 %3763
  %v3765 = vsel %vm1863, %v3681, 0.0
  %3766 = vadd.xlane.f32.xlu0 %v3765
  %v3767 = vpop.xlane.xlu0 %3766
  %v3768 = vsel %vm1863, %v3682, 0.0
  %3769 = vadd.xlane.f32.xlu0 %v3768
  %v3770 = vpop.xlane.xlu0 %3769
  %v3771 = vsel %vm1863, %v3683, 0.0
  %3772 = vadd.xlane.f32.xlu0 %v3771
  %v3773 = vpop.xlane.xlu0 %3772
  %v3774 = vsel %vm1863, %v3684, 0.0
  %3775 = vadd.xlane.f32.xlu0 %v3774
  %v3776 = vpop.xlane.xlu0 %3775
  %v3777 = vsel %vm1863, %v3685, 0.0
  %3778 = vadd.xlane.f32.xlu0 %v3777
  %v3779 = vpop.xlane.xlu0 %3778
  %v3780 = vsel %vm1863, %v3686, 0.0
  %3781 = vadd.xlane.f32.xlu0 %v3780
  %v3782 = vpop.xlane.xlu0 %3781
  %v3783 = vsel %vm1863, %v3687, 0.0
  %3784 = vadd.xlane.f32.xlu0 %v3783
  %v3785 = vpop.xlane.xlu0 %3784
  %v3786 = vsel %vm1863, %v3688, 0.0
  %3787 = vadd.xlane.f32.xlu0 %v3786
  %v3788 = vpop.xlane.xlu0 %3787
  %v3789 = vsel %vm1863, %v3689, 0.0
  %3790 = vadd.xlane.f32.xlu0 %v3789
  %v3791 = vpop.xlane.xlu0 %3790
  %v3792 = vsel %vm1863, %v3690, 0.0
  %3793 = vadd.xlane.f32.xlu0 %v3792
  %v3794 = vpop.xlane.xlu0 %3793
  %v3795 = vsel %vm1863, %v3691, 0.0
  %3796 = vadd.xlane.f32.xlu0 %v3795
  %v3797 = vpop.xlane.xlu0 %3796
  %v3798 = vsel %vm1863, %v3692, 0.0
  %3799 = vadd.xlane.f32.xlu0 %v3798
  %v3800 = vpop.xlane.xlu0 %3799
  %v3801 = vsel %vm1863, %v3693, 0.0
  %3802 = vadd.xlane.f32.xlu0 %v3801
  %v3803 = vpop.xlane.xlu0 %3802
  %v3804 = vsel %vm1863, %v3694, 0.0
  %3805 = vadd.xlane.f32.xlu0 %v3804
  %v3806 = vpop.xlane.xlu0 %3805
  %v3807 = vsel %vm1863, %v3695, 0.0
  %3808 = vadd.xlane.f32.xlu0 %v3807
  %v3809 = vpop.xlane.xlu0 %3808
  %v3810 = vsel %vm1863, %v3696, 0.0
  %3811 = vadd.xlane.f32.xlu0 %v3810
  %v3812 = vpop.xlane.xlu0 %3811
  %v3813 = vsel %vm1863, %v3697, 0.0
  %3814 = vadd.xlane.f32.xlu0 %v3813
  %v3815 = vpop.xlane.xlu0 %3814
  %v3816 = vsel %vm1863, %v3698, 0.0
  %3817 = vadd.xlane.f32.xlu0 %v3816
  %v3818 = vpop.xlane.xlu0 %3817
  %v3819 = vsel %vm1863, %v3699, 0.0
  %3820 = vadd.xlane.f32.xlu0 %v3819
  %v3821 = vpop.xlane.xlu0 %3820
  %v3822 = vsel %vm1863, %v3700, 0.0
  %3823 = vadd.xlane.f32.xlu0 %v3822
  %v3824 = vpop.xlane.xlu0 %3823
  %v3825 = vsel %vm1863, %v3701, 0.0
  %3826 = vadd.xlane.f32.xlu0 %v3825
  %v3827 = vpop.xlane.xlu0 %3826
  %v3828 = vsel %vm1863, %v3702, 0.0
  %3829 = vadd.xlane.f32.xlu0 %v3828
  %v3830 = vpop.xlane.xlu0 %3829
  %v3831 = vsel %vm1863, %v3703, 0.0
  %3832 = vadd.xlane.f32.xlu0 %v3831
  %v3833 = vpop.xlane.xlu0 %3832
  %v3834 = vsel %vm1863, %v3704, 0.0
  %3835 = vadd.xlane.f32.xlu0 %v3834
  %v3836 = vpop.xlane.xlu0 %3835
  %v3837 = vsel %vm1863, %v3705, 0.0
  %3838 = vadd.xlane.f32.xlu0 %v3837
  %v3839 = vpop.xlane.xlu0 %3838
  %v3840 = vsel %vm1863, %v3706, 0.0
  %3841 = vadd.xlane.f32.xlu0 %v3840
  %v3842 = vpop.xlane.xlu0 %3841
  %v3843 = vsel %vm1863, %v3707, 0.0
  %3844 = vadd.xlane.f32.xlu0 %v3843
  %v3845 = vpop.xlane.xlu0 %3844
  %v3846 = vsel %vm1863, %v3708, 0.0
  %3847 = vadd.xlane.f32.xlu0 %v3846
  %v3848 = vpop.xlane.xlu0 %3847
  %v3849 = vsel %vm1863, %v3709, 0.0
  %3850 = vadd.xlane.f32.xlu0 %v3849
  %v3851 = vpop.xlane.xlu0 %3850
  %v3852 = vsel %vm1863, %v3710, 0.0
  %3853 = vadd.xlane.f32.xlu0 %v3852
  %v3854 = vpop.xlane.xlu0 %3853
  %v3855 = vsel %vm1863, %v3711, 0.0
  %3856 = vadd.xlane.f32.xlu0 %v3855
  %v3857 = vpop.xlane.xlu0 %3856
  %v3858 = vsel %vm1863, %v3712, 0.0
  %3859 = vadd.xlane.f32.xlu0 %v3858
  %v3860 = vpop.xlane.xlu0 %3859
  %v3861 = vsel %vm1863, %v3713, 0.0
  %3862 = vadd.xlane.f32.xlu0 %v3861
  %v3863 = vpop.xlane.xlu0 %3862
  %v3864 = vsel %vm1863, %v3714, 0.0
  %3865 = vadd.xlane.f32.xlu0 %v3864
  %v3866 = vpop.xlane.xlu0 %3865
  %v3867 = vsel %vm1863, %v3715, 0.0
  %3868 = vadd.xlane.f32.xlu0 %v3867
  %v3869 = vpop.xlane.xlu0 %3868
  %v3870 = vsel %vm1863, %v3716, 0.0
  %3871 = vadd.xlane.f32.xlu0 %v3870
  %v3872 = vpop.xlane.xlu0 %3871
  %v3873 = vsel %vm1863, %v3717, 0.0
  %3874 = vadd.xlane.f32.xlu0 %v3873
  %v3875 = vpop.xlane.xlu0 %3874
  %v3876 = vsel %vm1863, %v3718, 0.0
  %3877 = vadd.xlane.f32.xlu0 %v3876
  %v3878 = vpop.xlane.xlu0 %3877
  %v3879 = vsel %vm1863, %v3719, 0.0
  %3880 = vadd.xlane.f32.xlu0 %v3879
  %v3881 = vpop.xlane.xlu0 %3880
  %v3882 = vsel %vm1863, %v3720, 0.0
  %3883 = vadd.xlane.f32.xlu0 %v3882
  %v3884 = vpop.xlane.xlu0 %3883
  %v3885 = vsel %vm1863, %v3721, 0.0
  %3886 = vadd.xlane.f32.xlu0 %v3885
  %v3887 = vpop.xlane.xlu0 %3886
  %v3888 = vsel %vm1863, %v3722, 0.0
  %3889 = vadd.xlane.f32.xlu0 %v3888
  %v3890 = vpop.xlane.xlu0 %3889
  %v3891 = vsel %vm1863, %v3723, 0.0
  %3892 = vadd.xlane.f32.xlu0 %v3891
  %v3893 = vpop.xlane.xlu0 %3892
  %v3894 = vsel %vm1863, %v3724, 0.0
  %3895 = vadd.xlane.f32.xlu0 %v3894
  %v3896 = vpop.xlane.xlu0 %3895
  %v3897 = vsel %vm1863, %v3725, 0.0
  %3898 = vadd.xlane.f32.xlu0 %v3897
  %v3899 = vpop.xlane.xlu0 %3898
  %v3900 = vsel %vm1863, %v3726, 0.0
  %3901 = vadd.xlane.f32.xlu0 %v3900
  %v3902 = vpop.xlane.xlu0 %3901
  %v3903 = vsel %vm1863, %v3727, 0.0
  %3904 = vadd.xlane.f32.xlu0 %v3903
  %v3905 = vpop.xlane.xlu0 %3904
  %v3906 = vsel %vm1863, %v3728, 0.0
  %3907 = vadd.xlane.f32.xlu0 %v3906
  %v3908 = vpop.xlane.xlu0 %3907
  %v3909 = vsel %vm1863, %v3729, 0.0
  %3910 = vadd.xlane.f32.xlu0 %v3909
  %v3911 = vpop.xlane.xlu0 %3910
  %v3912 = vsel %vm1863, %v3730, 0.0
  %3913 = vadd.xlane.f32.xlu0 %v3912
  %v3914 = vpop.xlane.xlu0 %3913
  %v3915 = vsel %vm1863, %v3731, 0.0
  %3916 = vadd.xlane.f32.xlu0 %v3915
  %v3917 = vpop.xlane.xlu0 %3916
  %v3918 = vsel %vm1863, %v3732, 0.0
  %3919 = vadd.xlane.f32.xlu0 %v3918
  %v3920 = vpop.xlane.xlu0 %3919
  %v3921 = vsel %vm1863, %v3733, 0.0
  %3922 = vadd.xlane.f32.xlu0 %v3921
  %v3923 = vpop.xlane.xlu0 %3922
  %v3924 = vsel %vm1863, %v3734, 0.0
  %3925 = vadd.xlane.f32.xlu0 %v3924
  %v3926 = vpop.xlane.xlu0 %3925
  %v3927 = vmul.f32 %v3281, %v3737
  %v3928 = vmul.f32 %v3282, %v3740
  %v3929 = vmul.f32 %v3283, %v3743
  %v3930 = vmul.f32 %v3284, %v3746
  %v3931 = vmul.f32 %v3285, %v3749
  %v3932 = vmul.f32 %v3286, %v3752
  %v3933 = vmul.f32 %v3287, %v3755
  %v3934 = vmul.f32 %v3288, %v3758
  %v3935 = vmul.f32 %v3289, %v3761
  %v3936 = vmul.f32 %v3290, %v3764
  %v3937 = vmul.f32 %v3291, %v3767
  %v3938 = vmul.f32 %v3292, %v3770
  %v3939 = vmul.f32 %v3293, %v3773
  %v3940 = vmul.f32 %v3294, %v3776
  %v3941 = vmul.f32 %v3295, %v3779
  %v3942 = vmul.f32 %v3296, %v3782
  %v3943 = vmul.f32 %v3297, %v3785
  %v3944 = vmul.f32 %v3298, %v3788
  %v3945 = vmul.f32 %v3299, %v3791
  %v3946 = vmul.f32 %v3300, %v3794
  %v3947 = vmul.f32 %v3301, %v3797
  %v3948 = vmul.f32 %v3302, %v3800
  %v3949 = vmul.f32 %v3303, %v3803
  %v3950 = vmul.f32 %v3304, %v3806
  %v3951 = vmul.f32 %v3305, %v3809
  %v3952 = vmul.f32 %v3306, %v3812
  %v3953 = vmul.f32 %v3307, %v3815
  %v3954 = vmul.f32 %v3308, %v3818
  %v3955 = vmul.f32 %v3309, %v3821
  %v3956 = vmul.f32 %v3310, %v3824
  %v3957 = vmul.f32 %v3311, %v3827
  %v3958 = vmul.f32 %v3312, %v3830
  %v3959 = vmul.f32 %v3313, %v3833
  %v3960 = vmul.f32 %v3314, %v3836
  %v3961 = vmul.f32 %v3315, %v3839
  %v3962 = vmul.f32 %v3316, %v3842
  %v3963 = vmul.f32 %v3317, %v3845
  %v3964 = vmul.f32 %v3318, %v3848
  %v3965 = vmul.f32 %v3319, %v3851
  %v3966 = vmul.f32 %v3320, %v3854
  %v3967 = vmul.f32 %v3321, %v3857
  %v3968 = vmul.f32 %v3322, %v3860
  %v3969 = vmul.f32 %v3323, %v3863
  %v3970 = vmul.f32 %v3324, %v3866
  %v3971 = vmul.f32 %v3325, %v3869
  %v3972 = vmul.f32 %v3326, %v3872
  %v3973 = vmul.f32 %v3327, %v3875
  %v3974 = vmul.f32 %v3328, %v3878
  %v3975 = vmul.f32 %v3329, %v3881
  %v3976 = vmul.f32 %v3330, %v3884
  %v3977 = vmul.f32 %v3331, %v3887
  %v3978 = vmul.f32 %v3332, %v3890
  %v3979 = vmul.f32 %v3333, %v3893
  %v3980 = vmul.f32 %v3334, %v3896
  %v3981 = vmul.f32 %v3335, %v3899
  %v3982 = vmul.f32 %v3336, %v3902
  %v3983 = vmul.f32 %v3337, %v3905
  %v3984 = vmul.f32 %v3338, %v3908
  %v3985 = vmul.f32 %v3339, %v3911
  %v3986 = vmul.f32 %v3340, %v3914
  %v3987 = vmul.f32 %v3341, %v3917
  %v3988 = vmul.f32 %v3342, %v3920
  %v3989 = vmul.f32 %v3343, %v3923
  %v3990 = vmul.f32 %v3344, %v3926
  %v3991 = vlaneseq
  %v3992 = vshrl.u32 %v3991, 7
  %v3993 = vsub.s32 0, %v3992
  %v3994 = vrot.slane %v3666, %v3993
  %v3995 = vadd.f32 %v3927, %v3994
  %v3996 = vadd.f32 %v3928, %v3994
  %v3997 = vadd.f32 %v3929, %v3994
  %v3998 = vadd.f32 %v3930, %v3994
  %v3999 = vadd.f32 %v3931, %v3994
  %v4000 = vadd.f32 %v3932, %v3994
  %v4001 = vadd.f32 %v3933, %v3994
  %v4002 = vadd.f32 %v3934, %v3994
  %v4003 = vadd.f32 %v3935, %v3994
  %v4004 = vadd.f32 %v3936, %v3994
  %v4005 = vadd.f32 %v3937, %v3994
  %v4006 = vadd.f32 %v3938, %v3994
  %v4007 = vadd.f32 %v3939, %v3994
  %v4008 = vadd.f32 %v3940, %v3994
  %v4009 = vadd.f32 %v3941, %v3994
  %v4010 = vadd.f32 %v3942, %v3994
  %v4011 = vadd.f32 %v3943, %v3994
  %v4012 = vadd.f32 %v3944, %v3994
  %v4013 = vadd.f32 %v3945, %v3994
  %v4014 = vadd.f32 %v3946, %v3994
  %v4015 = vadd.f32 %v3947, %v3994
  %v4016 = vadd.f32 %v3948, %v3994
  %v4017 = vadd.f32 %v3949, %v3994
  %v4018 = vadd.f32 %v3950, %v3994
  %v4019 = vadd.f32 %v3951, %v3994
  %v4020 = vadd.f32 %v3952, %v3994
  %v4021 = vadd.f32 %v3953, %v3994
  %v4022 = vadd.f32 %v3954, %v3994
  %v4023 = vadd.f32 %v3955, %v3994
  %v4024 = vadd.f32 %v3956, %v3994
  %v4025 = vadd.f32 %v3957, %v3994
  %v4026 = vadd.f32 %v3958, %v3994
  %v4027 = vadd.f32 %v3959, %v3994
  %v4028 = vadd.f32 %v3960, %v3994
  %v4029 = vadd.f32 %v3961, %v3994
  %v4030 = vadd.f32 %v3962, %v3994
  %v4031 = vadd.f32 %v3963, %v3994
  %v4032 = vadd.f32 %v3964, %v3994
  %v4033 = vadd.f32 %v3965, %v3994
  %v4034 = vadd.f32 %v3966, %v3994
  %v4035 = vadd.f32 %v3967, %v3994
  %v4036 = vadd.f32 %v3968, %v3994
  %v4037 = vadd.f32 %v3969, %v3994
  %v4038 = vadd.f32 %v3970, %v3994
  %v4039 = vadd.f32 %v3971, %v3994
  %v4040 = vadd.f32 %v3972, %v3994
  %v4041 = vadd.f32 %v3973, %v3994
  %v4042 = vadd.f32 %v3974, %v3994
  %v4043 = vadd.f32 %v3975, %v3994
  %v4044 = vadd.f32 %v3976, %v3994
  %v4045 = vadd.f32 %v3977, %v3994
  %v4046 = vadd.f32 %v3978, %v3994
  %v4047 = vadd.f32 %v3979, %v3994
  %v4048 = vadd.f32 %v3980, %v3994
  %v4049 = vadd.f32 %v3981, %v3994
  %v4050 = vadd.f32 %v3982, %v3994
  %v4051 = vadd.f32 %v3983, %v3994
  %v4052 = vadd.f32 %v3984, %v3994
  %v4053 = vadd.f32 %v3985, %v3994
  %v4054 = vadd.f32 %v3986, %v3994
  %v4055 = vadd.f32 %v3987, %v3994
  %v4056 = vadd.f32 %v3988, %v3994
  %v4057 = vadd.f32 %v3989, %v3994
  %v4058 = vadd.f32 %v3990, %v3994
  %v4059 = vadd.f32 %v3995, %v3281
  %v4060 = vadd.f32 %v3996, %v3282
  %v4061 = vadd.f32 %v3997, %v3283
  %v4062 = vadd.f32 %v3998, %v3284
  %v4063 = vadd.f32 %v3999, %v3285
  %v4064 = vadd.f32 %v4000, %v3286
  %v4065 = vadd.f32 %v4001, %v3287
  %v4066 = vadd.f32 %v4002, %v3288
  %v4067 = vadd.f32 %v4003, %v3289
  %v4068 = vadd.f32 %v4004, %v3290
  %v4069 = vadd.f32 %v4005, %v3291
  %v4070 = vadd.f32 %v4006, %v3292
  %v4071 = vadd.f32 %v4007, %v3293
  %v4072 = vadd.f32 %v4008, %v3294
  %v4073 = vadd.f32 %v4009, %v3295
  %v4074 = vadd.f32 %v4010, %v3296
  %v4075 = vadd.f32 %v4011, %v3297
  %v4076 = vadd.f32 %v4012, %v3298
  %v4077 = vadd.f32 %v4013, %v3299
  %v4078 = vadd.f32 %v4014, %v3300
  %v4079 = vadd.f32 %v4015, %v3301
  %v4080 = vadd.f32 %v4016, %v3302
  %v4081 = vadd.f32 %v4017, %v3303
  %v4082 = vadd.f32 %v4018, %v3304
  %v4083 = vadd.f32 %v4019, %v3305
  %v4084 = vadd.f32 %v4020, %v3306
  %v4085 = vadd.f32 %v4021, %v3307
  %v4086 = vadd.f32 %v4022, %v3308
  %v4087 = vadd.f32 %v4023, %v3309
  %v4088 = vadd.f32 %v4024, %v3310
  %v4089 = vadd.f32 %v4025, %v3311
  %v4090 = vadd.f32 %v4026, %v3312
  %v4091 = vadd.f32 %v4027, %v3313
  %v4092 = vadd.f32 %v4028, %v3314
  %v4093 = vadd.f32 %v4029, %v3315
  %v4094 = vadd.f32 %v4030, %v3316
  %v4095 = vadd.f32 %v4031, %v3317
  %v4096 = vadd.f32 %v4032, %v3318
  %v4097 = vadd.f32 %v4033, %v3319
  %v4098 = vadd.f32 %v4034, %v3320
  %v4099 = vadd.f32 %v4035, %v3321
  %v4100 = vadd.f32 %v4036, %v3322
  %v4101 = vadd.f32 %v4037, %v3323
  %v4102 = vadd.f32 %v4038, %v3324
  %v4103 = vadd.f32 %v4039, %v3325
  %v4104 = vadd.f32 %v4040, %v3326
  %v4105 = vadd.f32 %v4041, %v3327
  %v4106 = vadd.f32 %v4042, %v3328
  %v4107 = vadd.f32 %v4043, %v3329
  %v4108 = vadd.f32 %v4044, %v3330
  %v4109 = vadd.f32 %v4045, %v3331
  %v4110 = vadd.f32 %v4046, %v3332
  %v4111 = vadd.f32 %v4047, %v3333
  %v4112 = vadd.f32 %v4048, %v3334
  %v4113 = vadd.f32 %v4049, %v3335
  %v4114 = vadd.f32 %v4050, %v3336
  %v4115 = vadd.f32 %v4051, %v3337
  %v4116 = vadd.f32 %v4052, %v3338
  %v4117 = vadd.f32 %v4053, %v3339
  %v4118 = vadd.f32 %v4054, %v3340
  %v4119 = vadd.f32 %v4055, %v3341
  %v4120 = vadd.f32 %v4056, %v3342
  %v4121 = vadd.f32 %v4057, %v3343
  %v4122 = vadd.f32 %v4058, %v3344
  %v4123 = vld [vmem:[%s2 + $0x11] sm:$0x1]
  %v4124 = vld [vmem:[%s2 + $0x19] sm:$0x1]
  %v4125 = vlaneseq
  %v4126 = vshrl.u32 %v4125, 7
  %v4127 = vsub.s32 0, %v4126
  %v4128 = vrot.slane %v4123, %v4127
  %v4129 = vmul.f32 %v4059, %v4128
  %v4130 = vmul.f32 %v4060, %v4128
  %v4131 = vmul.f32 %v4061, %v4128
  %v4132 = vmul.f32 %v4062, %v4128
  %v4133 = vmul.f32 %v4063, %v4128
  %v4134 = vmul.f32 %v4064, %v4128
  %v4135 = vmul.f32 %v4065, %v4128
  %v4136 = vmul.f32 %v4066, %v4128
  %v4137 = vmul.f32 %v4067, %v4128
  %v4138 = vmul.f32 %v4068, %v4128
  %v4139 = vmul.f32 %v4069, %v4128
  %v4140 = vmul.f32 %v4070, %v4128
  %v4141 = vmul.f32 %v4071, %v4128
  %v4142 = vmul.f32 %v4072, %v4128
  %v4143 = vmul.f32 %v4073, %v4128
  %v4144 = vmul.f32 %v4074, %v4128
  %v4145 = vmul.f32 %v4075, %v4128
  %v4146 = vmul.f32 %v4076, %v4128
  %v4147 = vmul.f32 %v4077, %v4128
  %v4148 = vmul.f32 %v4078, %v4128
  %v4149 = vmul.f32 %v4079, %v4128
  %v4150 = vmul.f32 %v4080, %v4128
  %v4151 = vmul.f32 %v4081, %v4128
  %v4152 = vmul.f32 %v4082, %v4128
  %v4153 = vmul.f32 %v4083, %v4128
  %v4154 = vmul.f32 %v4084, %v4128
  %v4155 = vmul.f32 %v4085, %v4128
  %v4156 = vmul.f32 %v4086, %v4128
  %v4157 = vmul.f32 %v4087, %v4128
  %v4158 = vmul.f32 %v4088, %v4128
  %v4159 = vmul.f32 %v4089, %v4128
  %v4160 = vmul.f32 %v4090, %v4128
  %v4161 = vmul.f32 %v4091, %v4128
  %v4162 = vmul.f32 %v4092, %v4128
  %v4163 = vmul.f32 %v4093, %v4128
  %v4164 = vmul.f32 %v4094, %v4128
  %v4165 = vmul.f32 %v4095, %v4128
  %v4166 = vmul.f32 %v4096, %v4128
  %v4167 = vmul.f32 %v4097, %v4128
  %v4168 = vmul.f32 %v4098, %v4128
  %v4169 = vmul.f32 %v4099, %v4128
  %v4170 = vmul.f32 %v4100, %v4128
  %v4171 = vmul.f32 %v4101, %v4128
  %v4172 = vmul.f32 %v4102, %v4128
  %v4173 = vmul.f32 %v4103, %v4128
  %v4174 = vmul.f32 %v4104, %v4128
  %v4175 = vmul.f32 %v4105, %v4128
  %v4176 = vmul.f32 %v4106, %v4128
  %v4177 = vmul.f32 %v4107, %v4128
  %v4178 = vmul.f32 %v4108, %v4128
  %v4179 = vmul.f32 %v4109, %v4128
  %v4180 = vmul.f32 %v4110, %v4128
  %v4181 = vmul.f32 %v4111, %v4128
  %v4182 = vmul.f32 %v4112, %v4128
  %v4183 = vmul.f32 %v4113, %v4128
  %v4184 = vmul.f32 %v4114, %v4128
  %v4185 = vmul.f32 %v4115, %v4128
  %v4186 = vmul.f32 %v4116, %v4128
  %v4187 = vmul.f32 %v4117, %v4128
  %v4188 = vmul.f32 %v4118, %v4128
  %v4189 = vmul.f32 %v4119, %v4128
  %v4190 = vmul.f32 %v4120, %v4128
  %v4191 = vmul.f32 %v4121, %v4128
  %v4192 = vmul.f32 %v4122, %v4128
  %v4193 = vsel %vm1863, %v4129, 0.0
  %4194 = vadd.xlane.f32.xlu0 %v4193
  %v4195 = vpop.xlane.xlu0 %4194
  %v4196 = vsel %vm1863, %v4130, 0.0
  %4197 = vadd.xlane.f32.xlu0 %v4196
  %v4198 = vpop.xlane.xlu0 %4197
  %v4199 = vsel %vm1863, %v4131, 0.0
  %4200 = vadd.xlane.f32.xlu0 %v4199
  %v4201 = vpop.xlane.xlu0 %4200
  %v4202 = vsel %vm1863, %v4132, 0.0
  %4203 = vadd.xlane.f32.xlu0 %v4202
  %v4204 = vpop.xlane.xlu0 %4203
  %v4205 = vsel %vm1863, %v4133, 0.0
  %4206 = vadd.xlane.f32.xlu0 %v4205
  %v4207 = vpop.xlane.xlu0 %4206
  %v4208 = vsel %vm1863, %v4134, 0.0
  %4209 = vadd.xlane.f32.xlu0 %v4208
  %v4210 = vpop.xlane.xlu0 %4209
  %v4211 = vsel %vm1863, %v4135, 0.0
  %4212 = vadd.xlane.f32.xlu0 %v4211
  %v4213 = vpop.xlane.xlu0 %4212
  %v4214 = vsel %vm1863, %v4136, 0.0
  %4215 = vadd.xlane.f32.xlu0 %v4214
  %v4216 = vpop.xlane.xlu0 %4215
  %v4217 = vsel %vm1863, %v4137, 0.0
  %4218 = vadd.xlane.f32.xlu0 %v4217
  %v4219 = vpop.xlane.xlu0 %4218
  %v4220 = vsel %vm1863, %v4138, 0.0
  %4221 = vadd.xlane.f32.xlu0 %v4220
  %v4222 = vpop.xlane.xlu0 %4221
  %v4223 = vsel %vm1863, %v4139, 0.0
  %4224 = vadd.xlane.f32.xlu0 %v4223
  %v4225 = vpop.xlane.xlu0 %4224
  %v4226 = vsel %vm1863, %v4140, 0.0
  %4227 = vadd.xlane.f32.xlu0 %v4226
  %v4228 = vpop.xlane.xlu0 %4227
  %v4229 = vsel %vm1863, %v4141, 0.0
  %4230 = vadd.xlane.f32.xlu0 %v4229
  %v4231 = vpop.xlane.xlu0 %4230
  %v4232 = vsel %vm1863, %v4142, 0.0
  %4233 = vadd.xlane.f32.xlu0 %v4232
  %v4234 = vpop.xlane.xlu0 %4233
  %v4235 = vsel %vm1863, %v4143, 0.0
  %4236 = vadd.xlane.f32.xlu0 %v4235
  %v4237 = vpop.xlane.xlu0 %4236
  %v4238 = vsel %vm1863, %v4144, 0.0
  %4239 = vadd.xlane.f32.xlu0 %v4238
  %v4240 = vpop.xlane.xlu0 %4239
  %v4241 = vsel %vm1863, %v4145, 0.0
  %4242 = vadd.xlane.f32.xlu0 %v4241
  %v4243 = vpop.xlane.xlu0 %4242
  %v4244 = vsel %vm1863, %v4146, 0.0
  %4245 = vadd.xlane.f32.xlu0 %v4244
  %v4246 = vpop.xlane.xlu0 %4245
  %v4247 = vsel %vm1863, %v4147, 0.0
  %4248 = vadd.xlane.f32.xlu0 %v4247
  %v4249 = vpop.xlane.xlu0 %4248
  %v4250 = vsel %vm1863, %v4148, 0.0
  %4251 = vadd.xlane.f32.xlu0 %v4250
  %v4252 = vpop.xlane.xlu0 %4251
  %v4253 = vsel %vm1863, %v4149, 0.0
  %4254 = vadd.xlane.f32.xlu0 %v4253
  %v4255 = vpop.xlane.xlu0 %4254
  %v4256 = vsel %vm1863, %v4150, 0.0
  %4257 = vadd.xlane.f32.xlu0 %v4256
  %v4258 = vpop.xlane.xlu0 %4257
  %v4259 = vsel %vm1863, %v4151, 0.0
  %4260 = vadd.xlane.f32.xlu0 %v4259
  %v4261 = vpop.xlane.xlu0 %4260
  %v4262 = vsel %vm1863, %v4152, 0.0
  %4263 = vadd.xlane.f32.xlu0 %v4262
  %v4264 = vpop.xlane.xlu0 %4263
  %v4265 = vsel %vm1863, %v4153, 0.0
  %4266 = vadd.xlane.f32.xlu0 %v4265
  %v4267 = vpop.xlane.xlu0 %4266
  %v4268 = vsel %vm1863, %v4154, 0.0
  %4269 = vadd.xlane.f32.xlu0 %v4268
  %v4270 = vpop.xlane.xlu0 %4269
  %v4271 = vsel %vm1863, %v4155, 0.0
  %4272 = vadd.xlane.f32.xlu0 %v4271
  %v4273 = vpop.xlane.xlu0 %4272
  %v4274 = vsel %vm1863, %v4156, 0.0
  %4275 = vadd.xlane.f32.xlu0 %v4274
  %v4276 = vpop.xlane.xlu0 %4275
  %v4277 = vsel %vm1863, %v4157, 0.0
  %4278 = vadd.xlane.f32.xlu0 %v4277
  %v4279 = vpop.xlane.xlu0 %4278
  %v4280 = vsel %vm1863, %v4158, 0.0
  %4281 = vadd.xlane.f32.xlu0 %v4280
  %v4282 = vpop.xlane.xlu0 %4281
  %v4283 = vsel %vm1863, %v4159, 0.0
  %4284 = vadd.xlane.f32.xlu0 %v4283
  %v4285 = vpop.xlane.xlu0 %4284
  %v4286 = vsel %vm1863, %v4160, 0.0
  %4287 = vadd.xlane.f32.xlu0 %v4286
  %v4288 = vpop.xlane.xlu0 %4287
  %v4289 = vsel %vm1863, %v4161, 0.0
  %4290 = vadd.xlane.f32.xlu0 %v4289
  %v4291 = vpop.xlane.xlu0 %4290
  %v4292 = vsel %vm1863, %v4162, 0.0
  %4293 = vadd.xlane.f32.xlu0 %v4292
  %v4294 = vpop.xlane.xlu0 %4293
  %v4295 = vsel %vm1863, %v4163, 0.0
  %4296 = vadd.xlane.f32.xlu0 %v4295
  %v4297 = vpop.xlane.xlu0 %4296
  %v4298 = vsel %vm1863, %v4164, 0.0
  %4299 = vadd.xlane.f32.xlu0 %v4298
  %v4300 = vpop.xlane.xlu0 %4299
  %v4301 = vsel %vm1863, %v4165, 0.0
  %4302 = vadd.xlane.f32.xlu0 %v4301
  %v4303 = vpop.xlane.xlu0 %4302
  %v4304 = vsel %vm1863, %v4166, 0.0
  %4305 = vadd.xlane.f32.xlu0 %v4304
  %v4306 = vpop.xlane.xlu0 %4305
  %v4307 = vsel %vm1863, %v4167, 0.0
  %4308 = vadd.xlane.f32.xlu0 %v4307
  %v4309 = vpop.xlane.xlu0 %4308
  %v4310 = vsel %vm1863, %v4168, 0.0
  %4311 = vadd.xlane.f32.xlu0 %v4310
  %v4312 = vpop.xlane.xlu0 %4311
  %v4313 = vsel %vm1863, %v4169, 0.0
  %4314 = vadd.xlane.f32.xlu0 %v4313
  %v4315 = vpop.xlane.xlu0 %4314
  %v4316 = vsel %vm1863, %v4170, 0.0
  %4317 = vadd.xlane.f32.xlu0 %v4316
  %v4318 = vpop.xlane.xlu0 %4317
  %v4319 = vsel %vm1863, %v4171, 0.0
  %4320 = vadd.xlane.f32.xlu0 %v4319
  %v4321 = vpop.xlane.xlu0 %4320
  %v4322 = vsel %vm1863, %v4172, 0.0
  %4323 = vadd.xlane.f32.xlu0 %v4322
  %v4324 = vpop.xlane.xlu0 %4323
  %v4325 = vsel %vm1863, %v4173, 0.0
  %4326 = vadd.xlane.f32.xlu0 %v4325
  %v4327 = vpop.xlane.xlu0 %4326
  %v4328 = vsel %vm1863, %v4174, 0.0
  %4329 = vadd.xlane.f32.xlu0 %v4328
  %v4330 = vpop.xlane.xlu0 %4329
  %v4331 = vsel %vm1863, %v4175, 0.0
  %4332 = vadd.xlane.f32.xlu0 %v4331
  %v4333 = vpop.xlane.xlu0 %4332
  %v4334 = vsel %vm1863, %v4176, 0.0
  %4335 = vadd.xlane.f32.xlu0 %v4334
  %v4336 = vpop.xlane.xlu0 %4335
  %v4337 = vsel %vm1863, %v4177, 0.0
  %4338 = vadd.xlane.f32.xlu0 %v4337
  %v4339 = vpop.xlane.xlu0 %4338
  %v4340 = vsel %vm1863, %v4178, 0.0
  %4341 = vadd.xlane.f32.xlu0 %v4340
  %v4342 = vpop.xlane.xlu0 %4341
  %v4343 = vsel %vm1863, %v4179, 0.0
  %4344 = vadd.xlane.f32.xlu0 %v4343
  %v4345 = vpop.xlane.xlu0 %4344
  %v4346 = vsel %vm1863, %v4180, 0.0
  %4347 = vadd.xlane.f32.xlu0 %v4346
  %v4348 = vpop.xlane.xlu0 %4347
  %v4349 = vsel %vm1863, %v4181, 0.0
  %4350 = vadd.xlane.f32.xlu0 %v4349
  %v4351 = vpop.xlane.xlu0 %4350
  %v4352 = vsel %vm1863, %v4182, 0.0
  %4353 = vadd.xlane.f32.xlu0 %v4352
  %v4354 = vpop.xlane.xlu0 %4353
  %v4355 = vsel %vm1863, %v4183, 0.0
  %4356 = vadd.xlane.f32.xlu0 %v4355
  %v4357 = vpop.xlane.xlu0 %4356
  %v4358 = vsel %vm1863, %v4184, 0.0
  %4359 = vadd.xlane.f32.xlu0 %v4358
  %v4360 = vpop.xlane.xlu0 %4359
  %v4361 = vsel %vm1863, %v4185, 0.0
  %4362 = vadd.xlane.f32.xlu0 %v4361
  %v4363 = vpop.xlane.xlu0 %4362
  %v4364 = vsel %vm1863, %v4186, 0.0
  %4365 = vadd.xlane.f32.xlu0 %v4364
  %v4366 = vpop.xlane.xlu0 %4365
  %v4367 = vsel %vm1863, %v4187, 0.0
  %4368 = vadd.xlane.f32.xlu0 %v4367
  %v4369 = vpop.xlane.xlu0 %4368
  %v4370 = vsel %vm1863, %v4188, 0.0
  %4371 = vadd.xlane.f32.xlu0 %v4370
  %v4372 = vpop.xlane.xlu0 %4371
  %v4373 = vsel %vm1863, %v4189, 0.0
  %4374 = vadd.xlane.f32.xlu0 %v4373
  %v4375 = vpop.xlane.xlu0 %4374
  %v4376 = vsel %vm1863, %v4190, 0.0
  %4377 = vadd.xlane.f32.xlu0 %v4376
  %v4378 = vpop.xlane.xlu0 %4377
  %v4379 = vsel %vm1863, %v4191, 0.0
  %4380 = vadd.xlane.f32.xlu0 %v4379
  %v4381 = vpop.xlane.xlu0 %4380
  %v4382 = vsel %vm1863, %v4192, 0.0
  %4383 = vadd.xlane.f32.xlu0 %v4382
  %v4384 = vpop.xlane.xlu0 %4383
  %v4385 = vmul.f32 %v3281, %v4195
  %v4386 = vmul.f32 %v3282, %v4198
  %v4387 = vmul.f32 %v3283, %v4201
  %v4388 = vmul.f32 %v3284, %v4204
  %v4389 = vmul.f32 %v3285, %v4207
  %v4390 = vmul.f32 %v3286, %v4210
  %v4391 = vmul.f32 %v3287, %v4213
  %v4392 = vmul.f32 %v3288, %v4216
  %v4393 = vmul.f32 %v3289, %v4219
  %v4394 = vmul.f32 %v3290, %v4222
  %v4395 = vmul.f32 %v3291, %v4225
  %v4396 = vmul.f32 %v3292, %v4228
  %v4397 = vmul.f32 %v3293, %v4231
  %v4398 = vmul.f32 %v3294, %v4234
  %v4399 = vmul.f32 %v3295, %v4237
  %v4400 = vmul.f32 %v3296, %v4240
  %v4401 = vmul.f32 %v3297, %v4243
  %v4402 = vmul.f32 %v3298, %v4246
  %v4403 = vmul.f32 %v3299, %v4249
  %v4404 = vmul.f32 %v3300, %v4252
  %v4405 = vmul.f32 %v3301, %v4255
  %v4406 = vmul.f32 %v3302, %v4258
  %v4407 = vmul.f32 %v3303, %v4261
  %v4408 = vmul.f32 %v3304, %v4264
  %v4409 = vmul.f32 %v3305, %v4267
  %v4410 = vmul.f32 %v3306, %v4270
  %v4411 = vmul.f32 %v3307, %v4273
  %v4412 = vmul.f32 %v3308, %v4276
  %v4413 = vmul.f32 %v3309, %v4279
  %v4414 = vmul.f32 %v3310, %v4282
  %v4415 = vmul.f32 %v3311, %v4285
  %v4416 = vmul.f32 %v3312, %v4288
  %v4417 = vmul.f32 %v3313, %v4291
  %v4418 = vmul.f32 %v3314, %v4294
  %v4419 = vmul.f32 %v3315, %v4297
  %v4420 = vmul.f32 %v3316, %v4300
  %v4421 = vmul.f32 %v3317, %v4303
  %v4422 = vmul.f32 %v3318, %v4306
  %v4423 = vmul.f32 %v3319, %v4309
  %v4424 = vmul.f32 %v3320, %v4312
  %v4425 = vmul.f32 %v3321, %v4315
  %v4426 = vmul.f32 %v3322, %v4318
  %v4427 = vmul.f32 %v3323, %v4321
  %v4428 = vmul.f32 %v3324, %v4324
  %v4429 = vmul.f32 %v3325, %v4327
  %v4430 = vmul.f32 %v3326, %v4330
  %v4431 = vmul.f32 %v3327, %v4333
  %v4432 = vmul.f32 %v3328, %v4336
  %v4433 = vmul.f32 %v3329, %v4339
  %v4434 = vmul.f32 %v3330, %v4342
  %v4435 = vmul.f32 %v3331, %v4345
  %v4436 = vmul.f32 %v3332, %v4348
  %v4437 = vmul.f32 %v3333, %v4351
  %v4438 = vmul.f32 %v3334, %v4354
  %v4439 = vmul.f32 %v3335, %v4357
  %v4440 = vmul.f32 %v3336, %v4360
  %v4441 = vmul.f32 %v3337, %v4363
  %v4442 = vmul.f32 %v3338, %v4366
  %v4443 = vmul.f32 %v3339, %v4369
  %v4444 = vmul.f32 %v3340, %v4372
  %v4445 = vmul.f32 %v3341, %v4375
  %v4446 = vmul.f32 %v3342, %v4378
  %v4447 = vmul.f32 %v3343, %v4381
  %v4448 = vmul.f32 %v3344, %v4384
  %v4449 = vlaneseq
  %v4450 = vshrl.u32 %v4449, 7
  %v4451 = vsub.s32 0, %v4450
  %v4452 = vrot.slane %v4124, %v4451
  %v4453 = vadd.f32 %v4385, %v4452
  %v4454 = vadd.f32 %v4386, %v4452
  %v4455 = vadd.f32 %v4387, %v4452
  %v4456 = vadd.f32 %v4388, %v4452
  %v4457 = vadd.f32 %v4389, %v4452
  %v4458 = vadd.f32 %v4390, %v4452
  %v4459 = vadd.f32 %v4391, %v4452
  %v4460 = vadd.f32 %v4392, %v4452
  %v4461 = vadd.f32 %v4393, %v4452
  %v4462 = vadd.f32 %v4394, %v4452
  %v4463 = vadd.f32 %v4395, %v4452
  %v4464 = vadd.f32 %v4396, %v4452
  %v4465 = vadd.f32 %v4397, %v4452
  %v4466 = vadd.f32 %v4398, %v4452
  %v4467 = vadd.f32 %v4399, %v4452
  %v4468 = vadd.f32 %v4400, %v4452
  %v4469 = vadd.f32 %v4401, %v4452
  %v4470 = vadd.f32 %v4402, %v4452
  %v4471 = vadd.f32 %v4403, %v4452
  %v4472 = vadd.f32 %v4404, %v4452
  %v4473 = vadd.f32 %v4405, %v4452
  %v4474 = vadd.f32 %v4406, %v4452
  %v4475 = vadd.f32 %v4407, %v4452
  %v4476 = vadd.f32 %v4408, %v4452
  %v4477 = vadd.f32 %v4409, %v4452
  %v4478 = vadd.f32 %v4410, %v4452
  %v4479 = vadd.f32 %v4411, %v4452
  %v4480 = vadd.f32 %v4412, %v4452
  %v4481 = vadd.f32 %v4413, %v4452
  %v4482 = vadd.f32 %v4414, %v4452
  %v4483 = vadd.f32 %v4415, %v4452
  %v4484 = vadd.f32 %v4416, %v4452
  %v4485 = vadd.f32 %v4417, %v4452
  %v4486 = vadd.f32 %v4418, %v4452
  %v4487 = vadd.f32 %v4419, %v4452
  %v4488 = vadd.f32 %v4420, %v4452
  %v4489 = vadd.f32 %v4421, %v4452
  %v4490 = vadd.f32 %v4422, %v4452
  %v4491 = vadd.f32 %v4423, %v4452
  %v4492 = vadd.f32 %v4424, %v4452
  %v4493 = vadd.f32 %v4425, %v4452
  %v4494 = vadd.f32 %v4426, %v4452
  %v4495 = vadd.f32 %v4427, %v4452
  %v4496 = vadd.f32 %v4428, %v4452
  %v4497 = vadd.f32 %v4429, %v4452
  %v4498 = vadd.f32 %v4430, %v4452
  %v4499 = vadd.f32 %v4431, %v4452
  %v4500 = vadd.f32 %v4432, %v4452
  %v4501 = vadd.f32 %v4433, %v4452
  %v4502 = vadd.f32 %v4434, %v4452
  %v4503 = vadd.f32 %v4435, %v4452
  %v4504 = vadd.f32 %v4436, %v4452
  %v4505 = vadd.f32 %v4437, %v4452
  %v4506 = vadd.f32 %v4438, %v4452
  %v4507 = vadd.f32 %v4439, %v4452
  %v4508 = vadd.f32 %v4440, %v4452
  %v4509 = vadd.f32 %v4441, %v4452
  %v4510 = vadd.f32 %v4442, %v4452
  %v4511 = vadd.f32 %v4443, %v4452
  %v4512 = vadd.f32 %v4444, %v4452
  %v4513 = vadd.f32 %v4445, %v4452
  %v4514 = vadd.f32 %v4446, %v4452
  %v4515 = vadd.f32 %v4447, %v4452
  %v4516 = vadd.f32 %v4448, %v4452
  %v4517 = vadd.f32 %v4453, %v4059
  %v4518 = vadd.f32 %v4454, %v4060
  %v4519 = vadd.f32 %v4455, %v4061
  %v4520 = vadd.f32 %v4456, %v4062
  %v4521 = vadd.f32 %v4457, %v4063
  %v4522 = vadd.f32 %v4458, %v4064
  %v4523 = vadd.f32 %v4459, %v4065
  %v4524 = vadd.f32 %v4460, %v4066
  %v4525 = vadd.f32 %v4461, %v4067
  %v4526 = vadd.f32 %v4462, %v4068
  %v4527 = vadd.f32 %v4463, %v4069
  %v4528 = vadd.f32 %v4464, %v4070
  %v4529 = vadd.f32 %v4465, %v4071
  %v4530 = vadd.f32 %v4466, %v4072
  %v4531 = vadd.f32 %v4467, %v4073
  %v4532 = vadd.f32 %v4468, %v4074
  %v4533 = vadd.f32 %v4469, %v4075
  %v4534 = vadd.f32 %v4470, %v4076
  %v4535 = vadd.f32 %v4471, %v4077
  %v4536 = vadd.f32 %v4472, %v4078
  %v4537 = vadd.f32 %v4473, %v4079
  %v4538 = vadd.f32 %v4474, %v4080
  %v4539 = vadd.f32 %v4475, %v4081
  %v4540 = vadd.f32 %v4476, %v4082
  %v4541 = vadd.f32 %v4477, %v4083
  %v4542 = vadd.f32 %v4478, %v4084
  %v4543 = vadd.f32 %v4479, %v4085
  %v4544 = vadd.f32 %v4480, %v4086
  %v4545 = vadd.f32 %v4481, %v4087
  %v4546 = vadd.f32 %v4482, %v4088
  %v4547 = vadd.f32 %v4483, %v4089
  %v4548 = vadd.f32 %v4484, %v4090
  %v4549 = vadd.f32 %v4485, %v4091
  %v4550 = vadd.f32 %v4486, %v4092
  %v4551 = vadd.f32 %v4487, %v4093
  %v4552 = vadd.f32 %v4488, %v4094
  %v4553 = vadd.f32 %v4489, %v4095
  %v4554 = vadd.f32 %v4490, %v4096
  %v4555 = vadd.f32 %v4491, %v4097
  %v4556 = vadd.f32 %v4492, %v4098
  %v4557 = vadd.f32 %v4493, %v4099
  %v4558 = vadd.f32 %v4494, %v4100
  %v4559 = vadd.f32 %v4495, %v4101
  %v4560 = vadd.f32 %v4496, %v4102
  %v4561 = vadd.f32 %v4497, %v4103
  %v4562 = vadd.f32 %v4498, %v4104
  %v4563 = vadd.f32 %v4499, %v4105
  %v4564 = vadd.f32 %v4500, %v4106
  %v4565 = vadd.f32 %v4501, %v4107
  %v4566 = vadd.f32 %v4502, %v4108
  %v4567 = vadd.f32 %v4503, %v4109
  %v4568 = vadd.f32 %v4504, %v4110
  %v4569 = vadd.f32 %v4505, %v4111
  %v4570 = vadd.f32 %v4506, %v4112
  %v4571 = vadd.f32 %v4507, %v4113
  %v4572 = vadd.f32 %v4508, %v4114
  %v4573 = vadd.f32 %v4509, %v4115
  %v4574 = vadd.f32 %v4510, %v4116
  %v4575 = vadd.f32 %v4511, %v4117
  %v4576 = vadd.f32 %v4512, %v4118
  %v4577 = vadd.f32 %v4513, %v4119
  %v4578 = vadd.f32 %v4514, %v4120
  %v4579 = vadd.f32 %v4515, %v4121
  %v4580 = vadd.f32 %v4516, %v4122
  %v4581 = vld [vmem:[%s2 + $0x12] sm:$0x1]
  %v4582 = vld [vmem:[%s2 + $0x1a] sm:$0x1]
  %v4583 = vlaneseq
  %v4584 = vshrl.u32 %v4583, 7
  %v4585 = vsub.s32 0, %v4584
  %v4586 = vrot.slane %v4581, %v4585
  %v4587 = vmul.f32 %v4517, %v4586
  %v4588 = vmul.f32 %v4518, %v4586
  %v4589 = vmul.f32 %v4519, %v4586
  %v4590 = vmul.f32 %v4520, %v4586
  %v4591 = vmul.f32 %v4521, %v4586
  %v4592 = vmul.f32 %v4522, %v4586
  %v4593 = vmul.f32 %v4523, %v4586
  %v4594 = vmul.f32 %v4524, %v4586
  %v4595 = vmul.f32 %v4525, %v4586
  %v4596 = vmul.f32 %v4526, %v4586
  %v4597 = vmul.f32 %v4527, %v4586
  %v4598 = vmul.f32 %v4528, %v4586
  %v4599 = vmul.f32 %v4529, %v4586
  %v4600 = vmul.f32 %v4530, %v4586
  %v4601 = vmul.f32 %v4531, %v4586
  %v4602 = vmul.f32 %v4532, %v4586
  %v4603 = vmul.f32 %v4533, %v4586
  %v4604 = vmul.f32 %v4534, %v4586
  %v4605 = vmul.f32 %v4535, %v4586
  %v4606 = vmul.f32 %v4536, %v4586
  %v4607 = vmul.f32 %v4537, %v4586
  %v4608 = vmul.f32 %v4538, %v4586
  %v4609 = vmul.f32 %v4539, %v4586
  %v4610 = vmul.f32 %v4540, %v4586
  %v4611 = vmul.f32 %v4541, %v4586
  %v4612 = vmul.f32 %v4542, %v4586
  %v4613 = vmul.f32 %v4543, %v4586
  %v4614 = vmul.f32 %v4544, %v4586
  %v4615 = vmul.f32 %v4545, %v4586
  %v4616 = vmul.f32 %v4546, %v4586
  %v4617 = vmul.f32 %v4547, %v4586
  %v4618 = vmul.f32 %v4548, %v4586
  %v4619 = vmul.f32 %v4549, %v4586
  %v4620 = vmul.f32 %v4550, %v4586
  %v4621 = vmul.f32 %v4551, %v4586
  %v4622 = vmul.f32 %v4552, %v4586
  %v4623 = vmul.f32 %v4553, %v4586
  %v4624 = vmul.f32 %v4554, %v4586
  %v4625 = vmul.f32 %v4555, %v4586
  %v4626 = vmul.f32 %v4556, %v4586
  %v4627 = vmul.f32 %v4557, %v4586
  %v4628 = vmul.f32 %v4558, %v4586
  %v4629 = vmul.f32 %v4559, %v4586
  %v4630 = vmul.f32 %v4560, %v4586
  %v4631 = vmul.f32 %v4561, %v4586
  %v4632 = vmul.f32 %v4562, %v4586
  %v4633 = vmul.f32 %v4563, %v4586
  %v4634 = vmul.f32 %v4564, %v4586
  %v4635 = vmul.f32 %v4565, %v4586
  %v4636 = vmul.f32 %v4566, %v4586
  %v4637 = vmul.f32 %v4567, %v4586
  %v4638 = vmul.f32 %v4568, %v4586
  %v4639 = vmul.f32 %v4569, %v4586
  %v4640 = vmul.f32 %v4570, %v4586
  %v4641 = vmul.f32 %v4571, %v4586
  %v4642 = vmul.f32 %v4572, %v4586
  %v4643 = vmul.f32 %v4573, %v4586
  %v4644 = vmul.f32 %v4574, %v4586
  %v4645 = vmul.f32 %v4575, %v4586
  %v4646 = vmul.f32 %v4576, %v4586
  %v4647 = vmul.f32 %v4577, %v4586
  %v4648 = vmul.f32 %v4578, %v4586
  %v4649 = vmul.f32 %v4579, %v4586
  %v4650 = vmul.f32 %v4580, %v4586
  %v4651 = vsel %vm1863, %v4587, 0.0
  %4652 = vadd.xlane.f32.xlu0 %v4651
  %v4653 = vpop.xlane.xlu0 %4652
  %v4654 = vsel %vm1863, %v4588, 0.0
  %4655 = vadd.xlane.f32.xlu0 %v4654
  %v4656 = vpop.xlane.xlu0 %4655
  %v4657 = vsel %vm1863, %v4589, 0.0
  %4658 = vadd.xlane.f32.xlu0 %v4657
  %v4659 = vpop.xlane.xlu0 %4658
  %v4660 = vsel %vm1863, %v4590, 0.0
  %4661 = vadd.xlane.f32.xlu0 %v4660
  %v4662 = vpop.xlane.xlu0 %4661
  %v4663 = vsel %vm1863, %v4591, 0.0
  %4664 = vadd.xlane.f32.xlu0 %v4663
  %v4665 = vpop.xlane.xlu0 %4664
  %v4666 = vsel %vm1863, %v4592, 0.0
  %4667 = vadd.xlane.f32.xlu0 %v4666
  %v4668 = vpop.xlane.xlu0 %4667
  %v4669 = vsel %vm1863, %v4593, 0.0
  %4670 = vadd.xlane.f32.xlu0 %v4669
  %v4671 = vpop.xlane.xlu0 %4670
  %v4672 = vsel %vm1863, %v4594, 0.0
  %4673 = vadd.xlane.f32.xlu0 %v4672
  %v4674 = vpop.xlane.xlu0 %4673
  %v4675 = vsel %vm1863, %v4595, 0.0
  %4676 = vadd.xlane.f32.xlu0 %v4675
  %v4677 = vpop.xlane.xlu0 %4676
  %v4678 = vsel %vm1863, %v4596, 0.0
  %4679 = vadd.xlane.f32.xlu0 %v4678
  %v4680 = vpop.xlane.xlu0 %4679
  %v4681 = vsel %vm1863, %v4597, 0.0
  %4682 = vadd.xlane.f32.xlu0 %v4681
  %v4683 = vpop.xlane.xlu0 %4682
  %v4684 = vsel %vm1863, %v4598, 0.0
  %4685 = vadd.xlane.f32.xlu0 %v4684
  %v4686 = vpop.xlane.xlu0 %4685
  %v4687 = vsel %vm1863, %v4599, 0.0
  %4688 = vadd.xlane.f32.xlu0 %v4687
  %v4689 = vpop.xlane.xlu0 %4688
  %v4690 = vsel %vm1863, %v4600, 0.0
  %4691 = vadd.xlane.f32.xlu0 %v4690
  %v4692 = vpop.xlane.xlu0 %4691
  %v4693 = vsel %vm1863, %v4601, 0.0
  %4694 = vadd.xlane.f32.xlu0 %v4693
  %v4695 = vpop.xlane.xlu0 %4694
  %v4696 = vsel %vm1863, %v4602, 0.0
  %4697 = vadd.xlane.f32.xlu0 %v4696
  %v4698 = vpop.xlane.xlu0 %4697
  %v4699 = vsel %vm1863, %v4603, 0.0
  %4700 = vadd.xlane.f32.xlu0 %v4699
  %v4701 = vpop.xlane.xlu0 %4700
  %v4702 = vsel %vm1863, %v4604, 0.0
  %4703 = vadd.xlane.f32.xlu0 %v4702
  %v4704 = vpop.xlane.xlu0 %4703
  %v4705 = vsel %vm1863, %v4605, 0.0
  %4706 = vadd.xlane.f32.xlu0 %v4705
  %v4707 = vpop.xlane.xlu0 %4706
  %v4708 = vsel %vm1863, %v4606, 0.0
  %4709 = vadd.xlane.f32.xlu0 %v4708
  %v4710 = vpop.xlane.xlu0 %4709
  %v4711 = vsel %vm1863, %v4607, 0.0
  %4712 = vadd.xlane.f32.xlu0 %v4711
  %v4713 = vpop.xlane.xlu0 %4712
  %v4714 = vsel %vm1863, %v4608, 0.0
  %4715 = vadd.xlane.f32.xlu0 %v4714
  %v4716 = vpop.xlane.xlu0 %4715
  %v4717 = vsel %vm1863, %v4609, 0.0
  %4718 = vadd.xlane.f32.xlu0 %v4717
  %v4719 = vpop.xlane.xlu0 %4718
  %v4720 = vsel %vm1863, %v4610, 0.0
  %4721 = vadd.xlane.f32.xlu0 %v4720
  %v4722 = vpop.xlane.xlu0 %4721
  %v4723 = vsel %vm1863, %v4611, 0.0
  %4724 = vadd.xlane.f32.xlu0 %v4723
  %v4725 = vpop.xlane.xlu0 %4724
  %v4726 = vsel %vm1863, %v4612, 0.0
  %4727 = vadd.xlane.f32.xlu0 %v4726
  %v4728 = vpop.xlane.xlu0 %4727
  %v4729 = vsel %vm1863, %v4613, 0.0
  %4730 = vadd.xlane.f32.xlu0 %v4729
  %v4731 = vpop.xlane.xlu0 %4730
  %v4732 = vsel %vm1863, %v4614, 0.0
  %4733 = vadd.xlane.f32.xlu0 %v4732
  %v4734 = vpop.xlane.xlu0 %4733
  %v4735 = vsel %vm1863, %v4615, 0.0
  %4736 = vadd.xlane.f32.xlu0 %v4735
  %v4737 = vpop.xlane.xlu0 %4736
  %v4738 = vsel %vm1863, %v4616, 0.0
  %4739 = vadd.xlane.f32.xlu0 %v4738
  %v4740 = vpop.xlane.xlu0 %4739
  %v4741 = vsel %vm1863, %v4617, 0.0
  %4742 = vadd.xlane.f32.xlu0 %v4741
  %v4743 = vpop.xlane.xlu0 %4742
  %v4744 = vsel %vm1863, %v4618, 0.0
  %4745 = vadd.xlane.f32.xlu0 %v4744
  %v4746 = vpop.xlane.xlu0 %4745
  %v4747 = vsel %vm1863, %v4619, 0.0
  %4748 = vadd.xlane.f32.xlu0 %v4747
  %v4749 = vpop.xlane.xlu0 %4748
  %v4750 = vsel %vm1863, %v4620, 0.0
  %4751 = vadd.xlane.f32.xlu0 %v4750
  %v4752 = vpop.xlane.xlu0 %4751
  %v4753 = vsel %vm1863, %v4621, 0.0
  %4754 = vadd.xlane.f32.xlu0 %v4753
  %v4755 = vpop.xlane.xlu0 %4754
  %v4756 = vsel %vm1863, %v4622, 0.0
  %4757 = vadd.xlane.f32.xlu0 %v4756
  %v4758 = vpop.xlane.xlu0 %4757
  %v4759 = vsel %vm1863, %v4623, 0.0
  %4760 = vadd.xlane.f32.xlu0 %v4759
  %v4761 = vpop.xlane.xlu0 %4760
  %v4762 = vsel %vm1863, %v4624, 0.0
  %4763 = vadd.xlane.f32.xlu0 %v4762
  %v4764 = vpop.xlane.xlu0 %4763
  %v4765 = vsel %vm1863, %v4625, 0.0
  %4766 = vadd.xlane.f32.xlu0 %v4765
  %v4767 = vpop.xlane.xlu0 %4766
  %v4768 = vsel %vm1863, %v4626, 0.0
  %4769 = vadd.xlane.f32.xlu0 %v4768
  %v4770 = vpop.xlane.xlu0 %4769
  %v4771 = vsel %vm1863, %v4627, 0.0
  %4772 = vadd.xlane.f32.xlu0 %v4771
  %v4773 = vpop.xlane.xlu0 %4772
  %v4774 = vsel %vm1863, %v4628, 0.0
  %4775 = vadd.xlane.f32.xlu0 %v4774
  %v4776 = vpop.xlane.xlu0 %4775
  %v4777 = vsel %vm1863, %v4629, 0.0
  %4778 = vadd.xlane.f32.xlu0 %v4777
  %v4779 = vpop.xlane.xlu0 %4778
  %v4780 = vsel %vm1863, %v4630, 0.0
  %4781 = vadd.xlane.f32.xlu0 %v4780
  %v4782 = vpop.xlane.xlu0 %4781
  %v4783 = vsel %vm1863, %v4631, 0.0
  %4784 = vadd.xlane.f32.xlu0 %v4783
  %v4785 = vpop.xlane.xlu0 %4784
  %v4786 = vsel %vm1863, %v4632, 0.0
  %4787 = vadd.xlane.f32.xlu0 %v4786
  %v4788 = vpop.xlane.xlu0 %4787
  %v4789 = vsel %vm1863, %v4633, 0.0
  %4790 = vadd.xlane.f32.xlu0 %v4789
  %v4791 = vpop.xlane.xlu0 %4790
  %v4792 = vsel %vm1863, %v4634, 0.0
  %4793 = vadd.xlane.f32.xlu0 %v4792
  %v4794 = vpop.xlane.xlu0 %4793
  %v4795 = vsel %vm1863, %v4635, 0.0
  %4796 = vadd.xlane.f32.xlu0 %v4795
  %v4797 = vpop.xlane.xlu0 %4796
  %v4798 = vsel %vm1863, %v4636, 0.0
  %4799 = vadd.xlane.f32.xlu0 %v4798
  %v4800 = vpop.xlane.xlu0 %4799
  %v4801 = vsel %vm1863, %v4637, 0.0
  %4802 = vadd.xlane.f32.xlu0 %v4801
  %v4803 = vpop.xlane.xlu0 %4802
  %v4804 = vsel %vm1863, %v4638, 0.0
  %4805 = vadd.xlane.f32.xlu0 %v4804
  %v4806 = vpop.xlane.xlu0 %4805
  %v4807 = vsel %vm1863, %v4639, 0.0
  %4808 = vadd.xlane.f32.xlu0 %v4807
  %v4809 = vpop.xlane.xlu0 %4808
  %v4810 = vsel %vm1863, %v4640, 0.0
  %4811 = vadd.xlane.f32.xlu0 %v4810
  %v4812 = vpop.xlane.xlu0 %4811
  %v4813 = vsel %vm1863, %v4641, 0.0
  %4814 = vadd.xlane.f32.xlu0 %v4813
  %v4815 = vpop.xlane.xlu0 %4814
  %v4816 = vsel %vm1863, %v4642, 0.0
  %4817 = vadd.xlane.f32.xlu0 %v4816
  %v4818 = vpop.xlane.xlu0 %4817
  %v4819 = vsel %vm1863, %v4643, 0.0
  %4820 = vadd.xlane.f32.xlu0 %v4819
  %v4821 = vpop.xlane.xlu0 %4820
  %v4822 = vsel %vm1863, %v4644, 0.0
  %4823 = vadd.xlane.f32.xlu0 %v4822
  %v4824 = vpop.xlane.xlu0 %4823
  %v4825 = vsel %vm1863, %v4645, 0.0
  %4826 = vadd.xlane.f32.xlu0 %v4825
  %v4827 = vpop.xlane.xlu0 %4826
  %v4828 = vsel %vm1863, %v4646, 0.0
  %4829 = vadd.xlane.f32.xlu0 %v4828
  %v4830 = vpop.xlane.xlu0 %4829
  %v4831 = vsel %vm1863, %v4647, 0.0
  %4832 = vadd.xlane.f32.xlu0 %v4831
  %v4833 = vpop.xlane.xlu0 %4832
  %v4834 = vsel %vm1863, %v4648, 0.0
  %4835 = vadd.xlane.f32.xlu0 %v4834
  %v4836 = vpop.xlane.xlu0 %4835
  %v4837 = vsel %vm1863, %v4649, 0.0
  %4838 = vadd.xlane.f32.xlu0 %v4837
  %v4839 = vpop.xlane.xlu0 %4838
  %v4840 = vsel %vm1863, %v4650, 0.0
  %4841 = vadd.xlane.f32.xlu0 %v4840
  %v4842 = vpop.xlane.xlu0 %4841
  %v4843 = vmul.f32 %v3281, %v4653
  %v4844 = vmul.f32 %v3282, %v4656
  %v4845 = vmul.f32 %v3283, %v4659
  %v4846 = vmul.f32 %v3284, %v4662
  %v4847 = vmul.f32 %v3285, %v4665
  %v4848 = vmul.f32 %v3286, %v4668
  %v4849 = vmul.f32 %v3287, %v4671
  %v4850 = vmul.f32 %v3288, %v4674
  %v4851 = vmul.f32 %v3289, %v4677
  %v4852 = vmul.f32 %v3290, %v4680
  %v4853 = vmul.f32 %v3291, %v4683
  %v4854 = vmul.f32 %v3292, %v4686
  %v4855 = vmul.f32 %v3293, %v4689
  %v4856 = vmul.f32 %v3294, %v4692
  %v4857 = vmul.f32 %v3295, %v4695
  %v4858 = vmul.f32 %v3296, %v4698
  %v4859 = vmul.f32 %v3297, %v4701
  %v4860 = vmul.f32 %v3298, %v4704
  %v4861 = vmul.f32 %v3299, %v4707
  %v4862 = vmul.f32 %v3300, %v4710
  %v4863 = vmul.f32 %v3301, %v4713
  %v4864 = vmul.f32 %v3302, %v4716
  %v4865 = vmul.f32 %v3303, %v4719
  %v4866 = vmul.f32 %v3304, %v4722
  %v4867 = vmul.f32 %v3305, %v4725
  %v4868 = vmul.f32 %v3306, %v4728
  %v4869 = vmul.f32 %v3307, %v4731
  %v4870 = vmul.f32 %v3308, %v4734
  %v4871 = vmul.f32 %v3309, %v4737
  %v4872 = vmul.f32 %v3310, %v4740
  %v4873 = vmul.f32 %v3311, %v4743
  %v4874 = vmul.f32 %v3312, %v4746
  %v4875 = vmul.f32 %v3313, %v4749
  %v4876 = vmul.f32 %v3314, %v4752
  %v4877 = vmul.f32 %v3315, %v4755
  %v4878 = vmul.f32 %v3316, %v4758
  %v4879 = vmul.f32 %v3317, %v4761
  %v4880 = vmul.f32 %v3318, %v4764
  %v4881 = vmul.f32 %v3319, %v4767
  %v4882 = vmul.f32 %v3320, %v4770
  %v4883 = vmul.f32 %v3321, %v4773
  %v4884 = vmul.f32 %v3322, %v4776
  %v4885 = vmul.f32 %v3323, %v4779
  %v4886 = vmul.f32 %v3324, %v4782
  %v4887 = vmul.f32 %v3325, %v4785
  %v4888 = vmul.f32 %v3326, %v4788
  %v4889 = vmul.f32 %v3327, %v4791
  %v4890 = vmul.f32 %v3328, %v4794
  %v4891 = vmul.f32 %v3329, %v4797
  %v4892 = vmul.f32 %v3330, %v4800
  %v4893 = vmul.f32 %v3331, %v4803
  %v4894 = vmul.f32 %v3332, %v4806
  %v4895 = vmul.f32 %v3333, %v4809
  %v4896 = vmul.f32 %v3334, %v4812
  %v4897 = vmul.f32 %v3335, %v4815
  %v4898 = vmul.f32 %v3336, %v4818
  %v4899 = vmul.f32 %v3337, %v4821
  %v4900 = vmul.f32 %v3338, %v4824
  %v4901 = vmul.f32 %v3339, %v4827
  %v4902 = vmul.f32 %v3340, %v4830
  %v4903 = vmul.f32 %v3341, %v4833
  %v4904 = vmul.f32 %v3342, %v4836
  %v4905 = vmul.f32 %v3343, %v4839
  %v4906 = vmul.f32 %v3344, %v4842
  %v4907 = vlaneseq
  %v4908 = vshrl.u32 %v4907, 7
  %v4909 = vsub.s32 0, %v4908
  %v4910 = vrot.slane %v4582, %v4909
  %v4911 = vadd.f32 %v4843, %v4910
  %v4912 = vadd.f32 %v4844, %v4910
  %v4913 = vadd.f32 %v4845, %v4910
  %v4914 = vadd.f32 %v4846, %v4910
  %v4915 = vadd.f32 %v4847, %v4910
  %v4916 = vadd.f32 %v4848, %v4910
  %v4917 = vadd.f32 %v4849, %v4910
  %v4918 = vadd.f32 %v4850, %v4910
  %v4919 = vadd.f32 %v4851, %v4910
  %v4920 = vadd.f32 %v4852, %v4910
  %v4921 = vadd.f32 %v4853, %v4910
  %v4922 = vadd.f32 %v4854, %v4910
  %v4923 = vadd.f32 %v4855, %v4910
  %v4924 = vadd.f32 %v4856, %v4910
  %v4925 = vadd.f32 %v4857, %v4910
  %v4926 = vadd.f32 %v4858, %v4910
  %v4927 = vadd.f32 %v4859, %v4910
  %v4928 = vadd.f32 %v4860, %v4910
  %v4929 = vadd.f32 %v4861, %v4910
  %v4930 = vadd.f32 %v4862, %v4910
  %v4931 = vadd.f32 %v4863, %v4910
  %v4932 = vadd.f32 %v4864, %v4910
  %v4933 = vadd.f32 %v4865, %v4910
  %v4934 = vadd.f32 %v4866, %v4910
  %v4935 = vadd.f32 %v4867, %v4910
  %v4936 = vadd.f32 %v4868, %v4910
  %v4937 = vadd.f32 %v4869, %v4910
  %v4938 = vadd.f32 %v4870, %v4910
  %v4939 = vadd.f32 %v4871, %v4910
  %v4940 = vadd.f32 %v4872, %v4910
  %v4941 = vadd.f32 %v4873, %v4910
  %v4942 = vadd.f32 %v4874, %v4910
  %v4943 = vadd.f32 %v4875, %v4910
  %v4944 = vadd.f32 %v4876, %v4910
  %v4945 = vadd.f32 %v4877, %v4910
  %v4946 = vadd.f32 %v4878, %v4910
  %v4947 = vadd.f32 %v4879, %v4910
  %v4948 = vadd.f32 %v4880, %v4910
  %v4949 = vadd.f32 %v4881, %v4910
  %v4950 = vadd.f32 %v4882, %v4910
  %v4951 = vadd.f32 %v4883, %v4910
  %v4952 = vadd.f32 %v4884, %v4910
  %v4953 = vadd.f32 %v4885, %v4910
  %v4954 = vadd.f32 %v4886, %v4910
  %v4955 = vadd.f32 %v4887, %v4910
  %v4956 = vadd.f32 %v4888, %v4910
  %v4957 = vadd.f32 %v4889, %v4910
  %v4958 = vadd.f32 %v4890, %v4910
  %v4959 = vadd.f32 %v4891, %v4910
  %v4960 = vadd.f32 %v4892, %v4910
  %v4961 = vadd.f32 %v4893, %v4910
  %v4962 = vadd.f32 %v4894, %v4910
  %v4963 = vadd.f32 %v4895, %v4910
  %v4964 = vadd.f32 %v4896, %v4910
  %v4965 = vadd.f32 %v4897, %v4910
  %v4966 = vadd.f32 %v4898, %v4910
  %v4967 = vadd.f32 %v4899, %v4910
  %v4968 = vadd.f32 %v4900, %v4910
  %v4969 = vadd.f32 %v4901, %v4910
  %v4970 = vadd.f32 %v4902, %v4910
  %v4971 = vadd.f32 %v4903, %v4910
  %v4972 = vadd.f32 %v4904, %v4910
  %v4973 = vadd.f32 %v4905, %v4910
  %v4974 = vadd.f32 %v4906, %v4910
  %v4975 = vadd.f32 %v4911, %v4517
  %v4976 = vadd.f32 %v4912, %v4518
  %v4977 = vadd.f32 %v4913, %v4519
  %v4978 = vadd.f32 %v4914, %v4520
  %v4979 = vadd.f32 %v4915, %v4521
  %v4980 = vadd.f32 %v4916, %v4522
  %v4981 = vadd.f32 %v4917, %v4523
  %v4982 = vadd.f32 %v4918, %v4524
  %v4983 = vadd.f32 %v4919, %v4525
  %v4984 = vadd.f32 %v4920, %v4526
  %v4985 = vadd.f32 %v4921, %v4527
  %v4986 = vadd.f32 %v4922, %v4528
  %v4987 = vadd.f32 %v4923, %v4529
  %v4988 = vadd.f32 %v4924, %v4530
  %v4989 = vadd.f32 %v4925, %v4531
  %v4990 = vadd.f32 %v4926, %v4532
  %v4991 = vadd.f32 %v4927, %v4533
  %v4992 = vadd.f32 %v4928, %v4534
  %v4993 = vadd.f32 %v4929, %v4535
  %v4994 = vadd.f32 %v4930, %v4536
  %v4995 = vadd.f32 %v4931, %v4537
  %v4996 = vadd.f32 %v4932, %v4538
  %v4997 = vadd.f32 %v4933, %v4539
  %v4998 = vadd.f32 %v4934, %v4540
  %v4999 = vadd.f32 %v4935, %v4541
  %v5000 = vadd.f32 %v4936, %v4542
  %v5001 = vadd.f32 %v4937, %v4543
  %v5002 = vadd.f32 %v4938, %v4544
  %v5003 = vadd.f32 %v4939, %v4545
  %v5004 = vadd.f32 %v4940, %v4546
  %v5005 = vadd.f32 %v4941, %v4547
  %v5006 = vadd.f32 %v4942, %v4548
  %v5007 = vadd.f32 %v4943, %v4549
  %v5008 = vadd.f32 %v4944, %v4550
  %v5009 = vadd.f32 %v4945, %v4551
  %v5010 = vadd.f32 %v4946, %v4552
  %v5011 = vadd.f32 %v4947, %v4553
  %v5012 = vadd.f32 %v4948, %v4554
  %v5013 = vadd.f32 %v4949, %v4555
  %v5014 = vadd.f32 %v4950, %v4556
  %v5015 = vadd.f32 %v4951, %v4557
  %v5016 = vadd.f32 %v4952, %v4558
  %v5017 = vadd.f32 %v4953, %v4559
  %v5018 = vadd.f32 %v4954, %v4560
  %v5019 = vadd.f32 %v4955, %v4561
  %v5020 = vadd.f32 %v4956, %v4562
  %v5021 = vadd.f32 %v4957, %v4563
  %v5022 = vadd.f32 %v4958, %v4564
  %v5023 = vadd.f32 %v4959, %v4565
  %v5024 = vadd.f32 %v4960, %v4566
  %v5025 = vadd.f32 %v4961, %v4567
  %v5026 = vadd.f32 %v4962, %v4568
  %v5027 = vadd.f32 %v4963, %v4569
  %v5028 = vadd.f32 %v4964, %v4570
  %v5029 = vadd.f32 %v4965, %v4571
  %v5030 = vadd.f32 %v4966, %v4572
  %v5031 = vadd.f32 %v4967, %v4573
  %v5032 = vadd.f32 %v4968, %v4574
  %v5033 = vadd.f32 %v4969, %v4575
  %v5034 = vadd.f32 %v4970, %v4576
  %v5035 = vadd.f32 %v4971, %v4577
  %v5036 = vadd.f32 %v4972, %v4578
  %v5037 = vadd.f32 %v4973, %v4579
  %v5038 = vadd.f32 %v4974, %v4580
  %v5039 = vpack.c.bf16 %v3602, %v3601
  %v5040 = vpack.c.bf16 %v3604, %v3603
  %v5041 = vpack.c.bf16 %v3606, %v3605
  %v5042 = vpack.c.bf16 %v3608, %v3607
  %v5043 = vpack.c.bf16 %v3610, %v3609
  %v5044 = vpack.c.bf16 %v3612, %v3611
  %v5045 = vpack.c.bf16 %v3614, %v3613
  %v5046 = vpack.c.bf16 %v3616, %v3615
  %v5047 = vpack.c.bf16 %v3618, %v3617
  %v5048 = vpack.c.bf16 %v3620, %v3619
  %v5049 = vpack.c.bf16 %v3622, %v3621
  %v5050 = vpack.c.bf16 %v3624, %v3623
  %v5051 = vpack.c.bf16 %v3626, %v3625
  %v5052 = vpack.c.bf16 %v3628, %v3627
  %v5053 = vpack.c.bf16 %v3630, %v3629
  %v5054 = vpack.c.bf16 %v3632, %v3631
  %v5055 = vpack.c.bf16 %v3634, %v3633
  %v5056 = vpack.c.bf16 %v3636, %v3635
  %v5057 = vpack.c.bf16 %v3638, %v3637
  %v5058 = vpack.c.bf16 %v3640, %v3639
  %v5059 = vpack.c.bf16 %v3642, %v3641
  %v5060 = vpack.c.bf16 %v3644, %v3643
  %v5061 = vpack.c.bf16 %v3646, %v3645
  %v5062 = vpack.c.bf16 %v3648, %v3647
  %v5063 = vpack.c.bf16 %v3650, %v3649
  %v5064 = vpack.c.bf16 %v3652, %v3651
  %v5065 = vpack.c.bf16 %v3654, %v3653
  %v5066 = vpack.c.bf16 %v3656, %v3655
  %v5067 = vpack.c.bf16 %v3658, %v3657
  %v5068 = vpack.c.bf16 %v3660, %v3659
  %v5069 = vpack.c.bf16 %v3662, %v3661
  %v5070 = vpack.c.bf16 %v3664, %v3663
  %v5071 = vld [vmem:[%s1 + $0x90] sm:$0xf]
  %v5072 = vld [vmem:[%s1 + $0x94] sm:$0xf]
  %v5073 = vld [vmem:[%s1 + $0x98] sm:$0xf]
  %v5074 = vld [vmem:[%s1 + $0x9c] sm:$0xf]
  %v5075 = vld [vmem:[%s2 + $0x20] sm:$0x1]
  %v5076 = vlaneseq
  %v5077 = vshrl.u32 %v5076, 7
  %v5078 = vsub.s32 0, %v5077
  %v5079 = vrot.slane %v5075, %v5078
  %v5084 = vunpack.c.l.b16 %v5071
  %v5085 = vunpack.c.l.b16 %v5072
  %v5086 = vunpack.c.l.b16 %v5073
  %v5087 = vunpack.c.l.b16 %v5074
  %v5088 = vpack.c.b16 %v5085, %v5084
  %v5089 = vpack.c.b16 %v5087, %v5086
  %v5093 = vsel %vm1863, %v5039, 0
  %v5096 = vsel %vm1863, %v5040, 0
  %v5099 = vsel %vm1863, %v5041, 0
  %v5102 = vsel %vm1863, %v5042, 0
  %v5105 = vsel %vm1863, %v5043, 0
  %v5108 = vsel %vm1863, %v5044, 0
  %v5111 = vsel %vm1863, %v5045, 0
  %v5114 = vsel %vm1863, %v5046, 0
  %v5117 = vsel %vm1863, %v5047, 0
  %v5120 = vsel %vm1863, %v5048, 0
  %v5123 = vsel %vm1863, %v5049, 0
  %v5126 = vsel %vm1863, %v5050, 0
  %v5129 = vsel %vm1863, %v5051, 0
  %v5132 = vsel %vm1863, %v5052, 0
  %v5135 = vsel %vm1863, %v5053, 0
  %v5138 = vsel %vm1863, %v5054, 0
  %v5141 = vsel %vm1863, %v5055, 0
  %v5144 = vsel %vm1863, %v5056, 0
  %v5147 = vsel %vm1863, %v5057, 0
  %v5150 = vsel %vm1863, %v5058, 0
  %v5153 = vsel %vm1863, %v5059, 0
  %v5156 = vsel %vm1863, %v5060, 0
  %v5159 = vsel %vm1863, %v5061, 0
  %v5162 = vsel %vm1863, %v5062, 0
  %v5165 = vsel %vm1863, %v5063, 0
  %v5168 = vsel %vm1863, %v5064, 0
  %v5171 = vsel %vm1863, %v5065, 0
  %v5174 = vsel %vm1863, %v5066, 0
  %v5177 = vsel %vm1863, %v5067, 0
  %v5180 = vsel %vm1863, %v5068, 0
  %v5183 = vsel %vm1863, %v5069, 0
  %v5186 = vsel %vm1863, %v5070, 0
  %5188 = vmatprep.subr.bf16.mxu0 0
  %5189 = vmatpush1.bf16.msra.mxu0 %v5088
  %5190 = vmatprep.subr.bf16.mxu0 0
  %5191 = vmatpush1.bf16.msra.mxu0 %v5089
  %5192 = vmatprep.subr.bf16.mxu0 0
  %5193 = vmatpush1.bf16.msra.mxu0 0
  %5194 = vmatprep.subr.bf16.mxu0 0
  %5195 = vmatpush1.bf16.msra.mxu0 0
  %5196 = vmatprep.subr.bf16.mxu0 0
  %5197 = vmatpush1.bf16.msra.mxu0 0
  %5198 = vmatprep.subr.bf16.mxu0 0
  %5199 = vmatpush1.bf16.msra.mxu0 0
  %5200 = vmatprep.subr.bf16.mxu0 0
  %5201 = vmatpush1.bf16.msra.mxu0 0
  %5202 = vmatprep.subr.bf16.mxu0 0
  %5203 = vmatpush1.bf16.msra.mxu0 0
  %5204 = vmatprep.subr.bf16.mxu0 0
  %5205 = vmatpush1.bf16.msra.mxu0 0
  %5206 = vmatprep.subr.bf16.mxu0 0
  %5207 = vmatpush1.bf16.msra.mxu0 0
  %5208 = vmatprep.subr.bf16.mxu0 0
  %5209 = vmatpush1.bf16.msra.mxu0 0
  %5210 = vmatprep.subr.bf16.mxu0 0
  %5211 = vmatpush1.bf16.msra.mxu0 0
  %5212 = vmatprep.subr.bf16.mxu0 0
  %5213 = vmatpush1.bf16.msra.mxu0 0
  %5214 = vmatprep.subr.bf16.mxu0 0
  %5215 = vmatpush1.bf16.msra.mxu0 0
  %5216 = vmatprep.subr.bf16.mxu0 0
  %5217 = vmatpush1.bf16.msra.mxu0 0
  %5218 = vmatprep.subr.bf16.mxu0 0
  %5219 = vmatpush1.bf16.msra.mxu0 0
  %5220 = vmatprep.mubr.bf16.mxu0 0
  %5221 = vmatmul.mubr.bf16.gmra.mrb[0].mxu0 %v5093
  %v5222 = vpop.f32.mrb[0].mxu0
  %v5223 = vadd.f32 %v5079, %v5222
  %v5224 = vpop.f32.mrb[0].mxu0
  %v5225 = vpop.f32.mrb[0].mxu0
  %v5226 = vadd.f32 %v5079, %v5225
  %v5227 = vpop.f32.mrb[0].mxu0
  %5228 = vmatprep.mubr.bf16.mxu0 0
  %5229 = vmatmul.mubr.bf16.gmra.mrb[0].mxu0 %v5096
  %v5230 = vpop.f32.mrb[0].mxu0
  %v5231 = vadd.f32 %v5079, %v5230
  %v5232 = vpop.f32.mrb[0].mxu0
  %v5233 = vpop.f32.mrb[0].mxu0
  %v5234 = vadd.f32 %v5079, %v5233
  %v5235 = vpop.f32.mrb[0].mxu0
  %5236 = vmatprep.mubr.bf16.mxu0 0
  %5237 = vmatmul.mubr.bf16.gmra.mrb[0].mxu0 %v5099
  %v5238 = vpop.f32.mrb[0].mxu0
  %v5239 = vadd.f32 %v5079, %v5238
  %v5240 = vpop.f32.mrb[0].mxu0
  %v5241 = vpop.f32.mrb[0].mxu0
  %v5242 = vadd.f32 %v5079, %v5241
  %v5243 = vpop.f32.mrb[0].mxu0
  %5244 = vmatprep.mubr.bf16.mxu0 0
  %5245 = vmatmul.mubr.bf16.gmra.mrb[0].mxu0 %v5102
  %v5246 = vpop.f32.mrb[0].mxu0
  %v5247 = vadd.f32 %v5079, %v5246
  %v5248 = vpop.f32.mrb[0].mxu0
  %v5249 = vpop.f32.mrb[0].mxu0
  %v5250 = vadd.f32 %v5079, %v5249
  %v5251 = vpop.f32.mrb[0].mxu0
  %5252 = vmatprep.mubr.bf16.mxu0 0
  %5253 = vmatmul.mubr.bf16.gmra.mrb[0].mxu0 %v5105
  %v5254 = vpop.f32.mrb[0].mxu0
  %v5255 = vadd.f32 %v5079, %v5254
  %v5256 = vpop.f32.mrb[0].mxu0
  %v5257 = vpop.f32.mrb[0].mxu0
  %v5258 = vadd.f32 %v5079, %v5257
  %v5259 = vpop.f32.mrb[0].mxu0
  %5260 = vmatprep.mubr.bf16.mxu0 0
  %5261 = vmatmul.mubr.bf16.gmra.mrb[0].mxu0 %v5108
  %v5262 = vpop.f32.mrb[0].mxu0
  %v5263 = vadd.f32 %v5079, %v5262
  %v5264 = vpop.f32.mrb[0].mxu0
  %v5265 = vpop.f32.mrb[0].mxu0
  %v5266 = vadd.f32 %v5079, %v5265
  %v5267 = vpop.f32.mrb[0].mxu0
  %5268 = vmatprep.mubr.bf16.mxu0 0
  %5269 = vmatmul.mubr.bf16.gmra.mrb[0].mxu0 %v5111
  %v5270 = vpop.f32.mrb[0].mxu0
  %v5271 = vadd.f32 %v5079, %v5270
  %v5272 = vpop.f32.mrb[0].mxu0
  %v5273 = vpop.f32.mrb[0].mxu0
  %v5274 = vadd.f32 %v5079, %v5273
  %v5275 = vpop.f32.mrb[0].mxu0
  %5276 = vmatprep.mubr.bf16.mxu0 0
  %5277 = vmatmul.mubr.bf16.gmra.mrb[0].mxu0 %v5114
  %v5278 = vpop.f32.mrb[0].mxu0
  %v5279 = vadd.f32 %v5079, %v5278
  %v5280 = vpop.f32.mrb[0].mxu0
  %v5281 = vpop.f32.mrb[0].mxu0
  %v5282 = vadd.f32 %v5079, %v5281
  %v5283 = vpop.f32.mrb[0].mxu0
  %5284 = vmatprep.mubr.bf16.mxu0 0
  %5285 = vmatmul.mubr.bf16.gmra.mrb[0].mxu0 %v5117
  %v5286 = vpop.f32.mrb[0].mxu0
  %v5287 = vadd.f32 %v5079, %v5286
  %v5288 = vpop.f32.mrb[0].mxu0
  %v5289 = vpop.f32.mrb[0].mxu0
  %v5290 = vadd.f32 %v5079, %v5289
  %v5291 = vpop.f32.mrb[0].mxu0
  %5292 = vmatprep.mubr.bf16.mxu0 0
  %5293 = vmatmul.mubr.bf16.gmra.mrb[0].mxu0 %v5120
  %v5294 = vpop.f32.mrb[0].mxu0
  %v5295 = vadd.f32 %v5079, %v5294
  %v5296 = vpop.f32.mrb[0].mxu0
  %v5297 = vpop.f32.mrb[0].mxu0
  %v5298 = vadd.f32 %v5079, %v5297
  %v5299 = vpop.f32.mrb[0].mxu0
  %5300 = vmatprep.mubr.bf16.mxu0 0
  %5301 = vmatmul.mubr.bf16.gmra.mrb[0].mxu0 %v5123
  %v5302 = vpop.f32.mrb[0].mxu0
  %v5303 = vadd.f32 %v5079, %v5302
  %v5304 = vpop.f32.mrb[0].mxu0
  %v5305 = vpop.f32.mrb[0].mxu0
  %v5306 = vadd.f32 %v5079, %v5305
  %v5307 = vpop.f32.mrb[0].mxu0
  %5308 = vmatprep.mubr.bf16.mxu0 0
  %5309 = vmatmul.mubr.bf16.gmra.mrb[0].mxu0 %v5126
  %v5310 = vpop.f32.mrb[0].mxu0
  %v5311 = vadd.f32 %v5079, %v5310
  %v5312 = vpop.f32.mrb[0].mxu0
  %v5313 = vpop.f32.mrb[0].mxu0
  %v5314 = vadd.f32 %v5079, %v5313
  %v5315 = vpop.f32.mrb[0].mxu0
  %5316 = vmatprep.mubr.bf16.mxu0 0
  %5317 = vmatmul.mubr.bf16.gmra.mrb[0].mxu0 %v5129
  %v5318 = vpop.f32.mrb[0].mxu0
  %v5319 = vadd.f32 %v5079, %v5318
  %v5320 = vpop.f32.mrb[0].mxu0
  %v5321 = vpop.f32.mrb[0].mxu0
  %v5322 = vadd.f32 %v5079, %v5321
  %v5323 = vpop.f32.mrb[0].mxu0
  %5324 = vmatprep.mubr.bf16.mxu0 0
  %5325 = vmatmul.mubr.bf16.gmra.mrb[0].mxu0 %v5132
  %v5326 = vpop.f32.mrb[0].mxu0
  %v5327 = vadd.f32 %v5079, %v5326
  %v5328 = vpop.f32.mrb[0].mxu0
  %v5329 = vpop.f32.mrb[0].mxu0
  %v5330 = vadd.f32 %v5079, %v5329
  %v5331 = vpop.f32.mrb[0].mxu0
  %5332 = vmatprep.mubr.bf16.mxu0 0
  %5333 = vmatmul.mubr.bf16.gmra.mrb[0].mxu0 %v5135
  %v5334 = vpop.f32.mrb[0].mxu0
  %v5335 = vadd.f32 %v5079, %v5334
  %v5336 = vpop.f32.mrb[0].mxu0
  %v5337 = vpop.f32.mrb[0].mxu0
  %v5338 = vadd.f32 %v5079, %v5337
  %v5339 = vpop.f32.mrb[0].mxu0
  %5340 = vmatprep.mubr.bf16.mxu0 0
  %5341 = vmatmul.mubr.bf16.gmra.mrb[0].mxu0 %v5138
  %v5342 = vpop.f32.mrb[0].mxu0
  %v5343 = vadd.f32 %v5079, %v5342
  %v5344 = vpop.f32.mrb[0].mxu0
  %v5345 = vpop.f32.mrb[0].mxu0
  %v5346 = vadd.f32 %v5079, %v5345
  %v5347 = vpop.f32.mrb[0].mxu0
  %5348 = vmatprep.mubr.bf16.mxu0 0
  %5349 = vmatmul.mubr.bf16.gmra.mrb[0].mxu0 %v5141
  %v5350 = vpop.f32.mrb[0].mxu0
  %v5351 = vadd.f32 %v5079, %v5350
  %v5352 = vpop.f32.mrb[0].mxu0
  %v5353 = vpop.f32.mrb[0].mxu0
  %v5354 = vadd.f32 %v5079, %v5353
  %v5355 = vpop.f32.mrb[0].mxu0
  %5356 = vmatprep.mubr.bf16.mxu0 0
  %5357 = vmatmul.mubr.bf16.gmra.mrb[0].mxu0 %v5144
  %v5358 = vpop.f32.mrb[0].mxu0
  %v5359 = vadd.f32 %v5079, %v5358
  %v5360 = vpop.f32.mrb[0].mxu0
  %v5361 = vpop.f32.mrb[0].mxu0
  %v5362 = vadd.f32 %v5079, %v5361
  %v5363 = vpop.f32.mrb[0].mxu0
  %5364 = vmatprep.mubr.bf16.mxu0 0
  %5365 = vmatmul.mubr.bf16.gmra.mrb[0].mxu0 %v5147
  %v5366 = vpop.f32.mrb[0].mxu0
  %v5367 = vadd.f32 %v5079, %v5366
  %v5368 = vpop.f32.mrb[0].mxu0
  %v5369 = vpop.f32.mrb[0].mxu0
  %v5370 = vadd.f32 %v5079, %v5369
  %v5371 = vpop.f32.mrb[0].mxu0
  %5372 = vmatprep.mubr.bf16.mxu0 0
  %5373 = vmatmul.mubr.bf16.gmra.mrb[0].mxu0 %v5150
  %v5374 = vpop.f32.mrb[0].mxu0
  %v5375 = vadd.f32 %v5079, %v5374
  %v5376 = vpop.f32.mrb[0].mxu0
  %v5377 = vpop.f32.mrb[0].mxu0
  %v5378 = vadd.f32 %v5079, %v5377
  %v5379 = vpop.f32.mrb[0].mxu0
  %5380 = vmatprep.mubr.bf16.mxu0 0
  %5381 = vmatmul.mubr.bf16.gmra.mrb[0].mxu0 %v5153
  %v5382 = vpop.f32.mrb[0].mxu0
  %v5383 = vadd.f32 %v5079, %v5382
  %v5384 = vpop.f32.mrb[0].mxu0
  %v5385 = vpop.f32.mrb[0].mxu0
  %v5386 = vadd.f32 %v5079, %v5385
  %v5387 = vpop.f32.mrb[0].mxu0
  %5388 = vmatprep.mubr.bf16.mxu0 0
  %5389 = vmatmul.mubr.bf16.gmra.mrb[0].mxu0 %v5156
  %v5390 = vpop.f32.mrb[0].mxu0
  %v5391 = vadd.f32 %v5079, %v5390
  %v5392 = vpop.f32.mrb[0].mxu0
  %v5393 = vpop.f32.mrb[0].mxu0
  %v5394 = vadd.f32 %v5079, %v5393
  %v5395 = vpop.f32.mrb[0].mxu0
  %5396 = vmatprep.mubr.bf16.mxu0 0
  %5397 = vmatmul.mubr.bf16.gmra.mrb[0].mxu0 %v5159
  %v5398 = vpop.f32.mrb[0].mxu0
  %v5399 = vadd.f32 %v5079, %v5398
  %v5400 = vpop.f32.mrb[0].mxu0
  %v5401 = vpop.f32.mrb[0].mxu0
  %v5402 = vadd.f32 %v5079, %v5401
  %v5403 = vpop.f32.mrb[0].mxu0
  %5404 = vmatprep.mubr.bf16.mxu0 0
  %5405 = vmatmul.mubr.bf16.gmra.mrb[0].mxu0 %v5162
  %v5406 = vpop.f32.mrb[0].mxu0
  %v5407 = vadd.f32 %v5079, %v5406
  %v5408 = vpop.f32.mrb[0].mxu0
  %v5409 = vpop.f32.mrb[0].mxu0
  %v5410 = vadd.f32 %v5079, %v5409
  %v5411 = vpop.f32.mrb[0].mxu0
  %5412 = vmatprep.mubr.bf16.mxu0 0
  %5413 = vmatmul.mubr.bf16.gmra.mrb[0].mxu0 %v5165
  %v5414 = vpop.f32.mrb[0].mxu0
  %v5415 = vadd.f32 %v5079, %v5414
  %v5416 = vpop.f32.mrb[0].mxu0
  %v5417 = vpop.f32.mrb[0].mxu0
  %v5418 = vadd.f32 %v5079, %v5417
  %v5419 = vpop.f32.mrb[0].mxu0
  %5420 = vmatprep.mubr.bf16.mxu0 0
  %5421 = vmatmul.mubr.bf16.gmra.mrb[0].mxu0 %v5168
  %v5422 = vpop.f32.mrb[0].mxu0
  %v5423 = vadd.f32 %v5079, %v5422
  %v5424 = vpop.f32.mrb[0].mxu0
  %v5425 = vpop.f32.mrb[0].mxu0
  %v5426 = vadd.f32 %v5079, %v5425
  %v5427 = vpop.f32.mrb[0].mxu0
  %5428 = vmatprep.mubr.bf16.mxu0 0
  %5429 = vmatmul.mubr.bf16.gmra.mrb[0].mxu0 %v5171
  %v5430 = vpop.f32.mrb[0].mxu0
  %v5431 = vadd.f32 %v5079, %v5430
  %v5432 = vpop.f32.mrb[0].mxu0
  %v5433 = vpop.f32.mrb[0].mxu0
  %v5434 = vadd.f32 %v5079, %v5433
  %v5435 = vpop.f32.mrb[0].mxu0
  %5436 = vmatprep.mubr.bf16.mxu0 0
  %5437 = vmatmul.mubr.bf16.gmra.mrb[0].mxu0 %v5174
  %v5438 = vpop.f32.mrb[0].mxu0
  %v5439 = vadd.f32 %v5079, %v5438
  %v5440 = vpop.f32.mrb[0].mxu0
  %v5441 = vpop.f32.mrb[0].mxu0
  %v5442 = vadd.f32 %v5079, %v5441
  %v5443 = vpop.f32.mrb[0].mxu0
  %5444 = vmatprep.mubr.bf16.mxu0 0
  %5445 = vmatmul.mubr.bf16.gmra.mrb[0].mxu0 %v5177
  %v5446 = vpop.f32.mrb[0].mxu0
  %v5447 = vadd.f32 %v5079, %v5446
  %v5448 = vpop.f32.mrb[0].mxu0
  %v5449 = vpop.f32.mrb[0].mxu0
  %v5450 = vadd.f32 %v5079, %v5449
  %v5451 = vpop.f32.mrb[0].mxu0
  %5452 = vmatprep.mubr.bf16.mxu0 0
  %5453 = vmatmul.mubr.bf16.gmra.mrb[0].mxu0 %v5180
  %v5454 = vpop.f32.mrb[0].mxu0
  %v5455 = vadd.f32 %v5079, %v5454
  %v5456 = vpop.f32.mrb[0].mxu0
  %v5457 = vpop.f32.mrb[0].mxu0
  %v5458 = vadd.f32 %v5079, %v5457
  %v5459 = vpop.f32.mrb[0].mxu0
  %5460 = vmatprep.mubr.bf16.mxu0 0
  %5461 = vmatmul.mubr.bf16.gmra.mrb[0].mxu0 %v5183
  %v5462 = vpop.f32.mrb[0].mxu0
  %v5463 = vadd.f32 %v5079, %v5462
  %v5464 = vpop.f32.mrb[0].mxu0
  %v5465 = vpop.f32.mrb[0].mxu0
  %v5466 = vadd.f32 %v5079, %v5465
  %v5467 = vpop.f32.mrb[0].mxu0
  %5468 = vmatprep.mubr.bf16.mxu0 0
  %5469 = vmatmul.mubr.bf16.gmra.mrb[0].mxu0 %v5186
  %v5470 = vpop.f32.mrb[0].mxu0
  %v5471 = vadd.f32 %v5079, %v5470
  %v5472 = vpop.f32.mrb[0].mxu0
  %v5473 = vpop.f32.mrb[0].mxu0
  %v5474 = vadd.f32 %v5079, %v5473
  %v5475 = vpop.f32.mrb[0].mxu0
  %5476 = vdwg.mxu0
  %v5477 = vmax.f32 %v5223, 0.0
  %v5478 = vmax.f32 %v5226, 0.0
  %v5479 = vmax.f32 %v5231, 0.0
  %v5480 = vmax.f32 %v5234, 0.0
  %v5481 = vmax.f32 %v5239, 0.0
  %v5482 = vmax.f32 %v5242, 0.0
  %v5483 = vmax.f32 %v5247, 0.0
  %v5484 = vmax.f32 %v5250, 0.0
  %v5485 = vmax.f32 %v5255, 0.0
  %v5486 = vmax.f32 %v5258, 0.0
  %v5487 = vmax.f32 %v5263, 0.0
  %v5488 = vmax.f32 %v5266, 0.0
  %v5489 = vmax.f32 %v5271, 0.0
  %v5490 = vmax.f32 %v5274, 0.0
  %v5491 = vmax.f32 %v5279, 0.0
  %v5492 = vmax.f32 %v5282, 0.0
  %v5493 = vmax.f32 %v5287, 0.0
  %v5494 = vmax.f32 %v5290, 0.0
  %v5495 = vmax.f32 %v5295, 0.0
  %v5496 = vmax.f32 %v5298, 0.0
  %v5497 = vmax.f32 %v5303, 0.0
  %v5498 = vmax.f32 %v5306, 0.0
  %v5499 = vmax.f32 %v5311, 0.0
  %v5500 = vmax.f32 %v5314, 0.0
  %v5501 = vmax.f32 %v5319, 0.0
  %v5502 = vmax.f32 %v5322, 0.0
  %v5503 = vmax.f32 %v5327, 0.0
  %v5504 = vmax.f32 %v5330, 0.0
  %v5505 = vmax.f32 %v5335, 0.0
  %v5506 = vmax.f32 %v5338, 0.0
  %v5507 = vmax.f32 %v5343, 0.0
  %v5508 = vmax.f32 %v5346, 0.0
  %v5509 = vmax.f32 %v5351, 0.0
  %v5510 = vmax.f32 %v5354, 0.0
  %v5511 = vmax.f32 %v5359, 0.0
  %v5512 = vmax.f32 %v5362, 0.0
  %v5513 = vmax.f32 %v5367, 0.0
  %v5514 = vmax.f32 %v5370, 0.0
  %v5515 = vmax.f32 %v5375, 0.0
  %v5516 = vmax.f32 %v5378, 0.0
  %v5517 = vmax.f32 %v5383, 0.0
  %v5518 = vmax.f32 %v5386, 0.0
  %v5519 = vmax.f32 %v5391, 0.0
  %v5520 = vmax.f32 %v5394, 0.0
  %v5521 = vmax.f32 %v5399, 0.0
  %v5522 = vmax.f32 %v5402, 0.0
  %v5523 = vmax.f32 %v5407, 0.0
  %v5524 = vmax.f32 %v5410, 0.0
  %v5525 = vmax.f32 %v5415, 0.0
  %v5526 = vmax.f32 %v5418, 0.0
  %v5527 = vmax.f32 %v5423, 0.0
  %v5528 = vmax.f32 %v5426, 0.0
  %v5529 = vmax.f32 %v5431, 0.0
  %v5530 = vmax.f32 %v5434, 0.0
  %v5531 = vmax.f32 %v5439, 0.0
  %v5532 = vmax.f32 %v5442, 0.0
  %v5533 = vmax.f32 %v5447, 0.0
  %v5534 = vmax.f32 %v5450, 0.0
  %v5535 = vmax.f32 %v5455, 0.0
  %v5536 = vmax.f32 %v5458, 0.0
  %v5537 = vmax.f32 %v5463, 0.0
  %v5538 = vmax.f32 %v5466, 0.0
  %v5539 = vmax.f32 %v5471, 0.0
  %v5540 = vmax.f32 %v5474, 0.0
  %v5541 = vpack.c.bf16 %v5478, %v5477
  %v5542 = vpack.c.bf16 %v5480, %v5479
  %v5543 = vpack.c.bf16 %v5482, %v5481
  %v5544 = vpack.c.bf16 %v5484, %v5483
  %v5545 = vpack.c.bf16 %v5486, %v5485
  %v5546 = vpack.c.bf16 %v5488, %v5487
  %v5547 = vpack.c.bf16 %v5490, %v5489
  %v5548 = vpack.c.bf16 %v5492, %v5491
  %v5549 = vpack.c.bf16 %v5494, %v5493
  %v5550 = vpack.c.bf16 %v5496, %v5495
  %v5551 = vpack.c.bf16 %v5498, %v5497
  %v5552 = vpack.c.bf16 %v5500, %v5499
  %v5553 = vpack.c.bf16 %v5502, %v5501
  %v5554 = vpack.c.bf16 %v5504, %v5503
  %v5555 = vpack.c.bf16 %v5506, %v5505
  %v5556 = vpack.c.bf16 %v5508, %v5507
  %v5557 = vpack.c.bf16 %v5510, %v5509
  %v5558 = vpack.c.bf16 %v5512, %v5511
  %v5559 = vpack.c.bf16 %v5514, %v5513
  %v5560 = vpack.c.bf16 %v5516, %v5515
  %v5561 = vpack.c.bf16 %v5518, %v5517
  %v5562 = vpack.c.bf16 %v5520, %v5519
  %v5563 = vpack.c.bf16 %v5522, %v5521
  %v5564 = vpack.c.bf16 %v5524, %v5523
  %v5565 = vpack.c.bf16 %v5526, %v5525
  %v5566 = vpack.c.bf16 %v5528, %v5527
  %v5567 = vpack.c.bf16 %v5530, %v5529
  %v5568 = vpack.c.bf16 %v5532, %v5531
  %v5569 = vpack.c.bf16 %v5534, %v5533
  %v5570 = vpack.c.bf16 %v5536, %v5535
  %v5571 = vpack.c.bf16 %v5538, %v5537
  %v5572 = vpack.c.bf16 %v5540, %v5539
  %v5573 = vld [vmem:[%s1 + $0xa0] sm:$0xf]
  %v5574 = vld [vmem:[%s1 + $0xa4] sm:$0xf]
  %v5575 = vld [vmem:[%s1 + $0xa8] sm:$0xf]
  %v5576 = vld [vmem:[%s1 + $0xac] sm:$0xf]
  %v5577 = vld [vmem:[%s1 + $0xb0] sm:$0xf]
  %v5578 = vld [vmem:[%s1 + $0xb4] sm:$0xf]
  %v5579 = vld [vmem:[%s1 + $0xb8] sm:$0xf]
  %v5580 = vld [vmem:[%s1 + $0xbc] sm:$0xf]
  %v5581 = vld [vmem:[%s2 + $0x28] sm:$0x1]
  %v5582 = vlaneseq
  %v5583 = vshrl.u32 %v5582, 7
  %v5584 = vsub.s32 0, %v5583
  %v5585 = vrot.slane %v5581, %v5584
  %v5594 = vunpack.c.l.b16 %v5573
  %v5595 = vunpack.c.l.b16 %v5574
  %v5596 = vunpack.c.l.b16 %v5575
  %v5597 = vunpack.c.l.b16 %v5576
  %v5598 = vunpack.c.l.b16 %v5577
  %v5599 = vunpack.c.l.b16 %v5578
  %v5600 = vunpack.c.l.b16 %v5579
  %v5601 = vunpack.c.l.b16 %v5580
  %v5602 = vpack.c.b16 %v5595, %v5594
  %v5603 = vpack.c.b16 %v5597, %v5596
  %v5604 = vpack.c.b16 %v5599, %v5598
  %v5605 = vpack.c.b16 %v5601, %v5600
  %v5611 = vsel %vm2382, %v5541, 0
  %v5614 = vsel %vm2382, %v5542, 0
  %v5617 = vsel %vm2382, %v5543, 0
  %v5620 = vsel %vm2382, %v5544, 0
  %v5623 = vsel %vm2382, %v5545, 0
  %v5626 = vsel %vm2382, %v5546, 0
  %v5629 = vsel %vm2382, %v5547, 0
  %v5632 = vsel %vm2382, %v5548, 0
  %v5635 = vsel %vm2382, %v5549, 0
  %v5638 = vsel %vm2382, %v5550, 0
  %v5641 = vsel %vm2382, %v5551, 0
  %v5644 = vsel %vm2382, %v5552, 0
  %v5647 = vsel %vm2382, %v5553, 0
  %v5650 = vsel %vm2382, %v5554, 0
  %v5653 = vsel %vm2382, %v5555, 0
  %v5656 = vsel %vm2382, %v5556, 0
  %v5659 = vsel %vm2382, %v5557, 0
  %v5662 = vsel %vm2382, %v5558, 0
  %v5665 = vsel %vm2382, %v5559, 0
  %v5668 = vsel %vm2382, %v5560, 0
  %v5671 = vsel %vm2382, %v5561, 0
  %v5674 = vsel %vm2382, %v5562, 0
  %v5677 = vsel %vm2382, %v5563, 0
  %v5680 = vsel %vm2382, %v5564, 0
  %v5683 = vsel %vm2382, %v5565, 0
  %v5686 = vsel %vm2382, %v5566, 0
  %v5689 = vsel %vm2382, %v5567, 0
  %v5692 = vsel %vm2382, %v5568, 0
  %v5695 = vsel %vm2382, %v5569, 0
  %v5698 = vsel %vm2382, %v5570, 0
  %v5701 = vsel %vm2382, %v5571, 0
  %v5704 = vsel %vm2382, %v5572, 0
  %5706 = vmatprep.subr.bf16.mxu0 0
  %5707 = vmatpush1.bf16.msra.mxu0 %v5602
  %5708 = vmatprep.subr.bf16.mxu0 0
  %5709 = vmatpush1.bf16.msra.mxu0 %v5603
  %5710 = vmatprep.subr.bf16.mxu0 0
  %5711 = vmatpush1.bf16.msra.mxu0 %v5604
  %5712 = vmatprep.subr.bf16.mxu0 0
  %5713 = vmatpush1.bf16.msra.mxu0 %v5605
  %5714 = vmatprep.subr.bf16.mxu0 0
  %5715 = vmatpush1.bf16.msra.mxu0 0
  %5716 = vmatprep.subr.bf16.mxu0 0
  %5717 = vmatpush1.bf16.msra.mxu0 0
  %5718 = vmatprep.subr.bf16.mxu0 0
  %5719 = vmatpush1.bf16.msra.mxu0 0
  %5720 = vmatprep.subr.bf16.mxu0 0
  %5721 = vmatpush1.bf16.msra.mxu0 0
  %5722 = vmatprep.subr.bf16.mxu0 0
  %5723 = vmatpush1.bf16.msra.mxu0 0
  %5724 = vmatprep.subr.bf16.mxu0 0
  %5725 = vmatpush1.bf16.msra.mxu0 0
  %5726 = vmatprep.subr.bf16.mxu0 0
  %5727 = vmatpush1.bf16.msra.mxu0 0
  %5728 = vmatprep.subr.bf16.mxu0 0
  %5729 = vmatpush1.bf16.msra.mxu0 0
  %5730 = vmatprep.subr.bf16.mxu0 0
  %5731 = vmatpush1.bf16.msra.mxu0 0
  %5732 = vmatprep.subr.bf16.mxu0 0
  %5733 = vmatpush1.bf16.msra.mxu0 0
  %5734 = vmatprep.subr.bf16.mxu0 0
  %5735 = vmatpush1.bf16.msra.mxu0 0
  %5736 = vmatprep.subr.bf16.mxu0 0
  %5737 = vmatpush1.bf16.msra.mxu0 0
  %5738 = vmatprep.mubr.bf16.mxu0 0
  %5739 = vmatmul.mubr.bf16.gmra.mrb[0].mxu0 %v5611
  %v5740 = vpop.f32.mrb[0].mxu0
  %v5741 = vadd.f32 %v5585, %v5740
  %v5742 = vpop.f32.mrb[0].mxu0
  %v5743 = vpop.f32.mrb[0].mxu0
  %v5744 = vadd.f32 %v5585, %v5743
  %v5745 = vpop.f32.mrb[0].mxu0
  %5746 = vmatprep.mubr.bf16.mxu0 0
  %5747 = vmatmul.mubr.bf16.gmra.mrb[0].mxu0 %v5614
  %v5748 = vpop.f32.mrb[0].mxu0
  %v5749 = vadd.f32 %v5585, %v5748
  %v5750 = vpop.f32.mrb[0].mxu0
  %v5751 = vpop.f32.mrb[0].mxu0
  %v5752 = vadd.f32 %v5585, %v5751
  %v5753 = vpop.f32.mrb[0].mxu0
  %5754 = vmatprep.mubr.bf16.mxu0 0
  %5755 = vmatmul.mubr.bf16.gmra.mrb[0].mxu0 %v5617
  %v5756 = vpop.f32.mrb[0].mxu0
  %v5757 = vadd.f32 %v5585, %v5756
  %v5758 = vpop.f32.mrb[0].mxu0
  %v5759 = vpop.f32.mrb[0].mxu0
  %v5760 = vadd.f32 %v5585, %v5759
  %v5761 = vpop.f32.mrb[0].mxu0
  %5762 = vmatprep.mubr.bf16.mxu0 0
  %5763 = vmatmul.mubr.bf16.gmra.mrb[0].mxu0 %v5620
  %v5764 = vpop.f32.mrb[0].mxu0
  %v5765 = vadd.f32 %v5585, %v5764
  %v5766 = vpop.f32.mrb[0].mxu0
  %v5767 = vpop.f32.mrb[0].mxu0
  %v5768 = vadd.f32 %v5585, %v5767
  %v5769 = vpop.f32.mrb[0].mxu0
  %5770 = vmatprep.mubr.bf16.mxu0 0
  %5771 = vmatmul.mubr.bf16.gmra.mrb[0].mxu0 %v5623
  %v5772 = vpop.f32.mrb[0].mxu0
  %v5773 = vadd.f32 %v5585, %v5772
  %v5774 = vpop.f32.mrb[0].mxu0
  %v5775 = vpop.f32.mrb[0].mxu0
  %v5776 = vadd.f32 %v5585, %v5775
  %v5777 = vpop.f32.mrb[0].mxu0
  %5778 = vmatprep.mubr.bf16.mxu0 0
  %5779 = vmatmul.mubr.bf16.gmra.mrb[0].mxu0 %v5626
  %v5780 = vpop.f32.mrb[0].mxu0
  %v5781 = vadd.f32 %v5585, %v5780
  %v5782 = vpop.f32.mrb[0].mxu0
  %v5783 = vpop.f32.mrb[0].mxu0
  %v5784 = vadd.f32 %v5585, %v5783
  %v5785 = vpop.f32.mrb[0].mxu0
  %5786 = vmatprep.mubr.bf16.mxu0 0
  %5787 = vmatmul.mubr.bf16.gmra.mrb[0].mxu0 %v5629
  %v5788 = vpop.f32.mrb[0].mxu0
  %v5789 = vadd.f32 %v5585, %v5788
  %v5790 = vpop.f32.mrb[0].mxu0
  %v5791 = vpop.f32.mrb[0].mxu0
  %v5792 = vadd.f32 %v5585, %v5791
  %v5793 = vpop.f32.mrb[0].mxu0
  %5794 = vmatprep.mubr.bf16.mxu0 0
  %5795 = vmatmul.mubr.bf16.gmra.mrb[0].mxu0 %v5632
  %v5796 = vpop.f32.mrb[0].mxu0
  %v5797 = vadd.f32 %v5585, %v5796
  %v5798 = vpop.f32.mrb[0].mxu0
  %v5799 = vpop.f32.mrb[0].mxu0
  %v5800 = vadd.f32 %v5585, %v5799
  %v5801 = vpop.f32.mrb[0].mxu0
  %5802 = vmatprep.mubr.bf16.mxu0 0
  %5803 = vmatmul.mubr.bf16.gmra.mrb[0].mxu0 %v5635
  %v5804 = vpop.f32.mrb[0].mxu0
  %v5805 = vadd.f32 %v5585, %v5804
  %v5806 = vpop.f32.mrb[0].mxu0
  %v5807 = vpop.f32.mrb[0].mxu0
  %v5808 = vadd.f32 %v5585, %v5807
  %v5809 = vpop.f32.mrb[0].mxu0
  %5810 = vmatprep.mubr.bf16.mxu0 0
  %5811 = vmatmul.mubr.bf16.gmra.mrb[0].mxu0 %v5638
  %v5812 = vpop.f32.mrb[0].mxu0
  %v5813 = vadd.f32 %v5585, %v5812
  %v5814 = vpop.f32.mrb[0].mxu0
  %v5815 = vpop.f32.mrb[0].mxu0
  %v5816 = vadd.f32 %v5585, %v5815
  %v5817 = vpop.f32.mrb[0].mxu0
  %5818 = vmatprep.mubr.bf16.mxu0 0
  %5819 = vmatmul.mubr.bf16.gmra.mrb[0].mxu0 %v5641
  %v5820 = vpop.f32.mrb[0].mxu0
  %v5821 = vadd.f32 %v5585, %v5820
  %v5822 = vpop.f32.mrb[0].mxu0
  %v5823 = vpop.f32.mrb[0].mxu0
  %v5824 = vadd.f32 %v5585, %v5823
  %v5825 = vpop.f32.mrb[0].mxu0
  %5826 = vmatprep.mubr.bf16.mxu0 0
  %5827 = vmatmul.mubr.bf16.gmra.mrb[0].mxu0 %v5644
  %v5828 = vpop.f32.mrb[0].mxu0
  %v5829 = vadd.f32 %v5585, %v5828
  %v5830 = vpop.f32.mrb[0].mxu0
  %v5831 = vpop.f32.mrb[0].mxu0
  %v5832 = vadd.f32 %v5585, %v5831
  %v5833 = vpop.f32.mrb[0].mxu0
  %5834 = vmatprep.mubr.bf16.mxu0 0
  %5835 = vmatmul.mubr.bf16.gmra.mrb[0].mxu0 %v5647
  %v5836 = vpop.f32.mrb[0].mxu0
  %v5837 = vadd.f32 %v5585, %v5836
  %v5838 = vpop.f32.mrb[0].mxu0
  %v5839 = vpop.f32.mrb[0].mxu0
  %v5840 = vadd.f32 %v5585, %v5839
  %v5841 = vpop.f32.mrb[0].mxu0
  %5842 = vmatprep.mubr.bf16.mxu0 0
  %5843 = vmatmul.mubr.bf16.gmra.mrb[0].mxu0 %v5650
  %v5844 = vpop.f32.mrb[0].mxu0
  %v5845 = vadd.f32 %v5585, %v5844
  %v5846 = vpop.f32.mrb[0].mxu0
  %v5847 = vpop.f32.mrb[0].mxu0
  %v5848 = vadd.f32 %v5585, %v5847
  %v5849 = vpop.f32.mrb[0].mxu0
  %5850 = vmatprep.mubr.bf16.mxu0 0
  %5851 = vmatmul.mubr.bf16.gmra.mrb[0].mxu0 %v5653
  %v5852 = vpop.f32.mrb[0].mxu0
  %v5853 = vadd.f32 %v5585, %v5852
  %v5854 = vpop.f32.mrb[0].mxu0
  %v5855 = vpop.f32.mrb[0].mxu0
  %v5856 = vadd.f32 %v5585, %v5855
  %v5857 = vpop.f32.mrb[0].mxu0
  %5858 = vmatprep.mubr.bf16.mxu0 0
  %5859 = vmatmul.mubr.bf16.gmra.mrb[0].mxu0 %v5656
  %v5860 = vpop.f32.mrb[0].mxu0
  %v5861 = vadd.f32 %v5585, %v5860
  %v5862 = vpop.f32.mrb[0].mxu0
  %v5863 = vpop.f32.mrb[0].mxu0
  %v5864 = vadd.f32 %v5585, %v5863
  %v5865 = vpop.f32.mrb[0].mxu0
  %5866 = vmatprep.mubr.bf16.mxu0 0
  %5867 = vmatmul.mubr.bf16.gmra.mrb[0].mxu0 %v5659
  %v5868 = vpop.f32.mrb[0].mxu0
  %v5869 = vadd.f32 %v5585, %v5868
  %v5870 = vpop.f32.mrb[0].mxu0
  %v5871 = vpop.f32.mrb[0].mxu0
  %v5872 = vadd.f32 %v5585, %v5871
  %v5873 = vpop.f32.mrb[0].mxu0
  %5874 = vmatprep.mubr.bf16.mxu0 0
  %5875 = vmatmul.mubr.bf16.gmra.mrb[0].mxu0 %v5662
  %v5876 = vpop.f32.mrb[0].mxu0
  %v5877 = vadd.f32 %v5585, %v5876
  %v5878 = vpop.f32.mrb[0].mxu0
  %v5879 = vpop.f32.mrb[0].mxu0
  %v5880 = vadd.f32 %v5585, %v5879
  %v5881 = vpop.f32.mrb[0].mxu0
  %5882 = vmatprep.mubr.bf16.mxu0 0
  %5883 = vmatmul.mubr.bf16.gmra.mrb[0].mxu0 %v5665
  %v5884 = vpop.f32.mrb[0].mxu0
  %v5885 = vadd.f32 %v5585, %v5884
  %v5886 = vpop.f32.mrb[0].mxu0
  %v5887 = vpop.f32.mrb[0].mxu0
  %v5888 = vadd.f32 %v5585, %v5887
  %v5889 = vpop.f32.mrb[0].mxu0
  %5890 = vmatprep.mubr.bf16.mxu0 0
  %5891 = vmatmul.mubr.bf16.gmra.mrb[0].mxu0 %v5668
  %v5892 = vpop.f32.mrb[0].mxu0
  %v5893 = vadd.f32 %v5585, %v5892
  %v5894 = vpop.f32.mrb[0].mxu0
  %v5895 = vpop.f32.mrb[0].mxu0
  %v5896 = vadd.f32 %v5585, %v5895
  %v5897 = vpop.f32.mrb[0].mxu0
  %5898 = vmatprep.mubr.bf16.mxu0 0
  %5899 = vmatmul.mubr.bf16.gmra.mrb[0].mxu0 %v5671
  %v5900 = vpop.f32.mrb[0].mxu0
  %v5901 = vadd.f32 %v5585, %v5900
  %v5902 = vpop.f32.mrb[0].mxu0
  %v5903 = vpop.f32.mrb[0].mxu0
  %v5904 = vadd.f32 %v5585, %v5903
  %v5905 = vpop.f32.mrb[0].mxu0
  %5906 = vmatprep.mubr.bf16.mxu0 0
  %5907 = vmatmul.mubr.bf16.gmra.mrb[0].mxu0 %v5674
  %v5908 = vpop.f32.mrb[0].mxu0
  %v5909 = vadd.f32 %v5585, %v5908
  %v5910 = vpop.f32.mrb[0].mxu0
  %v5911 = vpop.f32.mrb[0].mxu0
  %v5912 = vadd.f32 %v5585, %v5911
  %v5913 = vpop.f32.mrb[0].mxu0
  %5914 = vmatprep.mubr.bf16.mxu0 0
  %5915 = vmatmul.mubr.bf16.gmra.mrb[0].mxu0 %v5677
  %v5916 = vpop.f32.mrb[0].mxu0
  %v5917 = vadd.f32 %v5585, %v5916
  %v5918 = vpop.f32.mrb[0].mxu0
  %v5919 = vpop.f32.mrb[0].mxu0
  %v5920 = vadd.f32 %v5585, %v5919
  %v5921 = vpop.f32.mrb[0].mxu0
  %5922 = vmatprep.mubr.bf16.mxu0 0
  %5923 = vmatmul.mubr.bf16.gmra.mrb[0].mxu0 %v5680
  %v5924 = vpop.f32.mrb[0].mxu0
  %v5925 = vadd.f32 %v5585, %v5924
  %v5926 = vpop.f32.mrb[0].mxu0
  %v5927 = vpop.f32.mrb[0].mxu0
  %v5928 = vadd.f32 %v5585, %v5927
  %v5929 = vpop.f32.mrb[0].mxu0
  %5930 = vmatprep.mubr.bf16.mxu0 0
  %5931 = vmatmul.mubr.bf16.gmra.mrb[0].mxu0 %v5683
  %v5932 = vpop.f32.mrb[0].mxu0
  %v5933 = vadd.f32 %v5585, %v5932
  %v5934 = vpop.f32.mrb[0].mxu0
  %v5935 = vpop.f32.mrb[0].mxu0
  %v5936 = vadd.f32 %v5585, %v5935
  %v5937 = vpop.f32.mrb[0].mxu0
  %5938 = vmatprep.mubr.bf16.mxu0 0
  %5939 = vmatmul.mubr.bf16.gmra.mrb[0].mxu0 %v5686
  %v5940 = vpop.f32.mrb[0].mxu0
  %v5941 = vadd.f32 %v5585, %v5940
  %v5942 = vpop.f32.mrb[0].mxu0
  %v5943 = vpop.f32.mrb[0].mxu0
  %v5944 = vadd.f32 %v5585, %v5943
  %v5945 = vpop.f32.mrb[0].mxu0
  %5946 = vmatprep.mubr.bf16.mxu0 0
  %5947 = vmatmul.mubr.bf16.gmra.mrb[0].mxu0 %v5689
  %v5948 = vpop.f32.mrb[0].mxu0
  %v5949 = vadd.f32 %v5585, %v5948
  %v5950 = vpop.f32.mrb[0].mxu0
  %v5951 = vpop.f32.mrb[0].mxu0
  %v5952 = vadd.f32 %v5585, %v5951
  %v5953 = vpop.f32.mrb[0].mxu0
  %5954 = vmatprep.mubr.bf16.mxu0 0
  %5955 = vmatmul.mubr.bf16.gmra.mrb[0].mxu0 %v5692
  %v5956 = vpop.f32.mrb[0].mxu0
  %v5957 = vadd.f32 %v5585, %v5956
  %v5958 = vpop.f32.mrb[0].mxu0
  %v5959 = vpop.f32.mrb[0].mxu0
  %v5960 = vadd.f32 %v5585, %v5959
  %v5961 = vpop.f32.mrb[0].mxu0
  %5962 = vmatprep.mubr.bf16.mxu0 0
  %5963 = vmatmul.mubr.bf16.gmra.mrb[0].mxu0 %v5695
  %v5964 = vpop.f32.mrb[0].mxu0
  %v5965 = vadd.f32 %v5585, %v5964
  %v5966 = vpop.f32.mrb[0].mxu0
  %v5967 = vpop.f32.mrb[0].mxu0
  %v5968 = vadd.f32 %v5585, %v5967
  %v5969 = vpop.f32.mrb[0].mxu0
  %5970 = vmatprep.mubr.bf16.mxu0 0
  %5971 = vmatmul.mubr.bf16.gmra.mrb[0].mxu0 %v5698
  %v5972 = vpop.f32.mrb[0].mxu0
  %v5973 = vadd.f32 %v5585, %v5972
  %v5974 = vpop.f32.mrb[0].mxu0
  %v5975 = vpop.f32.mrb[0].mxu0
  %v5976 = vadd.f32 %v5585, %v5975
  %v5977 = vpop.f32.mrb[0].mxu0
  %5978 = vmatprep.mubr.bf16.mxu0 0
  %5979 = vmatmul.mubr.bf16.gmra.mrb[0].mxu0 %v5701
  %v5980 = vpop.f32.mrb[0].mxu0
  %v5981 = vadd.f32 %v5585, %v5980
  %v5982 = vpop.f32.mrb[0].mxu0
  %v5983 = vpop.f32.mrb[0].mxu0
  %v5984 = vadd.f32 %v5585, %v5983
  %v5985 = vpop.f32.mrb[0].mxu0
  %5986 = vmatprep.mubr.bf16.mxu0 0
  %5987 = vmatmul.mubr.bf16.gmra.mrb[0].mxu0 %v5704
  %v5988 = vpop.f32.mrb[0].mxu0
  %v5989 = vadd.f32 %v5585, %v5988
  %v5990 = vpop.f32.mrb[0].mxu0
  %v5991 = vpop.f32.mrb[0].mxu0
  %v5992 = vadd.f32 %v5585, %v5991
  %v5993 = vpop.f32.mrb[0].mxu0
  %5994 = vdwg.mxu0
  %v5995 = vmax.f32 %v5741, 0.0
  %v5996 = vmax.f32 %v5744, 0.0
  %v5997 = vmax.f32 %v5749, 0.0
  %v5998 = vmax.f32 %v5752, 0.0
  %v5999 = vmax.f32 %v5757, 0.0
  %v6000 = vmax.f32 %v5760, 0.0
  %v6001 = vmax.f32 %v5765, 0.0
  %v6002 = vmax.f32 %v5768, 0.0
  %v6003 = vmax.f32 %v5773, 0.0
  %v6004 = vmax.f32 %v5776, 0.0
  %v6005 = vmax.f32 %v5781, 0.0
  %v6006 = vmax.f32 %v5784, 0.0
  %v6007 = vmax.f32 %v5789, 0.0
  %v6008 = vmax.f32 %v5792, 0.0
  %v6009 = vmax.f32 %v5797, 0.0
  %v6010 = vmax.f32 %v5800, 0.0
  %v6011 = vmax.f32 %v5805, 0.0
  %v6012 = vmax.f32 %v5808, 0.0
  %v6013 = vmax.f32 %v5813, 0.0
  %v6014 = vmax.f32 %v5816, 0.0
  %v6015 = vmax.f32 %v5821, 0.0
  %v6016 = vmax.f32 %v5824, 0.0
  %v6017 = vmax.f32 %v5829, 0.0
  %v6018 = vmax.f32 %v5832, 0.0
  %v6019 = vmax.f32 %v5837, 0.0
  %v6020 = vmax.f32 %v5840, 0.0
  %v6021 = vmax.f32 %v5845, 0.0
  %v6022 = vmax.f32 %v5848, 0.0
  %v6023 = vmax.f32 %v5853, 0.0
  %v6024 = vmax.f32 %v5856, 0.0
  %v6025 = vmax.f32 %v5861, 0.0
  %v6026 = vmax.f32 %v5864, 0.0
  %v6027 = vmax.f32 %v5869, 0.0
  %v6028 = vmax.f32 %v5872, 0.0
  %v6029 = vmax.f32 %v5877, 0.0
  %v6030 = vmax.f32 %v5880, 0.0
  %v6031 = vmax.f32 %v5885, 0.0
  %v6032 = vmax.f32 %v5888, 0.0
  %v6033 = vmax.f32 %v5893, 0.0
  %v6034 = vmax.f32 %v5896, 0.0
  %v6035 = vmax.f32 %v5901, 0.0
  %v6036 = vmax.f32 %v5904, 0.0
  %v6037 = vmax.f32 %v5909, 0.0
  %v6038 = vmax.f32 %v5912, 0.0
  %v6039 = vmax.f32 %v5917, 0.0
  %v6040 = vmax.f32 %v5920, 0.0
  %v6041 = vmax.f32 %v5925, 0.0
  %v6042 = vmax.f32 %v5928, 0.0
  %v6043 = vmax.f32 %v5933, 0.0
  %v6044 = vmax.f32 %v5936, 0.0
  %v6045 = vmax.f32 %v5941, 0.0
  %v6046 = vmax.f32 %v5944, 0.0
  %v6047 = vmax.f32 %v5949, 0.0
  %v6048 = vmax.f32 %v5952, 0.0
  %v6049 = vmax.f32 %v5957, 0.0
  %v6050 = vmax.f32 %v5960, 0.0
  %v6051 = vmax.f32 %v5965, 0.0
  %v6052 = vmax.f32 %v5968, 0.0
  %v6053 = vmax.f32 %v5973, 0.0
  %v6054 = vmax.f32 %v5976, 0.0
  %v6055 = vmax.f32 %v5981, 0.0
  %v6056 = vmax.f32 %v5984, 0.0
  %v6057 = vmax.f32 %v5989, 0.0
  %v6058 = vmax.f32 %v5992, 0.0
  %v6059 = vpack.c.bf16 %v5996, %v5995
  %v6060 = vpack.c.bf16 %v5998, %v5997
  %v6061 = vpack.c.bf16 %v6000, %v5999
  %v6062 = vpack.c.bf16 %v6002, %v6001
  %v6063 = vpack.c.bf16 %v6004, %v6003
  %v6064 = vpack.c.bf16 %v6006, %v6005
  %v6065 = vpack.c.bf16 %v6008, %v6007
  %v6066 = vpack.c.bf16 %v6010, %v6009
  %v6067 = vpack.c.bf16 %v6012, %v6011
  %v6068 = vpack.c.bf16 %v6014, %v6013
  %v6069 = vpack.c.bf16 %v6016, %v6015
  %v6070 = vpack.c.bf16 %v6018, %v6017
  %v6071 = vpack.c.bf16 %v6020, %v6019
  %v6072 = vpack.c.bf16 %v6022, %v6021
  %v6073 = vpack.c.bf16 %v6024, %v6023
  %v6074 = vpack.c.bf16 %v6026, %v6025
  %v6075 = vpack.c.bf16 %v6028, %v6027
  %v6076 = vpack.c.bf16 %v6030, %v6029
  %v6077 = vpack.c.bf16 %v6032, %v6031
  %v6078 = vpack.c.bf16 %v6034, %v6033
  %v6079 = vpack.c.bf16 %v6036, %v6035
  %v6080 = vpack.c.bf16 %v6038, %v6037
  %v6081 = vpack.c.bf16 %v6040, %v6039
  %v6082 = vpack.c.bf16 %v6042, %v6041
  %v6083 = vpack.c.bf16 %v6044, %v6043
  %v6084 = vpack.c.bf16 %v6046, %v6045
  %v6085 = vpack.c.bf16 %v6048, %v6047
  %v6086 = vpack.c.bf16 %v6050, %v6049
  %v6087 = vpack.c.bf16 %v6052, %v6051
  %v6088 = vpack.c.bf16 %v6054, %v6053
  %v6089 = vpack.c.bf16 %v6056, %v6055
  %v6090 = vpack.c.bf16 %v6058, %v6057
  %v6091 = vld [vmem:[%s1 + $0xc0] sm:$0xf]
  %v6092 = vld [vmem:[%s1 + $0xc4] sm:$0xf]
  %v6093 = vld [vmem:[%s1 + $0xc8] sm:$0xf]
  %v6094 = vld [vmem:[%s1 + $0xcc] sm:$0xf]
  %v6095 = vld [vmem:[%s1 + $0xd0] sm:$0xf]
  %v6096 = vld [vmem:[%s1 + $0xd4] sm:$0xf]
  %v6097 = vld [vmem:[%s1 + $0xd8] sm:$0xf]
  %v6098 = vld [vmem:[%s1 + $0xdc] sm:$0xf]
  %v6099 = vld [vmem:[%s2 + $0x30] sm:$0x1]
  %v6100 = vlaneseq
  %v6101 = vshrl.u32 %v6100, 7
  %v6102 = vsub.s32 0, %v6101
  %v6103 = vrot.slane %v6099, %v6102
  %v6112 = vunpack.c.l.b16 %v6091
  %v6113 = vunpack.c.l.b16 %v6092
  %v6114 = vunpack.c.l.b16 %v6093
  %v6115 = vunpack.c.l.b16 %v6094
  %v6116 = vunpack.c.l.b16 %v6095
  %v6117 = vunpack.c.l.b16 %v6096
  %v6118 = vunpack.c.l.b16 %v6097
  %v6119 = vunpack.c.l.b16 %v6098
  %v6120 = vpack.c.b16 %v6113, %v6112
  %v6121 = vpack.c.b16 %v6115, %v6114
  %v6122 = vpack.c.b16 %v6117, %v6116
  %v6123 = vpack.c.b16 %v6119, %v6118
  %v6129 = vsel %vm2382, %v6059, 0
  %v6132 = vsel %vm2382, %v6060, 0
  %v6135 = vsel %vm2382, %v6061, 0
  %v6138 = vsel %vm2382, %v6062, 0
  %v6141 = vsel %vm2382, %v6063, 0
  %v6144 = vsel %vm2382, %v6064, 0
  %v6147 = vsel %vm2382, %v6065, 0
  %v6150 = vsel %vm2382, %v6066, 0
  %v6153 = vsel %vm2382, %v6067, 0
  %v6156 = vsel %vm2382, %v6068, 0
  %v6159 = vsel %vm2382, %v6069, 0
  %v6162 = vsel %vm2382, %v6070, 0
  %v6165 = vsel %vm2382, %v6071, 0
  %v6168 = vsel %vm2382, %v6072, 0
  %v6171 = vsel %vm2382, %v6073, 0
  %v6174 = vsel %vm2382, %v6074, 0
  %v6177 = vsel %vm2382, %v6075, 0
  %v6180 = vsel %vm2382, %v6076, 0
  %v6183 = vsel %vm2382, %v6077, 0
  %v6186 = vsel %vm2382, %v6078, 0
  %v6189 = vsel %vm2382, %v6079, 0
  %v6192 = vsel %vm2382, %v6080, 0
  %v6195 = vsel %vm2382, %v6081, 0
  %v6198 = vsel %vm2382, %v6082, 0
  %v6201 = vsel %vm2382, %v6083, 0
  %v6204 = vsel %vm2382, %v6084, 0
  %v6207 = vsel %vm2382, %v6085, 0
  %v6210 = vsel %vm2382, %v6086, 0
  %v6213 = vsel %vm2382, %v6087, 0
  %v6216 = vsel %vm2382, %v6088, 0
  %v6219 = vsel %vm2382, %v6089, 0
  %v6222 = vsel %vm2382, %v6090, 0
  %6224 = vmatprep.subr.bf16.mxu0 0
  %6225 = vmatpush1.bf16.msra.mxu0 %v6120
  %6226 = vmatprep.subr.bf16.mxu0 0
  %6227 = vmatpush1.bf16.msra.mxu0 %v6121
  %6228 = vmatprep.subr.bf16.mxu0 0
  %6229 = vmatpush1.bf16.msra.mxu0 %v6122
  %6230 = vmatprep.subr.bf16.mxu0 0
  %6231 = vmatpush1.bf16.msra.mxu0 %v6123
  %6232 = vmatprep.subr.bf16.mxu0 0
  %6233 = vmatpush1.bf16.msra.mxu0 0
  %6234 = vmatprep.subr.bf16.mxu0 0
  %6235 = vmatpush1.bf16.msra.mxu0 0
  %6236 = vmatprep.subr.bf16.mxu0 0
  %6237 = vmatpush1.bf16.msra.mxu0 0
  %6238 = vmatprep.subr.bf16.mxu0 0
  %6239 = vmatpush1.bf16.msra.mxu0 0
  %6240 = vmatprep.subr.bf16.mxu0 0
  %6241 = vmatpush1.bf16.msra.mxu0 0
  %6242 = vmatprep.subr.bf16.mxu0 0
  %6243 = vmatpush1.bf16.msra.mxu0 0
  %6244 = vmatprep.subr.bf16.mxu0 0
  %6245 = vmatpush1.bf16.msra.mxu0 0
  %6246 = vmatprep.subr.bf16.mxu0 0
  %6247 = vmatpush1.bf16.msra.mxu0 0
  %6248 = vmatprep.subr.bf16.mxu0 0
  %6249 = vmatpush1.bf16.msra.mxu0 0
  %6250 = vmatprep.subr.bf16.mxu0 0
  %6251 = vmatpush1.bf16.msra.mxu0 0
  %6252 = vmatprep.subr.bf16.mxu0 0
  %6253 = vmatpush1.bf16.msra.mxu0 0
  %6254 = vmatprep.subr.bf16.mxu0 0
  %6255 = vmatpush1.bf16.msra.mxu0 0
  %6256 = vmatprep.mubr.bf16.mxu0 0
  %6257 = vmatmul.mubr.bf16.gmra.mrb[0].mxu0 %v6129
  %v6258 = vpop.f32.mrb[0].mxu0
  %v6259 = vadd.f32 %v6103, %v6258
  %v6260 = vpop.f32.mrb[0].mxu0
  %v6261 = vpop.f32.mrb[0].mxu0
  %v6262 = vadd.f32 %v6103, %v6261
  %v6263 = vpop.f32.mrb[0].mxu0
  %6264 = vmatprep.mubr.bf16.mxu0 0
  %6265 = vmatmul.mubr.bf16.gmra.mrb[0].mxu0 %v6132
  %v6266 = vpop.f32.mrb[0].mxu0
  %v6267 = vadd.f32 %v6103, %v6266
  %v6268 = vpop.f32.mrb[0].mxu0
  %v6269 = vpop.f32.mrb[0].mxu0
  %v6270 = vadd.f32 %v6103, %v6269
  %v6271 = vpop.f32.mrb[0].mxu0
  %6272 = vmatprep.mubr.bf16.mxu0 0
  %6273 = vmatmul.mubr.bf16.gmra.mrb[0].mxu0 %v6135
  %v6274 = vpop.f32.mrb[0].mxu0
  %v6275 = vadd.f32 %v6103, %v6274
  %v6276 = vpop.f32.mrb[0].mxu0
  %v6277 = vpop.f32.mrb[0].mxu0
  %v6278 = vadd.f32 %v6103, %v6277
  %v6279 = vpop.f32.mrb[0].mxu0
  %6280 = vmatprep.mubr.bf16.mxu0 0
  %6281 = vmatmul.mubr.bf16.gmra.mrb[0].mxu0 %v6138
  %v6282 = vpop.f32.mrb[0].mxu0
  %v6283 = vadd.f32 %v6103, %v6282
  %v6284 = vpop.f32.mrb[0].mxu0
  %v6285 = vpop.f32.mrb[0].mxu0
  %v6286 = vadd.f32 %v6103, %v6285
  %v6287 = vpop.f32.mrb[0].mxu0
  %6288 = vmatprep.mubr.bf16.mxu0 0
  %6289 = vmatmul.mubr.bf16.gmra.mrb[0].mxu0 %v6141
  %v6290 = vpop.f32.mrb[0].mxu0
  %v6291 = vadd.f32 %v6103, %v6290
  %v6292 = vpop.f32.mrb[0].mxu0
  %v6293 = vpop.f32.mrb[0].mxu0
  %v6294 = vadd.f32 %v6103, %v6293
  %v6295 = vpop.f32.mrb[0].mxu0
  %6296 = vmatprep.mubr.bf16.mxu0 0
  %6297 = vmatmul.mubr.bf16.gmra.mrb[0].mxu0 %v6144
  %v6298 = vpop.f32.mrb[0].mxu0
  %v6299 = vadd.f32 %v6103, %v6298
  %v6300 = vpop.f32.mrb[0].mxu0
  %v6301 = vpop.f32.mrb[0].mxu0
  %v6302 = vadd.f32 %v6103, %v6301
  %v6303 = vpop.f32.mrb[0].mxu0
  %6304 = vmatprep.mubr.bf16.mxu0 0
  %6305 = vmatmul.mubr.bf16.gmra.mrb[0].mxu0 %v6147
  %v6306 = vpop.f32.mrb[0].mxu0
  %v6307 = vadd.f32 %v6103, %v6306
  %v6308 = vpop.f32.mrb[0].mxu0
  %v6309 = vpop.f32.mrb[0].mxu0
  %v6310 = vadd.f32 %v6103, %v6309
  %v6311 = vpop.f32.mrb[0].mxu0
  %6312 = vmatprep.mubr.bf16.mxu0 0
  %6313 = vmatmul.mubr.bf16.gmra.mrb[0].mxu0 %v6150
  %v6314 = vpop.f32.mrb[0].mxu0
  %v6315 = vadd.f32 %v6103, %v6314
  %v6316 = vpop.f32.mrb[0].mxu0
  %v6317 = vpop.f32.mrb[0].mxu0
  %v6318 = vadd.f32 %v6103, %v6317
  %v6319 = vpop.f32.mrb[0].mxu0
  %6320 = vmatprep.mubr.bf16.mxu0 0
  %6321 = vmatmul.mubr.bf16.gmra.mrb[0].mxu0 %v6153
  %v6322 = vpop.f32.mrb[0].mxu0
  %v6323 = vadd.f32 %v6103, %v6322
  %v6324 = vpop.f32.mrb[0].mxu0
  %v6325 = vpop.f32.mrb[0].mxu0
  %v6326 = vadd.f32 %v6103, %v6325
  %v6327 = vpop.f32.mrb[0].mxu0
  %6328 = vmatprep.mubr.bf16.mxu0 0
  %6329 = vmatmul.mubr.bf16.gmra.mrb[0].mxu0 %v6156
  %v6330 = vpop.f32.mrb[0].mxu0
  %v6331 = vadd.f32 %v6103, %v6330
  %v6332 = vpop.f32.mrb[0].mxu0
  %v6333 = vpop.f32.mrb[0].mxu0
  %v6334 = vadd.f32 %v6103, %v6333
  %v6335 = vpop.f32.mrb[0].mxu0
  %6336 = vmatprep.mubr.bf16.mxu0 0
  %6337 = vmatmul.mubr.bf16.gmra.mrb[0].mxu0 %v6159
  %v6338 = vpop.f32.mrb[0].mxu0
  %v6339 = vadd.f32 %v6103, %v6338
  %v6340 = vpop.f32.mrb[0].mxu0
  %v6341 = vpop.f32.mrb[0].mxu0
  %v6342 = vadd.f32 %v6103, %v6341
  %v6343 = vpop.f32.mrb[0].mxu0
  %6344 = vmatprep.mubr.bf16.mxu0 0
  %6345 = vmatmul.mubr.bf16.gmra.mrb[0].mxu0 %v6162
  %v6346 = vpop.f32.mrb[0].mxu0
  %v6347 = vadd.f32 %v6103, %v6346
  %v6348 = vpop.f32.mrb[0].mxu0
  %v6349 = vpop.f32.mrb[0].mxu0
  %v6350 = vadd.f32 %v6103, %v6349
  %v6351 = vpop.f32.mrb[0].mxu0
  %6352 = vmatprep.mubr.bf16.mxu0 0
  %6353 = vmatmul.mubr.bf16.gmra.mrb[0].mxu0 %v6165
  %v6354 = vpop.f32.mrb[0].mxu0
  %v6355 = vadd.f32 %v6103, %v6354
  %v6356 = vpop.f32.mrb[0].mxu0
  %v6357 = vpop.f32.mrb[0].mxu0
  %v6358 = vadd.f32 %v6103, %v6357
  %v6359 = vpop.f32.mrb[0].mxu0
  %6360 = vmatprep.mubr.bf16.mxu0 0
  %6361 = vmatmul.mubr.bf16.gmra.mrb[0].mxu0 %v6168
  %v6362 = vpop.f32.mrb[0].mxu0
  %v6363 = vadd.f32 %v6103, %v6362
  %v6364 = vpop.f32.mrb[0].mxu0
  %v6365 = vpop.f32.mrb[0].mxu0
  %v6366 = vadd.f32 %v6103, %v6365
  %v6367 = vpop.f32.mrb[0].mxu0
  %6368 = vmatprep.mubr.bf16.mxu0 0
  %6369 = vmatmul.mubr.bf16.gmra.mrb[0].mxu0 %v6171
  %v6370 = vpop.f32.mrb[0].mxu0
  %v6371 = vadd.f32 %v6103, %v6370
  %v6372 = vpop.f32.mrb[0].mxu0
  %v6373 = vpop.f32.mrb[0].mxu0
  %v6374 = vadd.f32 %v6103, %v6373
  %v6375 = vpop.f32.mrb[0].mxu0
  %6376 = vmatprep.mubr.bf16.mxu0 0
  %6377 = vmatmul.mubr.bf16.gmra.mrb[0].mxu0 %v6174
  %v6378 = vpop.f32.mrb[0].mxu0
  %v6379 = vadd.f32 %v6103, %v6378
  %v6380 = vpop.f32.mrb[0].mxu0
  %v6381 = vpop.f32.mrb[0].mxu0
  %v6382 = vadd.f32 %v6103, %v6381
  %v6383 = vpop.f32.mrb[0].mxu0
  %6384 = vmatprep.mubr.bf16.mxu0 0
  %6385 = vmatmul.mubr.bf16.gmra.mrb[0].mxu0 %v6177
  %v6386 = vpop.f32.mrb[0].mxu0
  %v6387 = vadd.f32 %v6103, %v6386
  %v6388 = vpop.f32.mrb[0].mxu0
  %v6389 = vpop.f32.mrb[0].mxu0
  %v6390 = vadd.f32 %v6103, %v6389
  %v6391 = vpop.f32.mrb[0].mxu0
  %6392 = vmatprep.mubr.bf16.mxu0 0
  %6393 = vmatmul.mubr.bf16.gmra.mrb[0].mxu0 %v6180
  %v6394 = vpop.f32.mrb[0].mxu0
  %v6395 = vadd.f32 %v6103, %v6394
  %v6396 = vpop.f32.mrb[0].mxu0
  %v6397 = vpop.f32.mrb[0].mxu0
  %v6398 = vadd.f32 %v6103, %v6397
  %v6399 = vpop.f32.mrb[0].mxu0
  %6400 = vmatprep.mubr.bf16.mxu0 0
  %6401 = vmatmul.mubr.bf16.gmra.mrb[0].mxu0 %v6183
  %v6402 = vpop.f32.mrb[0].mxu0
  %v6403 = vadd.f32 %v6103, %v6402
  %v6404 = vpop.f32.mrb[0].mxu0
  %v6405 = vpop.f32.mrb[0].mxu0
  %v6406 = vadd.f32 %v6103, %v6405
  %v6407 = vpop.f32.mrb[0].mxu0
  %6408 = vmatprep.mubr.bf16.mxu0 0
  %6409 = vmatmul.mubr.bf16.gmra.mrb[0].mxu0 %v6186
  %v6410 = vpop.f32.mrb[0].mxu0
  %v6411 = vadd.f32 %v6103, %v6410
  %v6412 = vpop.f32.mrb[0].mxu0
  %v6413 = vpop.f32.mrb[0].mxu0
  %v6414 = vadd.f32 %v6103, %v6413
  %v6415 = vpop.f32.mrb[0].mxu0
  %6416 = vmatprep.mubr.bf16.mxu0 0
  %6417 = vmatmul.mubr.bf16.gmra.mrb[0].mxu0 %v6189
  %v6418 = vpop.f32.mrb[0].mxu0
  %v6419 = vadd.f32 %v6103, %v6418
  %v6420 = vpop.f32.mrb[0].mxu0
  %v6421 = vpop.f32.mrb[0].mxu0
  %v6422 = vadd.f32 %v6103, %v6421
  %v6423 = vpop.f32.mrb[0].mxu0
  %6424 = vmatprep.mubr.bf16.mxu0 0
  %6425 = vmatmul.mubr.bf16.gmra.mrb[0].mxu0 %v6192
  %v6426 = vpop.f32.mrb[0].mxu0
  %v6427 = vadd.f32 %v6103, %v6426
  %v6428 = vpop.f32.mrb[0].mxu0
  %v6429 = vpop.f32.mrb[0].mxu0
  %v6430 = vadd.f32 %v6103, %v6429
  %v6431 = vpop.f32.mrb[0].mxu0
  %6432 = vmatprep.mubr.bf16.mxu0 0
  %6433 = vmatmul.mubr.bf16.gmra.mrb[0].mxu0 %v6195
  %v6434 = vpop.f32.mrb[0].mxu0
  %v6435 = vadd.f32 %v6103, %v6434
  %v6436 = vpop.f32.mrb[0].mxu0
  %v6437 = vpop.f32.mrb[0].mxu0
  %v6438 = vadd.f32 %v6103, %v6437
  %v6439 = vpop.f32.mrb[0].mxu0
  %6440 = vmatprep.mubr.bf16.mxu0 0
  %6441 = vmatmul.mubr.bf16.gmra.mrb[0].mxu0 %v6198
  %v6442 = vpop.f32.mrb[0].mxu0
  %v6443 = vadd.f32 %v6103, %v6442
  %v6444 = vpop.f32.mrb[0].mxu0
  %v6445 = vpop.f32.mrb[0].mxu0
  %v6446 = vadd.f32 %v6103, %v6445
  %v6447 = vpop.f32.mrb[0].mxu0
  %6448 = vmatprep.mubr.bf16.mxu0 0
  %6449 = vmatmul.mubr.bf16.gmra.mrb[0].mxu0 %v6201
  %v6450 = vpop.f32.mrb[0].mxu0
  %v6451 = vadd.f32 %v6103, %v6450
  %v6452 = vpop.f32.mrb[0].mxu0
  %v6453 = vpop.f32.mrb[0].mxu0
  %v6454 = vadd.f32 %v6103, %v6453
  %v6455 = vpop.f32.mrb[0].mxu0
  %6456 = vmatprep.mubr.bf16.mxu0 0
  %6457 = vmatmul.mubr.bf16.gmra.mrb[0].mxu0 %v6204
  %v6458 = vpop.f32.mrb[0].mxu0
  %v6459 = vadd.f32 %v6103, %v6458
  %v6460 = vpop.f32.mrb[0].mxu0
  %v6461 = vpop.f32.mrb[0].mxu0
  %v6462 = vadd.f32 %v6103, %v6461
  %v6463 = vpop.f32.mrb[0].mxu0
  %6464 = vmatprep.mubr.bf16.mxu0 0
  %6465 = vmatmul.mubr.bf16.gmra.mrb[0].mxu0 %v6207
  %v6466 = vpop.f32.mrb[0].mxu0
  %v6467 = vadd.f32 %v6103, %v6466
  %v6468 = vpop.f32.mrb[0].mxu0
  %v6469 = vpop.f32.mrb[0].mxu0
  %v6470 = vadd.f32 %v6103, %v6469
  %v6471 = vpop.f32.mrb[0].mxu0
  %6472 = vmatprep.mubr.bf16.mxu0 0
  %6473 = vmatmul.mubr.bf16.gmra.mrb[0].mxu0 %v6210
  %v6474 = vpop.f32.mrb[0].mxu0
  %v6475 = vadd.f32 %v6103, %v6474
  %v6476 = vpop.f32.mrb[0].mxu0
  %v6477 = vpop.f32.mrb[0].mxu0
  %v6478 = vadd.f32 %v6103, %v6477
  %v6479 = vpop.f32.mrb[0].mxu0
  %6480 = vmatprep.mubr.bf16.mxu0 0
  %6481 = vmatmul.mubr.bf16.gmra.mrb[0].mxu0 %v6213
  %v6482 = vpop.f32.mrb[0].mxu0
  %v6483 = vadd.f32 %v6103, %v6482
  %v6484 = vpop.f32.mrb[0].mxu0
  %v6485 = vpop.f32.mrb[0].mxu0
  %v6486 = vadd.f32 %v6103, %v6485
  %v6487 = vpop.f32.mrb[0].mxu0
  %6488 = vmatprep.mubr.bf16.mxu0 0
  %6489 = vmatmul.mubr.bf16.gmra.mrb[0].mxu0 %v6216
  %v6490 = vpop.f32.mrb[0].mxu0
  %v6491 = vadd.f32 %v6103, %v6490
  %v6492 = vpop.f32.mrb[0].mxu0
  %v6493 = vpop.f32.mrb[0].mxu0
  %v6494 = vadd.f32 %v6103, %v6493
  %v6495 = vpop.f32.mrb[0].mxu0
  %6496 = vmatprep.mubr.bf16.mxu0 0
  %6497 = vmatmul.mubr.bf16.gmra.mrb[0].mxu0 %v6219
  %v6498 = vpop.f32.mrb[0].mxu0
  %v6499 = vadd.f32 %v6103, %v6498
  %v6500 = vpop.f32.mrb[0].mxu0
  %v6501 = vpop.f32.mrb[0].mxu0
  %v6502 = vadd.f32 %v6103, %v6501
  %v6503 = vpop.f32.mrb[0].mxu0
  %6504 = vmatprep.mubr.bf16.mxu0 0
  %6505 = vmatmul.mubr.bf16.gmra.mrb[0].mxu0 %v6222
  %v6506 = vpop.f32.mrb[0].mxu0
  %v6507 = vadd.f32 %v6103, %v6506
  %v6508 = vpop.f32.mrb[0].mxu0
  %v6509 = vpop.f32.mrb[0].mxu0
  %v6510 = vadd.f32 %v6103, %v6509
  %v6511 = vpop.f32.mrb[0].mxu0
  %6512 = vdwg.mxu0
  %v6513 = vmax.f32 %v6259, 0.0
  %v6514 = vmax.f32 %v6262, 0.0
  %v6515 = vmax.f32 %v6267, 0.0
  %v6516 = vmax.f32 %v6270, 0.0
  %v6517 = vmax.f32 %v6275, 0.0
  %v6518 = vmax.f32 %v6278, 0.0
  %v6519 = vmax.f32 %v6283, 0.0
  %v6520 = vmax.f32 %v6286, 0.0
  %v6521 = vmax.f32 %v6291, 0.0
  %v6522 = vmax.f32 %v6294, 0.0
  %v6523 = vmax.f32 %v6299, 0.0
  %v6524 = vmax.f32 %v6302, 0.0
  %v6525 = vmax.f32 %v6307, 0.0
  %v6526 = vmax.f32 %v6310, 0.0
  %v6527 = vmax.f32 %v6315, 0.0
  %v6528 = vmax.f32 %v6318, 0.0
  %v6529 = vmax.f32 %v6323, 0.0
  %v6530 = vmax.f32 %v6326, 0.0
  %v6531 = vmax.f32 %v6331, 0.0
  %v6532 = vmax.f32 %v6334, 0.0
  %v6533 = vmax.f32 %v6339, 0.0
  %v6534 = vmax.f32 %v6342, 0.0
  %v6535 = vmax.f32 %v6347, 0.0
  %v6536 = vmax.f32 %v6350, 0.0
  %v6537 = vmax.f32 %v6355, 0.0
  %v6538 = vmax.f32 %v6358, 0.0
  %v6539 = vmax.f32 %v6363, 0.0
  %v6540 = vmax.f32 %v6366, 0.0
  %v6541 = vmax.f32 %v6371, 0.0
  %v6542 = vmax.f32 %v6374, 0.0
  %v6543 = vmax.f32 %v6379, 0.0
  %v6544 = vmax.f32 %v6382, 0.0
  %v6545 = vmax.f32 %v6387, 0.0
  %v6546 = vmax.f32 %v6390, 0.0
  %v6547 = vmax.f32 %v6395, 0.0
  %v6548 = vmax.f32 %v6398, 0.0
  %v6549 = vmax.f32 %v6403, 0.0
  %v6550 = vmax.f32 %v6406, 0.0
  %v6551 = vmax.f32 %v6411, 0.0
  %v6552 = vmax.f32 %v6414, 0.0
  %v6553 = vmax.f32 %v6419, 0.0
  %v6554 = vmax.f32 %v6422, 0.0
  %v6555 = vmax.f32 %v6427, 0.0
  %v6556 = vmax.f32 %v6430, 0.0
  %v6557 = vmax.f32 %v6435, 0.0
  %v6558 = vmax.f32 %v6438, 0.0
  %v6559 = vmax.f32 %v6443, 0.0
  %v6560 = vmax.f32 %v6446, 0.0
  %v6561 = vmax.f32 %v6451, 0.0
  %v6562 = vmax.f32 %v6454, 0.0
  %v6563 = vmax.f32 %v6459, 0.0
  %v6564 = vmax.f32 %v6462, 0.0
  %v6565 = vmax.f32 %v6467, 0.0
  %v6566 = vmax.f32 %v6470, 0.0
  %v6567 = vmax.f32 %v6475, 0.0
  %v6568 = vmax.f32 %v6478, 0.0
  %v6569 = vmax.f32 %v6483, 0.0
  %v6570 = vmax.f32 %v6486, 0.0
  %v6571 = vmax.f32 %v6491, 0.0
  %v6572 = vmax.f32 %v6494, 0.0
  %v6573 = vmax.f32 %v6499, 0.0
  %v6574 = vmax.f32 %v6502, 0.0
  %v6575 = vmax.f32 %v6507, 0.0
  %v6576 = vmax.f32 %v6510, 0.0
  %v6577 = vld [vmem:[%s2 + $0x38] sm:$0x1]
  %v6578 = vlaneseq
  %v6579 = vshrl.u32 %v6578, 7
  %v6580 = vsub.s32 0, %v6579
  %v6581 = vrot.slane %v6577, %v6580
  %v6582 = vmul.f32 %v4975, %v6581
  %v6583 = vmul.f32 %v4976, %v6581
  %v6584 = vmul.f32 %v4977, %v6581
  %v6585 = vmul.f32 %v4978, %v6581
  %v6586 = vmul.f32 %v4979, %v6581
  %v6587 = vmul.f32 %v4980, %v6581
  %v6588 = vmul.f32 %v4981, %v6581
  %v6589 = vmul.f32 %v4982, %v6581
  %v6590 = vmul.f32 %v4983, %v6581
  %v6591 = vmul.f32 %v4984, %v6581
  %v6592 = vmul.f32 %v4985, %v6581
  %v6593 = vmul.f32 %v4986, %v6581
  %v6594 = vmul.f32 %v4987, %v6581
  %v6595 = vmul.f32 %v4988, %v6581
  %v6596 = vmul.f32 %v4989, %v6581
  %v6597 = vmul.f32 %v4990, %v6581
  %v6598 = vmul.f32 %v4991, %v6581
  %v6599 = vmul.f32 %v4992, %v6581
  %v6600 = vmul.f32 %v4993, %v6581
  %v6601 = vmul.f32 %v4994, %v6581
  %v6602 = vmul.f32 %v4995, %v6581
  %v6603 = vmul.f32 %v4996, %v6581
  %v6604 = vmul.f32 %v4997, %v6581
  %v6605 = vmul.f32 %v4998, %v6581
  %v6606 = vmul.f32 %v4999, %v6581
  %v6607 = vmul.f32 %v5000, %v6581
  %v6608 = vmul.f32 %v5001, %v6581
  %v6609 = vmul.f32 %v5002, %v6581
  %v6610 = vmul.f32 %v5003, %v6581
  %v6611 = vmul.f32 %v5004, %v6581
  %v6612 = vmul.f32 %v5005, %v6581
  %v6613 = vmul.f32 %v5006, %v6581
  %v6614 = vmul.f32 %v5007, %v6581
  %v6615 = vmul.f32 %v5008, %v6581
  %v6616 = vmul.f32 %v5009, %v6581
  %v6617 = vmul.f32 %v5010, %v6581
  %v6618 = vmul.f32 %v5011, %v6581
  %v6619 = vmul.f32 %v5012, %v6581
  %v6620 = vmul.f32 %v5013, %v6581
  %v6621 = vmul.f32 %v5014, %v6581
  %v6622 = vmul.f32 %v5015, %v6581
  %v6623 = vmul.f32 %v5016, %v6581
  %v6624 = vmul.f32 %v5017, %v6581
  %v6625 = vmul.f32 %v5018, %v6581
  %v6626 = vmul.f32 %v5019, %v6581
  %v6627 = vmul.f32 %v5020, %v6581
  %v6628 = vmul.f32 %v5021, %v6581
  %v6629 = vmul.f32 %v5022, %v6581
  %v6630 = vmul.f32 %v5023, %v6581
  %v6631 = vmul.f32 %v5024, %v6581
  %v6632 = vmul.f32 %v5025, %v6581
  %v6633 = vmul.f32 %v5026, %v6581
  %v6634 = vmul.f32 %v5027, %v6581
  %v6635 = vmul.f32 %v5028, %v6581
  %v6636 = vmul.f32 %v5029, %v6581
  %v6637 = vmul.f32 %v5030, %v6581
  %v6638 = vmul.f32 %v5031, %v6581
  %v6639 = vmul.f32 %v5032, %v6581
  %v6640 = vmul.f32 %v5033, %v6581
  %v6641 = vmul.f32 %v5034, %v6581
  %v6642 = vmul.f32 %v5035, %v6581
  %v6643 = vmul.f32 %v5036, %v6581
  %v6644 = vmul.f32 %v5037, %v6581
  %v6645 = vmul.f32 %v5038, %v6581
  %v6646 = vsel %vm1863, %v6582, 0.0
  %6647 = vadd.xlane.f32.xlu0 %v6646
  %v6648 = vpop.xlane.xlu0 %6647
  %v6649 = vsel %vm1863, %v6583, 0.0
  %6650 = vadd.xlane.f32.xlu0 %v6649
  %v6651 = vpop.xlane.xlu0 %6650
  %v6652 = vsel %vm1863, %v6584, 0.0
  %6653 = vadd.xlane.f32.xlu0 %v6652
  %v6654 = vpop.xlane.xlu0 %6653
  %v6655 = vsel %vm1863, %v6585, 0.0
  %6656 = vadd.xlane.f32.xlu0 %v6655
  %v6657 = vpop.xlane.xlu0 %6656
  %v6658 = vsel %vm1863, %v6586, 0.0
  %6659 = vadd.xlane.f32.xlu0 %v6658
  %v6660 = vpop.xlane.xlu0 %6659
  %v6661 = vsel %vm1863, %v6587, 0.0
  %6662 = vadd.xlane.f32.xlu0 %v6661
  %v6663 = vpop.xlane.xlu0 %6662
  %v6664 = vsel %vm1863, %v6588, 0.0
  %6665 = vadd.xlane.f32.xlu0 %v6664
  %v6666 = vpop.xlane.xlu0 %6665
  %v6667 = vsel %vm1863, %v6589, 0.0
  %6668 = vadd.xlane.f32.xlu0 %v6667
  %v6669 = vpop.xlane.xlu0 %6668
  %v6670 = vsel %vm1863, %v6590, 0.0
  %6671 = vadd.xlane.f32.xlu0 %v6670
  %v6672 = vpop.xlane.xlu0 %6671
  %v6673 = vsel %vm1863, %v6591, 0.0
  %6674 = vadd.xlane.f32.xlu0 %v6673
  %v6675 = vpop.xlane.xlu0 %6674
  %v6676 = vsel %vm1863, %v6592, 0.0
  %6677 = vadd.xlane.f32.xlu0 %v6676
  %v6678 = vpop.xlane.xlu0 %6677
  %v6679 = vsel %vm1863, %v6593, 0.0
  %6680 = vadd.xlane.f32.xlu0 %v6679
  %v6681 = vpop.xlane.xlu0 %6680
  %v6682 = vsel %vm1863, %v6594, 0.0
  %6683 = vadd.xlane.f32.xlu0 %v6682
  %v6684 = vpop.xlane.xlu0 %6683
  %v6685 = vsel %vm1863, %v6595, 0.0
  %6686 = vadd.xlane.f32.xlu0 %v6685
  %v6687 = vpop.xlane.xlu0 %6686
  %v6688 = vsel %vm1863, %v6596, 0.0
  %6689 = vadd.xlane.f32.xlu0 %v6688
  %v6690 = vpop.xlane.xlu0 %6689
  %v6691 = vsel %vm1863, %v6597, 0.0
  %6692 = vadd.xlane.f32.xlu0 %v6691
  %v6693 = vpop.xlane.xlu0 %6692
  %v6694 = vsel %vm1863, %v6598, 0.0
  %6695 = vadd.xlane.f32.xlu0 %v6694
  %v6696 = vpop.xlane.xlu0 %6695
  %v6697 = vsel %vm1863, %v6599, 0.0
  %6698 = vadd.xlane.f32.xlu0 %v6697
  %v6699 = vpop.xlane.xlu0 %6698
  %v6700 = vsel %vm1863, %v6600, 0.0
  %6701 = vadd.xlane.f32.xlu0 %v6700
  %v6702 = vpop.xlane.xlu0 %6701
  %v6703 = vsel %vm1863, %v6601, 0.0
  %6704 = vadd.xlane.f32.xlu0 %v6703
  %v6705 = vpop.xlane.xlu0 %6704
  %v6706 = vsel %vm1863, %v6602, 0.0
  %6707 = vadd.xlane.f32.xlu0 %v6706
  %v6708 = vpop.xlane.xlu0 %6707
  %v6709 = vsel %vm1863, %v6603, 0.0
  %6710 = vadd.xlane.f32.xlu0 %v6709
  %v6711 = vpop.xlane.xlu0 %6710
  %v6712 = vsel %vm1863, %v6604, 0.0
  %6713 = vadd.xlane.f32.xlu0 %v6712
  %v6714 = vpop.xlane.xlu0 %6713
  %v6715 = vsel %vm1863, %v6605, 0.0
  %6716 = vadd.xlane.f32.xlu0 %v6715
  %v6717 = vpop.xlane.xlu0 %6716
  %v6718 = vsel %vm1863, %v6606, 0.0
  %6719 = vadd.xlane.f32.xlu0 %v6718
  %v6720 = vpop.xlane.xlu0 %6719
  %v6721 = vsel %vm1863, %v6607, 0.0
  %6722 = vadd.xlane.f32.xlu0 %v6721
  %v6723 = vpop.xlane.xlu0 %6722
  %v6724 = vsel %vm1863, %v6608, 0.0
  %6725 = vadd.xlane.f32.xlu0 %v6724
  %v6726 = vpop.xlane.xlu0 %6725
  %v6727 = vsel %vm1863, %v6609, 0.0
  %6728 = vadd.xlane.f32.xlu0 %v6727
  %v6729 = vpop.xlane.xlu0 %6728
  %v6730 = vsel %vm1863, %v6610, 0.0
  %6731 = vadd.xlane.f32.xlu0 %v6730
  %v6732 = vpop.xlane.xlu0 %6731
  %v6733 = vsel %vm1863, %v6611, 0.0
  %6734 = vadd.xlane.f32.xlu0 %v6733
  %v6735 = vpop.xlane.xlu0 %6734
  %v6736 = vsel %vm1863, %v6612, 0.0
  %6737 = vadd.xlane.f32.xlu0 %v6736
  %v6738 = vpop.xlane.xlu0 %6737
  %v6739 = vsel %vm1863, %v6613, 0.0
  %6740 = vadd.xlane.f32.xlu0 %v6739
  %v6741 = vpop.xlane.xlu0 %6740
  %v6742 = vsel %vm1863, %v6614, 0.0
  %6743 = vadd.xlane.f32.xlu0 %v6742
  %v6744 = vpop.xlane.xlu0 %6743
  %v6745 = vsel %vm1863, %v6615, 0.0
  %6746 = vadd.xlane.f32.xlu0 %v6745
  %v6747 = vpop.xlane.xlu0 %6746
  %v6748 = vsel %vm1863, %v6616, 0.0
  %6749 = vadd.xlane.f32.xlu0 %v6748
  %v6750 = vpop.xlane.xlu0 %6749
  %v6751 = vsel %vm1863, %v6617, 0.0
  %6752 = vadd.xlane.f32.xlu0 %v6751
  %v6753 = vpop.xlane.xlu0 %6752
  %v6754 = vsel %vm1863, %v6618, 0.0
  %6755 = vadd.xlane.f32.xlu0 %v6754
  %v6756 = vpop.xlane.xlu0 %6755
  %v6757 = vsel %vm1863, %v6619, 0.0
  %6758 = vadd.xlane.f32.xlu0 %v6757
  %v6759 = vpop.xlane.xlu0 %6758
  %v6760 = vsel %vm1863, %v6620, 0.0
  %6761 = vadd.xlane.f32.xlu0 %v6760
  %v6762 = vpop.xlane.xlu0 %6761
  %v6763 = vsel %vm1863, %v6621, 0.0
  %6764 = vadd.xlane.f32.xlu0 %v6763
  %v6765 = vpop.xlane.xlu0 %6764
  %v6766 = vsel %vm1863, %v6622, 0.0
  %6767 = vadd.xlane.f32.xlu0 %v6766
  %v6768 = vpop.xlane.xlu0 %6767
  %v6769 = vsel %vm1863, %v6623, 0.0
  %6770 = vadd.xlane.f32.xlu0 %v6769
  %v6771 = vpop.xlane.xlu0 %6770
  %v6772 = vsel %vm1863, %v6624, 0.0
  %6773 = vadd.xlane.f32.xlu0 %v6772
  %v6774 = vpop.xlane.xlu0 %6773
  %v6775 = vsel %vm1863, %v6625, 0.0
  %6776 = vadd.xlane.f32.xlu0 %v6775
  %v6777 = vpop.xlane.xlu0 %6776
  %v6778 = vsel %vm1863, %v6626, 0.0
  %6779 = vadd.xlane.f32.xlu0 %v6778
  %v6780 = vpop.xlane.xlu0 %6779
  %v6781 = vsel %vm1863, %v6627, 0.0
  %6782 = vadd.xlane.f32.xlu0 %v6781
  %v6783 = vpop.xlane.xlu0 %6782
  %v6784 = vsel %vm1863, %v6628, 0.0
  %6785 = vadd.xlane.f32.xlu0 %v6784
  %v6786 = vpop.xlane.xlu0 %6785
  %v6787 = vsel %vm1863, %v6629, 0.0
  %6788 = vadd.xlane.f32.xlu0 %v6787
  %v6789 = vpop.xlane.xlu0 %6788
  %v6790 = vsel %vm1863, %v6630, 0.0
  %6791 = vadd.xlane.f32.xlu0 %v6790
  %v6792 = vpop.xlane.xlu0 %6791
  %v6793 = vsel %vm1863, %v6631, 0.0
  %6794 = vadd.xlane.f32.xlu0 %v6793
  %v6795 = vpop.xlane.xlu0 %6794
  %v6796 = vsel %vm1863, %v6632, 0.0
  %6797 = vadd.xlane.f32.xlu0 %v6796
  %v6798 = vpop.xlane.xlu0 %6797
  %v6799 = vsel %vm1863, %v6633, 0.0
  %6800 = vadd.xlane.f32.xlu0 %v6799
  %v6801 = vpop.xlane.xlu0 %6800
  %v6802 = vsel %vm1863, %v6634, 0.0
  %6803 = vadd.xlane.f32.xlu0 %v6802
  %v6804 = vpop.xlane.xlu0 %6803
  %v6805 = vsel %vm1863, %v6635, 0.0
  %6806 = vadd.xlane.f32.xlu0 %v6805
  %v6807 = vpop.xlane.xlu0 %6806
  %v6808 = vsel %vm1863, %v6636, 0.0
  %6809 = vadd.xlane.f32.xlu0 %v6808
  %v6810 = vpop.xlane.xlu0 %6809
  %v6811 = vsel %vm1863, %v6637, 0.0
  %6812 = vadd.xlane.f32.xlu0 %v6811
  %v6813 = vpop.xlane.xlu0 %6812
  %v6814 = vsel %vm1863, %v6638, 0.0
  %6815 = vadd.xlane.f32.xlu0 %v6814
  %v6816 = vpop.xlane.xlu0 %6815
  %v6817 = vsel %vm1863, %v6639, 0.0
  %6818 = vadd.xlane.f32.xlu0 %v6817
  %v6819 = vpop.xlane.xlu0 %6818
  %v6820 = vsel %vm1863, %v6640, 0.0
  %6821 = vadd.xlane.f32.xlu0 %v6820
  %v6822 = vpop.xlane.xlu0 %6821
  %v6823 = vsel %vm1863, %v6641, 0.0
  %6824 = vadd.xlane.f32.xlu0 %v6823
  %v6825 = vpop.xlane.xlu0 %6824
  %v6826 = vsel %vm1863, %v6642, 0.0
  %6827 = vadd.xlane.f32.xlu0 %v6826
  %v6828 = vpop.xlane.xlu0 %6827
  %v6829 = vsel %vm1863, %v6643, 0.0
  %6830 = vadd.xlane.f32.xlu0 %v6829
  %v6831 = vpop.xlane.xlu0 %6830
  %v6832 = vsel %vm1863, %v6644, 0.0
  %6833 = vadd.xlane.f32.xlu0 %v6832
  %v6834 = vpop.xlane.xlu0 %6833
  %v6835 = vsel %vm1863, %v6645, 0.0
  %6836 = vadd.xlane.f32.xlu0 %v6835
  %v6837 = vpop.xlane.xlu0 %6836
  %v6838 = vld [vmem:[%s2 + $0x40] sm:$0x1]
  %v6839 = vlaneseq
  %v6840 = vshrl.u32 %v6839, 7
  %v6841 = vsub.s32 0, %v6840
  %v6842 = vrot.slane %v6838, %v6841
  %v6843 = vmul.f32 %v6513, %v6842
  %v6844 = vmul.f32 %v6514, %v6842
  %v6845 = vmul.f32 %v6515, %v6842
  %v6846 = vmul.f32 %v6516, %v6842
  %v6847 = vmul.f32 %v6517, %v6842
  %v6848 = vmul.f32 %v6518, %v6842
  %v6849 = vmul.f32 %v6519, %v6842
  %v6850 = vmul.f32 %v6520, %v6842
  %v6851 = vmul.f32 %v6521, %v6842
  %v6852 = vmul.f32 %v6522, %v6842
  %v6853 = vmul.f32 %v6523, %v6842
  %v6854 = vmul.f32 %v6524, %v6842
  %v6855 = vmul.f32 %v6525, %v6842
  %v6856 = vmul.f32 %v6526, %v6842
  %v6857 = vmul.f32 %v6527, %v6842
  %v6858 = vmul.f32 %v6528, %v6842
  %v6859 = vmul.f32 %v6529, %v6842
  %v6860 = vmul.f32 %v6530, %v6842
  %v6861 = vmul.f32 %v6531, %v6842
  %v6862 = vmul.f32 %v6532, %v6842
  %v6863 = vmul.f32 %v6533, %v6842
  %v6864 = vmul.f32 %v6534, %v6842
  %v6865 = vmul.f32 %v6535, %v6842
  %v6866 = vmul.f32 %v6536, %v6842
  %v6867 = vmul.f32 %v6537, %v6842
  %v6868 = vmul.f32 %v6538, %v6842
  %v6869 = vmul.f32 %v6539, %v6842
  %v6870 = vmul.f32 %v6540, %v6842
  %v6871 = vmul.f32 %v6541, %v6842
  %v6872 = vmul.f32 %v6542, %v6842
  %v6873 = vmul.f32 %v6543, %v6842
  %v6874 = vmul.f32 %v6544, %v6842
  %v6875 = vmul.f32 %v6545, %v6842
  %v6876 = vmul.f32 %v6546, %v6842
  %v6877 = vmul.f32 %v6547, %v6842
  %v6878 = vmul.f32 %v6548, %v6842
  %v6879 = vmul.f32 %v6549, %v6842
  %v6880 = vmul.f32 %v6550, %v6842
  %v6881 = vmul.f32 %v6551, %v6842
  %v6882 = vmul.f32 %v6552, %v6842
  %v6883 = vmul.f32 %v6553, %v6842
  %v6884 = vmul.f32 %v6554, %v6842
  %v6885 = vmul.f32 %v6555, %v6842
  %v6886 = vmul.f32 %v6556, %v6842
  %v6887 = vmul.f32 %v6557, %v6842
  %v6888 = vmul.f32 %v6558, %v6842
  %v6889 = vmul.f32 %v6559, %v6842
  %v6890 = vmul.f32 %v6560, %v6842
  %v6891 = vmul.f32 %v6561, %v6842
  %v6892 = vmul.f32 %v6562, %v6842
  %v6893 = vmul.f32 %v6563, %v6842
  %v6894 = vmul.f32 %v6564, %v6842
  %v6895 = vmul.f32 %v6565, %v6842
  %v6896 = vmul.f32 %v6566, %v6842
  %v6897 = vmul.f32 %v6567, %v6842
  %v6898 = vmul.f32 %v6568, %v6842
  %v6899 = vmul.f32 %v6569, %v6842
  %v6900 = vmul.f32 %v6570, %v6842
  %v6901 = vmul.f32 %v6571, %v6842
  %v6902 = vmul.f32 %v6572, %v6842
  %v6903 = vmul.f32 %v6573, %v6842
  %v6904 = vmul.f32 %v6574, %v6842
  %v6905 = vmul.f32 %v6575, %v6842
  %v6906 = vmul.f32 %v6576, %v6842
  %v6907 = vsel %vm2382, %v6843, 0.0
  %6908 = vadd.xlane.f32.xlu0 %v6907
  %v6909 = vpop.xlane.xlu0 %6908
  %v6910 = vsel %vm2382, %v6844, 0.0
  %6911 = vadd.xlane.f32.xlu0 %v6910
  %v6912 = vpop.xlane.xlu0 %6911
  %v6913 = vsel %vm2382, %v6845, 0.0
  %6914 = vadd.xlane.f32.xlu0 %v6913
  %v6915 = vpop.xlane.xlu0 %6914
  %v6916 = vsel %vm2382, %v6846, 0.0
  %6917 = vadd.xlane.f32.xlu0 %v6916
  %v6918 = vpop.xlane.xlu0 %6917
  %v6919 = vsel %vm2382, %v6847, 0.0
  %6920 = vadd.xlane.f32.xlu0 %v6919
  %v6921 = vpop.xlane.xlu0 %6920
  %v6922 = vsel %vm2382, %v6848, 0.0
  %6923 = vadd.xlane.f32.xlu0 %v6922
  %v6924 = vpop.xlane.xlu0 %6923
  %v6925 = vsel %vm2382, %v6849, 0.0
  %6926 = vadd.xlane.f32.xlu0 %v6925
  %v6927 = vpop.xlane.xlu0 %6926
  %v6928 = vsel %vm2382, %v6850, 0.0
  %6929 = vadd.xlane.f32.xlu0 %v6928
  %v6930 = vpop.xlane.xlu0 %6929
  %v6931 = vsel %vm2382, %v6851, 0.0
  %6932 = vadd.xlane.f32.xlu0 %v6931
  %v6933 = vpop.xlane.xlu0 %6932
  %v6934 = vsel %vm2382, %v6852, 0.0
  %6935 = vadd.xlane.f32.xlu0 %v6934
  %v6936 = vpop.xlane.xlu0 %6935
  %v6937 = vsel %vm2382, %v6853, 0.0
  %6938 = vadd.xlane.f32.xlu0 %v6937
  %v6939 = vpop.xlane.xlu0 %6938
  %v6940 = vsel %vm2382, %v6854, 0.0
  %6941 = vadd.xlane.f32.xlu0 %v6940
  %v6942 = vpop.xlane.xlu0 %6941
  %v6943 = vsel %vm2382, %v6855, 0.0
  %6944 = vadd.xlane.f32.xlu0 %v6943
  %v6945 = vpop.xlane.xlu0 %6944
  %v6946 = vsel %vm2382, %v6856, 0.0
  %6947 = vadd.xlane.f32.xlu0 %v6946
  %v6948 = vpop.xlane.xlu0 %6947
  %v6949 = vsel %vm2382, %v6857, 0.0
  %6950 = vadd.xlane.f32.xlu0 %v6949
  %v6951 = vpop.xlane.xlu0 %6950
  %v6952 = vsel %vm2382, %v6858, 0.0
  %6953 = vadd.xlane.f32.xlu0 %v6952
  %v6954 = vpop.xlane.xlu0 %6953
  %v6955 = vsel %vm2382, %v6859, 0.0
  %6956 = vadd.xlane.f32.xlu0 %v6955
  %v6957 = vpop.xlane.xlu0 %6956
  %v6958 = vsel %vm2382, %v6860, 0.0
  %6959 = vadd.xlane.f32.xlu0 %v6958
  %v6960 = vpop.xlane.xlu0 %6959
  %v6961 = vsel %vm2382, %v6861, 0.0
  %6962 = vadd.xlane.f32.xlu0 %v6961
  %v6963 = vpop.xlane.xlu0 %6962
  %v6964 = vsel %vm2382, %v6862, 0.0
  %6965 = vadd.xlane.f32.xlu0 %v6964
  %v6966 = vpop.xlane.xlu0 %6965
  %v6967 = vsel %vm2382, %v6863, 0.0
  %6968 = vadd.xlane.f32.xlu0 %v6967
  %v6969 = vpop.xlane.xlu0 %6968
  %v6970 = vsel %vm2382, %v6864, 0.0
  %6971 = vadd.xlane.f32.xlu0 %v6970
  %v6972 = vpop.xlane.xlu0 %6971
  %v6973 = vsel %vm2382, %v6865, 0.0
  %6974 = vadd.xlane.f32.xlu0 %v6973
  %v6975 = vpop.xlane.xlu0 %6974
  %v6976 = vsel %vm2382, %v6866, 0.0
  %6977 = vadd.xlane.f32.xlu0 %v6976
  %v6978 = vpop.xlane.xlu0 %6977
  %v6979 = vsel %vm2382, %v6867, 0.0
  %6980 = vadd.xlane.f32.xlu0 %v6979
  %v6981 = vpop.xlane.xlu0 %6980
  %v6982 = vsel %vm2382, %v6868, 0.0
  %6983 = vadd.xlane.f32.xlu0 %v6982
  %v6984 = vpop.xlane.xlu0 %6983
  %v6985 = vsel %vm2382, %v6869, 0.0
  %6986 = vadd.xlane.f32.xlu0 %v6985
  %v6987 = vpop.xlane.xlu0 %6986
  %v6988 = vsel %vm2382, %v6870, 0.0
  %6989 = vadd.xlane.f32.xlu0 %v6988
  %v6990 = vpop.xlane.xlu0 %6989
  %v6991 = vsel %vm2382, %v6871, 0.0
  %6992 = vadd.xlane.f32.xlu0 %v6991
  %v6993 = vpop.xlane.xlu0 %6992
  %v6994 = vsel %vm2382, %v6872, 0.0
  %6995 = vadd.xlane.f32.xlu0 %v6994
  %v6996 = vpop.xlane.xlu0 %6995
  %v6997 = vsel %vm2382, %v6873, 0.0
  %6998 = vadd.xlane.f32.xlu0 %v6997
  %v6999 = vpop.xlane.xlu0 %6998
  %v7000 = vsel %vm2382, %v6874, 0.0
  %7001 = vadd.xlane.f32.xlu0 %v7000
  %v7002 = vpop.xlane.xlu0 %7001
  %v7003 = vsel %vm2382, %v6875, 0.0
  %7004 = vadd.xlane.f32.xlu0 %v7003
  %v7005 = vpop.xlane.xlu0 %7004
  %v7006 = vsel %vm2382, %v6876, 0.0
  %7007 = vadd.xlane.f32.xlu0 %v7006
  %v7008 = vpop.xlane.xlu0 %7007
  %v7009 = vsel %vm2382, %v6877, 0.0
  %7010 = vadd.xlane.f32.xlu0 %v7009
  %v7011 = vpop.xlane.xlu0 %7010
  %v7012 = vsel %vm2382, %v6878, 0.0
  %7013 = vadd.xlane.f32.xlu0 %v7012
  %v7014 = vpop.xlane.xlu0 %7013
  %v7015 = vsel %vm2382, %v6879, 0.0
  %7016 = vadd.xlane.f32.xlu0 %v7015
  %v7017 = vpop.xlane.xlu0 %7016
  %v7018 = vsel %vm2382, %v6880, 0.0
  %7019 = vadd.xlane.f32.xlu0 %v7018
  %v7020 = vpop.xlane.xlu0 %7019
  %v7021 = vsel %vm2382, %v6881, 0.0
  %7022 = vadd.xlane.f32.xlu0 %v7021
  %v7023 = vpop.xlane.xlu0 %7022
  %v7024 = vsel %vm2382, %v6882, 0.0
  %7025 = vadd.xlane.f32.xlu0 %v7024
  %v7026 = vpop.xlane.xlu0 %7025
  %v7027 = vsel %vm2382, %v6883, 0.0
  %7028 = vadd.xlane.f32.xlu0 %v7027
  %v7029 = vpop.xlane.xlu0 %7028
  %v7030 = vsel %vm2382, %v6884, 0.0
  %7031 = vadd.xlane.f32.xlu0 %v7030
  %v7032 = vpop.xlane.xlu0 %7031
  %v7033 = vsel %vm2382, %v6885, 0.0
  %7034 = vadd.xlane.f32.xlu0 %v7033
  %v7035 = vpop.xlane.xlu0 %7034
  %v7036 = vsel %vm2382, %v6886, 0.0
  %7037 = vadd.xlane.f32.xlu0 %v7036
  %v7038 = vpop.xlane.xlu0 %7037
  %v7039 = vsel %vm2382, %v6887, 0.0
  %7040 = vadd.xlane.f32.xlu0 %v7039
  %v7041 = vpop.xlane.xlu0 %7040
  %v7042 = vsel %vm2382, %v6888, 0.0
  %7043 = vadd.xlane.f32.xlu0 %v7042
  %v7044 = vpop.xlane.xlu0 %7043
  %v7045 = vsel %vm2382, %v6889, 0.0
  %7046 = vadd.xlane.f32.xlu0 %v7045
  %v7047 = vpop.xlane.xlu0 %7046
  %v7048 = vsel %vm2382, %v6890, 0.0
  %7049 = vadd.xlane.f32.xlu0 %v7048
  %v7050 = vpop.xlane.xlu0 %7049
  %v7051 = vsel %vm2382, %v6891, 0.0
  %7052 = vadd.xlane.f32.xlu0 %v7051
  %v7053 = vpop.xlane.xlu0 %7052
  %v7054 = vsel %vm2382, %v6892, 0.0
  %7055 = vadd.xlane.f32.xlu0 %v7054
  %v7056 = vpop.xlane.xlu0 %7055
  %v7057 = vsel %vm2382, %v6893, 0.0
  %7058 = vadd.xlane.f32.xlu0 %v7057
  %v7059 = vpop.xlane.xlu0 %7058
  %v7060 = vsel %vm2382, %v6894, 0.0
  %7061 = vadd.xlane.f32.xlu0 %v7060
  %v7062 = vpop.xlane.xlu0 %7061
  %v7063 = vsel %vm2382, %v6895, 0.0
  %7064 = vadd.xlane.f32.xlu0 %v7063
  %v7065 = vpop.xlane.xlu0 %7064
  %v7066 = vsel %vm2382, %v6896, 0.0
  %7067 = vadd.xlane.f32.xlu0 %v7066
  %v7068 = vpop.xlane.xlu0 %7067
  %v7069 = vsel %vm2382, %v6897, 0.0
  %7070 = vadd.xlane.f32.xlu0 %v7069
  %v7071 = vpop.xlane.xlu0 %7070
  %v7072 = vsel %vm2382, %v6898, 0.0
  %7073 = vadd.xlane.f32.xlu0 %v7072
  %v7074 = vpop.xlane.xlu0 %7073
  %v7075 = vsel %vm2382, %v6899, 0.0
  %7076 = vadd.xlane.f32.xlu0 %v7075
  %v7077 = vpop.xlane.xlu0 %7076
  %v7078 = vsel %vm2382, %v6900, 0.0
  %7079 = vadd.xlane.f32.xlu0 %v7078
  %v7080 = vpop.xlane.xlu0 %7079
  %v7081 = vsel %vm2382, %v6901, 0.0
  %7082 = vadd.xlane.f32.xlu0 %v7081
  %v7083 = vpop.xlane.xlu0 %7082
  %v7084 = vsel %vm2382, %v6902, 0.0
  %7085 = vadd.xlane.f32.xlu0 %v7084
  %v7086 = vpop.xlane.xlu0 %7085
  %v7087 = vsel %vm2382, %v6903, 0.0
  %7088 = vadd.xlane.f32.xlu0 %v7087
  %v7089 = vpop.xlane.xlu0 %7088
  %v7090 = vsel %vm2382, %v6904, 0.0
  %7091 = vadd.xlane.f32.xlu0 %v7090
  %v7092 = vpop.xlane.xlu0 %7091
  %v7093 = vsel %vm2382, %v6905, 0.0
  %7094 = vadd.xlane.f32.xlu0 %v7093
  %v7095 = vpop.xlane.xlu0 %7094
  %v7096 = vsel %vm2382, %v6906, 0.0
  %7097 = vadd.xlane.f32.xlu0 %v7096
  %v7098 = vpop.xlane.xlu0 %7097
  %v7099 = vadd.f32 %v6648, %v6909
  %v7100 = vadd.f32 %v6651, %v6912
  %v7101 = vadd.f32 %v6654, %v6915
  %v7102 = vadd.f32 %v6657, %v6918
  %v7103 = vadd.f32 %v6660, %v6921
  %v7104 = vadd.f32 %v6663, %v6924
  %v7105 = vadd.f32 %v6666, %v6927
  %v7106 = vadd.f32 %v6669, %v6930
  %v7107 = vadd.f32 %v6672, %v6933
  %v7108 = vadd.f32 %v6675, %v6936
  %v7109 = vadd.f32 %v6678, %v6939
  %v7110 = vadd.f32 %v6681, %v6942
  %v7111 = vadd.f32 %v6684, %v6945
  %v7112 = vadd.f32 %v6687, %v6948
  %v7113 = vadd.f32 %v6690, %v6951
  %v7114 = vadd.f32 %v6693, %v6954
  %v7115 = vadd.f32 %v6696, %v6957
  %v7116 = vadd.f32 %v6699, %v6960
  %v7117 = vadd.f32 %v6702, %v6963
  %v7118 = vadd.f32 %v6705, %v6966
  %v7119 = vadd.f32 %v6708, %v6969
  %v7120 = vadd.f32 %v6711, %v6972
  %v7121 = vadd.f32 %v6714, %v6975
  %v7122 = vadd.f32 %v6717, %v6978
  %v7123 = vadd.f32 %v6720, %v6981
  %v7124 = vadd.f32 %v6723, %v6984
  %v7125 = vadd.f32 %v6726, %v6987
  %v7126 = vadd.f32 %v6729, %v6990
  %v7127 = vadd.f32 %v6732, %v6993
  %v7128 = vadd.f32 %v6735, %v6996
  %v7129 = vadd.f32 %v6738, %v6999
  %v7130 = vadd.f32 %v6741, %v7002
  %v7131 = vadd.f32 %v6744, %v7005
  %v7132 = vadd.f32 %v6747, %v7008
  %v7133 = vadd.f32 %v6750, %v7011
  %v7134 = vadd.f32 %v6753, %v7014
  %v7135 = vadd.f32 %v6756, %v7017
  %v7136 = vadd.f32 %v6759, %v7020
  %v7137 = vadd.f32 %v6762, %v7023
  %v7138 = vadd.f32 %v6765, %v7026
  %v7139 = vadd.f32 %v6768, %v7029
  %v7140 = vadd.f32 %v6771, %v7032
  %v7141 = vadd.f32 %v6774, %v7035
  %v7142 = vadd.f32 %v6777, %v7038
  %v7143 = vadd.f32 %v6780, %v7041
  %v7144 = vadd.f32 %v6783, %v7044
  %v7145 = vadd.f32 %v6786, %v7047
  %v7146 = vadd.f32 %v6789, %v7050
  %v7147 = vadd.f32 %v6792, %v7053
  %v7148 = vadd.f32 %v6795, %v7056
  %v7149 = vadd.f32 %v6798, %v7059
  %v7150 = vadd.f32 %v6801, %v7062
  %v7151 = vadd.f32 %v6804, %v7065
  %v7152 = vadd.f32 %v6807, %v7068
  %v7153 = vadd.f32 %v6810, %v7071
  %v7154 = vadd.f32 %v6813, %v7074
  %v7155 = vadd.f32 %v6816, %v7077
  %v7156 = vadd.f32 %v6819, %v7080
  %v7157 = vadd.f32 %v6822, %v7083
  %v7158 = vadd.f32 %v6825, %v7086
  %v7159 = vadd.f32 %v6828, %v7089
  %v7160 = vadd.f32 %v6831, %v7092
  %v7161 = vadd.f32 %v6834, %v7095
  %v7162 = vadd.f32 %v6837, %v7098
  %v7163 = vld [vmem:[%s2 + $0x48] sm:$0x1]
  %v7164 = vlaneseq
  %v7165 = vshrl.u32 %v7164, 7
  %v7166 = vsub.s32 0, %v7165
  %v7167 = vrot.slane %v7163, %v7166
  %v7168 = vadd.f32 %v7099, %v7167
  %v7169 = vadd.f32 %v7100, %v7167
  %v7170 = vadd.f32 %v7101, %v7167
  %v7171 = vadd.f32 %v7102, %v7167
  %v7172 = vadd.f32 %v7103, %v7167
  %v7173 = vadd.f32 %v7104, %v7167
  %v7174 = vadd.f32 %v7105, %v7167
  %v7175 = vadd.f32 %v7106, %v7167
  %v7176 = vadd.f32 %v7107, %v7167
  %v7177 = vadd.f32 %v7108, %v7167
  %v7178 = vadd.f32 %v7109, %v7167
  %v7179 = vadd.f32 %v7110, %v7167
  %v7180 = vadd.f32 %v7111, %v7167
  %v7181 = vadd.f32 %v7112, %v7167
  %v7182 = vadd.f32 %v7113, %v7167
  %v7183 = vadd.f32 %v7114, %v7167
  %v7184 = vadd.f32 %v7115, %v7167
  %v7185 = vadd.f32 %v7116, %v7167
  %v7186 = vadd.f32 %v7117, %v7167
  %v7187 = vadd.f32 %v7118, %v7167
  %v7188 = vadd.f32 %v7119, %v7167
  %v7189 = vadd.f32 %v7120, %v7167
  %v7190 = vadd.f32 %v7121, %v7167
  %v7191 = vadd.f32 %v7122, %v7167
  %v7192 = vadd.f32 %v7123, %v7167
  %v7193 = vadd.f32 %v7124, %v7167
  %v7194 = vadd.f32 %v7125, %v7167
  %v7195 = vadd.f32 %v7126, %v7167
  %v7196 = vadd.f32 %v7127, %v7167
  %v7197 = vadd.f32 %v7128, %v7167
  %v7198 = vadd.f32 %v7129, %v7167
  %v7199 = vadd.f32 %v7130, %v7167
  %v7200 = vadd.f32 %v7131, %v7167
  %v7201 = vadd.f32 %v7132, %v7167
  %v7202 = vadd.f32 %v7133, %v7167
  %v7203 = vadd.f32 %v7134, %v7167
  %v7204 = vadd.f32 %v7135, %v7167
  %v7205 = vadd.f32 %v7136, %v7167
  %v7206 = vadd.f32 %v7137, %v7167
  %v7207 = vadd.f32 %v7138, %v7167
  %v7208 = vadd.f32 %v7139, %v7167
  %v7209 = vadd.f32 %v7140, %v7167
  %v7210 = vadd.f32 %v7141, %v7167
  %v7211 = vadd.f32 %v7142, %v7167
  %v7212 = vadd.f32 %v7143, %v7167
  %v7213 = vadd.f32 %v7144, %v7167
  %v7214 = vadd.f32 %v7145, %v7167
  %v7215 = vadd.f32 %v7146, %v7167
  %v7216 = vadd.f32 %v7147, %v7167
  %v7217 = vadd.f32 %v7148, %v7167
  %v7218 = vadd.f32 %v7149, %v7167
  %v7219 = vadd.f32 %v7150, %v7167
  %v7220 = vadd.f32 %v7151, %v7167
  %v7221 = vadd.f32 %v7152, %v7167
  %v7222 = vadd.f32 %v7153, %v7167
  %v7223 = vadd.f32 %v7154, %v7167
  %v7224 = vadd.f32 %v7155, %v7167
  %v7225 = vadd.f32 %v7156, %v7167
  %v7226 = vadd.f32 %v7157, %v7167
  %v7227 = vadd.f32 %v7158, %v7167
  %v7228 = vadd.f32 %v7159, %v7167
  %v7229 = vadd.f32 %v7160, %v7167
  %v7230 = vadd.f32 %v7161, %v7167
  %v7231 = vadd.f32 %v7162, %v7167
  %vm7232 = vcmask 7168
  %7233 = vst.msk [vmem:[%s3] sm:$0xff] %vm7232, %v7168
  %7234 = vst.msk [vmem:[%s3 + $0x8] sm:$0xff] %vm7232, %v7169
  %7235 = vst.msk [vmem:[%s3 + $0x10] sm:$0xff] %vm7232, %v7170
  %7236 = vst.msk [vmem:[%s3 + $0x18] sm:$0xff] %vm7232, %v7171
  %7237 = vst.msk [vmem:[%s3 + $0x20] sm:$0xff] %vm7232, %v7172
  %7238 = vst.msk [vmem:[%s3 + $0x28] sm:$0xff] %vm7232, %v7173
  %7239 = vst.msk [vmem:[%s3 + $0x30] sm:$0xff] %vm7232, %v7174
  %7240 = vst.msk [vmem:[%s3 + $0x38] sm:$0xff] %vm7232, %v7175
  %7241 = vst.msk [vmem:[%s3 + $0x40] sm:$0xff] %vm7232, %v7176
  %7242 = vst.msk [vmem:[%s3 + $0x48] sm:$0xff] %vm7232, %v7177
  %7243 = vst.msk [vmem:[%s3 + $0x50] sm:$0xff] %vm7232, %v7178
  %7244 = vst.msk [vmem:[%s3 + $0x58] sm:$0xff] %vm7232, %v7179
  %7245 = vst.msk [vmem:[%s3 + $0x60] sm:$0xff] %vm7232, %v7180
  %7246 = vst.msk [vmem:[%s3 + $0x68] sm:$0xff] %vm7232, %v7181
  %7247 = vst.msk [vmem:[%s3 + $0x70] sm:$0xff] %vm7232, %v7182
  %7248 = vst.msk [vmem:[%s3 + $0x78] sm:$0xff] %vm7232, %v7183
  %7249 = vst.msk [vmem:[%s3 + $0x80] sm:$0xff] %vm7232, %v7184
  %7250 = vst.msk [vmem:[%s3 + $0x88] sm:$0xff] %vm7232, %v7185
  %7251 = vst.msk [vmem:[%s3 + $0x90] sm:$0xff] %vm7232, %v7186
  %7252 = vst.msk [vmem:[%s3 + $0x98] sm:$0xff] %vm7232, %v7187
  %7253 = vst.msk [vmem:[%s3 + $0xa0] sm:$0xff] %vm7232, %v7188
  %7254 = vst.msk [vmem:[%s3 + $0xa8] sm:$0xff] %vm7232, %v7189
  %7255 = vst.msk [vmem:[%s3 + $0xb0] sm:$0xff] %vm7232, %v7190
  %7256 = vst.msk [vmem:[%s3 + $0xb8] sm:$0xff] %vm7232, %v7191
  %7257 = vst.msk [vmem:[%s3 + $0xc0] sm:$0xff] %vm7232, %v7192
  %7258 = vst.msk [vmem:[%s3 + $0xc8] sm:$0xff] %vm7232, %v7193
  %7259 = vst.msk [vmem:[%s3 + $0xd0] sm:$0xff] %vm7232, %v7194
  %7260 = vst.msk [vmem:[%s3 + $0xd8] sm:$0xff] %vm7232, %v7195
  %7261 = vst.msk [vmem:[%s3 + $0xe0] sm:$0xff] %vm7232, %v7196
  %7262 = vst.msk [vmem:[%s3 + $0xe8] sm:$0xff] %vm7232, %v7197
  %7263 = vst.msk [vmem:[%s3 + $0xf0] sm:$0xff] %vm7232, %v7198
  %7264 = vst.msk [vmem:[%s3 + $0xf8] sm:$0xff] %vm7232, %v7199
  %7265 = vst.msk [vmem:[%s3 + $0x100] sm:$0xff] %vm7232, %v7200
  %7266 = vst.msk [vmem:[%s3 + $0x108] sm:$0xff] %vm7232, %v7201
  %7267 = vst.msk [vmem:[%s3 + $0x110] sm:$0xff] %vm7232, %v7202
  %7268 = vst.msk [vmem:[%s3 + $0x118] sm:$0xff] %vm7232, %v7203
  %7269 = vst.msk [vmem:[%s3 + $0x120] sm:$0xff] %vm7232, %v7204
  %7270 = vst.msk [vmem:[%s3 + $0x128] sm:$0xff] %vm7232, %v7205
  %7271 = vst.msk [vmem:[%s3 + $0x130] sm:$0xff] %vm7232, %v7206
  %7272 = vst.msk [vmem:[%s3 + $0x138] sm:$0xff] %vm7232, %v7207
  %7273 = vst.msk [vmem:[%s3 + $0x140] sm:$0xff] %vm7232, %v7208
  %7274 = vst.msk [vmem:[%s3 + $0x148] sm:$0xff] %vm7232, %v7209
  %7275 = vst.msk [vmem:[%s3 + $0x150] sm:$0xff] %vm7232, %v7210
  %7276 = vst.msk [vmem:[%s3 + $0x158] sm:$0xff] %vm7232, %v7211
  %7277 = vst.msk [vmem:[%s3 + $0x160] sm:$0xff] %vm7232, %v7212
  %7278 = vst.msk [vmem:[%s3 + $0x168] sm:$0xff] %vm7232, %v7213
  %7279 = vst.msk [vmem:[%s3 + $0x170] sm:$0xff] %vm7232, %v7214
  %7280 = vst.msk [vmem:[%s3 + $0x178] sm:$0xff] %vm7232, %v7215
  %7281 = vst.msk [vmem:[%s3 + $0x180] sm:$0xff] %vm7232, %v7216
  %7282 = vst.msk [vmem:[%s3 + $0x188] sm:$0xff] %vm7232, %v7217
  %7283 = vst.msk [vmem:[%s3 + $0x190] sm:$0xff] %vm7232, %v7218
  %7284 = vst.msk [vmem:[%s3 + $0x198] sm:$0xff] %vm7232, %v7219
  %7285 = vst.msk [vmem:[%s3 + $0x1a0] sm:$0xff] %vm7232, %v7220
  %7286 = vst.msk [vmem:[%s3 + $0x1a8] sm:$0xff] %vm7232, %v7221
  %7287 = vst.msk [vmem:[%s3 + $0x1b0] sm:$0xff] %vm7232, %v7222
  %7288 = vst.msk [vmem:[%s3 + $0x1b8] sm:$0xff] %vm7232, %v7223
  %7289 = vst.msk [vmem:[%s3 + $0x1c0] sm:$0xff] %vm7232, %v7224
  %7290 = vst.msk [vmem:[%s3 + $0x1c8] sm:$0xff] %vm7232, %v7225
  %7291 = vst.msk [vmem:[%s3 + $0x1d0] sm:$0xff] %vm7232, %v7226
  %7292 = vst.msk [vmem:[%s3 + $0x1d8] sm:$0xff] %vm7232, %v7227
  %7293 = vst.msk [vmem:[%s3 + $0x1e0] sm:$0xff] %vm7232, %v7228
  %7294 = vst.msk [vmem:[%s3 + $0x1e8] sm:$0xff] %vm7232, %v7229
  %7295 = vst.msk [vmem:[%s3 + $0x1f0] sm:$0xff] %vm7232, %v7230
  %7296 = vst.msk [vmem:[%s3 + $0x1f8] sm:$0xff] %vm7232, %v7231
  // Predicated region
  $region14: #{tpu_custom_call.1} parent=0 // pred_check
    _
  $region15: #{tpu_custom_call.1} parent=0 // pred_check_branch
    %7298 = sbr.rel (0) target = $region17
  $region16: #{tpu_custom_call.1} parent=0 // pred_region
    _
  $region17: #{tpu_custom_call.1} parent=0 // pred_fallthru
    _
  // Predicated region
  $region18: #{tpu_custom_call.1} parent=0 // pred_check
    _
  $region19: #{tpu_custom_call.1} parent=0 // pred_check_branch
    %7300 = sbr.rel (0) target = $region21
  $region20: #{tpu_custom_call.1} parent=0 // pred_region
    _
  $region21: #{tpu_custom_call.1} parent=0 // pred_fallthru
    _

</llo_original>
